<compile_context>
chip_gen: v7x
topology: tpu7x:2x2x1
jax: 0.10.0
libtpu: 0.0.40
codegen_flags: <defaults>
</compile_context>

<pallas_src>
import functools

import jax
import jax.numpy as jnp
import numpy as np
from jax.experimental import pallas as pl
from jax.experimental.pallas import tpu as pltpu

BN_EPS = 1e-5
_VMEM_LIMIT = 48 * 1024 * 1024


def _bf(x):
    return x.astype(jnp.bfloat16)


def _cparams(sem):
    return pltpu.CompilerParams(dimension_semantics=tuple(sem),
                                vmem_limit_bytes=_VMEM_LIMIT)


def _shared(shape):
    zeros = (0,) * len(shape)
    return pl.BlockSpec(tuple(shape), lambda *_: zeros)


def _attn_tiles(n):
    """Pick q / kv tile sizes (full N for small inputs, 128-multiples otherwise)."""
    def pick(target):
        if n <= target:
            return n
        for t in range(target, 0, -128):
            if n % t == 0:
                return t
        return n
    return pick(256), pick(512)


# ---------------------------------------------------------------------------
# 3x3 conv + folded BN + (leaky-)ReLU:  9 shifted-slice GEMMs, no HBM im2col
# ---------------------------------------------------------------------------
def _conv3x3_kernel(xpad_ref, w_ref, scale_ref, shift_ref, o_ref, *, H, W, neg_slope):
    # xpad_ref: (1, H+2, W+2, Cin) bf16; w_ref: (9, Cin, Cout) bf16;
    # scale/shift: (1, Cout) f32; o_ref: (1, H*W, Cout) f32
    cout = w_ref.shape[-1]
    xp = xpad_ref[0]                                       # (H+2, W+2, Cin) bf16
    acc = jnp.zeros((H * W, cout), jnp.float32)
    for dy in range(3):
        for dx in range(3):
            xs = xp[dy:dy + H, dx:dx + W, :]               # (H, W, Cin) bf16
            xs = xs.reshape(H * W, xs.shape[-1])
            acc = acc + jnp.dot(xs, w_ref[dy * 3 + dx],
                                preferred_element_type=jnp.float32)
    y = acc * scale_ref[...] + shift_ref[...]              # folded eval BatchNorm
    o_ref[0] = jnp.where(y >= 0.0, y, neg_slope * y)


def conv3x3_bn_act(x_nhwc, w_oihw, gamma, beta, mean, var, neg_slope):
    """3x3 conv (pad=1, no bias) + eval BN + (leaky)ReLU. Returns (B, H*W, Cout)."""
    B, H, W, Cin = x_nhwc.shape
    Cout = w_oihw.shape[0]
    # pad + bf16 cast in the wrapper (fused by XLA); halves the kernel's input DMA.
    xpad = jnp.pad(_bf(x_nhwc), ((0, 0), (1, 1), (1, 1), (0, 0)))
    # w_taps[dy*3+dx, ci, co] = w[co, ci, dy, dx]
    w_taps = _bf(jnp.transpose(w_oihw, (2, 3, 1, 0)).reshape(9, Cin, Cout))
    scale = gamma / jnp.sqrt(var + BN_EPS)
    shift = beta - mean * scale
    kern = functools.partial(_conv3x3_kernel, H=H, W=W, neg_slope=neg_slope)
    # TODO(synk): for very large feature maps add an H-tile (halo) grid axis; one
    # padded spatial tile per batch element is fine at these sizes.
    return pl.pallas_call(
        kern,
        grid=(B,),
        out_shape=jax.ShapeDtypeStruct((B, H * W, Cout), jnp.float32),
        in_specs=[pl.BlockSpec((1, H + 2, W + 2, Cin), lambda b: (b, 0, 0, 0)),
                  _shared((9, Cin, Cout)),
                  _shared((1, Cout)), _shared((1, Cout))],
        out_specs=pl.BlockSpec((1, H * W, Cout), lambda b: (b, 0, 0)),
        compiler_params=_cparams(("parallel",)),
    )(xpad, w_taps, scale.reshape(1, Cout), shift.reshape(1, Cout))


# ---------------------------------------------------------------------------
# PAModule: flash-tiled position attention + fused 1x1 reduce-conv epilogue
# ---------------------------------------------------------------------------
def _make_pa_kernel(emit_full):
    def kernel(xq_ref, xkv_ref, wq_ref, bq_ref, wk_ref, bk_ref, wv_ref, bv_ref,
               gamma_ref, wr_ref, br_ref, *rest):
        if emit_full:
            o_ref, red_ref = rest[0], rest[1]
            q_scr, m_scr, l_scr, acc_scr = rest[2:]
        else:
            o_ref = None
            red_ref = rest[0]
            q_scr, m_scr, l_scr, acc_scr = rest[1:]

        j = pl.program_id(2)

        @pl.when(j == 0)
        def _init():
            xq = _bf(xq_ref[0])
            q = (jnp.dot(xq, wq_ref[...], preferred_element_type=jnp.float32)
                 + bq_ref[...])
            q_scr[...] = _bf(q)                            # cast once, reuse per kv
            m_scr[...] = jnp.full(m_scr.shape, -jnp.inf, m_scr.dtype)
            l_scr[...] = jnp.zeros(l_scr.shape, l_scr.dtype)
            acc_scr[...] = jnp.zeros(acc_scr.shape, acc_scr.dtype)

        xkv = _bf(xkv_ref[0])                                          # (TKV, C)
        k = jnp.dot(xkv, wk_ref[...], preferred_element_type=jnp.float32) + bk_ref[...]
        v = jnp.dot(xkv, wv_ref[...], preferred_element_type=jnp.float32) + bv_ref[...]
        # s[i, j] = <q_i, k_j>
        s = jax.lax.dot_general(q_scr[...], _bf(k), (((1,), (1,)), ((), ())),
                                preferred_element_type=jnp.float32)    # (TQ, TKV)
        m_prev = m_scr[...]
        m_new = jnp.maximum(m_prev, jnp.max(s, axis=-1, keepdims=True))
        alpha = jnp.exp(m_prev - m_new)
        p = jnp.exp(s - m_new)
        l_scr[...] = alpha * l_scr[...] + jnp.sum(p, axis=-1, keepdims=True)
        acc_scr[...] = alpha * acc_scr[...] + jnp.dot(
            _bf(p), _bf(v), preferred_element_type=jnp.float32)
        m_scr[...] = m_new

        @pl.when(j == pl.num_programs(2) - 1)
        def _finalize():
            out = acc_scr[...] * pl.reciprocal(l_scr[...], approx=True)
            res = gamma_ref[...] * out + xq_ref[0]                     # gamma*out + x
            if emit_full:
                o_ref[0] = res
            red_ref[0] = (jnp.dot(_bf(res), wr_ref[...],
                                  preferred_element_type=jnp.float32) + br_ref[...])

    return kernel


def pa_module(x_bnc, p, wr, br, emit_full):
    B, N, C = x_bnc.shape
    C8 = p["pa_wq"].shape[0]
    Cr = wr.shape[0]
    TQ, TKV = _attn_tiles(N)
    n_q, n_kv = N // TQ, N // TKV

    red_shape = jax.ShapeDtypeStruct((B, N, Cr), jnp.float32)
    red_spec = pl.BlockSpec((1, TQ, Cr), lambda b, i, j: (b, i, 0))
    if emit_full:
        out_shape = (jax.ShapeDtypeStruct((B, N, C), jnp.float32), red_shape)
        out_specs = (pl.BlockSpec((1, TQ, C), lambda b, i, j: (b, i, 0)), red_spec)
    else:
        out_shape = red_shape
        out_specs = red_spec

    result = pl.pallas_call(
        _make_pa_kernel(emit_full),
        grid=(B, n_q, n_kv),
        out_shape=out_shape,
        in_specs=[pl.BlockSpec((1, TQ, C), lambda b, i, j: (b, i, 0)),
                  pl.BlockSpec((1, TKV, C), lambda b, i, j: (b, j, 0)),
                  _shared((C, C8)), _shared((1, C8)),
                  _shared((C, C8)), _shared((1, C8)),
                  _shared((C, C)), _shared((1, C)),
                  _shared((1, 1)),
                  _shared((C, Cr)), _shared((1, Cr))],
        out_specs=out_specs,
        scratch_shapes=[pltpu.VMEM((TQ, C8), jnp.bfloat16),
                        pltpu.VMEM((TQ, 1), jnp.float32),
                        pltpu.VMEM((TQ, 1), jnp.float32),
                        pltpu.VMEM((TQ, C), jnp.float32)],
        compiler_params=_cparams(("parallel", "parallel", "arbitrary")),
    )(x_bnc, x_bnc,
      _bf(p["pa_wq"].T), p["pa_bq"].reshape(1, C8),
      _bf(p["pa_wk"].T), p["pa_bk"].reshape(1, C8),
      _bf(p["pa_wv"].T), p["pa_bv"].reshape(1, C),
      p["pa_gamma"].reshape(1, 1),
      _bf(wr.T), br.reshape(1, Cr))
    return result


# ---------------------------------------------------------------------------
# CAModule: tiled X^T X energy pass + apply pass with fused reduce-conv epilogue
# ---------------------------------------------------------------------------
def _ca_energy_kernel(x_ref, att_ref, e_scr):
    j = pl.program_id(1)

    @pl.when(j == 0)
    def _():
        e_scr[...] = jnp.zeros(e_scr.shape, e_scr.dtype)

    x = _bf(x_ref[0])                                                  # (TKV, C)
    # energy[c, d] += sum_n x[n, c] * x[n, d]
    e_scr[...] += jax.lax.dot_general(x, x, (((0,), (0,)), ((), ())),
                                      preferred_element_type=jnp.float32)

    @pl.when(j == pl.num_programs(1) - 1)
    def _():
        energy = e_scr[...]
        energy_new = jnp.max(energy, axis=-1, keepdims=True) - energy
        m = jnp.max(energy_new, axis=-1, keepdims=True)
        e = jnp.exp(energy_new - m)
        att_ref[0] = e * pl.reciprocal(jnp.sum(e, axis=-1, keepdims=True),
                                       approx=True)


def _ca_apply_kernel(x_ref, att_ref, beta_ref, wr_ref, br_ref, o_ref, red_ref):
    x = x_ref[0]                                                       # (TN, C) f32
    att = att_ref[0]                                                   # (C, C)  f32
    # out[n, c] = sum_d att[c, d] * x[n, d]
    out = jax.lax.dot_general(_bf(x), _bf(att), (((1,), (1,)), ((), ())),
                              preferred_element_type=jnp.float32)
    res = beta_ref[...] * out + x                                      # beta*out + x
    o_ref[0] = res
    red_ref[0] = (jnp.dot(_bf(res), wr_ref[...],
                          preferred_element_type=jnp.float32) + br_ref[...])


def ca_module(x_bnc, beta, wr, br):
    B, N, C = x_bnc.shape
    Cr = wr.shape[0]
    TQ, TKV = _attn_tiles(N)
    n_q, n_kv = N // TQ, N // TKV

    att = pl.pallas_call(
        _ca_energy_kernel,
        grid=(B, n_kv),
        out_shape=jax.ShapeDtypeStruct((B, C, C), jnp.float32),
        in_specs=[pl.BlockSpec((1, TKV, C), lambda b, j: (b, j, 0))],
        out_specs=pl.BlockSpec((1, C, C), lambda b, j: (b, 0, 0)),
        scratch_shapes=[pltpu.VMEM((C, C), jnp.float32)],
        compiler_params=_cparams(("parallel", "arbitrary")),
    )(x_bnc)

    out, red = pl.pallas_call(
        _ca_apply_kernel,
        grid=(B, n_q),
        out_shape=(jax.ShapeDtypeStruct((B, N, C), jnp.float32),
                   jax.ShapeDtypeStruct((B, N, Cr), jnp.float32)),
        in_specs=[pl.BlockSpec((1, TQ, C), lambda b, i: (b, i, 0)),
                  pl.BlockSpec((1, C, C), lambda b, i: (b, 0, 0)),
                  _shared((1, 1)), _shared((C, Cr)), _shared((1, Cr))],
        out_specs=(pl.BlockSpec((1, TQ, C), lambda b, i: (b, i, 0)),
                   pl.BlockSpec((1, TQ, Cr), lambda b, i: (b, i, 0))),
        compiler_params=_cparams(("parallel", "parallel")),
    )(x_bnc, att, beta.reshape(1, 1), _bf(wr.T), br.reshape(1, Cr))
    return out, red


# ---------------------------------------------------------------------------
# Full DPC forward
# ---------------------------------------------------------------------------
def dpc_forward(x, p):
    """x: (B, in_channels, H, W) NCHW -> (B, out_channels, H, W) NCHW."""
    B, Cin, H, W = x.shape
    N = H * W
    x_nhwc = jnp.transpose(x, (0, 2, 3, 1))
    # conv1: Conv3x3(no bias) -> InPlaceABNSync (BN + leaky_relu) -> ReLU (== ReLU)
    pcp = conv3x3_bn_act(x_nhwc, p["conv1_w"], p["bn1_gamma"], p["bn1_beta"],
                         p["bn1_mean"], p["bn1_var"], neg_slope=0.0)   # (B, N, inter)
    # TODO(synk): Dropout2d(0.1) layers are eval-mode identities (no RNG masking).
    pcp_p1, p1_red = pa_module(pcp, p, p["red1_w"], p["red1_b"], emit_full=True)
    pcp_c, c_red = ca_module(pcp_p1, p["ca_beta"], p["red2_w"], p["red2_b"])
    p2_red = pa_module(pcp_c, p, p["red3_w"], p["red3_b"], emit_full=False)
    # channel-last concat feeds the bottleneck conv directly (no NCHW transposes)
    cat = jnp.concatenate([x_nhwc.reshape(B, N, Cin), p1_red, c_red, p2_red], axis=-1)
    Ctot = cat.shape[-1]
    out = conv3x3_bn_act(cat.reshape(B, H, W, Ctot), p["bott_w"],
                         p["bott_gamma"], p["bott_beta"],
                         p["bott_mean"], p["bott_var"], neg_slope=0.01)  # (B, N, out)
    Cout = p["bott_w"].shape[0]
    return jnp.transpose(out.reshape(B, H, W, Cout), (0, 3, 1, 2))


# ---------------------------------------------------------------------------
# Deterministic synthetic parameters (matches DPCModule.__init__ shapes)
# ---------------------------------------------------------------------------
def init_params(key, in_channels, out_channels):
    inter = in_channels // 4
    c8 = inter // 8
    assert c8 >= 1, "in_channels must be >= 32 so that inter_channels // 8 >= 1"
    ks = jax.random.split(key, 22)
    n = lambda k, shape, s: jax.random.normal(k, shape, jnp.float32) * s
    return dict(
        conv1_w=n(ks[0], (inter, in_channels, 3, 3), 0.05),
        bn1_gamma=0.25 + n(ks[1], (inter,), 0.03),
        bn1_beta=0.10 + n(ks[2], (inter,), 0.03),
        bn1_mean=n(ks[3], (inter,), 0.02),
        bn1_var=1.0 + jnp.abs(n(ks[4], (inter,), 0.1)),
        pa_wq=n(ks[5], (c8, inter), 0.3), pa_bq=n(ks[6], (c8,), 0.1),
        pa_wk=n(ks[7], (c8, inter), 0.3), pa_bk=n(ks[8], (c8,), 0.1),
        pa_wv=n(ks[9], (inter, inter), 0.1), pa_bv=n(ks[10], (inter,), 0.05),
        # torch inits gamma/beta to 0 (attention branch disabled at init); use
        # nonzero values so the attention compute path is exercised by the test.
        pa_gamma=jnp.array([0.5], jnp.float32),
        ca_beta=jnp.array([0.5], jnp.float32),
        red1_w=n(ks[11], (out_channels, inter), 0.1), red1_b=n(ks[12], (out_channels,), 0.05),
        red2_w=n(ks[13], (out_channels, inter), 0.1), red2_b=n(ks[14], (out_channels,), 0.05),
        red3_w=n(ks[15], (out_channels, inter), 0.1), red3_b=n(ks[16], (out_channels,), 0.05),
        # == (out, inter*3 + in_channels, 3, 3) since the module needs out == inter
        bott_w=n(ks[17], (out_channels, in_channels + 3 * out_channels, 3, 3), 0.1),
        bott_gamma=1.0 + n(ks[18], (out_channels,), 0.05),
        bott_beta=n(ks[19], (out_channels,), 0.05),
        bott_mean=n(ks[20], (out_channels,), 0.02),
        bott_var=1.0 + jnp.abs(n(ks[21], (out_channels,), 0.1)),
    )


# ---------------------------------------------------------------------------
# Pure-JAX reference (mirrors the PyTorch forward in NCHW; uses the same
# bf16-matmul-input / f32-accumulation policy as the kernels so the tolerance
# check validates kernel structure rather than precision drift)
# ---------------------------------------------------------------------------
def _ref_conv3x3(x, w):
    return jax.lax.conv_general_dilated(
        _bf(x), _bf(w), (1, 1), ((1, 1), (1, 1)),
        dimension_numbers=("NCHW", "OIHW", "NCHW"),
        preferred_element_type=jnp.float32)


def _ref_bn_act(y, gamma, beta, mean, var, neg_slope):
    scale = gamma / jnp.sqrt(var + BN_EPS)
    shift = beta - mean * scale
    y = y * scale[None, :, None, None] + shift[None, :, None, None]
    return jnp.where(y >= 0, y, neg_slope * y)


def _ref_conv1x1(x, w, b):
    return (jnp.einsum("oc,bchw->bohw", _bf(w), _bf(x),
                       preferred_element_type=jnp.float32)
            + b[None, :, None, None])


def _ref_pa(x, p):
    B, C, H, W = x.shape
    xf = x.reshape(B, C, H * W)
    xb = _bf(xf)
    q = jnp.einsum("oc,bcn->bon", _bf(p["pa_wq"]), xb,
                   preferred_element_type=jnp.float32) + p["pa_bq"][None, :, None]
    k = jnp.einsum("oc,bcn->bon", _bf(p["pa_wk"]), xb,
                   preferred_element_type=jnp.float32) + p["pa_bk"][None, :, None]
    v = jnp.einsum("oc,bcn->bon", _bf(p["pa_wv"]), xb,
                   preferred_element_type=jnp.float32) + p["pa_bv"][None, :, None]
    energy = jnp.einsum("bci,bcj->bij", _bf(q), _bf(k),
                        preferred_element_type=jnp.float32)
    att = jax.nn.softmax(energy, axis=-1)
    out = jnp.einsum("bcj,bij->bci", _bf(v), _bf(att),
                     preferred_element_type=jnp.float32)
    return (p["pa_gamma"][0] * out + xf).reshape(B, C, H, W)


def _ref_ca(x, beta):
    B, C, H, W = x.shape
    xf = x.reshape(B, C, H * W)
    xb = _bf(xf)
    energy = jnp.einsum("bcn,bdn->bcd", xb, xb, preferred_element_type=jnp.float32)
    energy_new = jnp.max(energy, axis=-1, keepdims=True) - energy
    att = jax.nn.softmax(energy_new, axis=-1)
    out = jnp.einsum("bcd,bdn->bcn", _bf(att), xb,
                     preferred_element_type=jnp.float32)
    return (beta[0] * out + xf).reshape(B, C, H, W)


def dpc_forward_ref(x, p):
    pcp = _ref_bn_act(_ref_conv3x3(x, p["conv1_w"]),
                      p["bn1_gamma"], p["bn1_beta"], p["bn1_mean"], p["bn1_var"], 0.0)
    p1 = _ref_pa(pcp, p)
    p1o = _ref_conv1x1(p1, p["red1_w"], p["red1_b"])
    c = _ref_ca(p1, p["ca_beta"])
    co = _ref_conv1x1(c, p["red2_w"], p["red2_b"])
    p2 = _ref_pa(c, p)
    p2o = _ref_conv1x1(p2, p["red3_w"], p["red3_b"])
    cat = jnp.concatenate([x, p1o, co, p2o], axis=1)
    return _ref_bn_act(_ref_conv3x3(cat, p["bott_w"]),
                       p["bott_gamma"], p["bott_beta"],
                       p["bott_mean"], p["bott_var"], 0.01)


if __name__ == "__main__":
    B, in_channels, H, W = 2, 64, 8, 8
    out_channels = in_channels // 4  # bottleneck/cat consistency requires out == inter
    key = jax.random.PRNGKey(0)
    kx, kp = jax.random.split(key)
    x = jax.random.normal(kx, (B, in_channels, H, W), jnp.float32)
    params = init_params(kp, in_channels, out_channels)

    out = jax.block_until_ready(jax.jit(dpc_forward)(x, params))
    assert out.shape == (B, out_channels, H, W)

    ref = dpc_forward_ref(x, params)
    np.testing.assert_allclose(np.asarray(out), np.asarray(ref), rtol=2e-2, atol=2e-2)
    print("KERNEL_OK")
</pallas_src>

<mosaic_0001>
module attributes {stable_mosaic.version = 11 : i64} {
  func.func @_conv3x3_kernel(%arg0: i32, %arg1: memref<1x10x10x64xbf16, #tpu.memory_space<vmem>>, %arg2: memref<9x64x16xbf16, #tpu.memory_space<vmem>>, %arg3: memref<1x16xf32, #tpu.memory_space<vmem>>, %arg4: memref<1x16xf32, #tpu.memory_space<vmem>>, %arg5: memref<1x64x16xf32, #tpu.memory_space<vmem>>) attributes {dimension_semantics = [#tpu.dimension_semantics<parallel>], iteration_bounds = array<i64: 2>, scalar_prefetch = 0 : i64, scratch_operands = 0 : i64, tpu.core_type = #tpu.core_type<tc>, window_params = [{transform_indices = @transform_0, window_bounds = array<i64: 1, 10, 10, 64>}, {pipeline_mode = #tpu.pipeline_mode<synchronous>, transform_indices = @transform_1, window_bounds = array<i64: 9, 64, 16>}, {pipeline_mode = #tpu.pipeline_mode<synchronous>, transform_indices = @transform_2, window_bounds = array<i64: 1, 16>}, {pipeline_mode = #tpu.pipeline_mode<synchronous>, transform_indices = @transform_3, window_bounds = array<i64: 1, 16>}, {transform_indices = @transform_4, window_bounds = array<i64: 1, 64, 16>}]} {
    %c0 = arith.constant 0 : index
    %c0_0 = arith.constant 0 : index
    %c0_1 = arith.constant 0 : index
    %c0_2 = arith.constant 0 : index
    %0 = vector.load %arg1[%c0, %c0_0, %c0_1, %c0_2] : memref<1x10x10x64xbf16, #tpu.memory_space<vmem>>, vector<1x10x10x64xbf16>
    %1 = vector.shape_cast %0 : vector<1x10x10x64xbf16> to vector<10x10x64xbf16>
    %cst = arith.constant 0.000000e+00 : f32
    %2 = vector.broadcast %cst : f32 to vector<64x16xf32>
    %3 = vector.extract_strided_slice %1 {offsets = [0, 0, 0], sizes = [8, 8, 64], strides = [1, 1, 1]} : vector<10x10x64xbf16> to vector<8x8x64xbf16>
    %4 = vector.shape_cast %3 : vector<8x8x64xbf16> to vector<64x64xbf16>
    %c0_3 = arith.constant 0 : index
    %c0_4 = arith.constant 0 : index
    %c0_5 = arith.constant 0 : index
    %5 = vector.load %arg2[%c0_3, %c0_4, %c0_5] : memref<9x64x16xbf16, #tpu.memory_space<vmem>>, vector<1x64x16xbf16>
    %6 = vector.shape_cast %5 : vector<1x64x16xbf16> to vector<64x16xbf16>
    %cst_6 = arith.constant dense<0.000000e+00> : vector<64x16xf32>
    %7 = tpu.matmul %4, %6, %cst_6 {dimension_numbers = #tpu.dot_dimension_numbers<[1], [0], [0], [1], [0, 0, 1, 1], [], []>} : vector<64x64xbf16>, vector<64x16xbf16>, vector<64x16xf32> -> vector<64x16xf32>
    %8 = arith.addf %2, %7 : vector<64x16xf32>
    %9 = vector.extract_strided_slice %1 {offsets = [0, 1, 0], sizes = [8, 8, 64], strides = [1, 1, 1]} : vector<10x10x64xbf16> to vector<8x8x64xbf16>
    %10 = vector.shape_cast %9 : vector<8x8x64xbf16> to vector<64x64xbf16>
    %c1 = arith.constant 1 : index
    %c0_7 = arith.constant 0 : index
    %c0_8 = arith.constant 0 : index
    %11 = vector.load %arg2[%c1, %c0_7, %c0_8] : memref<9x64x16xbf16, #tpu.memory_space<vmem>>, vector<1x64x16xbf16>
    %12 = vector.shape_cast %11 : vector<1x64x16xbf16> to vector<64x16xbf16>
    %cst_9 = arith.constant dense<0.000000e+00> : vector<64x16xf32>
    %13 = tpu.matmul %10, %12, %cst_9 {dimension_numbers = #tpu.dot_dimension_numbers<[1], [0], [0], [1], [0, 0, 1, 1], [], []>} : vector<64x64xbf16>, vector<64x16xbf16>, vector<64x16xf32> -> vector<64x16xf32>
    %14 = arith.addf %8, %13 : vector<64x16xf32>
    %15 = vector.extract_strided_slice %1 {offsets = [0, 2, 0], sizes = [8, 8, 64], strides = [1, 1, 1]} : vector<10x10x64xbf16> to vector<8x8x64xbf16>
    %16 = vector.shape_cast %15 : vector<8x8x64xbf16> to vector<64x64xbf16>
    %c2 = arith.constant 2 : index
    %c0_10 = arith.constant 0 : index
    %c0_11 = arith.constant 0 : index
    %17 = vector.load %arg2[%c2, %c0_10, %c0_11] : memref<9x64x16xbf16, #tpu.memory_space<vmem>>, vector<1x64x16xbf16>
    %18 = vector.shape_cast %17 : vector<1x64x16xbf16> to vector<64x16xbf16>
    %cst_12 = arith.constant dense<0.000000e+00> : vector<64x16xf32>
    %19 = tpu.matmul %16, %18, %cst_12 {dimension_numbers = #tpu.dot_dimension_numbers<[1], [0], [0], [1], [0, 0, 1, 1], [], []>} : vector<64x64xbf16>, vector<64x16xbf16>, vector<64x16xf32> -> vector<64x16xf32>
    %20 = arith.addf %14, %19 : vector<64x16xf32>
    %21 = vector.extract_strided_slice %1 {offsets = [1, 0, 0], sizes = [8, 8, 64], strides = [1, 1, 1]} : vector<10x10x64xbf16> to vector<8x8x64xbf16>
    %22 = vector.shape_cast %21 : vector<8x8x64xbf16> to vector<64x64xbf16>
    %c3 = arith.constant 3 : index
    %c0_13 = arith.constant 0 : index
    %c0_14 = arith.constant 0 : index
    %23 = vector.load %arg2[%c3, %c0_13, %c0_14] : memref<9x64x16xbf16, #tpu.memory_space<vmem>>, vector<1x64x16xbf16>
    %24 = vector.shape_cast %23 : vector<1x64x16xbf16> to vector<64x16xbf16>
    %cst_15 = arith.constant dense<0.000000e+00> : vector<64x16xf32>
    %25 = tpu.matmul %22, %24, %cst_15 {dimension_numbers = #tpu.dot_dimension_numbers<[1], [0], [0], [1], [0, 0, 1, 1], [], []>} : vector<64x64xbf16>, vector<64x16xbf16>, vector<64x16xf32> -> vector<64x16xf32>
    %26 = arith.addf %20, %25 : vector<64x16xf32>
    %27 = vector.extract_strided_slice %1 {offsets = [1, 1, 0], sizes = [8, 8, 64], strides = [1, 1, 1]} : vector<10x10x64xbf16> to vector<8x8x64xbf16>
    %28 = vector.shape_cast %27 : vector<8x8x64xbf16> to vector<64x64xbf16>
    %c4 = arith.constant 4 : index
    %c0_16 = arith.constant 0 : index
    %c0_17 = arith.constant 0 : index
    %29 = vector.load %arg2[%c4, %c0_16, %c0_17] : memref<9x64x16xbf16, #tpu.memory_space<vmem>>, vector<1x64x16xbf16>
    %30 = vector.shape_cast %29 : vector<1x64x16xbf16> to vector<64x16xbf16>
    %cst_18 = arith.constant dense<0.000000e+00> : vector<64x16xf32>
    %31 = tpu.matmul %28, %30, %cst_18 {dimension_numbers = #tpu.dot_dimension_numbers<[1], [0], [0], [1], [0, 0, 1, 1], [], []>} : vector<64x64xbf16>, vector<64x16xbf16>, vector<64x16xf32> -> vector<64x16xf32>
    %32 = arith.addf %26, %31 : vector<64x16xf32>
    %33 = vector.extract_strided_slice %1 {offsets = [1, 2, 0], sizes = [8, 8, 64], strides = [1, 1, 1]} : vector<10x10x64xbf16> to vector<8x8x64xbf16>
    %34 = vector.shape_cast %33 : vector<8x8x64xbf16> to vector<64x64xbf16>
    %c5 = arith.constant 5 : index
    %c0_19 = arith.constant 0 : index
    %c0_20 = arith.constant 0 : index
    %35 = vector.load %arg2[%c5, %c0_19, %c0_20] : memref<9x64x16xbf16, #tpu.memory_space<vmem>>, vector<1x64x16xbf16>
    %36 = vector.shape_cast %35 : vector<1x64x16xbf16> to vector<64x16xbf16>
    %cst_21 = arith.constant dense<0.000000e+00> : vector<64x16xf32>
    %37 = tpu.matmul %34, %36, %cst_21 {dimension_numbers = #tpu.dot_dimension_numbers<[1], [0], [0], [1], [0, 0, 1, 1], [], []>} : vector<64x64xbf16>, vector<64x16xbf16>, vector<64x16xf32> -> vector<64x16xf32>
    %38 = arith.addf %32, %37 : vector<64x16xf32>
    %39 = vector.extract_strided_slice %1 {offsets = [2, 0, 0], sizes = [8, 8, 64], strides = [1, 1, 1]} : vector<10x10x64xbf16> to vector<8x8x64xbf16>
    %40 = vector.shape_cast %39 : vector<8x8x64xbf16> to vector<64x64xbf16>
    %c6 = arith.constant 6 : index
    %c0_22 = arith.constant 0 : index
    %c0_23 = arith.constant 0 : index
    %41 = vector.load %arg2[%c6, %c0_22, %c0_23] : memref<9x64x16xbf16, #tpu.memory_space<vmem>>, vector<1x64x16xbf16>
    %42 = vector.shape_cast %41 : vector<1x64x16xbf16> to vector<64x16xbf16>
    %cst_24 = arith.constant dense<0.000000e+00> : vector<64x16xf32>
    %43 = tpu.matmul %40, %42, %cst_24 {dimension_numbers = #tpu.dot_dimension_numbers<[1], [0], [0], [1], [0, 0, 1, 1], [], []>} : vector<64x64xbf16>, vector<64x16xbf16>, vector<64x16xf32> -> vector<64x16xf32>
    %44 = arith.addf %38, %43 : vector<64x16xf32>
    %45 = vector.extract_strided_slice %1 {offsets = [2, 1, 0], sizes = [8, 8, 64], strides = [1, 1, 1]} : vector<10x10x64xbf16> to vector<8x8x64xbf16>
    %46 = vector.shape_cast %45 : vector<8x8x64xbf16> to vector<64x64xbf16>
    %c7 = arith.constant 7 : index
    %c0_25 = arith.constant 0 : index
    %c0_26 = arith.constant 0 : index
    %47 = vector.load %arg2[%c7, %c0_25, %c0_26] : memref<9x64x16xbf16, #tpu.memory_space<vmem>>, vector<1x64x16xbf16>
    %48 = vector.shape_cast %47 : vector<1x64x16xbf16> to vector<64x16xbf16>
    %cst_27 = arith.constant dense<0.000000e+00> : vector<64x16xf32>
    %49 = tpu.matmul %46, %48, %cst_27 {dimension_numbers = #tpu.dot_dimension_numbers<[1], [0], [0], [1], [0, 0, 1, 1], [], []>} : vector<64x64xbf16>, vector<64x16xbf16>, vector<64x16xf32> -> vector<64x16xf32>
    %50 = arith.addf %44, %49 : vector<64x16xf32>
    %51 = vector.extract_strided_slice %1 {offsets = [2, 2, 0], sizes = [8, 8, 64], strides = [1, 1, 1]} : vector<10x10x64xbf16> to vector<8x8x64xbf16>
    %52 = vector.shape_cast %51 : vector<8x8x64xbf16> to vector<64x64xbf16>
    %c8 = arith.constant 8 : index
    %c0_28 = arith.constant 0 : index
    %c0_29 = arith.constant 0 : index
    %53 = vector.load %arg2[%c8, %c0_28, %c0_29] : memref<9x64x16xbf16, #tpu.memory_space<vmem>>, vector<1x64x16xbf16>
    %54 = vector.shape_cast %53 : vector<1x64x16xbf16> to vector<64x16xbf16>
    %cst_30 = arith.constant dense<0.000000e+00> : vector<64x16xf32>
    %55 = tpu.matmul %52, %54, %cst_30 {dimension_numbers = #tpu.dot_dimension_numbers<[1], [0], [0], [1], [0, 0, 1, 1], [], []>} : vector<64x64xbf16>, vector<64x16xbf16>, vector<64x16xf32> -> vector<64x16xf32>
    %56 = arith.addf %50, %55 : vector<64x16xf32>
    %c0_31 = arith.constant 0 : index
    %c0_32 = arith.constant 0 : index
    %57 = vector.load %arg3[%c0_31, %c0_32] : memref<1x16xf32, #tpu.memory_space<vmem>>, vector<1x16xf32>
    %58 = vector.broadcast %57 : vector<1x16xf32> to vector<64x16xf32>
    %59 = arith.mulf %56, %58 : vector<64x16xf32>
    %c0_33 = arith.constant 0 : index
    %c0_34 = arith.constant 0 : index
    %60 = vector.load %arg4[%c0_33, %c0_34] : memref<1x16xf32, #tpu.memory_space<vmem>>, vector<1x16xf32>
    %61 = vector.broadcast %60 : vector<1x16xf32> to vector<64x16xf32>
    %62 = arith.addf %59, %61 : vector<64x16xf32>
    %cst_35 = arith.constant 0.000000e+00 : f32
    %63 = vector.broadcast %cst_35 : f32 to vector<64x16xf32>
    %64 = arith.cmpf oge, %62, %63 : vector<64x16xf32>
    %cst_36 = arith.constant 0.000000e+00 : f32
    %65 = vector.broadcast %cst_36 : f32 to vector<64x16xf32>
    %66 = arith.mulf %65, %62 : vector<64x16xf32>
    %67 = arith.select %64, %62, %66 : vector<64x16xi1>, vector<64x16xf32>
    %c0_37 = arith.constant 0 : index
    %c0_38 = arith.constant 0 : index
    %c0_39 = arith.constant 0 : index
    %68 = vector.load %arg5[%c0_37, %c0_38, %c0_39] : memref<1x64x16xf32, #tpu.memory_space<vmem>>, vector<1x64x16xf32>
    %69 = vector.shape_cast %68 : vector<1x64x16xf32> to vector<64x16xf32>
    %70 = vector.shape_cast %67 : vector<64x16xf32> to vector<1x64x16xf32>
    tpu.vector_store %arg5[%c0_37, %c0_38, %c0_39], %70 {strides = array<i32>} : memref<1x64x16xf32, #tpu.memory_space<vmem>>, vector<1x64x16xf32>,
    return
  }
  func.func @transform_0(%arg0: i32) -> (i32, i32, i32, i32) {
    %c0_i32 = arith.constant 0 : i32
    %c0_i32_0 = arith.constant 0 : i32
    %c0_i32_1 = arith.constant 0 : i32
    %c0_i32_2 = arith.constant 0 : i32
    return %arg0, %c0_i32, %c0_i32_0, %c0_i32_1 : i32, i32, i32, i32
  }
  func.func @transform_1(%arg0: i32) -> (i32, i32, i32) {
    %c0_i32 = arith.constant 0 : i32
    %c0_i32_0 = arith.constant 0 : i32
    %c0_i32_1 = arith.constant 0 : i32
    %c0_i32_2 = arith.constant 0 : i32
    return %c0_i32, %c0_i32_0, %c0_i32_1 : i32, i32, i32
  }
  func.func @transform_2(%arg0: i32) -> (i32, i32) {
    %c0_i32 = arith.constant 0 : i32
    %c0_i32_0 = arith.constant 0 : i32
    %c0_i32_1 = arith.constant 0 : i32
    return %c0_i32, %c0_i32_0 : i32, i32
  }
  func.func @transform_3(%arg0: i32) -> (i32, i32) {
    %c0_i32 = arith.constant 0 : i32
    %c0_i32_0 = arith.constant 0 : i32
    %c0_i32_1 = arith.constant 0 : i32
    return %c0_i32, %c0_i32_0 : i32, i32
  }
  func.func @transform_4(%arg0: i32) -> (i32, i32, i32) {
    %c0_i32 = arith.constant 0 : i32
    %c0_i32_0 = arith.constant 0 : i32
    %c0_i32_1 = arith.constant 0 : i32
    return %arg0, %c0_i32, %c0_i32_0 : i32, i32, i32
  }
}

module attributes {stable_mosaic.version = 11 : i64} {
  func.func @kernel(%arg0: i32, %arg1: i32, %arg2: i32, %arg3: memref<1x64x16xf32, #tpu.memory_space<vmem>>, %arg4: memref<1x64x16xf32, #tpu.memory_space<vmem>>, %arg5: memref<16x2xbf16, #tpu.memory_space<vmem>>, %arg6: memref<1x2xf32, #tpu.memory_space<vmem>>, %arg7: memref<16x2xbf16, #tpu.memory_space<vmem>>, %arg8: memref<1x2xf32, #tpu.memory_space<vmem>>, %arg9: memref<16x16xbf16, #tpu.memory_space<vmem>>, %arg10: memref<1x16xf32, #tpu.memory_space<vmem>>, %arg11: memref<1x1xf32, #tpu.memory_space<vmem>>, %arg12: memref<16x16xbf16, #tpu.memory_space<vmem>>, %arg13: memref<1x16xf32, #tpu.memory_space<vmem>>, %arg14: memref<1x64x16xf32, #tpu.memory_space<vmem>>, %arg15: memref<1x64x16xf32, #tpu.memory_space<vmem>>, %arg16: memref<64x2xbf16, #tpu.memory_space<vmem>>, %arg17: memref<64x1xf32, #tpu.memory_space<vmem>>, %arg18: memref<64x1xf32, #tpu.memory_space<vmem>>, %arg19: memref<64x16xf32, #tpu.memory_space<vmem>>) attributes {dimension_semantics = [#tpu.dimension_semantics<parallel>, #tpu.dimension_semantics<parallel>, #tpu.dimension_semantics<arbitrary>], iteration_bounds = array<i64: 2, 1, 1>, scalar_prefetch = 0 : i64, scratch_operands = 4 : i64, tpu.core_type = #tpu.core_type<tc>, window_params = [{transform_indices = @transform_0, window_bounds = array<i64: 1, 64, 16>}, {transform_indices = @transform_1, window_bounds = array<i64: 1, 64, 16>}, {pipeline_mode = #tpu.pipeline_mode<synchronous>, transform_indices = @transform_2, window_bounds = array<i64: 16, 2>}, {pipeline_mode = #tpu.pipeline_mode<synchronous>, transform_indices = @transform_3, window_bounds = array<i64: 1, 2>}, {pipeline_mode = #tpu.pipeline_mode<synchronous>, transform_indices = @transform_4, window_bounds = array<i64: 16, 2>}, {pipeline_mode = #tpu.pipeline_mode<synchronous>, transform_indices = @transform_5, window_bounds = array<i64: 1, 2>}, {pipeline_mode = #tpu.pipeline_mode<synchronous>, transform_indices = @transform_6, window_bounds = array<i64: 16, 16>}, {pipeline_mode = #tpu.pipeline_mode<synchronous>, transform_indices = @transform_7, window_bounds = array<i64: 1, 16>}, {pipeline_mode = #tpu.pipeline_mode<synchronous>, transform_indices = @transform_8, window_bounds = array<i64: 1, 1>}, {pipeline_mode = #tpu.pipeline_mode<synchronous>, transform_indices = @transform_9, window_bounds = array<i64: 16, 16>}, {pipeline_mode = #tpu.pipeline_mode<synchronous>, transform_indices = @transform_10, window_bounds = array<i64: 1, 16>}, {transform_indices = @transform_11, window_bounds = array<i64: 1, 64, 16>}, {transform_indices = @transform_12, window_bounds = array<i64: 1, 64, 16>}]} {
    %c0_i32 = arith.constant 0 : i32
    %0 = arith.cmpi eq, %arg2, %c0_i32 : i32
    %1 = arith.extui %0 : i1 to i32
    %c0_i32_0 = arith.constant 0 : i32
    %2 = arith.cmpi ne, %1, %c0_i32_0 : i32
    scf.if %2 {
      %c0_32 = arith.constant 0 : index
      %c0_33 = arith.constant 0 : index
      %c0_34 = arith.constant 0 : index
      %46 = vector.load %arg3[%c0_32, %c0_33, %c0_34] : memref<1x64x16xf32, #tpu.memory_space<vmem>>, vector<1x64x16xf32>
      %47 = vector.shape_cast %46 : vector<1x64x16xf32> to vector<64x16xf32>
      %48 = arith.truncf %47 : vector<64x16xf32> to vector<64x16xbf16>
      %c0_35 = arith.constant 0 : index
      %c0_36 = arith.constant 0 : index
      %49 = vector.load %arg5[%c0_35, %c0_36] : memref<16x2xbf16, #tpu.memory_space<vmem>>, vector<16x2xbf16>
      %cst_37 = arith.constant dense<0.000000e+00> : vector<64x2xf32>
      %50 = tpu.matmul %48, %49, %cst_37 {dimension_numbers = #tpu.dot_dimension_numbers<[1], [0], [0], [1], [0, 0, 1, 1], [], []>} : vector<64x16xbf16>, vector<16x2xbf16>, vector<64x2xf32> -> vector<64x2xf32>
      %c0_38 = arith.constant 0 : index
      %c0_39 = arith.constant 0 : index
      %51 = vector.load %arg6[%c0_38, %c0_39] : memref<1x2xf32, #tpu.memory_space<vmem>>, vector<1x2xf32>
      %52 = vector.broadcast %51 : vector<1x2xf32> to vector<64x2xf32>
      %53 = arith.addf %50, %52 : vector<64x2xf32>
      %54 = arith.truncf %53 : vector<64x2xf32> to vector<64x2xbf16>
      %c0_40 = arith.constant 0 : index
      %c0_41 = arith.constant 0 : index
      %55 = vector.load %arg16[%c0_40, %c0_41] : memref<64x2xbf16, #tpu.memory_space<vmem>>, vector<64x2xbf16>
      tpu.vector_store %arg16[%c0_40, %c0_41], %54 {strides = array<i32>} : memref<64x2xbf16, #tpu.memory_space<vmem>>, vector<64x2xbf16>,
      %cst_42 = arith.constant 0xFF800000 : f32
      %56 = vector.broadcast %cst_42 : f32 to vector<64x1xf32>
      %c0_43 = arith.constant 0 : index
      %c0_44 = arith.constant 0 : index
      %57 = vector.load %arg17[%c0_43, %c0_44] : memref<64x1xf32, #tpu.memory_space<vmem>>, vector<64x1xf32>
      tpu.vector_store %arg17[%c0_43, %c0_44], %56 {strides = array<i32>} : memref<64x1xf32, #tpu.memory_space<vmem>>, vector<64x1xf32>,
      %cst_45 = arith.constant 0.000000e+00 : f32
      %58 = vector.broadcast %cst_45 : f32 to vector<64x1xf32>
      %c0_46 = arith.constant 0 : index
      %c0_47 = arith.constant 0 : index
      %59 = vector.load %arg18[%c0_46, %c0_47] : memref<64x1xf32, #tpu.memory_space<vmem>>, vector<64x1xf32>
      tpu.vector_store %arg18[%c0_46, %c0_47], %58 {strides = array<i32>} : memref<64x1xf32, #tpu.memory_space<vmem>>, vector<64x1xf32>,
      %cst_48 = arith.constant 0.000000e+00 : f32
      %60 = vector.broadcast %cst_48 : f32 to vector<64x16xf32>
      %c0_49 = arith.constant 0 : index
      %c0_50 = arith.constant 0 : index
      %61 = vector.load %arg19[%c0_49, %c0_50] : memref<64x16xf32, #tpu.memory_space<vmem>>, vector<64x16xf32>
      tpu.vector_store %arg19[%c0_49, %c0_50], %60 {strides = array<i32>} : memref<64x16xf32, #tpu.memory_space<vmem>>, vector<64x16xf32>,
    } else {
    }
    %c0 = arith.constant 0 : index
    %c0_1 = arith.constant 0 : index
    %c0_2 = arith.constant 0 : index
    %3 = vector.load %arg4[%c0, %c0_1, %c0_2] : memref<1x64x16xf32, #tpu.memory_space<vmem>>, vector<1x64x16xf32>
    %4 = vector.shape_cast %3 : vector<1x64x16xf32> to vector<64x16xf32>
    %5 = arith.truncf %4 : vector<64x16xf32> to vector<64x16xbf16>
    %c0_3 = arith.constant 0 : index
    %c0_4 = arith.constant 0 : index
    %6 = vector.load %arg7[%c0_3, %c0_4] : memref<16x2xbf16, #tpu.memory_space<vmem>>, vector<16x2xbf16>
    %cst = arith.constant dense<0.000000e+00> : vector<64x2xf32>
    %7 = tpu.matmul %5, %6, %cst {dimension_numbers = #tpu.dot_dimension_numbers<[1], [0], [0], [1], [0, 0, 1, 1], [], []>} : vector<64x16xbf16>, vector<16x2xbf16>, vector<64x2xf32> -> vector<64x2xf32>
    %c0_5 = arith.constant 0 : index
    %c0_6 = arith.constant 0 : index
    %8 = vector.load %arg8[%c0_5, %c0_6] : memref<1x2xf32, #tpu.memory_space<vmem>>, vector<1x2xf32>
    %9 = vector.broadcast %8 : vector<1x2xf32> to vector<64x2xf32>
    %10 = arith.addf %7, %9 : vector<64x2xf32>
    %c0_7 = arith.constant 0 : index
    %c0_8 = arith.constant 0 : index
    %11 = vector.load %arg9[%c0_7, %c0_8] : memref<16x16xbf16, #tpu.memory_space<vmem>>, vector<16x16xbf16>
    %cst_9 = arith.constant dense<0.000000e+00> : vector<64x16xf32>
    %12 = tpu.matmul %5, %11, %cst_9 {dimension_numbers = #tpu.dot_dimension_numbers<[1], [0], [0], [1], [0, 0, 1, 1], [], []>} : vector<64x16xbf16>, vector<16x16xbf16>, vector<64x16xf32> -> vector<64x16xf32>
    %c0_10 = arith.constant 0 : index
    %c0_11 = arith.constant 0 : index
    %13 = vector.load %arg10[%c0_10, %c0_11] : memref<1x16xf32, #tpu.memory_space<vmem>>, vector<1x16xf32>
    %14 = vector.broadcast %13 : vector<1x16xf32> to vector<64x16xf32>
    %15 = arith.addf %12, %14 : vector<64x16xf32>
    %c0_12 = arith.constant 0 : index
    %c0_13 = arith.constant 0 : index
    %16 = vector.load %arg16[%c0_12, %c0_13] : memref<64x2xbf16, #tpu.memory_space<vmem>>, vector<64x2xbf16>
    %17 = arith.truncf %10 : vector<64x2xf32> to vector<64x2xbf16>
    %cst_14 = arith.constant dense<0.000000e+00> : vector<64x64xf32>
    %18 = tpu.matmul %16, %17, %cst_14 {dimension_numbers = #tpu.dot_dimension_numbers<[1], [1], [0], [0], [0, 0, 1, 0], [], []>} : vector<64x2xbf16>, vector<64x2xbf16>, vector<64x64xf32> -> vector<64x64xf32>
    %c0_15 = arith.constant 0 : index
    %c0_16 = arith.constant 0 : index
    %19 = vector.load %arg17[%c0_15, %c0_16] : memref<64x1xf32, #tpu.memory_space<vmem>>, vector<64x1xf32>
    %cst_17 = arith.constant dense<0xFF800000> : vector<64xf32>
    %20 = vector.multi_reduction <maximumf>, %18, %cst_17 [1] : vector<64x64xf32> to vector<64xf32>
    %21 = vector.shape_cast %20 : vector<64xf32> to vector<64x1xf32>
    %22 = arith.maximumf %19, %21 : vector<64x1xf32>
    %23 = arith.subf %19, %22 : vector<64x1xf32>
    %24 = math.exp %23 : vector<64x1xf32>
    %25 = vector.broadcast %22 : vector<64x1xf32> to vector<64x64xf32>
    %26 = arith.subf %18, %25 : vector<64x64xf32>
    %27 = math.exp %26 : vector<64x64xf32>
    %c0_18 = arith.constant 0 : index
    %c0_19 = arith.constant 0 : index
    %28 = vector.load %arg18[%c0_18, %c0_19] : memref<64x1xf32, #tpu.memory_space<vmem>>, vector<64x1xf32>
    %29 = arith.mulf %24, %28 : vector<64x1xf32>
    %cst_20 = arith.constant dense<0.000000e+00> : vector<64xf32>
    %30 = vector.multi_reduction <add>, %27, %cst_20 [1] : vector<64x64xf32> to vector<64xf32>
    %31 = vector.shape_cast %30 : vector<64xf32> to vector<64x1xf32>
    %32 = arith.addf %29, %31 : vector<64x1xf32>
    %c0_21 = arith.constant 0 : index
    %c0_22 = arith.constant 0 : index
    %33 = vector.load %arg18[%c0_21, %c0_22] : memref<64x1xf32, #tpu.memory_space<vmem>>, vector<64x1xf32>
    tpu.vector_store %arg18[%c0_21, %c0_22], %32 {strides = array<i32>} : memref<64x1xf32, #tpu.memory_space<vmem>>, vector<64x1xf32>,
    %c0_23 = arith.constant 0 : index
    %c0_24 = arith.constant 0 : index
    %34 = vector.load %arg19[%c0_23, %c0_24] : memref<64x16xf32, #tpu.memory_space<vmem>>, vector<64x16xf32>
    %35 = vector.broadcast %24 : vector<64x1xf32> to vector<64x16xf32>
    %36 = arith.mulf %35, %34 : vector<64x16xf32>
    %37 = arith.truncf %27 : vector<64x64xf32> to vector<64x64xbf16>
    %38 = arith.truncf %15 : vector<64x16xf32> to vector<64x16xbf16>
    %cst_25 = arith.constant dense<0.000000e+00> : vector<64x16xf32>
    %39 = tpu.matmul %37, %38, %cst_25 {dimension_numbers = #tpu.dot_dimension_numbers<[1], [0], [0], [1], [0, 0, 1, 1], [], []>} : vector<64x64xbf16>, vector<64x16xbf16>, vector<64x16xf32> -> vector<64x16xf32>
    %40 = arith.addf %36, %39 : vector<64x16xf32>
    %c0_26 = arith.constant 0 : index
    %c0_27 = arith.constant 0 : index
    %41 = vector.load %arg19[%c0_26, %c0_27] : memref<64x16xf32, #tpu.memory_space<vmem>>, vector<64x16xf32>
    tpu.vector_store %arg19[%c0_26, %c0_27], %40 {strides = array<i32>} : memref<64x16xf32, #tpu.memory_space<vmem>>, vector<64x16xf32>,
    %c0_28 = arith.constant 0 : index
    %c0_29 = arith.constant 0 : index
    %42 = vector.load %arg17[%c0_28, %c0_29] : memref<64x1xf32, #tpu.memory_space<vmem>>, vector<64x1xf32>
    tpu.vector_store %arg17[%c0_28, %c0_29], %22 {strides = array<i32>} : memref<64x1xf32, #tpu.memory_space<vmem>>, vector<64x1xf32>,
    %c0_i32_30 = arith.constant 0 : i32
    %43 = arith.cmpi eq, %arg2, %c0_i32_30 : i32
    %44 = arith.extui %43 : i1 to i32
    %c0_i32_31 = arith.constant 0 : i32
    %45 = arith.cmpi ne, %44, %c0_i32_31 : i32
    scf.if %45 {
      %c0_32 = arith.constant 0 : index
      %c0_33 = arith.constant 0 : index
      %46 = vector.load %arg19[%c0_32, %c0_33] : memref<64x16xf32, #tpu.memory_space<vmem>>, vector<64x16xf32>
      %c0_34 = arith.constant 0 : index
      %c0_35 = arith.constant 0 : index
      %47 = vector.load %arg18[%c0_34, %c0_35] : memref<64x1xf32, #tpu.memory_space<vmem>>, vector<64x1xf32>
      %48 = tpu.reciprocal %47 {approx = true} : vector<64x1xf32> -> vector<64x1xf32>
      %49 = vector.broadcast %48 : vector<64x1xf32> to vector<64x16xf32>
      %50 = arith.mulf %46, %49 : vector<64x16xf32>
      %c0_36 = arith.constant 0 : index
      %c0_37 = arith.constant 0 : index
      %51 = vector.load %arg11[%c0_36, %c0_37] : memref<1x1xf32, #tpu.memory_space<vmem>>, vector<1x1xf32>
      %52 = vector.broadcast %51 : vector<1x1xf32> to vector<64x16xf32>
      %53 = arith.mulf %52, %50 : vector<64x16xf32>
      %c0_38 = arith.constant 0 : index
      %c0_39 = arith.constant 0 : index
      %c0_40 = arith.constant 0 : index
      %54 = vector.load %arg3[%c0_38, %c0_39, %c0_40] : memref<1x64x16xf32, #tpu.memory_space<vmem>>, vector<1x64x16xf32>
      %55 = vector.shape_cast %54 : vector<1x64x16xf32> to vector<64x16xf32>
      %56 = arith.addf %53, %55 : vector<64x16xf32>
      %c0_41 = arith.constant 0 : index
      %c0_42 = arith.constant 0 : index
      %c0_43 = arith.constant 0 : index
      %57 = vector.load %arg14[%c0_41, %c0_42, %c0_43] : memref<1x64x16xf32, #tpu.memory_space<vmem>>, vector<1x64x16xf32>
      %58 = vector.shape_cast %57 : vector<1x64x16xf32> to vector<64x16xf32>
      %59 = vector.shape_cast %56 : vector<64x16xf32> to vector<1x64x16xf32>
      tpu.vector_store %arg14[%c0_41, %c0_42, %c0_43], %59 {strides = array<i32>} : memref<1x64x16xf32, #tpu.memory_space<vmem>>, vector<1x64x16xf32>,
      %60 = arith.truncf %56 : vector<64x16xf32> to vector<64x16xbf16>
      %c0_44 = arith.constant 0 : index
      %c0_45 = arith.constant 0 : index
      %61 = vector.load %arg12[%c0_44, %c0_45] : memref<16x16xbf16, #tpu.memory_space<vmem>>, vector<16x16xbf16>
      %cst_46 = arith.constant dense<0.000000e+00> : vector<64x16xf32>
      %62 = tpu.matmul %60, %61, %cst_46 {dimension_numbers = #tpu.dot_dimension_numbers<[1], [0], [0], [1], [0, 0, 1, 1], [], []>} : vector<64x16xbf16>, vector<16x16xbf16>, vector<64x16xf32> -> vector<64x16xf32>
      %c0_47 = arith.constant 0 : index
      %c0_48 = arith.constant 0 : index
      %63 = vector.load %arg13[%c0_47, %c0_48] : memref<1x16xf32, #tpu.memory_space<vmem>>, vector<1x16xf32>
      %64 = vector.broadcast %63 : vector<1x16xf32> to vector<64x16xf32>
      %65 = arith.addf %62, %64 : vector<64x16xf32>
      %c0_49 = arith.constant 0 : index
      %c0_50 = arith.constant 0 : index
      %c0_51 = arith.constant 0 : index
      %66 = vector.load %arg15[%c0_49, %c0_50, %c0_51] : memref<1x64x16xf32, #tpu.memory_space<vmem>>, vector<1x64x16xf32>
      %67 = vector.shape_cast %66 : vector<1x64x16xf32> to vector<64x16xf32>
      %68 = vector.shape_cast %65 : vector<64x16xf32> to vector<1x64x16xf32>
      tpu.vector_store %arg15[%c0_49, %c0_50, %c0_51], %68 {strides = array<i32>} : memref<1x64x16xf32, #tpu.memory_space<vmem>>, vector<1x64x16xf32>,
    } else {
    }
    return
  }
  func.func @transform_0(%arg0: i32, %arg1: i32, %arg2: i32) -> (i32, i32, i32) {
    %c0_i32 = arith.constant 0 : i32
    %c0_i32_0 = arith.constant 0 : i32
    return %arg0, %arg1, %c0_i32 : i32, i32, i32
  }
  func.func @transform_1(%arg0: i32, %arg1: i32, %arg2: i32) -> (i32, i32, i32) {
    %c0_i32 = arith.constant 0 : i32
    %c0_i32_0 = arith.constant 0 : i32
    return %arg0, %arg2, %c0_i32 : i32, i32, i32
  }
  func.func @transform_2(%arg0: i32, %arg1: i32, %arg2: i32) -> (i32, i32) {
    %c0_i32 = arith.constant 0 : i32
    %c0_i32_0 = arith.constant 0 : i32
    %c0_i32_1 = arith.constant 0 : i32
    return %c0_i32, %c0_i32_0 : i32, i32
  }
  func.func @transform_3(%arg0: i32, %arg1: i32, %arg2: i32) -> (i32, i32) {
    %c0_i32 = arith.constant 0 : i32
    %c0_i32_0 = arith.constant 0 : i32
    %c0_i32_1 = arith.constant 0 : i32
    return %c0_i32, %c0_i32_0 : i32, i32
  }
  func.func @transform_4(%arg0: i32, %arg1: i32, %arg2: i32) -> (i32, i32) {
    %c0_i32 = arith.constant 0 : i32
    %c0_i32_0 = arith.constant 0 : i32
    %c0_i32_1 = arith.constant 0 : i32
    return %c0_i32, %c0_i32_0 : i32, i32
  }
  func.func @transform_5(%arg0: i32, %arg1: i32, %arg2: i32) -> (i32, i32) {
    %c0_i32 = arith.constant 0 : i32
    %c0_i32_0 = arith.constant 0 : i32
    %c0_i32_1 = arith.constant 0 : i32
    return %c0_i32, %c0_i32_0 : i32, i32
  }
  func.func @transform_6(%arg0: i32, %arg1: i32, %arg2: i32) -> (i32, i32) {
    %c0_i32 = arith.constant 0 : i32
    %c0_i32_0 = arith.constant 0 : i32
    %c0_i32_1 = arith.constant 0 : i32
    return %c0_i32, %c0_i32_0 : i32, i32
  }
  func.func @transform_7(%arg0: i32, %arg1: i32, %arg2: i32) -> (i32, i32) {
    %c0_i32 = arith.constant 0 : i32
    %c0_i32_0 = arith.constant 0 : i32
    %c0_i32_1 = arith.constant 0 : i32
    return %c0_i32, %c0_i32_0 : i32, i32
  }
  func.func @transform_8(%arg0: i32, %arg1: i32, %arg2: i32) -> (i32, i32) {
    %c0_i32 = arith.constant 0 : i32
    %c0_i32_0 = arith.constant 0 : i32
    %c0_i32_1 = arith.constant 0 : i32
    return %c0_i32, %c0_i32_0 : i32, i32
  }
  func.func @transform_9(%arg0: i32, %arg1: i32, %arg2: i32) -> (i32, i32) {
    %c0_i32 = arith.constant 0 : i32
    %c0_i32_0 = arith.constant 0 : i32
    %c0_i32_1 = arith.constant 0 : i32
    return %c0_i32, %c0_i32_0 : i32, i32
  }
  func.func @transform_10(%arg0: i32, %arg1: i32, %arg2: i32) -> (i32, i32) {
    %c0_i32 = arith.constant 0 : i32
    %c0_i32_0 = arith.constant 0 : i32
    %c0_i32_1 = arith.constant 0 : i32
    return %c0_i32, %c0_i32_0 : i32, i32
  }
  func.func @transform_11(%arg0: i32, %arg1: i32, %arg2: i32) -> (i32, i32, i32) {
    %c0_i32 = arith.constant 0 : i32
    %c0_i32_0 = arith.constant 0 : i32
    return %arg0, %arg1, %c0_i32 : i32, i32, i32
  }
  func.func @transform_12(%arg0: i32, %arg1: i32, %arg2: i32) -> (i32, i32, i32) {
    %c0_i32 = arith.constant 0 : i32
    %c0_i32_0 = arith.constant 0 : i32
    return %arg0, %arg1, %c0_i32 : i32, i32, i32
  }
}

module attributes {stable_mosaic.version = 11 : i64} {
  func.func @_ca_energy_kernel(%arg0: i32, %arg1: i32, %arg2: memref<1x64x16xf32, #tpu.memory_space<vmem>>, %arg3: memref<1x16x16xf32, #tpu.memory_space<vmem>>, %arg4: memref<16x16xf32, #tpu.memory_space<vmem>>) attributes {dimension_semantics = [#tpu.dimension_semantics<parallel>, #tpu.dimension_semantics<arbitrary>], iteration_bounds = array<i64: 2, 1>, scalar_prefetch = 0 : i64, scratch_operands = 1 : i64, tpu.core_type = #tpu.core_type<tc>, window_params = [{transform_indices = @transform_0, window_bounds = array<i64: 1, 64, 16>}, {transform_indices = @transform_1, window_bounds = array<i64: 1, 16, 16>}]} {
    %c0_i32 = arith.constant 0 : i32
    %0 = arith.cmpi eq, %arg1, %c0_i32 : i32
    %1 = arith.extui %0 : i1 to i32
    %c0_i32_0 = arith.constant 0 : i32
    %2 = arith.cmpi ne, %1, %c0_i32_0 : i32
    scf.if %2 {
      %cst_9 = arith.constant 0.000000e+00 : f32
      %13 = vector.broadcast %cst_9 : f32 to vector<16x16xf32>
      %c0_10 = arith.constant 0 : index
      %c0_11 = arith.constant 0 : index
      %14 = vector.load %arg4[%c0_10, %c0_11] : memref<16x16xf32, #tpu.memory_space<vmem>>, vector<16x16xf32>
      tpu.vector_store %arg4[%c0_10, %c0_11], %13 {strides = array<i32>} : memref<16x16xf32, #tpu.memory_space<vmem>>, vector<16x16xf32>,
    } else {
    }
    %c0 = arith.constant 0 : index
    %c0_1 = arith.constant 0 : index
    %c0_2 = arith.constant 0 : index
    %3 = vector.load %arg2[%c0, %c0_1, %c0_2] : memref<1x64x16xf32, #tpu.memory_space<vmem>>, vector<1x64x16xf32>
    %4 = vector.shape_cast %3 : vector<1x64x16xf32> to vector<64x16xf32>
    %5 = arith.truncf %4 : vector<64x16xf32> to vector<64x16xbf16>
    %c0_3 = arith.constant 0 : index
    %c0_4 = arith.constant 0 : index
    %6 = vector.load %arg4[%c0_3, %c0_4] : memref<16x16xf32, #tpu.memory_space<vmem>>, vector<16x16xf32>
    %cst = arith.constant dense<0.000000e+00> : vector<16x16xf32>
    %7 = tpu.matmul %5, %5, %cst {dimension_numbers = #tpu.dot_dimension_numbers<[0], [0], [1], [1], [0, 1, 1, 1], [], []>} : vector<64x16xbf16>, vector<64x16xbf16>, vector<16x16xf32> -> vector<16x16xf32>
    %8 = arith.addf %6, %7 : vector<16x16xf32>
    %c0_5 = arith.constant 0 : index
    %c0_6 = arith.constant 0 : index
    %9 = vector.load %arg4[%c0_5, %c0_6] : memref<16x16xf32, #tpu.memory_space<vmem>>, vector<16x16xf32>
    tpu.vector_store %arg4[%c0_5, %c0_6], %8 {strides = array<i32>} : memref<16x16xf32, #tpu.memory_space<vmem>>, vector<16x16xf32>,
    %c0_i32_7 = arith.constant 0 : i32
    %10 = arith.cmpi eq, %arg1, %c0_i32_7 : i32
    %11 = arith.extui %10 : i1 to i32
    %c0_i32_8 = arith.constant 0 : i32
    %12 = arith.cmpi ne, %11, %c0_i32_8 : i32
    scf.if %12 {
      %c0_9 = arith.constant 0 : index
      %c0_10 = arith.constant 0 : index
      %13 = vector.load %arg4[%c0_9, %c0_10] : memref<16x16xf32, #tpu.memory_space<vmem>>, vector<16x16xf32>
      %cst_11 = arith.constant dense<0xFF800000> : vector<16xf32>
      %14 = vector.multi_reduction <maximumf>, %13, %cst_11 [1] : vector<16x16xf32> to vector<16xf32>
      %15 = vector.shape_cast %14 : vector<16xf32> to vector<16x1xf32>
      %16 = vector.broadcast %15 : vector<16x1xf32> to vector<16x16xf32>
      %17 = arith.subf %16, %13 : vector<16x16xf32>
      %cst_12 = arith.constant dense<0xFF800000> : vector<16xf32>
      %18 = vector.multi_reduction <maximumf>, %17, %cst_12 [1] : vector<16x16xf32> to vector<16xf32>
      %19 = vector.shape_cast %18 : vector<16xf32> to vector<16x1xf32>
      %20 = vector.broadcast %19 : vector<16x1xf32> to vector<16x16xf32>
      %21 = arith.subf %17, %20 : vector<16x16xf32>
      %22 = math.exp %21 : vector<16x16xf32>
      %cst_13 = arith.constant dense<0.000000e+00> : vector<16xf32>
      %23 = vector.multi_reduction <add>, %22, %cst_13 [1] : vector<16x16xf32> to vector<16xf32>
      %24 = vector.shape_cast %23 : vector<16xf32> to vector<16x1xf32>
      %25 = tpu.reciprocal %24 {approx = true} : vector<16x1xf32> -> vector<16x1xf32>
      %26 = vector.broadcast %25 : vector<16x1xf32> to vector<16x16xf32>
      %27 = arith.mulf %22, %26 : vector<16x16xf32>
      %c0_14 = arith.constant 0 : index
      %c0_15 = arith.constant 0 : index
      %c0_16 = arith.constant 0 : index
      %28 = vector.load %arg3[%c0_14, %c0_15, %c0_16] : memref<1x16x16xf32, #tpu.memory_space<vmem>>, vector<1x16x16xf32>
      %29 = vector.shape_cast %28 : vector<1x16x16xf32> to vector<16x16xf32>
      %30 = vector.shape_cast %27 : vector<16x16xf32> to vector<1x16x16xf32>
      tpu.vector_store %arg3[%c0_14, %c0_15, %c0_16], %30 {strides = array<i32>} : memref<1x16x16xf32, #tpu.memory_space<vmem>>, vector<1x16x16xf32>,
    } else {
    }
    return
  }
  func.func @transform_0(%arg0: i32, %arg1: i32) -> (i32, i32, i32) {
    %c0_i32 = arith.constant 0 : i32
    %c0_i32_0 = arith.constant 0 : i32
    return %arg0, %arg1, %c0_i32 : i32, i32, i32
  }
  func.func @transform_1(%arg0: i32, %arg1: i32) -> (i32, i32, i32) {
    %c0_i32 = arith.constant 0 : i32
    %c0_i32_0 = arith.constant 0 : i32
    %c0_i32_1 = arith.constant 0 : i32
    return %arg0, %c0_i32, %c0_i32_0 : i32, i32, i32
  }
}

module attributes {stable_mosaic.version = 11 : i64} {
  func.func @_ca_apply_kernel(%arg0: i32, %arg1: i32, %arg2: memref<1x64x16xf32, #tpu.memory_space<vmem>>, %arg3: memref<1x16x16xf32, #tpu.memory_space<vmem>>, %arg4: memref<1x1xf32, #tpu.memory_space<vmem>>, %arg5: memref<16x16xbf16, #tpu.memory_space<vmem>>, %arg6: memref<1x16xf32, #tpu.memory_space<vmem>>, %arg7: memref<1x64x16xf32, #tpu.memory_space<vmem>>, %arg8: memref<1x64x16xf32, #tpu.memory_space<vmem>>) attributes {dimension_semantics = [#tpu.dimension_semantics<parallel>, #tpu.dimension_semantics<parallel>], iteration_bounds = array<i64: 2, 1>, scalar_prefetch = 0 : i64, scratch_operands = 0 : i64, tpu.core_type = #tpu.core_type<tc>, window_params = [{transform_indices = @transform_0, window_bounds = array<i64: 1, 64, 16>}, {transform_indices = @transform_1, window_bounds = array<i64: 1, 16, 16>}, {pipeline_mode = #tpu.pipeline_mode<synchronous>, transform_indices = @transform_2, window_bounds = array<i64: 1, 1>}, {pipeline_mode = #tpu.pipeline_mode<synchronous>, transform_indices = @transform_3, window_bounds = array<i64: 16, 16>}, {pipeline_mode = #tpu.pipeline_mode<synchronous>, transform_indices = @transform_4, window_bounds = array<i64: 1, 16>}, {transform_indices = @transform_5, window_bounds = array<i64: 1, 64, 16>}, {transform_indices = @transform_6, window_bounds = array<i64: 1, 64, 16>}]} {
    %c0 = arith.constant 0 : index
    %c0_0 = arith.constant 0 : index
    %c0_1 = arith.constant 0 : index
    %0 = vector.load %arg2[%c0, %c0_0, %c0_1] : memref<1x64x16xf32, #tpu.memory_space<vmem>>, vector<1x64x16xf32>
    %1 = vector.shape_cast %0 : vector<1x64x16xf32> to vector<64x16xf32>
    %c0_2 = arith.constant 0 : index
    %c0_3 = arith.constant 0 : index
    %c0_4 = arith.constant 0 : index
    %2 = vector.load %arg3[%c0_2, %c0_3, %c0_4] : memref<1x16x16xf32, #tpu.memory_space<vmem>>, vector<1x16x16xf32>
    %3 = vector.shape_cast %2 : vector<1x16x16xf32> to vector<16x16xf32>
    %4 = arith.truncf %1 : vector<64x16xf32> to vector<64x16xbf16>
    %5 = arith.truncf %3 : vector<16x16xf32> to vector<16x16xbf16>
    %cst = arith.constant dense<0.000000e+00> : vector<64x16xf32>
    %6 = tpu.matmul %4, %5, %cst {dimension_numbers = #tpu.dot_dimension_numbers<[1], [1], [0], [0], [0, 0, 1, 0], [], []>} : vector<64x16xbf16>, vector<16x16xbf16>, vector<64x16xf32> -> vector<64x16xf32>
    %c0_5 = arith.constant 0 : index
    %c0_6 = arith.constant 0 : index
    %7 = vector.load %arg4[%c0_5, %c0_6] : memref<1x1xf32, #tpu.memory_space<vmem>>, vector<1x1xf32>
    %8 = vector.broadcast %7 : vector<1x1xf32> to vector<64x16xf32>
    %9 = arith.mulf %8, %6 : vector<64x16xf32>
    %10 = arith.addf %9, %1 : vector<64x16xf32>
    %c0_7 = arith.constant 0 : index
    %c0_8 = arith.constant 0 : index
    %c0_9 = arith.constant 0 : index
    %11 = vector.load %arg7[%c0_7, %c0_8, %c0_9] : memref<1x64x16xf32, #tpu.memory_space<vmem>>, vector<1x64x16xf32>
    %12 = vector.shape_cast %11 : vector<1x64x16xf32> to vector<64x16xf32>
    %13 = vector.shape_cast %10 : vector<64x16xf32> to vector<1x64x16xf32>
    tpu.vector_store %arg7[%c0_7, %c0_8, %c0_9], %13 {strides = array<i32>} : memref<1x64x16xf32, #tpu.memory_space<vmem>>, vector<1x64x16xf32>,
    %14 = arith.truncf %10 : vector<64x16xf32> to vector<64x16xbf16>
    %c0_10 = arith.constant 0 : index
    %c0_11 = arith.constant 0 : index
    %15 = vector.load %arg5[%c0_10, %c0_11] : memref<16x16xbf16, #tpu.memory_space<vmem>>, vector<16x16xbf16>
    %cst_12 = arith.constant dense<0.000000e+00> : vector<64x16xf32>
    %16 = tpu.matmul %14, %15, %cst_12 {dimension_numbers = #tpu.dot_dimension_numbers<[1], [0], [0], [1], [0, 0, 1, 1], [], []>} : vector<64x16xbf16>, vector<16x16xbf16>, vector<64x16xf32> -> vector<64x16xf32>
    %c0_13 = arith.constant 0 : index
    %c0_14 = arith.constant 0 : index
    %17 = vector.load %arg6[%c0_13, %c0_14] : memref<1x16xf32, #tpu.memory_space<vmem>>, vector<1x16xf32>
    %18 = vector.broadcast %17 : vector<1x16xf32> to vector<64x16xf32>
    %19 = arith.addf %16, %18 : vector<64x16xf32>
    %c0_15 = arith.constant 0 : index
    %c0_16 = arith.constant 0 : index
    %c0_17 = arith.constant 0 : index
    %20 = vector.load %arg8[%c0_15, %c0_16, %c0_17] : memref<1x64x16xf32, #tpu.memory_space<vmem>>, vector<1x64x16xf32>
    %21 = vector.shape_cast %20 : vector<1x64x16xf32> to vector<64x16xf32>
    %22 = vector.shape_cast %19 : vector<64x16xf32> to vector<1x64x16xf32>
    tpu.vector_store %arg8[%c0_15, %c0_16, %c0_17], %22 {strides = array<i32>} : memref<1x64x16xf32, #tpu.memory_space<vmem>>, vector<1x64x16xf32>,
    return
  }
  func.func @transform_0(%arg0: i32, %arg1: i32) -> (i32, i32, i32) {
    %c0_i32 = arith.constant 0 : i32
    %c0_i32_0 = arith.constant 0 : i32
    return %arg0, %arg1, %c0_i32 : i32, i32, i32
  }
  func.func @transform_1(%arg0: i32, %arg1: i32) -> (i32, i32, i32) {
    %c0_i32 = arith.constant 0 : i32
    %c0_i32_0 = arith.constant 0 : i32
    %c0_i32_1 = arith.constant 0 : i32
    return %arg0, %c0_i32, %c0_i32_0 : i32, i32, i32
  }
  func.func @transform_2(%arg0: i32, %arg1: i32) -> (i32, i32) {
    %c0_i32 = arith.constant 0 : i32
    %c0_i32_0 = arith.constant 0 : i32
    %c0_i32_1 = arith.constant 0 : i32
    return %c0_i32, %c0_i32_0 : i32, i32
  }
  func.func @transform_3(%arg0: i32, %arg1: i32) -> (i32, i32) {
    %c0_i32 = arith.constant 0 : i32
    %c0_i32_0 = arith.constant 0 : i32
    %c0_i32_1 = arith.constant 0 : i32
    return %c0_i32, %c0_i32_0 : i32, i32
  }
  func.func @transform_4(%arg0: i32, %arg1: i32) -> (i32, i32) {
    %c0_i32 = arith.constant 0 : i32
    %c0_i32_0 = arith.constant 0 : i32
    %c0_i32_1 = arith.constant 0 : i32
    return %c0_i32, %c0_i32_0 : i32, i32
  }
  func.func @transform_5(%arg0: i32, %arg1: i32) -> (i32, i32, i32) {
    %c0_i32 = arith.constant 0 : i32
    %c0_i32_0 = arith.constant 0 : i32
    return %arg0, %arg1, %c0_i32 : i32, i32, i32
  }
  func.func @transform_6(%arg0: i32, %arg1: i32) -> (i32, i32, i32) {
    %c0_i32 = arith.constant 0 : i32
    %c0_i32_0 = arith.constant 0 : i32
    return %arg0, %arg1, %c0_i32 : i32, i32, i32
  }
}

module attributes {stable_mosaic.version = 11 : i64} {
  func.func @kernel(%arg0: i32, %arg1: i32, %arg2: i32, %arg3: memref<1x64x16xf32, #tpu.memory_space<vmem>>, %arg4: memref<1x64x16xf32, #tpu.memory_space<vmem>>, %arg5: memref<16x2xbf16, #tpu.memory_space<vmem>>, %arg6: memref<1x2xf32, #tpu.memory_space<vmem>>, %arg7: memref<16x2xbf16, #tpu.memory_space<vmem>>, %arg8: memref<1x2xf32, #tpu.memory_space<vmem>>, %arg9: memref<16x16xbf16, #tpu.memory_space<vmem>>, %arg10: memref<1x16xf32, #tpu.memory_space<vmem>>, %arg11: memref<1x1xf32, #tpu.memory_space<vmem>>, %arg12: memref<16x16xbf16, #tpu.memory_space<vmem>>, %arg13: memref<1x16xf32, #tpu.memory_space<vmem>>, %arg14: memref<1x64x16xf32, #tpu.memory_space<vmem>>, %arg15: memref<64x2xbf16, #tpu.memory_space<vmem>>, %arg16: memref<64x1xf32, #tpu.memory_space<vmem>>, %arg17: memref<64x1xf32, #tpu.memory_space<vmem>>, %arg18: memref<64x16xf32, #tpu.memory_space<vmem>>) attributes {dimension_semantics = [#tpu.dimension_semantics<parallel>, #tpu.dimension_semantics<parallel>, #tpu.dimension_semantics<arbitrary>], iteration_bounds = array<i64: 2, 1, 1>, scalar_prefetch = 0 : i64, scratch_operands = 4 : i64, tpu.core_type = #tpu.core_type<tc>, window_params = [{transform_indices = @transform_0, window_bounds = array<i64: 1, 64, 16>}, {transform_indices = @transform_1, window_bounds = array<i64: 1, 64, 16>}, {pipeline_mode = #tpu.pipeline_mode<synchronous>, transform_indices = @transform_2, window_bounds = array<i64: 16, 2>}, {pipeline_mode = #tpu.pipeline_mode<synchronous>, transform_indices = @transform_3, window_bounds = array<i64: 1, 2>}, {pipeline_mode = #tpu.pipeline_mode<synchronous>, transform_indices = @transform_4, window_bounds = array<i64: 16, 2>}, {pipeline_mode = #tpu.pipeline_mode<synchronous>, transform_indices = @transform_5, window_bounds = array<i64: 1, 2>}, {pipeline_mode = #tpu.pipeline_mode<synchronous>, transform_indices = @transform_6, window_bounds = array<i64: 16, 16>}, {pipeline_mode = #tpu.pipeline_mode<synchronous>, transform_indices = @transform_7, window_bounds = array<i64: 1, 16>}, {pipeline_mode = #tpu.pipeline_mode<synchronous>, transform_indices = @transform_8, window_bounds = array<i64: 1, 1>}, {pipeline_mode = #tpu.pipeline_mode<synchronous>, transform_indices = @transform_9, window_bounds = array<i64: 16, 16>}, {pipeline_mode = #tpu.pipeline_mode<synchronous>, transform_indices = @transform_10, window_bounds = array<i64: 1, 16>}, {transform_indices = @transform_11, window_bounds = array<i64: 1, 64, 16>}]} {
    %c0_i32 = arith.constant 0 : i32
    %0 = arith.cmpi eq, %arg2, %c0_i32 : i32
    %1 = arith.extui %0 : i1 to i32
    %c0_i32_0 = arith.constant 0 : i32
    %2 = arith.cmpi ne, %1, %c0_i32_0 : i32
    scf.if %2 {
      %c0_32 = arith.constant 0 : index
      %c0_33 = arith.constant 0 : index
      %c0_34 = arith.constant 0 : index
      %46 = vector.load %arg3[%c0_32, %c0_33, %c0_34] : memref<1x64x16xf32, #tpu.memory_space<vmem>>, vector<1x64x16xf32>
      %47 = vector.shape_cast %46 : vector<1x64x16xf32> to vector<64x16xf32>
      %48 = arith.truncf %47 : vector<64x16xf32> to vector<64x16xbf16>
      %c0_35 = arith.constant 0 : index
      %c0_36 = arith.constant 0 : index
      %49 = vector.load %arg5[%c0_35, %c0_36] : memref<16x2xbf16, #tpu.memory_space<vmem>>, vector<16x2xbf16>
      %cst_37 = arith.constant dense<0.000000e+00> : vector<64x2xf32>
      %50 = tpu.matmul %48, %49, %cst_37 {dimension_numbers = #tpu.dot_dimension_numbers<[1], [0], [0], [1], [0, 0, 1, 1], [], []>} : vector<64x16xbf16>, vector<16x2xbf16>, vector<64x2xf32> -> vector<64x2xf32>
      %c0_38 = arith.constant 0 : index
      %c0_39 = arith.constant 0 : index
      %51 = vector.load %arg6[%c0_38, %c0_39] : memref<1x2xf32, #tpu.memory_space<vmem>>, vector<1x2xf32>
      %52 = vector.broadcast %51 : vector<1x2xf32> to vector<64x2xf32>
      %53 = arith.addf %50, %52 : vector<64x2xf32>
      %54 = arith.truncf %53 : vector<64x2xf32> to vector<64x2xbf16>
      %c0_40 = arith.constant 0 : index
      %c0_41 = arith.constant 0 : index
      %55 = vector.load %arg15[%c0_40, %c0_41] : memref<64x2xbf16, #tpu.memory_space<vmem>>, vector<64x2xbf16>
      tpu.vector_store %arg15[%c0_40, %c0_41], %54 {strides = array<i32>} : memref<64x2xbf16, #tpu.memory_space<vmem>>, vector<64x2xbf16>,
      %cst_42 = arith.constant 0xFF800000 : f32
      %56 = vector.broadcast %cst_42 : f32 to vector<64x1xf32>
      %c0_43 = arith.constant 0 : index
      %c0_44 = arith.constant 0 : index
      %57 = vector.load %arg16[%c0_43, %c0_44] : memref<64x1xf32, #tpu.memory_space<vmem>>, vector<64x1xf32>
      tpu.vector_store %arg16[%c0_43, %c0_44], %56 {strides = array<i32>} : memref<64x1xf32, #tpu.memory_space<vmem>>, vector<64x1xf32>,
      %cst_45 = arith.constant 0.000000e+00 : f32
      %58 = vector.broadcast %cst_45 : f32 to vector<64x1xf32>
      %c0_46 = arith.constant 0 : index
      %c0_47 = arith.constant 0 : index
      %59 = vector.load %arg17[%c0_46, %c0_47] : memref<64x1xf32, #tpu.memory_space<vmem>>, vector<64x1xf32>
      tpu.vector_store %arg17[%c0_46, %c0_47], %58 {strides = array<i32>} : memref<64x1xf32, #tpu.memory_space<vmem>>, vector<64x1xf32>,
      %cst_48 = arith.constant 0.000000e+00 : f32
      %60 = vector.broadcast %cst_48 : f32 to vector<64x16xf32>
      %c0_49 = arith.constant 0 : index
      %c0_50 = arith.constant 0 : index
      %61 = vector.load %arg18[%c0_49, %c0_50] : memref<64x16xf32, #tpu.memory_space<vmem>>, vector<64x16xf32>
      tpu.vector_store %arg18[%c0_49, %c0_50], %60 {strides = array<i32>} : memref<64x16xf32, #tpu.memory_space<vmem>>, vector<64x16xf32>,
    } else {
    }
    %c0 = arith.constant 0 : index
    %c0_1 = arith.constant 0 : index
    %c0_2 = arith.constant 0 : index
    %3 = vector.load %arg4[%c0, %c0_1, %c0_2] : memref<1x64x16xf32, #tpu.memory_space<vmem>>, vector<1x64x16xf32>
    %4 = vector.shape_cast %3 : vector<1x64x16xf32> to vector<64x16xf32>
    %5 = arith.truncf %4 : vector<64x16xf32> to vector<64x16xbf16>
    %c0_3 = arith.constant 0 : index
    %c0_4 = arith.constant 0 : index
    %6 = vector.load %arg7[%c0_3, %c0_4] : memref<16x2xbf16, #tpu.memory_space<vmem>>, vector<16x2xbf16>
    %cst = arith.constant dense<0.000000e+00> : vector<64x2xf32>
    %7 = tpu.matmul %5, %6, %cst {dimension_numbers = #tpu.dot_dimension_numbers<[1], [0], [0], [1], [0, 0, 1, 1], [], []>} : vector<64x16xbf16>, vector<16x2xbf16>, vector<64x2xf32> -> vector<64x2xf32>
    %c0_5 = arith.constant 0 : index
    %c0_6 = arith.constant 0 : index
    %8 = vector.load %arg8[%c0_5, %c0_6] : memref<1x2xf32, #tpu.memory_space<vmem>>, vector<1x2xf32>
    %9 = vector.broadcast %8 : vector<1x2xf32> to vector<64x2xf32>
    %10 = arith.addf %7, %9 : vector<64x2xf32>
    %c0_7 = arith.constant 0 : index
    %c0_8 = arith.constant 0 : index
    %11 = vector.load %arg9[%c0_7, %c0_8] : memref<16x16xbf16, #tpu.memory_space<vmem>>, vector<16x16xbf16>
    %cst_9 = arith.constant dense<0.000000e+00> : vector<64x16xf32>
    %12 = tpu.matmul %5, %11, %cst_9 {dimension_numbers = #tpu.dot_dimension_numbers<[1], [0], [0], [1], [0, 0, 1, 1], [], []>} : vector<64x16xbf16>, vector<16x16xbf16>, vector<64x16xf32> -> vector<64x16xf32>
    %c0_10 = arith.constant 0 : index
    %c0_11 = arith.constant 0 : index
    %13 = vector.load %arg10[%c0_10, %c0_11] : memref<1x16xf32, #tpu.memory_space<vmem>>, vector<1x16xf32>
    %14 = vector.broadcast %13 : vector<1x16xf32> to vector<64x16xf32>
    %15 = arith.addf %12, %14 : vector<64x16xf32>
    %c0_12 = arith.constant 0 : index
    %c0_13 = arith.constant 0 : index
    %16 = vector.load %arg15[%c0_12, %c0_13] : memref<64x2xbf16, #tpu.memory_space<vmem>>, vector<64x2xbf16>
    %17 = arith.truncf %10 : vector<64x2xf32> to vector<64x2xbf16>
    %cst_14 = arith.constant dense<0.000000e+00> : vector<64x64xf32>
    %18 = tpu.matmul %16, %17, %cst_14 {dimension_numbers = #tpu.dot_dimension_numbers<[1], [1], [0], [0], [0, 0, 1, 0], [], []>} : vector<64x2xbf16>, vector<64x2xbf16>, vector<64x64xf32> -> vector<64x64xf32>
    %c0_15 = arith.constant 0 : index
    %c0_16 = arith.constant 0 : index
    %19 = vector.load %arg16[%c0_15, %c0_16] : memref<64x1xf32, #tpu.memory_space<vmem>>, vector<64x1xf32>
    %cst_17 = arith.constant dense<0xFF800000> : vector<64xf32>
    %20 = vector.multi_reduction <maximumf>, %18, %cst_17 [1] : vector<64x64xf32> to vector<64xf32>
    %21 = vector.shape_cast %20 : vector<64xf32> to vector<64x1xf32>
    %22 = arith.maximumf %19, %21 : vector<64x1xf32>
    %23 = arith.subf %19, %22 : vector<64x1xf32>
    %24 = math.exp %23 : vector<64x1xf32>
    %25 = vector.broadcast %22 : vector<64x1xf32> to vector<64x64xf32>
    %26 = arith.subf %18, %25 : vector<64x64xf32>
    %27 = math.exp %26 : vector<64x64xf32>
    %c0_18 = arith.constant 0 : index
    %c0_19 = arith.constant 0 : index
    %28 = vector.load %arg17[%c0_18, %c0_19] : memref<64x1xf32, #tpu.memory_space<vmem>>, vector<64x1xf32>
    %29 = arith.mulf %24, %28 : vector<64x1xf32>
    %cst_20 = arith.constant dense<0.000000e+00> : vector<64xf32>
    %30 = vector.multi_reduction <add>, %27, %cst_20 [1] : vector<64x64xf32> to vector<64xf32>
    %31 = vector.shape_cast %30 : vector<64xf32> to vector<64x1xf32>
    %32 = arith.addf %29, %31 : vector<64x1xf32>
    %c0_21 = arith.constant 0 : index
    %c0_22 = arith.constant 0 : index
    %33 = vector.load %arg17[%c0_21, %c0_22] : memref<64x1xf32, #tpu.memory_space<vmem>>, vector<64x1xf32>
    tpu.vector_store %arg17[%c0_21, %c0_22], %32 {strides = array<i32>} : memref<64x1xf32, #tpu.memory_space<vmem>>, vector<64x1xf32>,
    %c0_23 = arith.constant 0 : index
    %c0_24 = arith.constant 0 : index
    %34 = vector.load %arg18[%c0_23, %c0_24] : memref<64x16xf32, #tpu.memory_space<vmem>>, vector<64x16xf32>
    %35 = vector.broadcast %24 : vector<64x1xf32> to vector<64x16xf32>
    %36 = arith.mulf %35, %34 : vector<64x16xf32>
    %37 = arith.truncf %27 : vector<64x64xf32> to vector<64x64xbf16>
    %38 = arith.truncf %15 : vector<64x16xf32> to vector<64x16xbf16>
    %cst_25 = arith.constant dense<0.000000e+00> : vector<64x16xf32>
    %39 = tpu.matmul %37, %38, %cst_25 {dimension_numbers = #tpu.dot_dimension_numbers<[1], [0], [0], [1], [0, 0, 1, 1], [], []>} : vector<64x64xbf16>, vector<64x16xbf16>, vector<64x16xf32> -> vector<64x16xf32>
    %40 = arith.addf %36, %39 : vector<64x16xf32>
    %c0_26 = arith.constant 0 : index
    %c0_27 = arith.constant 0 : index
    %41 = vector.load %arg18[%c0_26, %c0_27] : memref<64x16xf32, #tpu.memory_space<vmem>>, vector<64x16xf32>
    tpu.vector_store %arg18[%c0_26, %c0_27], %40 {strides = array<i32>} : memref<64x16xf32, #tpu.memory_space<vmem>>, vector<64x16xf32>,
    %c0_28 = arith.constant 0 : index
    %c0_29 = arith.constant 0 : index
    %42 = vector.load %arg16[%c0_28, %c0_29] : memref<64x1xf32, #tpu.memory_space<vmem>>, vector<64x1xf32>
    tpu.vector_store %arg16[%c0_28, %c0_29], %22 {strides = array<i32>} : memref<64x1xf32, #tpu.memory_space<vmem>>, vector<64x1xf32>,
    %c0_i32_30 = arith.constant 0 : i32
    %43 = arith.cmpi eq, %arg2, %c0_i32_30 : i32
    %44 = arith.extui %43 : i1 to i32
    %c0_i32_31 = arith.constant 0 : i32
    %45 = arith.cmpi ne, %44, %c0_i32_31 : i32
    scf.if %45 {
      %c0_32 = arith.constant 0 : index
      %c0_33 = arith.constant 0 : index
      %46 = vector.load %arg18[%c0_32, %c0_33] : memref<64x16xf32, #tpu.memory_space<vmem>>, vector<64x16xf32>
      %c0_34 = arith.constant 0 : index
      %c0_35 = arith.constant 0 : index
      %47 = vector.load %arg17[%c0_34, %c0_35] : memref<64x1xf32, #tpu.memory_space<vmem>>, vector<64x1xf32>
      %48 = tpu.reciprocal %47 {approx = true} : vector<64x1xf32> -> vector<64x1xf32>
      %49 = vector.broadcast %48 : vector<64x1xf32> to vector<64x16xf32>
      %50 = arith.mulf %46, %49 : vector<64x16xf32>
      %c0_36 = arith.constant 0 : index
      %c0_37 = arith.constant 0 : index
      %51 = vector.load %arg11[%c0_36, %c0_37] : memref<1x1xf32, #tpu.memory_space<vmem>>, vector<1x1xf32>
      %52 = vector.broadcast %51 : vector<1x1xf32> to vector<64x16xf32>
      %53 = arith.mulf %52, %50 : vector<64x16xf32>
      %c0_38 = arith.constant 0 : index
      %c0_39 = arith.constant 0 : index
      %c0_40 = arith.constant 0 : index
      %54 = vector.load %arg3[%c0_38, %c0_39, %c0_40] : memref<1x64x16xf32, #tpu.memory_space<vmem>>, vector<1x64x16xf32>
      %55 = vector.shape_cast %54 : vector<1x64x16xf32> to vector<64x16xf32>
      %56 = arith.addf %53, %55 : vector<64x16xf32>
      %57 = arith.truncf %56 : vector<64x16xf32> to vector<64x16xbf16>
      %c0_41 = arith.constant 0 : index
      %c0_42 = arith.constant 0 : index
      %58 = vector.load %arg12[%c0_41, %c0_42] : memref<16x16xbf16, #tpu.memory_space<vmem>>, vector<16x16xbf16>
      %cst_43 = arith.constant dense<0.000000e+00> : vector<64x16xf32>
      %59 = tpu.matmul %57, %58, %cst_43 {dimension_numbers = #tpu.dot_dimension_numbers<[1], [0], [0], [1], [0, 0, 1, 1], [], []>} : vector<64x16xbf16>, vector<16x16xbf16>, vector<64x16xf32> -> vector<64x16xf32>
      %c0_44 = arith.constant 0 : index
      %c0_45 = arith.constant 0 : index
      %60 = vector.load %arg13[%c0_44, %c0_45] : memref<1x16xf32, #tpu.memory_space<vmem>>, vector<1x16xf32>
      %61 = vector.broadcast %60 : vector<1x16xf32> to vector<64x16xf32>
      %62 = arith.addf %59, %61 : vector<64x16xf32>
      %c0_46 = arith.constant 0 : index
      %c0_47 = arith.constant 0 : index
      %c0_48 = arith.constant 0 : index
      %63 = vector.load %arg14[%c0_46, %c0_47, %c0_48] : memref<1x64x16xf32, #tpu.memory_space<vmem>>, vector<1x64x16xf32>
      %64 = vector.shape_cast %63 : vector<1x64x16xf32> to vector<64x16xf32>
      %65 = vector.shape_cast %62 : vector<64x16xf32> to vector<1x64x16xf32>
      tpu.vector_store %arg14[%c0_46, %c0_47, %c0_48], %65 {strides = array<i32>} : memref<1x64x16xf32, #tpu.memory_space<vmem>>, vector<1x64x16xf32>,
    } else {
    }
    return
  }
  func.func @transform_0(%arg0: i32, %arg1: i32, %arg2: i32) -> (i32, i32, i32) {
    %c0_i32 = arith.constant 0 : i32
    %c0_i32_0 = arith.constant 0 : i32
    return %arg0, %arg1, %c0_i32 : i32, i32, i32
  }
  func.func @transform_1(%arg0: i32, %arg1: i32, %arg2: i32) -> (i32, i32, i32) {
    %c0_i32 = arith.constant 0 : i32
    %c0_i32_0 = arith.constant 0 : i32
    return %arg0, %arg2, %c0_i32 : i32, i32, i32
  }
  func.func @transform_2(%arg0: i32, %arg1: i32, %arg2: i32) -> (i32, i32) {
    %c0_i32 = arith.constant 0 : i32
    %c0_i32_0 = arith.constant 0 : i32
    %c0_i32_1 = arith.constant 0 : i32
    return %c0_i32, %c0_i32_0 : i32, i32
  }
  func.func @transform_3(%arg0: i32, %arg1: i32, %arg2: i32) -> (i32, i32) {
    %c0_i32 = arith.constant 0 : i32
    %c0_i32_0 = arith.constant 0 : i32
    %c0_i32_1 = arith.constant 0 : i32
    return %c0_i32, %c0_i32_0 : i32, i32
  }
  func.func @transform_4(%arg0: i32, %arg1: i32, %arg2: i32) -> (i32, i32) {
    %c0_i32 = arith.constant 0 : i32
    %c0_i32_0 = arith.constant 0 : i32
    %c0_i32_1 = arith.constant 0 : i32
    return %c0_i32, %c0_i32_0 : i32, i32
  }
  func.func @transform_5(%arg0: i32, %arg1: i32, %arg2: i32) -> (i32, i32) {
    %c0_i32 = arith.constant 0 : i32
    %c0_i32_0 = arith.constant 0 : i32
    %c0_i32_1 = arith.constant 0 : i32
    return %c0_i32, %c0_i32_0 : i32, i32
  }
  func.func @transform_6(%arg0: i32, %arg1: i32, %arg2: i32) -> (i32, i32) {
    %c0_i32 = arith.constant 0 : i32
    %c0_i32_0 = arith.constant 0 : i32
    %c0_i32_1 = arith.constant 0 : i32
    return %c0_i32, %c0_i32_0 : i32, i32
  }
  func.func @transform_7(%arg0: i32, %arg1: i32, %arg2: i32) -> (i32, i32) {
    %c0_i32 = arith.constant 0 : i32
    %c0_i32_0 = arith.constant 0 : i32
    %c0_i32_1 = arith.constant 0 : i32
    return %c0_i32, %c0_i32_0 : i32, i32
  }
  func.func @transform_8(%arg0: i32, %arg1: i32, %arg2: i32) -> (i32, i32) {
    %c0_i32 = arith.constant 0 : i32
    %c0_i32_0 = arith.constant 0 : i32
    %c0_i32_1 = arith.constant 0 : i32
    return %c0_i32, %c0_i32_0 : i32, i32
  }
  func.func @transform_9(%arg0: i32, %arg1: i32, %arg2: i32) -> (i32, i32) {
    %c0_i32 = arith.constant 0 : i32
    %c0_i32_0 = arith.constant 0 : i32
    %c0_i32_1 = arith.constant 0 : i32
    return %c0_i32, %c0_i32_0 : i32, i32
  }
  func.func @transform_10(%arg0: i32, %arg1: i32, %arg2: i32) -> (i32, i32) {
    %c0_i32 = arith.constant 0 : i32
    %c0_i32_0 = arith.constant 0 : i32
    %c0_i32_1 = arith.constant 0 : i32
    return %c0_i32, %c0_i32_0 : i32, i32
  }
  func.func @transform_11(%arg0: i32, %arg1: i32, %arg2: i32) -> (i32, i32, i32) {
    %c0_i32 = arith.constant 0 : i32
    %c0_i32_0 = arith.constant 0 : i32
    return %arg0, %arg1, %c0_i32 : i32, i32, i32
  }
}

module attributes {stable_mosaic.version = 11 : i64} {
  func.func @_conv3x3_kernel(%arg0: i32, %arg1: memref<1x10x10x112xbf16, #tpu.memory_space<vmem>>, %arg2: memref<9x112x16xbf16, #tpu.memory_space<vmem>>, %arg3: memref<1x16xf32, #tpu.memory_space<vmem>>, %arg4: memref<1x16xf32, #tpu.memory_space<vmem>>, %arg5: memref<1x64x16xf32, #tpu.memory_space<vmem>>) attributes {dimension_semantics = [#tpu.dimension_semantics<parallel>], iteration_bounds = array<i64: 2>, scalar_prefetch = 0 : i64, scratch_operands = 0 : i64, tpu.core_type = #tpu.core_type<tc>, window_params = [{transform_indices = @transform_0, window_bounds = array<i64: 1, 10, 10, 112>}, {pipeline_mode = #tpu.pipeline_mode<synchronous>, transform_indices = @transform_1, window_bounds = array<i64: 9, 112, 16>}, {pipeline_mode = #tpu.pipeline_mode<synchronous>, transform_indices = @transform_2, window_bounds = array<i64: 1, 16>}, {pipeline_mode = #tpu.pipeline_mode<synchronous>, transform_indices = @transform_3, window_bounds = array<i64: 1, 16>}, {transform_indices = @transform_4, window_bounds = array<i64: 1, 64, 16>}]} {
    %c0 = arith.constant 0 : index
    %c0_0 = arith.constant 0 : index
    %c0_1 = arith.constant 0 : index
    %c0_2 = arith.constant 0 : index
    %0 = vector.load %arg1[%c0, %c0_0, %c0_1, %c0_2] : memref<1x10x10x112xbf16, #tpu.memory_space<vmem>>, vector<1x10x10x112xbf16>
    %1 = vector.shape_cast %0 : vector<1x10x10x112xbf16> to vector<10x10x112xbf16>
    %cst = arith.constant 0.000000e+00 : f32
    %2 = vector.broadcast %cst : f32 to vector<64x16xf32>
    %3 = vector.extract_strided_slice %1 {offsets = [0, 0, 0], sizes = [8, 8, 112], strides = [1, 1, 1]} : vector<10x10x112xbf16> to vector<8x8x112xbf16>
    %4 = vector.shape_cast %3 : vector<8x8x112xbf16> to vector<64x112xbf16>
    %c0_3 = arith.constant 0 : index
    %c0_4 = arith.constant 0 : index
    %c0_5 = arith.constant 0 : index
    %5 = vector.load %arg2[%c0_3, %c0_4, %c0_5] : memref<9x112x16xbf16, #tpu.memory_space<vmem>>, vector<1x112x16xbf16>
    %6 = vector.shape_cast %5 : vector<1x112x16xbf16> to vector<112x16xbf16>
    %cst_6 = arith.constant dense<0.000000e+00> : vector<64x16xf32>
    %7 = tpu.matmul %4, %6, %cst_6 {dimension_numbers = #tpu.dot_dimension_numbers<[1], [0], [0], [1], [0, 0, 1, 1], [], []>} : vector<64x112xbf16>, vector<112x16xbf16>, vector<64x16xf32> -> vector<64x16xf32>
    %8 = arith.addf %2, %7 : vector<64x16xf32>
    %9 = vector.extract_strided_slice %1 {offsets = [0, 1, 0], sizes = [8, 8, 112], strides = [1, 1, 1]} : vector<10x10x112xbf16> to vector<8x8x112xbf16>
    %10 = vector.shape_cast %9 : vector<8x8x112xbf16> to vector<64x112xbf16>
    %c1 = arith.constant 1 : index
    %c0_7 = arith.constant 0 : index
    %c0_8 = arith.constant 0 : index
    %11 = vector.load %arg2[%c1, %c0_7, %c0_8] : memref<9x112x16xbf16, #tpu.memory_space<vmem>>, vector<1x112x16xbf16>
    %12 = vector.shape_cast %11 : vector<1x112x16xbf16> to vector<112x16xbf16>
    %cst_9 = arith.constant dense<0.000000e+00> : vector<64x16xf32>
    %13 = tpu.matmul %10, %12, %cst_9 {dimension_numbers = #tpu.dot_dimension_numbers<[1], [0], [0], [1], [0, 0, 1, 1], [], []>} : vector<64x112xbf16>, vector<112x16xbf16>, vector<64x16xf32> -> vector<64x16xf32>
    %14 = arith.addf %8, %13 : vector<64x16xf32>
    %15 = vector.extract_strided_slice %1 {offsets = [0, 2, 0], sizes = [8, 8, 112], strides = [1, 1, 1]} : vector<10x10x112xbf16> to vector<8x8x112xbf16>
    %16 = vector.shape_cast %15 : vector<8x8x112xbf16> to vector<64x112xbf16>
    %c2 = arith.constant 2 : index
    %c0_10 = arith.constant 0 : index
    %c0_11 = arith.constant 0 : index
    %17 = vector.load %arg2[%c2, %c0_10, %c0_11] : memref<9x112x16xbf16, #tpu.memory_space<vmem>>, vector<1x112x16xbf16>
    %18 = vector.shape_cast %17 : vector<1x112x16xbf16> to vector<112x16xbf16>
    %cst_12 = arith.constant dense<0.000000e+00> : vector<64x16xf32>
    %19 = tpu.matmul %16, %18, %cst_12 {dimension_numbers = #tpu.dot_dimension_numbers<[1], [0], [0], [1], [0, 0, 1, 1], [], []>} : vector<64x112xbf16>, vector<112x16xbf16>, vector<64x16xf32> -> vector<64x16xf32>
    %20 = arith.addf %14, %19 : vector<64x16xf32>
    %21 = vector.extract_strided_slice %1 {offsets = [1, 0, 0], sizes = [8, 8, 112], strides = [1, 1, 1]} : vector<10x10x112xbf16> to vector<8x8x112xbf16>
    %22 = vector.shape_cast %21 : vector<8x8x112xbf16> to vector<64x112xbf16>
    %c3 = arith.constant 3 : index
    %c0_13 = arith.constant 0 : index
    %c0_14 = arith.constant 0 : index
    %23 = vector.load %arg2[%c3, %c0_13, %c0_14] : memref<9x112x16xbf16, #tpu.memory_space<vmem>>, vector<1x112x16xbf16>
    %24 = vector.shape_cast %23 : vector<1x112x16xbf16> to vector<112x16xbf16>
    %cst_15 = arith.constant dense<0.000000e+00> : vector<64x16xf32>
    %25 = tpu.matmul %22, %24, %cst_15 {dimension_numbers = #tpu.dot_dimension_numbers<[1], [0], [0], [1], [0, 0, 1, 1], [], []>} : vector<64x112xbf16>, vector<112x16xbf16>, vector<64x16xf32> -> vector<64x16xf32>
    %26 = arith.addf %20, %25 : vector<64x16xf32>
    %27 = vector.extract_strided_slice %1 {offsets = [1, 1, 0], sizes = [8, 8, 112], strides = [1, 1, 1]} : vector<10x10x112xbf16> to vector<8x8x112xbf16>
    %28 = vector.shape_cast %27 : vector<8x8x112xbf16> to vector<64x112xbf16>
    %c4 = arith.constant 4 : index
    %c0_16 = arith.constant 0 : index
    %c0_17 = arith.constant 0 : index
    %29 = vector.load %arg2[%c4, %c0_16, %c0_17] : memref<9x112x16xbf16, #tpu.memory_space<vmem>>, vector<1x112x16xbf16>
    %30 = vector.shape_cast %29 : vector<1x112x16xbf16> to vector<112x16xbf16>
    %cst_18 = arith.constant dense<0.000000e+00> : vector<64x16xf32>
    %31 = tpu.matmul %28, %30, %cst_18 {dimension_numbers = #tpu.dot_dimension_numbers<[1], [0], [0], [1], [0, 0, 1, 1], [], []>} : vector<64x112xbf16>, vector<112x16xbf16>, vector<64x16xf32> -> vector<64x16xf32>
    %32 = arith.addf %26, %31 : vector<64x16xf32>
    %33 = vector.extract_strided_slice %1 {offsets = [1, 2, 0], sizes = [8, 8, 112], strides = [1, 1, 1]} : vector<10x10x112xbf16> to vector<8x8x112xbf16>
    %34 = vector.shape_cast %33 : vector<8x8x112xbf16> to vector<64x112xbf16>
    %c5 = arith.constant 5 : index
    %c0_19 = arith.constant 0 : index
    %c0_20 = arith.constant 0 : index
    %35 = vector.load %arg2[%c5, %c0_19, %c0_20] : memref<9x112x16xbf16, #tpu.memory_space<vmem>>, vector<1x112x16xbf16>
    %36 = vector.shape_cast %35 : vector<1x112x16xbf16> to vector<112x16xbf16>
    %cst_21 = arith.constant dense<0.000000e+00> : vector<64x16xf32>
    %37 = tpu.matmul %34, %36, %cst_21 {dimension_numbers = #tpu.dot_dimension_numbers<[1], [0], [0], [1], [0, 0, 1, 1], [], []>} : vector<64x112xbf16>, vector<112x16xbf16>, vector<64x16xf32> -> vector<64x16xf32>
    %38 = arith.addf %32, %37 : vector<64x16xf32>
    %39 = vector.extract_strided_slice %1 {offsets = [2, 0, 0], sizes = [8, 8, 112], strides = [1, 1, 1]} : vector<10x10x112xbf16> to vector<8x8x112xbf16>
    %40 = vector.shape_cast %39 : vector<8x8x112xbf16> to vector<64x112xbf16>
    %c6 = arith.constant 6 : index
    %c0_22 = arith.constant 0 : index
    %c0_23 = arith.constant 0 : index
    %41 = vector.load %arg2[%c6, %c0_22, %c0_23] : memref<9x112x16xbf16, #tpu.memory_space<vmem>>, vector<1x112x16xbf16>
    %42 = vector.shape_cast %41 : vector<1x112x16xbf16> to vector<112x16xbf16>
    %cst_24 = arith.constant dense<0.000000e+00> : vector<64x16xf32>
    %43 = tpu.matmul %40, %42, %cst_24 {dimension_numbers = #tpu.dot_dimension_numbers<[1], [0], [0], [1], [0, 0, 1, 1], [], []>} : vector<64x112xbf16>, vector<112x16xbf16>, vector<64x16xf32> -> vector<64x16xf32>
    %44 = arith.addf %38, %43 : vector<64x16xf32>
    %45 = vector.extract_strided_slice %1 {offsets = [2, 1, 0], sizes = [8, 8, 112], strides = [1, 1, 1]} : vector<10x10x112xbf16> to vector<8x8x112xbf16>
    %46 = vector.shape_cast %45 : vector<8x8x112xbf16> to vector<64x112xbf16>
    %c7 = arith.constant 7 : index
    %c0_25 = arith.constant 0 : index
    %c0_26 = arith.constant 0 : index
    %47 = vector.load %arg2[%c7, %c0_25, %c0_26] : memref<9x112x16xbf16, #tpu.memory_space<vmem>>, vector<1x112x16xbf16>
    %48 = vector.shape_cast %47 : vector<1x112x16xbf16> to vector<112x16xbf16>
    %cst_27 = arith.constant dense<0.000000e+00> : vector<64x16xf32>
    %49 = tpu.matmul %46, %48, %cst_27 {dimension_numbers = #tpu.dot_dimension_numbers<[1], [0], [0], [1], [0, 0, 1, 1], [], []>} : vector<64x112xbf16>, vector<112x16xbf16>, vector<64x16xf32> -> vector<64x16xf32>
    %50 = arith.addf %44, %49 : vector<64x16xf32>
    %51 = vector.extract_strided_slice %1 {offsets = [2, 2, 0], sizes = [8, 8, 112], strides = [1, 1, 1]} : vector<10x10x112xbf16> to vector<8x8x112xbf16>
    %52 = vector.shape_cast %51 : vector<8x8x112xbf16> to vector<64x112xbf16>
    %c8 = arith.constant 8 : index
    %c0_28 = arith.constant 0 : index
    %c0_29 = arith.constant 0 : index
    %53 = vector.load %arg2[%c8, %c0_28, %c0_29] : memref<9x112x16xbf16, #tpu.memory_space<vmem>>, vector<1x112x16xbf16>
    %54 = vector.shape_cast %53 : vector<1x112x16xbf16> to vector<112x16xbf16>
    %cst_30 = arith.constant dense<0.000000e+00> : vector<64x16xf32>
    %55 = tpu.matmul %52, %54, %cst_30 {dimension_numbers = #tpu.dot_dimension_numbers<[1], [0], [0], [1], [0, 0, 1, 1], [], []>} : vector<64x112xbf16>, vector<112x16xbf16>, vector<64x16xf32> -> vector<64x16xf32>
    %56 = arith.addf %50, %55 : vector<64x16xf32>
    %c0_31 = arith.constant 0 : index
    %c0_32 = arith.constant 0 : index
    %57 = vector.load %arg3[%c0_31, %c0_32] : memref<1x16xf32, #tpu.memory_space<vmem>>, vector<1x16xf32>
    %58 = vector.broadcast %57 : vector<1x16xf32> to vector<64x16xf32>
    %59 = arith.mulf %56, %58 : vector<64x16xf32>
    %c0_33 = arith.constant 0 : index
    %c0_34 = arith.constant 0 : index
    %60 = vector.load %arg4[%c0_33, %c0_34] : memref<1x16xf32, #tpu.memory_space<vmem>>, vector<1x16xf32>
    %61 = vector.broadcast %60 : vector<1x16xf32> to vector<64x16xf32>
    %62 = arith.addf %59, %61 : vector<64x16xf32>
    %cst_35 = arith.constant 0.000000e+00 : f32
    %63 = vector.broadcast %cst_35 : f32 to vector<64x16xf32>
    %64 = arith.cmpf oge, %62, %63 : vector<64x16xf32>
    %cst_36 = arith.constant 0.00999999977 : f32
    %65 = vector.broadcast %cst_36 : f32 to vector<64x16xf32>
    %66 = arith.mulf %65, %62 : vector<64x16xf32>
    %67 = arith.select %64, %62, %66 : vector<64x16xi1>, vector<64x16xf32>
    %c0_37 = arith.constant 0 : index
    %c0_38 = arith.constant 0 : index
    %c0_39 = arith.constant 0 : index
    %68 = vector.load %arg5[%c0_37, %c0_38, %c0_39] : memref<1x64x16xf32, #tpu.memory_space<vmem>>, vector<1x64x16xf32>
    %69 = vector.shape_cast %68 : vector<1x64x16xf32> to vector<64x16xf32>
    %70 = vector.shape_cast %67 : vector<64x16xf32> to vector<1x64x16xf32>
    tpu.vector_store %arg5[%c0_37, %c0_38, %c0_39], %70 {strides = array<i32>} : memref<1x64x16xf32, #tpu.memory_space<vmem>>, vector<1x64x16xf32>,
    return
  }
  func.func @transform_0(%arg0: i32) -> (i32, i32, i32, i32) {
    %c0_i32 = arith.constant 0 : i32
    %c0_i32_0 = arith.constant 0 : i32
    %c0_i32_1 = arith.constant 0 : i32
    %c0_i32_2 = arith.constant 0 : i32
    return %arg0, %c0_i32, %c0_i32_0, %c0_i32_1 : i32, i32, i32, i32
  }
  func.func @transform_1(%arg0: i32) -> (i32, i32, i32) {
    %c0_i32 = arith.constant 0 : i32
    %c0_i32_0 = arith.constant 0 : i32
    %c0_i32_1 = arith.constant 0 : i32
    %c0_i32_2 = arith.constant 0 : i32
    return %c0_i32, %c0_i32_0, %c0_i32_1 : i32, i32, i32
  }
  func.func @transform_2(%arg0: i32) -> (i32, i32) {
    %c0_i32 = arith.constant 0 : i32
    %c0_i32_0 = arith.constant 0 : i32
    %c0_i32_1 = arith.constant 0 : i32
    return %c0_i32, %c0_i32_0 : i32, i32
  }
  func.func @transform_3(%arg0: i32) -> (i32, i32) {
    %c0_i32 = arith.constant 0 : i32
    %c0_i32_0 = arith.constant 0 : i32
    %c0_i32_1 = arith.constant 0 : i32
    return %c0_i32, %c0_i32_0 : i32, i32
  }
  func.func @transform_4(%arg0: i32) -> (i32, i32, i32) {
    %c0_i32 = arith.constant 0 : i32
    %c0_i32_0 = arith.constant 0 : i32
    %c0_i32_1 = arith.constant 0 : i32
    return %arg0, %c0_i32, %c0_i32_0 : i32, i32, i32
  }
}

</mosaic_0001>

<llo_original>
// kernel: dpc_forward.9
$region0: #{dpc_forward.9}
  #allocation0 [shape = 'u32[]', space=smem, size = 0x4, offset = 0x4, fixed_abs, tag = 'smem constant byte address 0x4 - core index']
  #allocation1 [shape = 'u32[144,128]{1,0:T(1,128)}', space=vmem, size = 0x12000, scoped, tag = 'internal scratch']
  #allocation2 [shape = 'f32[1,1]{1,0:T(1,128)S(1)}', space=vmem, size = 0x200, scoped, tag = 'scoped memory for dpc_forward.9']
  %s0 = inlined_call_operand.vmem [shape: f32[2,64,16], index: 0, kind: input, shape index: {}]
  %s1 = inlined_call_operand.vmem [shape: f32[2,16,16], index: 1, kind: input, shape index: {}]
  %s2 = inlined_call_operand.<no memory space> [shape: f32[1,1], index: 2, kind: input, shape index: {}]
  %s3 = inlined_call_operand.vmem [shape: bf16[16,16], index: 3, kind: input, shape index: {}]
  %s4 = inlined_call_operand.vmem [shape: f32[1,16], index: 4, kind: input, shape index: {}]
  %s5 = inlined_call_operand.vmem [shape: f32[2,64,16], index: 5, kind: output, shape index: {0}]
  %s6 = inlined_call_operand.vmem [shape: f32[2,64,16], index: 6, kind: output, shape index: {1}]
  %7 = xla_tuple %s5, %s6
  %s8 = sld [smem:[#allocation0]]
  $region61: #{dpc_forward.9} parent=0
    _
  %s10 = ssub.s32 1, %s8
  %s11 = scalar_select 0, %s10, %s8
  %v12 = vstv %s2
  %13 = vst [vmem:[#allocation2] sm:$0x1] %v12
  loop: start=0, step=1, limit=4
  $region2: #{dpc_forward.9} parent=0 // loop_pre_header
    _
  $region3: #{dpc_forward.9} parent=0 // loop_header
    %s15 = sphi 0, %s19
    %p16 = scmp.ge.s32.totalorder %s15, 4
    %s22 = sphi 0, %s34
    %s23 = sphi 0, %s30
    %s24 = sphi 0, %s22
    %s25 = sphi 0, %s23
    %s26 = sphi 0, %s24
    %s27 = sphi 0, %s25
    %s39 = sphi 0, %s41
    %s42 = sphi 0, %s39
    %s43 = sphi 0, %s42
    %s59 = sphi 0, %s43
    %s65 = sphi 0, %s67
    %s68 = sphi 0, %s65
    %s69 = sphi 0, %s68
    %s85 = sphi 0, %s69
    %s89 = sphi 0, %s89
    %s91 = sphi 0, %s89
    %s92 = sphi 0, %s91
    %s106 = sphi 0, %s92
    %s110 = sphi 0, %s110
    %s112 = sphi 0, %s110
    %s113 = sphi 0, %s112
    %s127 = sphi 0, %s113
    %s131 = sphi 0, %s131
    %s133 = sphi 0, %s131
    %s134 = sphi 0, %s133
    %s148 = sphi 0, %s134
    %s156 = sphi 0, %s158
    %s159 = sphi 0, %s156
    %s160 = sphi 0, %s159
    %s176 = sphi 0, %s160
    %s184 = sphi 0, %s186
    %s187 = sphi 0, %s184
    %s188 = sphi 0, %s187
    %s204 = sphi 0, %s188
  $region4: #{dpc_forward.9} parent=0 // loop_header_branch
    %18 = sbr.rel (%p16) target = $region8
  $region5: #{dpc_forward.9} parent=0 // loop_body
    %s20 = ssub.s32 %s15, 1
    %s21 = ssub.s32 %s15, 2
    %s28 = sadd.s32 1, %s23
    %p29 = scmp.ge.s32.totalorder %s28, 1
    %s30 = scalar_select %p29, 0, %s28
    %s31 = sadd.s32 1, %s22
    %s32 = scalar_select %p29, %s31, %s22
    %p33 = scmp.ge.s32.totalorder %s32, 2
    %s34 = scalar_select %p33, 0, %s32
    %s35 = ssub.s32 %s22, %s34
    %s36 = ssub.s32 %s23, %s30
    %s37 = sor.u32 %s35, %s36
    %p38 = scmp.eq.s32.totalorder %s37, 0
    %s40 = sadd.s32 %s39, 1
    %s41 = scalar_select %p38, %s39, %s40
    %p44 = pneg %p38
    %p45 = scmp.eq.s32.totalorder %s15, 1
    %p46 = por %p44, %p45
    %p47 = scmp.ne.s32.totalorder %s39, %s42
    %p48 = scmp.eq.s32.totalorder %s15, 0
    %p49 = por %p47, %p48
    %p50 = scmp.ne.s32.totalorder %s39, %s42
    %p51 = scmp.eq.s32.totalorder %s20, 1
    %p52 = por %p50, %p51
    %p53 = scmp.ne.s32.totalorder %s42, %s43
    %p54 = scmp.eq.s32.totalorder %s20, 0
    %p55 = por %p53, %p54
    %p56 = scmp.ne.s32.totalorder %s42, %s43
    %p57 = scmp.eq.s32.totalorder %s21, 1
    %p58 = por %p56, %p57
    %p60 = scmp.ne.s32.totalorder %s43, %s59
    %p61 = scmp.eq.s32.totalorder %s21, 0
    %p62 = por %p60, %p61
    %s63 = ssub.s32 %s22, %s34
    %p64 = scmp.eq.s32.totalorder %s63, 0
    %s66 = sadd.s32 %s65, 1
    %s67 = scalar_select %p64, %s65, %s66
    %p70 = pneg %p64
    %p71 = scmp.eq.s32.totalorder %s15, 1
    %p72 = por %p70, %p71
    %p73 = scmp.ne.s32.totalorder %s65, %s68
    %p74 = scmp.eq.s32.totalorder %s15, 0
    %p75 = por %p73, %p74
    %p76 = scmp.ne.s32.totalorder %s65, %s68
    %p77 = scmp.eq.s32.totalorder %s20, 1
    %p78 = por %p76, %p77
    %p79 = scmp.ne.s32.totalorder %s68, %s69
    %p80 = scmp.eq.s32.totalorder %s20, 0
    %p81 = por %p79, %p80
    %p82 = scmp.ne.s32.totalorder %s68, %s69
    %p83 = scmp.eq.s32.totalorder %s21, 1
    %p84 = por %p82, %p83
    %p86 = scmp.ne.s32.totalorder %s69, %s85
    %p87 = scmp.eq.s32.totalorder %s21, 0
    %p88 = por %p86, %p87
    %s90 = sadd.s32 %s89, 1
    %p93 = scmp.eq.s32.totalorder %s15, 1
    %p94 = scmp.ne.s32.totalorder %s89, %s91
    %p95 = scmp.eq.s32.totalorder %s15, 0
    %p96 = por %p94, %p95
    %p97 = scmp.ne.s32.totalorder %s89, %s91
    %p98 = scmp.eq.s32.totalorder %s20, 1
    %p99 = por %p97, %p98
    %p100 = scmp.ne.s32.totalorder %s91, %s92
    %p101 = scmp.eq.s32.totalorder %s20, 0
    %p102 = por %p100, %p101
    %p103 = scmp.ne.s32.totalorder %s91, %s92
    %p104 = scmp.eq.s32.totalorder %s21, 1
    %p105 = por %p103, %p104
    %p107 = scmp.ne.s32.totalorder %s92, %s106
    %p108 = scmp.eq.s32.totalorder %s21, 0
    %p109 = por %p107, %p108
    %s111 = sadd.s32 %s110, 1
    %p114 = scmp.eq.s32.totalorder %s15, 1
    %p115 = scmp.ne.s32.totalorder %s110, %s112
    %p116 = scmp.eq.s32.totalorder %s15, 0
    %p117 = por %p115, %p116
    %p118 = scmp.ne.s32.totalorder %s110, %s112
    %p119 = scmp.eq.s32.totalorder %s20, 1
    %p120 = por %p118, %p119
    %p121 = scmp.ne.s32.totalorder %s112, %s113
    %p122 = scmp.eq.s32.totalorder %s20, 0
    %p123 = por %p121, %p122
    %p124 = scmp.ne.s32.totalorder %s112, %s113
    %p125 = scmp.eq.s32.totalorder %s21, 1
    %p126 = por %p124, %p125
    %p128 = scmp.ne.s32.totalorder %s113, %s127
    %p129 = scmp.eq.s32.totalorder %s21, 0
    %p130 = por %p128, %p129
    %s132 = sadd.s32 %s131, 1
    %p135 = scmp.eq.s32.totalorder %s15, 1
    %p136 = scmp.ne.s32.totalorder %s131, %s133
    %p137 = scmp.eq.s32.totalorder %s15, 0
    %p138 = por %p136, %p137
    %p139 = scmp.ne.s32.totalorder %s131, %s133
    %p140 = scmp.eq.s32.totalorder %s20, 1
    %p141 = por %p139, %p140
    %p142 = scmp.ne.s32.totalorder %s133, %s134
    %p143 = scmp.eq.s32.totalorder %s20, 0
    %p144 = por %p142, %p143
    %p145 = scmp.ne.s32.totalorder %s133, %s134
    %p146 = scmp.eq.s32.totalorder %s21, 1
    %p147 = por %p145, %p146
    %p149 = scmp.ne.s32.totalorder %s134, %s148
    %p150 = scmp.eq.s32.totalorder %s21, 0
    %p151 = por %p149, %p150
    %s152 = ssub.s32 %s22, %s34
    %s153 = ssub.s32 %s23, %s30
    %s154 = sor.u32 %s152, %s153
    %p155 = scmp.eq.s32.totalorder %s154, 0
    %s157 = sadd.s32 %s156, 1
    %s158 = scalar_select %p155, %s156, %s157
    %p161 = pneg %p155
    %p162 = scmp.eq.s32.totalorder %s15, 1
    %p163 = por %p161, %p162
    %p164 = scmp.ne.s32.totalorder %s156, %s159
    %p165 = scmp.eq.s32.totalorder %s15, 0
    %p166 = por %p164, %p165
    %p167 = scmp.ne.s32.totalorder %s156, %s159
    %p168 = scmp.eq.s32.totalorder %s20, 1
    %p169 = por %p167, %p168
    %p170 = scmp.ne.s32.totalorder %s159, %s160
    %p171 = scmp.eq.s32.totalorder %s20, 0
    %p172 = por %p170, %p171
    %p173 = scmp.ne.s32.totalorder %s159, %s160
    %p174 = scmp.eq.s32.totalorder %s21, 1
    %p175 = por %p173, %p174
    %p177 = scmp.ne.s32.totalorder %s160, %s176
    %p178 = scmp.eq.s32.totalorder %s21, 0
    %p179 = por %p177, %p178
    %s180 = ssub.s32 %s22, %s34
    %s181 = ssub.s32 %s23, %s30
    %s182 = sor.u32 %s180, %s181
    %p183 = scmp.eq.s32.totalorder %s182, 0
    %s185 = sadd.s32 %s184, 1
    %s186 = scalar_select %p183, %s184, %s185
    %p189 = pneg %p183
    %p190 = scmp.eq.s32.totalorder %s15, 1
    %p191 = por %p189, %p190
    %p192 = scmp.ne.s32.totalorder %s184, %s187
    %p193 = scmp.eq.s32.totalorder %s15, 0
    %p194 = por %p192, %p193
    %p195 = scmp.ne.s32.totalorder %s184, %s187
    %p196 = scmp.eq.s32.totalorder %s20, 1
    %p197 = por %p195, %p196
    %p198 = scmp.ne.s32.totalorder %s187, %s188
    %p199 = scmp.eq.s32.totalorder %s20, 0
    %p200 = por %p198, %p199
    %p201 = scmp.ne.s32.totalorder %s187, %s188
    %p202 = scmp.eq.s32.totalorder %s21, 1
    %p203 = por %p201, %p202
    %p205 = scmp.ne.s32.totalorder %s188, %s204
    %p206 = scmp.eq.s32.totalorder %s21, 0
    %p207 = por %p205, %p206
    %p208 = scmp.le.s32.totalorder 1, %s15
    %p209 = scmp.lt.s32.totalorder %s15, 3
    %p210 = pnand %p208, %p209
    %p211 = pneg %p210
    // Predicated region
    $region9: #{dpc_forward.9} parent=5 // pred_check
      _
    $region10: #{dpc_forward.9} parent=5 // pred_check_branch
      %213 = sbr.rel (%p210) target = $region12
    $region11: #{dpc_forward.9} parent=5 // pred_region
      %s214 = ssub.s32 %s15, 1
      // Predicated region
      $region13: #{dpc_forward.9} parent=11 // pred_check
        %p215 = pneg %p102
      $region14: #{dpc_forward.9} parent=11 // pred_check_branch
        %217 = sbr.rel (%p215) target = $region16
      $region15: #{dpc_forward.9} parent=11 // pred_region
        _
      $region16: #{dpc_forward.9} parent=11 // pred_fallthru
        _
      // Predicated region
      $region17: #{dpc_forward.9} parent=11 // pred_check
        %p218 = pneg %p123
      $region18: #{dpc_forward.9} parent=11 // pred_check_branch
        %220 = sbr.rel (%p218) target = $region20
      $region19: #{dpc_forward.9} parent=11 // pred_region
        _
      $region20: #{dpc_forward.9} parent=11 // pred_fallthru
        _
      // Predicated region
      $region21: #{dpc_forward.9} parent=11 // pred_check
        %p221 = pneg %p144
      $region22: #{dpc_forward.9} parent=11 // pred_check_branch
        %223 = sbr.rel (%p221) target = $region24
      $region23: #{dpc_forward.9} parent=11 // pred_region
        _
      $region24: #{dpc_forward.9} parent=11 // pred_fallthru
        _
    $region12: #{dpc_forward.9} parent=5 // pred_fallthru
      _
    %p224 = scmp.lt.s32.totalorder %s15, 2
    // Predicated region
    $region25: #{dpc_forward.9} parent=5 // pred_check
      %p225 = pneg %p224
    $region26: #{dpc_forward.9} parent=5 // pred_check_branch
      %227 = sbr.rel (%p225) target = $region28
    $region27: #{dpc_forward.9} parent=5 // pred_region
      // Predicated region
      $region29: #{dpc_forward.9} parent=27 // pred_check
        %p228 = pneg %p49
      $region30: #{dpc_forward.9} parent=27 // pred_check_branch
        %230 = sbr.rel (%p228) target = $region32
      $region31: #{dpc_forward.9} parent=27 // pred_region
        %s231 = smul.u32 8, %s23
        %p232 = scmp.lt.s32.totalorder %s22, 1
        %s233 = scalar_select %p232, %s22, 1
        %p234 = scmp.lt.s32.totalorder %s231, 7
        %s235 = scalar_select %p234, %s231, 7
        %s236 = smul.addr %s233, 8
        %s237 = sadd.s32 %s235, %s236
        %s238 = smul.addr %s237, 8
        %s239 = scalar_lea.vmem %s0, %s238
        %s240 = smul.u32 8, %s23
      $region32: #{dpc_forward.9} parent=27 // pred_fallthru
        _
      // Predicated region
      $region33: #{dpc_forward.9} parent=27 // pred_check
        %p241 = pneg %p75
      $region34: #{dpc_forward.9} parent=27 // pred_check_branch
        %243 = sbr.rel (%p241) target = $region36
      $region35: #{dpc_forward.9} parent=27 // pred_region
        %p244 = scmp.lt.s32.totalorder %s22, 1
        %s245 = scalar_select %p244, %s22, 1
        %s246 = smul.addr %s245, 2
        %s247 = smul.addr %s246, 8
        %s248 = scalar_lea.vmem %s1, %s247
      $region36: #{dpc_forward.9} parent=27 // pred_fallthru
        _
    $region28: #{dpc_forward.9} parent=5 // pred_fallthru
      _
    %p249 = scmp.le.s32.totalorder 1, %s15
    %p250 = scmp.lt.s32.totalorder %s15, 3
    %p251 = pnand %p249, %p250
    %p252 = pneg %p251
    // Predicated region
    $region37: #{dpc_forward.9} parent=5 // pred_check
      _
    $region38: #{dpc_forward.9} parent=5 // pred_check_branch
      %254 = sbr.rel (%p251) target = $region40
    $region39: #{dpc_forward.9} parent=5 // pred_region
      %s255 = ssub.s32 %s15, 1
      %s256 = smul.u32 8, %s25
      %p257 = scmp.lt.s32.totalorder %s24, 1
      %s258 = scalar_select %p257, %s24, 1
      %p259 = scmp.lt.s32.totalorder %s256, 7
      %s260 = scalar_select %p259, %s256, 7
      %s261 = smul.addr %s258, 8
      %s262 = sadd.s32 %s260, %s261
      %s263 = smul.addr %s262, 8
      %s264 = scalar_lea.vmem %s0, %s263
      %p265 = pneg %p55
      %p266 = pneg %p52
      %p267 = scmp.lt.s32.totalorder %s24, 1
      %s268 = scalar_select %p267, %s24, 1
      %s269 = smul.addr %s268, 2
      %s270 = smul.addr %s269, 8
      %s271 = scalar_lea.vmem %s1, %s270
      %p272 = pneg %p81
      %p273 = pneg %p78
      %p274 = pneg %p102
      %p275 = pneg %p99
      %p276 = pneg %p123
      %p277 = pneg %p120
      %p278 = pneg %p144
      %p279 = pneg %p141
      %p280 = pneg %p172
      %p281 = pneg %p169
      %s282 = smul.u32 8, %s25
      %p283 = scmp.lt.s32.totalorder %s24, 1
      %s284 = scalar_select %p283, %s24, 1
      %p285 = scmp.lt.s32.totalorder %s282, 7
      %s286 = scalar_select %p285, %s282, 7
      %s287 = smul.addr %s284, 8
      %s288 = sadd.s32 %s286, %s287
      %s289 = smul.addr %s288, 8
      %s290 = scalar_lea.vmem %s5, %s289
      %p291 = pneg %p200
      %p292 = pneg %p197
      %s293 = smul.u32 8, %s25
      %p294 = scmp.lt.s32.totalorder %s24, 1
      %s295 = scalar_select %p294, %s24, 1
      %p296 = scmp.lt.s32.totalorder %s293, 7
      %s297 = scalar_select %p296, %s293, 7
      %s298 = smul.addr %s295, 8
      %s299 = sadd.s32 %s297, %s298
      %s300 = smul.addr %s299, 8
      %s301 = scalar_lea.vmem %s6, %s300
      %s302 = smul.u32 8, %s25
      %p303 = scmp.lt.s32.totalorder %s24, 1
      %s304 = scalar_select %p303, %s24, 1
      %p305 = scmp.lt.s32.totalorder %s302, 7
      %s306 = scalar_select %p305, %s302, 7
      %s307 = smul.addr %s304, 8
      %s308 = sadd.s32 %s306, %s307
      %s309 = smul.addr %s308, 8
      %s310 = scalar_lea.vmem %s0, %s309
      %s311 = smul.u32 8, %s25
      %p312 = scmp.lt.s32.totalorder %s24, 1
      %s313 = scalar_select %p312, %s24, 1
      %s314 = smul.addr %s313, 2
      %s315 = smul.addr %s314, 8
      %s316 = scalar_lea.vmem %s1, %s315
      %s317 = smul.u32 8, %s25
      %p318 = scmp.lt.s32.totalorder %s24, 1
      %s319 = scalar_select %p318, %s24, 1
      %p320 = scmp.lt.s32.totalorder %s317, 7
      %s321 = scalar_select %p320, %s317, 7
      %s322 = smul.addr %s319, 8
      %s323 = sadd.s32 %s321, %s322
      %s324 = smul.addr %s323, 8
      %s325 = scalar_lea.vmem %s5, %s324
      %s326 = smul.u32 8, %s25
      %s327 = smul.u32 8, %s25
      %p328 = scmp.lt.s32.totalorder %s24, 1
      %s329 = scalar_select %p328, %s24, 1
      %p330 = scmp.lt.s32.totalorder %s327, 7
      %s331 = scalar_select %p330, %s327, 7
      %s332 = smul.addr %s329, 8
      %s333 = sadd.s32 %s331, %s332
      %s334 = smul.addr %s333, 8
      %s335 = scalar_lea.vmem %s6, %s334
      %s336 = smul.u32 8, %s25
      %v338 = vld [vmem:[%s310] sm:$0xff]
      %v339 = vld [vmem:[%s310 + $0x8] sm:$0xff]
      %v340 = vld [vmem:[%s310 + $0x10] sm:$0xff]
      %v341 = vld [vmem:[%s310 + $0x18] sm:$0xff]
      %v342 = vld [vmem:[%s310 + $0x20] sm:$0xff]
      %v343 = vld [vmem:[%s310 + $0x28] sm:$0xff]
      %v344 = vld [vmem:[%s310 + $0x30] sm:$0xff]
      %v345 = vld [vmem:[%s310 + $0x38] sm:$0xff]
      %v346 = vld [vmem:[%s316] sm:$0xff]
      %v347 = vld [vmem:[%s316 + $0x8] sm:$0xff]
      %v348 = vpack.c.bf16 %v339, %v338
      %v349 = vpack.c.bf16 %v341, %v340
      %v350 = vpack.c.bf16 %v343, %v342
      %v351 = vpack.c.bf16 %v345, %v344
      %v352 = vpack.c.bf16 %v347, %v346
      %vm353 = vcmask 130048
      %v355 = vsel %vm353, %v348, 0
      %v358 = vsel %vm353, %v349, 0
      %v361 = vsel %vm353, %v350, 0
      %v364 = vsel %vm353, %v351, 0
      %v367 = vsel %vm353, %v352, 0
      %369 = vmatprep.subr.bf16.mxu0 0
      %370 = vmatpush1.bf16.xpose.msra.mxu0 %v367
      %371 = vmatprep.subr.bf16.mxu0 0
      %372 = vmatpush1.bf16.xpose.msra.mxu0 0
      %373 = vmatprep.subr.bf16.mxu0 0
      %374 = vmatpush1.bf16.xpose.msra.mxu0 0
      %375 = vmatprep.subr.bf16.mxu0 0
      %376 = vmatpush1.bf16.xpose.msra.mxu0 0
      %377 = vmatprep.subr.bf16.mxu0 0
      %378 = vmatpush1.bf16.xpose.msra.mxu0 0
      %379 = vmatprep.subr.bf16.mxu0 0
      %380 = vmatpush1.bf16.xpose.msra.mxu0 0
      %381 = vmatprep.subr.bf16.mxu0 0
      %382 = vmatpush1.bf16.xpose.msra.mxu0 0
      %383 = vmatprep.subr.bf16.mxu0 0
      %384 = vmatpush1.bf16.xpose.msra.mxu0 0
      %385 = vmatprep.subr.bf16.mxu0 0
      %386 = vmatpush1.bf16.xpose.msra.mxu0 0
      %387 = vmatprep.subr.bf16.mxu0 0
      %388 = vmatpush1.bf16.xpose.msra.mxu0 0
      %389 = vmatprep.subr.bf16.mxu0 0
      %390 = vmatpush1.bf16.xpose.msra.mxu0 0
      %391 = vmatprep.subr.bf16.mxu0 0
      %392 = vmatpush1.bf16.xpose.msra.mxu0 0
      %393 = vmatprep.subr.bf16.mxu0 0
      %394 = vmatpush1.bf16.xpose.msra.mxu0 0
      %395 = vmatprep.subr.bf16.mxu0 0
      %396 = vmatpush1.bf16.xpose.msra.mxu0 0
      %397 = vmatprep.subr.bf16.mxu0 0
      %398 = vmatpush1.bf16.xpose.msra.mxu0 0
      %399 = vmatprep.subr.bf16.mxu0 0
      %400 = vmatpush1.bf16.xpose.msra.mxu0 0
      %401 = vmatprep.mubr.bf16.mxu0 0
      %402 = vmatmul.mubr.bf16.gmra.mrb[0].mxu0 %v355
      %v403 = vpop.f32.mrb[0].mxu0
      %v404 = vadd.f32 0.0, %v403
      %v405 = vpop.f32.mrb[0].mxu0
      %v406 = vpop.f32.mrb[0].mxu0
      %v407 = vadd.f32 0.0, %v406
      %v408 = vpop.f32.mrb[0].mxu0
      %409 = vmatprep.mubr.bf16.mxu0 0
      %410 = vmatmul.mubr.bf16.gmra.mrb[0].mxu0 %v358
      %v411 = vpop.f32.mrb[0].mxu0
      %v412 = vadd.f32 0.0, %v411
      %v413 = vpop.f32.mrb[0].mxu0
      %v414 = vpop.f32.mrb[0].mxu0
      %v415 = vadd.f32 0.0, %v414
      %v416 = vpop.f32.mrb[0].mxu0
      %417 = vmatprep.mubr.bf16.mxu0 0
      %418 = vmatmul.mubr.bf16.gmra.mrb[0].mxu0 %v361
      %v419 = vpop.f32.mrb[0].mxu0
      %v420 = vadd.f32 0.0, %v419
      %v421 = vpop.f32.mrb[0].mxu0
      %v422 = vpop.f32.mrb[0].mxu0
      %v423 = vadd.f32 0.0, %v422
      %v424 = vpop.f32.mrb[0].mxu0
      %425 = vmatprep.mubr.bf16.mxu0 0
      %426 = vmatmul.mubr.bf16.gmra.mrb[0].mxu0 %v364
      %v427 = vpop.f32.mrb[0].mxu0
      %v428 = vadd.f32 0.0, %v427
      %v429 = vpop.f32.mrb[0].mxu0
      %v430 = vpop.f32.mrb[0].mxu0
      %v431 = vadd.f32 0.0, %v430
      %v432 = vpop.f32.mrb[0].mxu0
      %433 = vdwg.mxu0
      %v434 = vld [vmem:[#allocation2] sm:$0x1]
      %v436 = vlaneseq
      %v437 = vshrl.u32 %v436, 7
      %v438 = vsub.s32 0, %v437
      %v439 = vrot.slane %v434, %v438
      %440 = vset.pattern.permute.xlu0 0
      %441 = vperm.xlu0 %440, %v439
      %v442 = vpop.permute.xlu0 %441
      %v444 = vmul.f32 %v442, %v404
      %v445 = vmul.f32 %v442, %v407
      %v446 = vmul.f32 %v442, %v412
      %v447 = vmul.f32 %v442, %v415
      %v448 = vmul.f32 %v442, %v420
      %v449 = vmul.f32 %v442, %v423
      %v450 = vmul.f32 %v442, %v428
      %v451 = vmul.f32 %v442, %v431
      %v452 = vadd.f32 %v444, %v338
      %v453 = vadd.f32 %v445, %v339
      %v454 = vadd.f32 %v446, %v340
      %v455 = vadd.f32 %v447, %v341
      %v456 = vadd.f32 %v448, %v342
      %v457 = vadd.f32 %v449, %v343
      %v458 = vadd.f32 %v450, %v344
      %v459 = vadd.f32 %v451, %v345
      %460 = vst.msk [vmem:[%s325] sm:$0xff] %vm353, %v452
      %461 = vst.msk [vmem:[%s325 + $0x8] sm:$0xff] %vm353, %v453
      %462 = vst.msk [vmem:[%s325 + $0x10] sm:$0xff] %vm353, %v454
      %463 = vst.msk [vmem:[%s325 + $0x18] sm:$0xff] %vm353, %v455
      %464 = vst.msk [vmem:[%s325 + $0x20] sm:$0xff] %vm353, %v456
      %465 = vst.msk [vmem:[%s325 + $0x28] sm:$0xff] %vm353, %v457
      %466 = vst.msk [vmem:[%s325 + $0x30] sm:$0xff] %vm353, %v458
      %467 = vst.msk [vmem:[%s325 + $0x38] sm:$0xff] %vm353, %v459
      %v468 = vpack.c.bf16 %v453, %v452
      %v469 = vpack.c.bf16 %v455, %v454
      %v470 = vpack.c.bf16 %v457, %v456
      %v471 = vpack.c.bf16 %v459, %v458
      %v472 = vld [vmem:[%s3] sm:$0xf]
      %v473 = vld [vmem:[%s3 + $0x4] sm:$0xf]
      %v474 = vld [vmem:[%s4] sm:$0x1]
      %v476 = vlaneseq
      %v477 = vshrl.u32 %v476, 7
      %v478 = vsub.s32 0, %v477
      %v479 = vrot.slane %v474, %v478
      %v483 = vunpack.c.l.b16 %v472
      %v484 = vunpack.c.l.b16 %v473
      %v485 = vpack.c.b16 %v484, %v483
      %v488 = vsel %vm353, %v468, 0
      %v491 = vsel %vm353, %v469, 0
      %v494 = vsel %vm353, %v470, 0
      %v497 = vsel %vm353, %v471, 0
      %499 = vmatprep.subr.bf16.mxu0 0
      %500 = vmatpush1.bf16.msra.mxu0 %v485
      %501 = vmatprep.subr.bf16.mxu0 0
      %502 = vmatpush1.bf16.msra.mxu0 0
      %503 = vmatprep.subr.bf16.mxu0 0
      %504 = vmatpush1.bf16.msra.mxu0 0
      %505 = vmatprep.subr.bf16.mxu0 0
      %506 = vmatpush1.bf16.msra.mxu0 0
      %507 = vmatprep.subr.bf16.mxu0 0
      %508 = vmatpush1.bf16.msra.mxu0 0
      %509 = vmatprep.subr.bf16.mxu0 0
      %510 = vmatpush1.bf16.msra.mxu0 0
      %511 = vmatprep.subr.bf16.mxu0 0
      %512 = vmatpush1.bf16.msra.mxu0 0
      %513 = vmatprep.subr.bf16.mxu0 0
      %514 = vmatpush1.bf16.msra.mxu0 0
      %515 = vmatprep.subr.bf16.mxu0 0
      %516 = vmatpush1.bf16.msra.mxu0 0
      %517 = vmatprep.subr.bf16.mxu0 0
      %518 = vmatpush1.bf16.msra.mxu0 0
      %519 = vmatprep.subr.bf16.mxu0 0
      %520 = vmatpush1.bf16.msra.mxu0 0
      %521 = vmatprep.subr.bf16.mxu0 0
      %522 = vmatpush1.bf16.msra.mxu0 0
      %523 = vmatprep.subr.bf16.mxu0 0
      %524 = vmatpush1.bf16.msra.mxu0 0
      %525 = vmatprep.subr.bf16.mxu0 0
      %526 = vmatpush1.bf16.msra.mxu0 0
      %527 = vmatprep.subr.bf16.mxu0 0
      %528 = vmatpush1.bf16.msra.mxu0 0
      %529 = vmatprep.subr.bf16.mxu0 0
      %530 = vmatpush1.bf16.msra.mxu0 0
      %531 = vmatprep.mubr.bf16.mxu0 0
      %532 = vmatmul.mubr.bf16.gmra.mrb[0].mxu0 %v488
      %v533 = vpop.f32.mrb[0].mxu0
      %v534 = vadd.f32 %v479, %v533
      %v535 = vpop.f32.mrb[0].mxu0
      %v536 = vpop.f32.mrb[0].mxu0
      %v537 = vadd.f32 %v479, %v536
      %v538 = vpop.f32.mrb[0].mxu0
      %539 = vmatprep.mubr.bf16.mxu0 0
      %540 = vmatmul.mubr.bf16.gmra.mrb[0].mxu0 %v491
      %v541 = vpop.f32.mrb[0].mxu0
      %v542 = vadd.f32 %v479, %v541
      %v543 = vpop.f32.mrb[0].mxu0
      %v544 = vpop.f32.mrb[0].mxu0
      %v545 = vadd.f32 %v479, %v544
      %v546 = vpop.f32.mrb[0].mxu0
      %547 = vmatprep.mubr.bf16.mxu0 0
      %548 = vmatmul.mubr.bf16.gmra.mrb[0].mxu0 %v494
      %v549 = vpop.f32.mrb[0].mxu0
      %v550 = vadd.f32 %v479, %v549
      %v551 = vpop.f32.mrb[0].mxu0
      %v552 = vpop.f32.mrb[0].mxu0
      %v553 = vadd.f32 %v479, %v552
      %v554 = vpop.f32.mrb[0].mxu0
      %555 = vmatprep.mubr.bf16.mxu0 0
      %556 = vmatmul.mubr.bf16.gmra.mrb[0].mxu0 %v497
      %v557 = vpop.f32.mrb[0].mxu0
      %v558 = vadd.f32 %v479, %v557
      %v559 = vpop.f32.mrb[0].mxu0
      %v560 = vpop.f32.mrb[0].mxu0
      %v561 = vadd.f32 %v479, %v560
      %v562 = vpop.f32.mrb[0].mxu0
      %563 = vdwg.mxu0
      %564 = vst.msk [vmem:[%s335] sm:$0xff] %vm353, %v534
      %565 = vst.msk [vmem:[%s335 + $0x8] sm:$0xff] %vm353, %v537
      %566 = vst.msk [vmem:[%s335 + $0x10] sm:$0xff] %vm353, %v542
      %567 = vst.msk [vmem:[%s335 + $0x18] sm:$0xff] %vm353, %v545
      %568 = vst.msk [vmem:[%s335 + $0x20] sm:$0xff] %vm353, %v550
      %569 = vst.msk [vmem:[%s335 + $0x28] sm:$0xff] %vm353, %v553
      %570 = vst.msk [vmem:[%s335 + $0x30] sm:$0xff] %vm353, %v558
      %571 = vst.msk [vmem:[%s335 + $0x38] sm:$0xff] %vm353, %v561
      %s572 = smul.u32 8, %s25
      %p573 = scmp.lt.s32.totalorder %s24, 1
      %s574 = scalar_select %p573, %s24, 1
      %p575 = scmp.lt.s32.totalorder %s572, 7
      %s576 = scalar_select %p575, %s572, 7
      %s577 = smul.addr %s574, 8
      %s578 = sadd.s32 %s576, %s577
      %s579 = smul.addr %s578, 8
      %s580 = scalar_lea.vmem %s5, %s579
      %s581 = smul.u32 8, %s25
      %p582 = scmp.lt.s32.totalorder %s24, 1
      %s583 = scalar_select %p582, %s24, 1
      %p584 = scmp.lt.s32.totalorder %s581, 7
      %s585 = scalar_select %p584, %s581, 7
      %s586 = smul.addr %s583, 8
      %s587 = sadd.s32 %s585, %s586
      %s588 = smul.addr %s587, 8
      %s589 = scalar_lea.vmem %s6, %s588
      // Predicated region
      $region41: #{dpc_forward.9} parent=39 // pred_check
        %p590 = pneg %p169
      $region42: #{dpc_forward.9} parent=39 // pred_check_branch
        %592 = sbr.rel (%p590) target = $region44
      $region43: #{dpc_forward.9} parent=39 // pred_region
        %s593 = smul.u32 8, %s25
      $region44: #{dpc_forward.9} parent=39 // pred_fallthru
        _
      // Predicated region
      $region45: #{dpc_forward.9} parent=39 // pred_check
        %p594 = pneg %p197
      $region46: #{dpc_forward.9} parent=39 // pred_check_branch
        %596 = sbr.rel (%p594) target = $region48
      $region47: #{dpc_forward.9} parent=39 // pred_region
        %s597 = smul.u32 8, %s25
      $region48: #{dpc_forward.9} parent=39 // pred_fallthru
        _
    $region40: #{dpc_forward.9} parent=5 // pred_fallthru
      _
    %p598 = scmp.le.s32.totalorder 2, %s15
    // Predicated region
    $region49: #{dpc_forward.9} parent=5 // pred_check
      %p599 = pneg %p598
    $region50: #{dpc_forward.9} parent=5 // pred_check_branch
      %601 = sbr.rel (%p599) target = $region52
    $region51: #{dpc_forward.9} parent=5 // pred_region
      %s602 = ssub.s32 %s15, 2
      // Predicated region
      $region53: #{dpc_forward.9} parent=51 // pred_check
        %p603 = pneg %p175
      $region54: #{dpc_forward.9} parent=51 // pred_check_branch
        %605 = sbr.rel (%p603) target = $region56
      $region55: #{dpc_forward.9} parent=51 // pred_region
        %s606 = smul.u32 8, %s27
        %p607 = scmp.lt.s32.totalorder %s26, 1
        %s608 = scalar_select %p607, %s26, 1
        %p609 = scmp.lt.s32.totalorder %s606, 7
        %s610 = scalar_select %p609, %s606, 7
        %s611 = smul.addr %s608, 8
        %s612 = sadd.s32 %s610, %s611
        %s613 = smul.addr %s612, 8
        %s614 = scalar_lea.vmem %s5, %s613
      $region56: #{dpc_forward.9} parent=51 // pred_fallthru
        _
      // Predicated region
      $region57: #{dpc_forward.9} parent=51 // pred_check
        %p615 = pneg %p203
      $region58: #{dpc_forward.9} parent=51 // pred_check_branch
        %617 = sbr.rel (%p615) target = $region60
      $region59: #{dpc_forward.9} parent=51 // pred_region
        %s618 = smul.u32 8, %s27
        %p619 = scmp.lt.s32.totalorder %s26, 1
        %s620 = scalar_select %p619, %s26, 1
        %p621 = scmp.lt.s32.totalorder %s618, 7
        %s622 = scalar_select %p621, %s618, 7
        %s623 = smul.addr %s620, 8
        %s624 = sadd.s32 %s622, %s623
        %s625 = smul.addr %s624, 8
        %s626 = scalar_lea.vmem %s6, %s625
      $region60: #{dpc_forward.9} parent=51 // pred_fallthru
        _
    $region52: #{dpc_forward.9} parent=5 // pred_fallthru
      _
  $region6: #{dpc_forward.9} parent=0 // loop_footer
    %s19 = sadd.s32 1, %s15
  $region7: #{dpc_forward.9} parent=0 // loop_footer_branch
    %14 = sbr.rel target = $region3
  $region8: #{dpc_forward.9} parent=0 // loop_exit
    _

// kernel: dpc_forward.8
$region0: #{dpc_forward.8}
  #allocation0 [shape = 'u32[]', space=smem, size = 0x4, offset = 0x4, fixed_abs, tag = 'smem constant byte address 0x4 - core index']
  #allocation1 [shape = 'u32[144,128]{1,0:T(1,128)}', space=vmem, size = 0x12000, scoped, tag = 'internal scratch']
  #allocation2 [shape = 'f32[16,16]{1,0:T(8,128)}', space=vmem, size = 0x2000, scoped, tag = 'scratch operand']
  %s0 = inlined_call_operand.vmem [shape: f32[2,64,16], index: 0, kind: input, shape index: {}]
  %s1 = inlined_call_operand.vmem [shape: f32[2,16,16], index: 1, kind: output, shape index: {}]
  %s2 = sld [smem:[#allocation0]]
  $region45: #{dpc_forward.8} parent=0
    _
  %s4 = ssub.s32 1, %s2
  %s5 = scalar_select 0, %s4, %s2
  loop: start=0, step=1, limit=4
  $region2: #{dpc_forward.8} parent=0 // loop_pre_header
    _
  $region3: #{dpc_forward.8} parent=0 // loop_header
    %s7 = sphi 0, %s11
    %p8 = scmp.ge.s32.totalorder %s7, 4
    %s14 = sphi 0, %s26
    %s15 = sphi 0, %s22
    %s16 = sphi 0, %s14
    %s17 = sphi 0, %s15
    %s18 = sphi 0, %s16
    %s19 = sphi 0, %s17
    %s31 = sphi 0, %s33
    %s34 = sphi 0, %s31
    %s35 = sphi 0, %s34
    %s51 = sphi 0, %s35
    %s57 = sphi 0, %s59
    %s60 = sphi 0, %s57
    %s61 = sphi 0, %s60
    %s77 = sphi 0, %s61
  $region4: #{dpc_forward.8} parent=0 // loop_header_branch
    %10 = sbr.rel (%p8) target = $region8
  $region5: #{dpc_forward.8} parent=0 // loop_body
    %s12 = ssub.s32 %s7, 1
    %s13 = ssub.s32 %s7, 2
    %s20 = sadd.s32 1, %s15
    %p21 = scmp.ge.s32.totalorder %s20, 1
    %s22 = scalar_select %p21, 0, %s20
    %s23 = sadd.s32 1, %s14
    %s24 = scalar_select %p21, %s23, %s14
    %p25 = scmp.ge.s32.totalorder %s24, 2
    %s26 = scalar_select %p25, 0, %s24
    %s27 = ssub.s32 %s14, %s26
    %s28 = ssub.s32 %s15, %s22
    %s29 = sor.u32 %s27, %s28
    %p30 = scmp.eq.s32.totalorder %s29, 0
    %s32 = sadd.s32 %s31, 1
    %s33 = scalar_select %p30, %s31, %s32
    %p36 = pneg %p30
    %p37 = scmp.eq.s32.totalorder %s7, 1
    %p38 = por %p36, %p37
    %p39 = scmp.ne.s32.totalorder %s31, %s34
    %p40 = scmp.eq.s32.totalorder %s7, 0
    %p41 = por %p39, %p40
    %p42 = scmp.ne.s32.totalorder %s31, %s34
    %p43 = scmp.eq.s32.totalorder %s12, 1
    %p44 = por %p42, %p43
    %p45 = scmp.ne.s32.totalorder %s34, %s35
    %p46 = scmp.eq.s32.totalorder %s12, 0
    %p47 = por %p45, %p46
    %p48 = scmp.ne.s32.totalorder %s34, %s35
    %p49 = scmp.eq.s32.totalorder %s13, 1
    %p50 = por %p48, %p49
    %p52 = scmp.ne.s32.totalorder %s35, %s51
    %p53 = scmp.eq.s32.totalorder %s13, 0
    %p54 = por %p52, %p53
    %s55 = ssub.s32 %s14, %s26
    %p56 = scmp.eq.s32.totalorder %s55, 0
    %s58 = sadd.s32 %s57, 1
    %s59 = scalar_select %p56, %s57, %s58
    %p62 = pneg %p56
    %p63 = scmp.eq.s32.totalorder %s7, 1
    %p64 = por %p62, %p63
    %p65 = scmp.ne.s32.totalorder %s57, %s60
    %p66 = scmp.eq.s32.totalorder %s7, 0
    %p67 = por %p65, %p66
    %p68 = scmp.ne.s32.totalorder %s57, %s60
    %p69 = scmp.eq.s32.totalorder %s12, 1
    %p70 = por %p68, %p69
    %p71 = scmp.ne.s32.totalorder %s60, %s61
    %p72 = scmp.eq.s32.totalorder %s12, 0
    %p73 = por %p71, %p72
    %p74 = scmp.ne.s32.totalorder %s60, %s61
    %p75 = scmp.eq.s32.totalorder %s13, 1
    %p76 = por %p74, %p75
    %p78 = scmp.ne.s32.totalorder %s61, %s77
    %p79 = scmp.eq.s32.totalorder %s13, 0
    %p80 = por %p78, %p79
    %p81 = scmp.le.s32.totalorder 1, %s7
    %p82 = scmp.lt.s32.totalorder %s7, 3
    %p83 = pnand %p81, %p82
    %p84 = pneg %p83
    // Predicated region
    $region9: #{dpc_forward.8} parent=5 // pred_check
      _
    $region10: #{dpc_forward.8} parent=5 // pred_check_branch
      %86 = sbr.rel (%p83) target = $region12
    $region11: #{dpc_forward.8} parent=5 // pred_region
      %s87 = ssub.s32 %s7, 1
    $region12: #{dpc_forward.8} parent=5 // pred_fallthru
      _
    %p88 = scmp.lt.s32.totalorder %s7, 2
    // Predicated region
    $region13: #{dpc_forward.8} parent=5 // pred_check
      %p89 = pneg %p88
    $region14: #{dpc_forward.8} parent=5 // pred_check_branch
      %91 = sbr.rel (%p89) target = $region16
    $region15: #{dpc_forward.8} parent=5 // pred_region
      // Predicated region
      $region17: #{dpc_forward.8} parent=15 // pred_check
        %p92 = pneg %p41
      $region18: #{dpc_forward.8} parent=15 // pred_check_branch
        %94 = sbr.rel (%p92) target = $region20
      $region19: #{dpc_forward.8} parent=15 // pred_region
        %s95 = smul.u32 8, %s15
        %p96 = scmp.lt.s32.totalorder %s14, 1
        %s97 = scalar_select %p96, %s14, 1
        %p98 = scmp.lt.s32.totalorder %s95, 7
        %s99 = scalar_select %p98, %s95, 7
        %s100 = smul.addr %s97, 8
        %s101 = sadd.s32 %s99, %s100
        %s102 = smul.addr %s101, 8
        %s103 = scalar_lea.vmem %s0, %s102
        %s104 = smul.u32 8, %s15
      $region20: #{dpc_forward.8} parent=15 // pred_fallthru
        _
    $region16: #{dpc_forward.8} parent=5 // pred_fallthru
      _
    %p105 = scmp.le.s32.totalorder 1, %s7
    %p106 = scmp.lt.s32.totalorder %s7, 3
    %p107 = pnand %p105, %p106
    %p108 = pneg %p107
    // Predicated region
    $region21: #{dpc_forward.8} parent=5 // pred_check
      _
    $region22: #{dpc_forward.8} parent=5 // pred_check_branch
      %110 = sbr.rel (%p107) target = $region24
    $region23: #{dpc_forward.8} parent=5 // pred_region
      %s111 = ssub.s32 %s7, 1
      %s112 = smul.u32 8, %s17
      %p113 = scmp.lt.s32.totalorder %s16, 1
      %s114 = scalar_select %p113, %s16, 1
      %p115 = scmp.lt.s32.totalorder %s112, 7
      %s116 = scalar_select %p115, %s112, 7
      %s117 = smul.addr %s114, 8
      %s118 = sadd.s32 %s116, %s117
      %s119 = smul.addr %s118, 8
      %s120 = scalar_lea.vmem %s0, %s119
      %p121 = pneg %p47
      %p122 = pneg %p44
      %p123 = pneg %p73
      %p124 = pneg %p70
      %p125 = scmp.lt.s32.totalorder %s16, 1
      %s126 = scalar_select %p125, %s16, 1
      %s127 = smul.addr %s126, 2
      %s128 = smul.addr %s127, 8
      %s129 = scalar_lea.vmem %s1, %s128
      %s130 = smul.u32 8, %s17
      %p131 = scmp.lt.s32.totalorder %s16, 1
      %s132 = scalar_select %p131, %s16, 1
      %p133 = scmp.lt.s32.totalorder %s130, 7
      %s134 = scalar_select %p133, %s130, 7
      %s135 = smul.addr %s132, 8
      %s136 = sadd.s32 %s134, %s135
      %s137 = smul.addr %s136, 8
      %s138 = scalar_lea.vmem %s0, %s137
      %s139 = smul.u32 8, %s17
      %p140 = scmp.lt.s32.totalorder %s16, 1
      %s141 = scalar_select %p140, %s16, 1
      %s142 = smul.addr %s141, 2
      %s143 = smul.addr %s142, 8
      %s144 = scalar_lea.vmem %s1, %s143
      %p146 = scmp.eq.s32.totalorder %s17, 0
      // Predicated region
      $region25: #{dpc_forward.8} parent=23 // pred_check
        %p147 = pneg %p146
      $region26: #{dpc_forward.8} parent=23 // pred_check_branch
        %149 = sbr.rel (%p147) target = $region28
      $region27: #{dpc_forward.8} parent=23 // pred_region
        %vm150 = vcmask 130048
        %151 = vst.msk [vmem:[#allocation2] sm:$0xff] %vm150, 0.0
        %152 = vst.msk [vmem:[#allocation2 + $0x8] sm:$0xff] %vm150, 0.0
      $region28: #{dpc_forward.8} parent=23 // pred_fallthru
        _
      %v153 = vld [vmem:[%s138] sm:$0xff]
      %v154 = vld [vmem:[%s138 + $0x8] sm:$0xff]
      %v155 = vld [vmem:[%s138 + $0x10] sm:$0xff]
      %v156 = vld [vmem:[%s138 + $0x18] sm:$0xff]
      %v157 = vld [vmem:[%s138 + $0x20] sm:$0xff]
      %v158 = vld [vmem:[%s138 + $0x28] sm:$0xff]
      %v159 = vld [vmem:[%s138 + $0x30] sm:$0xff]
      %v160 = vld [vmem:[%s138 + $0x38] sm:$0xff]
      %v161 = vpack.c.bf16 %v154, %v153
      %v162 = vpack.c.bf16 %v156, %v155
      %v163 = vpack.c.bf16 %v158, %v157
      %v164 = vpack.c.bf16 %v160, %v159
      %v165 = vld [vmem:[#allocation2] sm:$0xff]
      %v166 = vld [vmem:[#allocation2 + $0x8] sm:$0xff]
      %167 = vxpose.xlu0.c.b16.start [1/8] %v161, 128
      %168 = vxpose.xlu0.c.b16.cont [2/8] %v162, 128
      %169 = vxpose.xlu0.c.b16.cont [3/8] %v163, 128
      %170 = vxpose.xlu0.c.b16.cont [4/8] %v164, 128
      %171 = vxpose.xlu0.c.b16.cont [5/8] 0, 128
      %172 = vxpose.xlu0.c.b16.cont [6/8] 0, 128
      %173 = vxpose.xlu0.c.b16.cont [7/8] 0, 128
      %174 = vxpose.xlu0.c.b16.end [8/8] 0, 128
      %v175 = vpop.trf.xlu0
      %v176 = vpop.trf.xlu0
      %v177 = vpop.trf.xlu0
      %v178 = vpop.trf.xlu0
      %v179 = vpop.trf.xlu0
      %v180 = vpop.trf.xlu0
      %v181 = vpop.trf.xlu0
      %v182 = vpop.trf.xlu0
      %vm183 = vcmask 523264
      %v185 = vsel %vm183, %v175, 0
      %187 = vmatprep.subr.bf16.mxu0 0
      %188 = vmatpush1.bf16.msra.mxu0 %v161
      %189 = vmatprep.subr.bf16.mxu0 0
      %190 = vmatpush1.bf16.msra.mxu0 %v162
      %191 = vmatprep.subr.bf16.mxu0 0
      %192 = vmatpush1.bf16.msra.mxu0 %v163
      %193 = vmatprep.subr.bf16.mxu0 0
      %194 = vmatpush1.bf16.msra.mxu0 %v164
      %195 = vmatprep.subr.bf16.mxu0 0
      %196 = vmatpush1.bf16.msra.mxu0 0
      %197 = vmatprep.subr.bf16.mxu0 0
      %198 = vmatpush1.bf16.msra.mxu0 0
      %199 = vmatprep.subr.bf16.mxu0 0
      %200 = vmatpush1.bf16.msra.mxu0 0
      %201 = vmatprep.subr.bf16.mxu0 0
      %202 = vmatpush1.bf16.msra.mxu0 0
      %203 = vmatprep.subr.bf16.mxu0 0
      %204 = vmatpush1.bf16.msra.mxu0 0
      %205 = vmatprep.subr.bf16.mxu0 0
      %206 = vmatpush1.bf16.msra.mxu0 0
      %207 = vmatprep.subr.bf16.mxu0 0
      %208 = vmatpush1.bf16.msra.mxu0 0
      %209 = vmatprep.subr.bf16.mxu0 0
      %210 = vmatpush1.bf16.msra.mxu0 0
      %211 = vmatprep.subr.bf16.mxu0 0
      %212 = vmatpush1.bf16.msra.mxu0 0
      %213 = vmatprep.subr.bf16.mxu0 0
      %214 = vmatpush1.bf16.msra.mxu0 0
      %215 = vmatprep.subr.bf16.mxu0 0
      %216 = vmatpush1.bf16.msra.mxu0 0
      %217 = vmatprep.subr.bf16.mxu0 0
      %218 = vmatpush1.bf16.msra.mxu0 0
      %219 = vmatprep.mubr.bf16.mxu0 0
      %220 = vmatmul.mubr.bf16.gmra.mrb[0].mxu0 %v185
      %v221 = vpop.f32.mrb[0].mxu0
      %v222 = vadd.f32 0.0, %v221
      %v223 = vpop.f32.mrb[0].mxu0
      %v224 = vpop.f32.mrb[0].mxu0
      %v225 = vadd.f32 0.0, %v224
      %v226 = vpop.f32.mrb[0].mxu0
      %227 = vdwg.mxu0
      %v228 = vadd.f32 %v165, %v222
      %v229 = vadd.f32 %v166, %v225
      %vm230 = vcmask 130048
      %231 = vst.msk [vmem:[#allocation2] sm:$0xff] %vm230, %v228
      %232 = vst.msk [vmem:[#allocation2 + $0x8] sm:$0xff] %vm230, %v229
      // Predicated region
      $region29: #{dpc_forward.8} parent=23 // pred_check
        %p233 = pneg %p146
      $region30: #{dpc_forward.8} parent=23 // pred_check_branch
        %235 = sbr.rel (%p233) target = $region32
      $region31: #{dpc_forward.8} parent=23 // pred_region
        %v236 = vld [vmem:[#allocation2] sm:$0xff]
        %v237 = vld [vmem:[#allocation2 + $0x8] sm:$0xff]
        %v238 = vsel %vm230, %v236, -inf
        %239 = vmax.xlane.f32.xlu0 %v238
        %v240 = vpop.xlane.xlu0 %239
        %v241 = vsel %vm230, %v237, -inf
        %242 = vmax.xlane.f32.xlu0 %v241
        %v243 = vpop.xlane.xlu0 %242
        %v244 = vsub.f32 %v240, %v236
        %v245 = vsub.f32 %v243, %v237
        %v246 = vsel %vm230, %v244, -inf
        %247 = vmax.xlane.f32.xlu0 %v246
        %v248 = vpop.xlane.xlu0 %247
        %v249 = vsel %vm230, %v245, -inf
        %250 = vmax.xlane.f32.xlu0 %v249
        %v251 = vpop.xlane.xlu0 %250
        %v252 = vsub.f32 %v244, %v248
        %v253 = vsub.f32 %v245, %v251
        %v254 = vmul.f32 %v252, 1.442695
        %v255 = vpow.pop %v254
        %v256 = vmul.f32 %v253, 1.442695
        %v257 = vpow.pop %v256
        %v258 = vsel %vm230, %v255, 0.0
        %259 = vadd.xlane.f32.xlu0 %v258
        %v260 = vpop.xlane.xlu0 %259
        %v261 = vsel %vm230, %v257, 0.0
        %262 = vadd.xlane.f32.xlu0 %v261
        %v263 = vpop.xlane.xlu0 %262
        %v264 = vrcp.pop %v260
        %v265 = vrcp.pop %v263
        %v266 = vmul.f32 %v255, %v264
        %v267 = vmul.f32 %v257, %v265
        %268 = vst.msk [vmem:[%s144] sm:$0xff] %vm230, %v266
        %269 = vst.msk [vmem:[%s144 + $0x8] sm:$0xff] %vm230, %v267
      $region32: #{dpc_forward.8} parent=23 // pred_fallthru
        _
      %p270 = scmp.lt.s32.totalorder %s16, 1
      %s271 = scalar_select %p270, %s16, 1
      %s272 = smul.addr %s271, 2
      %s273 = smul.addr %s272, 8
      %s274 = scalar_lea.vmem %s1, %s273
      // Predicated region
      $region33: #{dpc_forward.8} parent=23 // pred_check
        %p275 = pneg %p70
      $region34: #{dpc_forward.8} parent=23 // pred_check_branch
        %277 = sbr.rel (%p275) target = $region36
      $region35: #{dpc_forward.8} parent=23 // pred_region
        _
      $region36: #{dpc_forward.8} parent=23 // pred_fallthru
        _
    $region24: #{dpc_forward.8} parent=5 // pred_fallthru
      _
    %p278 = scmp.le.s32.totalorder 2, %s7
    // Predicated region
    $region37: #{dpc_forward.8} parent=5 // pred_check
      %p279 = pneg %p278
    $region38: #{dpc_forward.8} parent=5 // pred_check_branch
      %281 = sbr.rel (%p279) target = $region40
    $region39: #{dpc_forward.8} parent=5 // pred_region
      %s282 = ssub.s32 %s7, 2
      // Predicated region
      $region41: #{dpc_forward.8} parent=39 // pred_check
        %p283 = pneg %p76
      $region42: #{dpc_forward.8} parent=39 // pred_check_branch
        %285 = sbr.rel (%p283) target = $region44
      $region43: #{dpc_forward.8} parent=39 // pred_region
        %p286 = scmp.lt.s32.totalorder %s18, 1
        %s287 = scalar_select %p286, %s18, 1
        %s288 = smul.addr %s287, 2
        %s289 = smul.addr %s288, 8
        %s290 = scalar_lea.vmem %s1, %s289
      $region44: #{dpc_forward.8} parent=39 // pred_fallthru
        _
    $region40: #{dpc_forward.8} parent=5 // pred_fallthru
      _
  $region6: #{dpc_forward.8} parent=0 // loop_footer
    %s11 = sadd.s32 1, %s7
  $region7: #{dpc_forward.8} parent=0 // loop_footer_branch
    %6 = sbr.rel target = $region3
  $region8: #{dpc_forward.8} parent=0 // loop_exit
    _

// kernel: dpc_forward.7
$region0: #{dpc_forward.7}
  #allocation0 [shape = 'u32[]', space=smem, size = 0x4, offset = 0x4, fixed_abs, tag = 'smem constant byte address 0x4 - core index']
  #allocation1 [shape = 'u32[144,128]{1,0:T(1,128)}', space=vmem, size = 0x12000, scoped, tag = 'internal scratch']
  #allocation2 [shape = 'bf16[64,2]{1,0:T(16,128)(2,1)}', space=vmem, size = 0x4000, scoped, tag = 'scratch operand']
  #allocation3 [shape = 'f32[64,1]{1,0:T(8,128)}', space=vmem, size = 0x8000, scoped, tag = 'scratch operand']
  #allocation4 [shape = 'f32[64,1]{1,0:T(8,128)}', space=vmem, size = 0x8000, scoped, tag = 'scratch operand']
  #allocation5 [shape = 'f32[64,16]{1,0:T(8,128)}', space=vmem, size = 0x8000, scoped, tag = 'scratch operand']
  #allocation6 [shape = 'f32[1,1]{1,0:T(1,128)S(1)}', space=vmem, size = 0x200, scoped, tag = 'scoped memory for dpc_forward.7']
  %s0 = inlined_call_operand.vmem [shape: f32[2,64,16], index: 0, kind: input, shape index: {}, may-alias: {0,1}]
  %s1 = inlined_call_operand.vmem [shape: f32[2,64,16], index: 1, kind: input, shape index: {}, may-alias: {0,1}]
  %s2 = inlined_call_operand.vmem [shape: bf16[16,2], index: 2, kind: input, shape index: {}]
  %s3 = inlined_call_operand.vmem [shape: f32[1,2], index: 3, kind: input, shape index: {}]
  %s4 = inlined_call_operand.vmem [shape: bf16[16,2], index: 4, kind: input, shape index: {}]
  %s5 = inlined_call_operand.vmem [shape: f32[1,2], index: 5, kind: input, shape index: {}]
  %s6 = inlined_call_operand.vmem [shape: bf16[16,16], index: 6, kind: input, shape index: {}]
  %s7 = inlined_call_operand.vmem [shape: f32[1,16], index: 7, kind: input, shape index: {}]
  %s8 = inlined_call_operand.<no memory space> [shape: f32[1,1], index: 8, kind: input, shape index: {}]
  %s9 = inlined_call_operand.vmem [shape: bf16[16,16], index: 9, kind: input, shape index: {}]
  %s10 = inlined_call_operand.vmem [shape: f32[1,16], index: 10, kind: input, shape index: {}]
  %s11 = inlined_call_operand.vmem [shape: f32[2,64,16], index: 11, kind: output, shape index: {0}]
  %s12 = inlined_call_operand.vmem [shape: f32[2,64,16], index: 12, kind: output, shape index: {1}]
  %13 = xla_tuple %s11, %s12
  %s14 = sld [smem:[#allocation0]]
  $region93: #{dpc_forward.7} parent=0
    _
  %s16 = ssub.s32 1, %s14
  %s17 = scalar_select 0, %s16, %s14
  %v18 = vstv %s8
  %19 = vst [vmem:[#allocation6] sm:$0x1] %v18
  loop: start=0, step=1, limit=4
  $region2: #{dpc_forward.7} parent=0 // loop_pre_header
    _
  $region3: #{dpc_forward.7} parent=0 // loop_header
    %s21 = sphi 0, %s25
    %p22 = scmp.ge.s32.totalorder %s21, 4
    %s28 = sphi 0, %s47
    %s29 = sphi 0, %s43
    %s30 = sphi 0, %s39
    %s31 = sphi 0, %s28
    %s32 = sphi 0, %s29
    %s33 = sphi 0, %s30
    %s34 = sphi 0, %s31
    %s35 = sphi 0, %s32
    %s36 = sphi 0, %s33
    %s52 = sphi 0, %s54
    %s55 = sphi 0, %s52
    %s56 = sphi 0, %s55
    %s72 = sphi 0, %s56
    %s80 = sphi 0, %s82
    %s83 = sphi 0, %s80
    %s84 = sphi 0, %s83
    %s100 = sphi 0, %s84
    %s104 = sphi 0, %s104
    %s106 = sphi 0, %s104
    %s107 = sphi 0, %s106
    %s121 = sphi 0, %s107
    %s125 = sphi 0, %s125
    %s127 = sphi 0, %s125
    %s128 = sphi 0, %s127
    %s142 = sphi 0, %s128
    %s146 = sphi 0, %s146
    %s148 = sphi 0, %s146
    %s149 = sphi 0, %s148
    %s163 = sphi 0, %s149
    %s167 = sphi 0, %s167
    %s169 = sphi 0, %s167
    %s170 = sphi 0, %s169
    %s184 = sphi 0, %s170
    %s188 = sphi 0, %s188
    %s190 = sphi 0, %s188
    %s191 = sphi 0, %s190
    %s205 = sphi 0, %s191
    %s209 = sphi 0, %s209
    %s211 = sphi 0, %s209
    %s212 = sphi 0, %s211
    %s226 = sphi 0, %s212
    %s230 = sphi 0, %s230
    %s232 = sphi 0, %s230
    %s233 = sphi 0, %s232
    %s247 = sphi 0, %s233
    %s251 = sphi 0, %s251
    %s253 = sphi 0, %s251
    %s254 = sphi 0, %s253
    %s268 = sphi 0, %s254
    %s272 = sphi 0, %s272
    %s274 = sphi 0, %s272
    %s275 = sphi 0, %s274
    %s289 = sphi 0, %s275
    %s297 = sphi 0, %s299
    %s300 = sphi 0, %s297
    %s301 = sphi 0, %s300
    %s317 = sphi 0, %s301
    %s325 = sphi 0, %s327
    %s328 = sphi 0, %s325
    %s329 = sphi 0, %s328
    %s345 = sphi 0, %s329
  $region4: #{dpc_forward.7} parent=0 // loop_header_branch
    %24 = sbr.rel (%p22) target = $region8
  $region5: #{dpc_forward.7} parent=0 // loop_body
    %s26 = ssub.s32 %s21, 1
    %s27 = ssub.s32 %s21, 2
    %s37 = sadd.s32 1, %s30
    %p38 = scmp.ge.s32.totalorder %s37, 1
    %s39 = scalar_select %p38, 0, %s37
    %s40 = sadd.s32 1, %s29
    %s41 = scalar_select %p38, %s40, %s29
    %p42 = scmp.ge.s32.totalorder %s41, 1
    %s43 = scalar_select %p42, 0, %s41
    %s44 = sadd.s32 1, %s28
    %s45 = scalar_select %p42, %s44, %s28
    %p46 = scmp.ge.s32.totalorder %s45, 2
    %s47 = scalar_select %p46, 0, %s45
    %s48 = ssub.s32 %s28, %s47
    %s49 = ssub.s32 %s29, %s43
    %s50 = sor.u32 %s48, %s49
    %p51 = scmp.eq.s32.totalorder %s50, 0
    %s53 = sadd.s32 %s52, 1
    %s54 = scalar_select %p51, %s52, %s53
    %p57 = pneg %p51
    %p58 = scmp.eq.s32.totalorder %s21, 1
    %p59 = por %p57, %p58
    %p60 = scmp.ne.s32.totalorder %s52, %s55
    %p61 = scmp.eq.s32.totalorder %s21, 0
    %p62 = por %p60, %p61
    %p63 = scmp.ne.s32.totalorder %s52, %s55
    %p64 = scmp.eq.s32.totalorder %s26, 1
    %p65 = por %p63, %p64
    %p66 = scmp.ne.s32.totalorder %s55, %s56
    %p67 = scmp.eq.s32.totalorder %s26, 0
    %p68 = por %p66, %p67
    %p69 = scmp.ne.s32.totalorder %s55, %s56
    %p70 = scmp.eq.s32.totalorder %s27, 1
    %p71 = por %p69, %p70
    %p73 = scmp.ne.s32.totalorder %s56, %s72
    %p74 = scmp.eq.s32.totalorder %s27, 0
    %p75 = por %p73, %p74
    %s76 = ssub.s32 %s28, %s47
    %s77 = ssub.s32 %s30, %s39
    %s78 = sor.u32 %s76, %s77
    %p79 = scmp.eq.s32.totalorder %s78, 0
    %s81 = sadd.s32 %s80, 1
    %s82 = scalar_select %p79, %s80, %s81
    %p85 = pneg %p79
    %p86 = scmp.eq.s32.totalorder %s21, 1
    %p87 = por %p85, %p86
    %p88 = scmp.ne.s32.totalorder %s80, %s83
    %p89 = scmp.eq.s32.totalorder %s21, 0
    %p90 = por %p88, %p89
    %p91 = scmp.ne.s32.totalorder %s80, %s83
    %p92 = scmp.eq.s32.totalorder %s26, 1
    %p93 = por %p91, %p92
    %p94 = scmp.ne.s32.totalorder %s83, %s84
    %p95 = scmp.eq.s32.totalorder %s26, 0
    %p96 = por %p94, %p95
    %p97 = scmp.ne.s32.totalorder %s83, %s84
    %p98 = scmp.eq.s32.totalorder %s27, 1
    %p99 = por %p97, %p98
    %p101 = scmp.ne.s32.totalorder %s84, %s100
    %p102 = scmp.eq.s32.totalorder %s27, 0
    %p103 = por %p101, %p102
    %s105 = sadd.s32 %s104, 1
    %p108 = scmp.eq.s32.totalorder %s21, 1
    %p109 = scmp.ne.s32.totalorder %s104, %s106
    %p110 = scmp.eq.s32.totalorder %s21, 0
    %p111 = por %p109, %p110
    %p112 = scmp.ne.s32.totalorder %s104, %s106
    %p113 = scmp.eq.s32.totalorder %s26, 1
    %p114 = por %p112, %p113
    %p115 = scmp.ne.s32.totalorder %s106, %s107
    %p116 = scmp.eq.s32.totalorder %s26, 0
    %p117 = por %p115, %p116
    %p118 = scmp.ne.s32.totalorder %s106, %s107
    %p119 = scmp.eq.s32.totalorder %s27, 1
    %p120 = por %p118, %p119
    %p122 = scmp.ne.s32.totalorder %s107, %s121
    %p123 = scmp.eq.s32.totalorder %s27, 0
    %p124 = por %p122, %p123
    %s126 = sadd.s32 %s125, 1
    %p129 = scmp.eq.s32.totalorder %s21, 1
    %p130 = scmp.ne.s32.totalorder %s125, %s127
    %p131 = scmp.eq.s32.totalorder %s21, 0
    %p132 = por %p130, %p131
    %p133 = scmp.ne.s32.totalorder %s125, %s127
    %p134 = scmp.eq.s32.totalorder %s26, 1
    %p135 = por %p133, %p134
    %p136 = scmp.ne.s32.totalorder %s127, %s128
    %p137 = scmp.eq.s32.totalorder %s26, 0
    %p138 = por %p136, %p137
    %p139 = scmp.ne.s32.totalorder %s127, %s128
    %p140 = scmp.eq.s32.totalorder %s27, 1
    %p141 = por %p139, %p140
    %p143 = scmp.ne.s32.totalorder %s128, %s142
    %p144 = scmp.eq.s32.totalorder %s27, 0
    %p145 = por %p143, %p144
    %s147 = sadd.s32 %s146, 1
    %p150 = scmp.eq.s32.totalorder %s21, 1
    %p151 = scmp.ne.s32.totalorder %s146, %s148
    %p152 = scmp.eq.s32.totalorder %s21, 0
    %p153 = por %p151, %p152
    %p154 = scmp.ne.s32.totalorder %s146, %s148
    %p155 = scmp.eq.s32.totalorder %s26, 1
    %p156 = por %p154, %p155
    %p157 = scmp.ne.s32.totalorder %s148, %s149
    %p158 = scmp.eq.s32.totalorder %s26, 0
    %p159 = por %p157, %p158
    %p160 = scmp.ne.s32.totalorder %s148, %s149
    %p161 = scmp.eq.s32.totalorder %s27, 1
    %p162 = por %p160, %p161
    %p164 = scmp.ne.s32.totalorder %s149, %s163
    %p165 = scmp.eq.s32.totalorder %s27, 0
    %p166 = por %p164, %p165
    %s168 = sadd.s32 %s167, 1
    %p171 = scmp.eq.s32.totalorder %s21, 1
    %p172 = scmp.ne.s32.totalorder %s167, %s169
    %p173 = scmp.eq.s32.totalorder %s21, 0
    %p174 = por %p172, %p173
    %p175 = scmp.ne.s32.totalorder %s167, %s169
    %p176 = scmp.eq.s32.totalorder %s26, 1
    %p177 = por %p175, %p176
    %p178 = scmp.ne.s32.totalorder %s169, %s170
    %p179 = scmp.eq.s32.totalorder %s26, 0
    %p180 = por %p178, %p179
    %p181 = scmp.ne.s32.totalorder %s169, %s170
    %p182 = scmp.eq.s32.totalorder %s27, 1
    %p183 = por %p181, %p182
    %p185 = scmp.ne.s32.totalorder %s170, %s184
    %p186 = scmp.eq.s32.totalorder %s27, 0
    %p187 = por %p185, %p186
    %s189 = sadd.s32 %s188, 1
    %p192 = scmp.eq.s32.totalorder %s21, 1
    %p193 = scmp.ne.s32.totalorder %s188, %s190
    %p194 = scmp.eq.s32.totalorder %s21, 0
    %p195 = por %p193, %p194
    %p196 = scmp.ne.s32.totalorder %s188, %s190
    %p197 = scmp.eq.s32.totalorder %s26, 1
    %p198 = por %p196, %p197
    %p199 = scmp.ne.s32.totalorder %s190, %s191
    %p200 = scmp.eq.s32.totalorder %s26, 0
    %p201 = por %p199, %p200
    %p202 = scmp.ne.s32.totalorder %s190, %s191
    %p203 = scmp.eq.s32.totalorder %s27, 1
    %p204 = por %p202, %p203
    %p206 = scmp.ne.s32.totalorder %s191, %s205
    %p207 = scmp.eq.s32.totalorder %s27, 0
    %p208 = por %p206, %p207
    %s210 = sadd.s32 %s209, 1
    %p213 = scmp.eq.s32.totalorder %s21, 1
    %p214 = scmp.ne.s32.totalorder %s209, %s211
    %p215 = scmp.eq.s32.totalorder %s21, 0
    %p216 = por %p214, %p215
    %p217 = scmp.ne.s32.totalorder %s209, %s211
    %p218 = scmp.eq.s32.totalorder %s26, 1
    %p219 = por %p217, %p218
    %p220 = scmp.ne.s32.totalorder %s211, %s212
    %p221 = scmp.eq.s32.totalorder %s26, 0
    %p222 = por %p220, %p221
    %p223 = scmp.ne.s32.totalorder %s211, %s212
    %p224 = scmp.eq.s32.totalorder %s27, 1
    %p225 = por %p223, %p224
    %p227 = scmp.ne.s32.totalorder %s212, %s226
    %p228 = scmp.eq.s32.totalorder %s27, 0
    %p229 = por %p227, %p228
    %s231 = sadd.s32 %s230, 1
    %p234 = scmp.eq.s32.totalorder %s21, 1
    %p235 = scmp.ne.s32.totalorder %s230, %s232
    %p236 = scmp.eq.s32.totalorder %s21, 0
    %p237 = por %p235, %p236
    %p238 = scmp.ne.s32.totalorder %s230, %s232
    %p239 = scmp.eq.s32.totalorder %s26, 1
    %p240 = por %p238, %p239
    %p241 = scmp.ne.s32.totalorder %s232, %s233
    %p242 = scmp.eq.s32.totalorder %s26, 0
    %p243 = por %p241, %p242
    %p244 = scmp.ne.s32.totalorder %s232, %s233
    %p245 = scmp.eq.s32.totalorder %s27, 1
    %p246 = por %p244, %p245
    %p248 = scmp.ne.s32.totalorder %s233, %s247
    %p249 = scmp.eq.s32.totalorder %s27, 0
    %p250 = por %p248, %p249
    %s252 = sadd.s32 %s251, 1
    %p255 = scmp.eq.s32.totalorder %s21, 1
    %p256 = scmp.ne.s32.totalorder %s251, %s253
    %p257 = scmp.eq.s32.totalorder %s21, 0
    %p258 = por %p256, %p257
    %p259 = scmp.ne.s32.totalorder %s251, %s253
    %p260 = scmp.eq.s32.totalorder %s26, 1
    %p261 = por %p259, %p260
    %p262 = scmp.ne.s32.totalorder %s253, %s254
    %p263 = scmp.eq.s32.totalorder %s26, 0
    %p264 = por %p262, %p263
    %p265 = scmp.ne.s32.totalorder %s253, %s254
    %p266 = scmp.eq.s32.totalorder %s27, 1
    %p267 = por %p265, %p266
    %p269 = scmp.ne.s32.totalorder %s254, %s268
    %p270 = scmp.eq.s32.totalorder %s27, 0
    %p271 = por %p269, %p270
    %s273 = sadd.s32 %s272, 1
    %p276 = scmp.eq.s32.totalorder %s21, 1
    %p277 = scmp.ne.s32.totalorder %s272, %s274
    %p278 = scmp.eq.s32.totalorder %s21, 0
    %p279 = por %p277, %p278
    %p280 = scmp.ne.s32.totalorder %s272, %s274
    %p281 = scmp.eq.s32.totalorder %s26, 1
    %p282 = por %p280, %p281
    %p283 = scmp.ne.s32.totalorder %s274, %s275
    %p284 = scmp.eq.s32.totalorder %s26, 0
    %p285 = por %p283, %p284
    %p286 = scmp.ne.s32.totalorder %s274, %s275
    %p287 = scmp.eq.s32.totalorder %s27, 1
    %p288 = por %p286, %p287
    %p290 = scmp.ne.s32.totalorder %s275, %s289
    %p291 = scmp.eq.s32.totalorder %s27, 0
    %p292 = por %p290, %p291
    %s293 = ssub.s32 %s28, %s47
    %s294 = ssub.s32 %s29, %s43
    %s295 = sor.u32 %s293, %s294
    %p296 = scmp.eq.s32.totalorder %s295, 0
    %s298 = sadd.s32 %s297, 1
    %s299 = scalar_select %p296, %s297, %s298
    %p302 = pneg %p296
    %p303 = scmp.eq.s32.totalorder %s21, 1
    %p304 = por %p302, %p303
    %p305 = scmp.ne.s32.totalorder %s297, %s300
    %p306 = scmp.eq.s32.totalorder %s21, 0
    %p307 = por %p305, %p306
    %p308 = scmp.ne.s32.totalorder %s297, %s300
    %p309 = scmp.eq.s32.totalorder %s26, 1
    %p310 = por %p308, %p309
    %p311 = scmp.ne.s32.totalorder %s300, %s301
    %p312 = scmp.eq.s32.totalorder %s26, 0
    %p313 = por %p311, %p312
    %p314 = scmp.ne.s32.totalorder %s300, %s301
    %p315 = scmp.eq.s32.totalorder %s27, 1
    %p316 = por %p314, %p315
    %p318 = scmp.ne.s32.totalorder %s301, %s317
    %p319 = scmp.eq.s32.totalorder %s27, 0
    %p320 = por %p318, %p319
    %s321 = ssub.s32 %s28, %s47
    %s322 = ssub.s32 %s29, %s43
    %s323 = sor.u32 %s321, %s322
    %p324 = scmp.eq.s32.totalorder %s323, 0
    %s326 = sadd.s32 %s325, 1
    %s327 = scalar_select %p324, %s325, %s326
    %p330 = pneg %p324
    %p331 = scmp.eq.s32.totalorder %s21, 1
    %p332 = por %p330, %p331
    %p333 = scmp.ne.s32.totalorder %s325, %s328
    %p334 = scmp.eq.s32.totalorder %s21, 0
    %p335 = por %p333, %p334
    %p336 = scmp.ne.s32.totalorder %s325, %s328
    %p337 = scmp.eq.s32.totalorder %s26, 1
    %p338 = por %p336, %p337
    %p339 = scmp.ne.s32.totalorder %s328, %s329
    %p340 = scmp.eq.s32.totalorder %s26, 0
    %p341 = por %p339, %p340
    %p342 = scmp.ne.s32.totalorder %s328, %s329
    %p343 = scmp.eq.s32.totalorder %s27, 1
    %p344 = por %p342, %p343
    %p346 = scmp.ne.s32.totalorder %s329, %s345
    %p347 = scmp.eq.s32.totalorder %s27, 0
    %p348 = por %p346, %p347
    %p349 = scmp.le.s32.totalorder 1, %s21
    %p350 = scmp.lt.s32.totalorder %s21, 3
    %p351 = pnand %p349, %p350
    %p352 = pneg %p351
    // Predicated region
    $region9: #{dpc_forward.7} parent=5 // pred_check
      _
    $region10: #{dpc_forward.7} parent=5 // pred_check_branch
      %354 = sbr.rel (%p351) target = $region12
    $region11: #{dpc_forward.7} parent=5 // pred_region
      %s355 = ssub.s32 %s21, 1
      // Predicated region
      $region13: #{dpc_forward.7} parent=11 // pred_check
        %p356 = pneg %p117
      $region14: #{dpc_forward.7} parent=11 // pred_check_branch
        %358 = sbr.rel (%p356) target = $region16
      $region15: #{dpc_forward.7} parent=11 // pred_region
        _
      $region16: #{dpc_forward.7} parent=11 // pred_fallthru
        _
      // Predicated region
      $region17: #{dpc_forward.7} parent=11 // pred_check
        %p359 = pneg %p138
      $region18: #{dpc_forward.7} parent=11 // pred_check_branch
        %361 = sbr.rel (%p359) target = $region20
      $region19: #{dpc_forward.7} parent=11 // pred_region
        _
      $region20: #{dpc_forward.7} parent=11 // pred_fallthru
        _
      // Predicated region
      $region21: #{dpc_forward.7} parent=11 // pred_check
        %p362 = pneg %p159
      $region22: #{dpc_forward.7} parent=11 // pred_check_branch
        %364 = sbr.rel (%p362) target = $region24
      $region23: #{dpc_forward.7} parent=11 // pred_region
        _
      $region24: #{dpc_forward.7} parent=11 // pred_fallthru
        _
      // Predicated region
      $region25: #{dpc_forward.7} parent=11 // pred_check
        %p365 = pneg %p180
      $region26: #{dpc_forward.7} parent=11 // pred_check_branch
        %367 = sbr.rel (%p365) target = $region28
      $region27: #{dpc_forward.7} parent=11 // pred_region
        _
      $region28: #{dpc_forward.7} parent=11 // pred_fallthru
        _
      // Predicated region
      $region29: #{dpc_forward.7} parent=11 // pred_check
        %p368 = pneg %p201
      $region30: #{dpc_forward.7} parent=11 // pred_check_branch
        %370 = sbr.rel (%p368) target = $region32
      $region31: #{dpc_forward.7} parent=11 // pred_region
        _
      $region32: #{dpc_forward.7} parent=11 // pred_fallthru
        _
      // Predicated region
      $region33: #{dpc_forward.7} parent=11 // pred_check
        %p371 = pneg %p222
      $region34: #{dpc_forward.7} parent=11 // pred_check_branch
        %373 = sbr.rel (%p371) target = $region36
      $region35: #{dpc_forward.7} parent=11 // pred_region
        _
      $region36: #{dpc_forward.7} parent=11 // pred_fallthru
        _
      // Predicated region
      $region37: #{dpc_forward.7} parent=11 // pred_check
        %p374 = pneg %p243
      $region38: #{dpc_forward.7} parent=11 // pred_check_branch
        %376 = sbr.rel (%p374) target = $region40
      $region39: #{dpc_forward.7} parent=11 // pred_region
        _
      $region40: #{dpc_forward.7} parent=11 // pred_fallthru
        _
      // Predicated region
      $region41: #{dpc_forward.7} parent=11 // pred_check
        %p377 = pneg %p264
      $region42: #{dpc_forward.7} parent=11 // pred_check_branch
        %379 = sbr.rel (%p377) target = $region44
      $region43: #{dpc_forward.7} parent=11 // pred_region
        _
      $region44: #{dpc_forward.7} parent=11 // pred_fallthru
        _
      // Predicated region
      $region45: #{dpc_forward.7} parent=11 // pred_check
        %p380 = pneg %p285
      $region46: #{dpc_forward.7} parent=11 // pred_check_branch
        %382 = sbr.rel (%p380) target = $region48
      $region47: #{dpc_forward.7} parent=11 // pred_region
        _
      $region48: #{dpc_forward.7} parent=11 // pred_fallthru
        _
    $region12: #{dpc_forward.7} parent=5 // pred_fallthru
      _
    %p383 = scmp.lt.s32.totalorder %s21, 2
    // Predicated region
    $region49: #{dpc_forward.7} parent=5 // pred_check
      %p384 = pneg %p383
    $region50: #{dpc_forward.7} parent=5 // pred_check_branch
      %386 = sbr.rel (%p384) target = $region52
    $region51: #{dpc_forward.7} parent=5 // pred_region
      // Predicated region
      $region53: #{dpc_forward.7} parent=51 // pred_check
        %p387 = pneg %p62
      $region54: #{dpc_forward.7} parent=51 // pred_check_branch
        %389 = sbr.rel (%p387) target = $region56
      $region55: #{dpc_forward.7} parent=51 // pred_region
        %s390 = smul.u32 8, %s29
        %p391 = scmp.lt.s32.totalorder %s28, 1
        %s392 = scalar_select %p391, %s28, 1
        %p393 = scmp.lt.s32.totalorder %s390, 7
        %s394 = scalar_select %p393, %s390, 7
        %s395 = smul.addr %s392, 8
        %s396 = sadd.s32 %s394, %s395
        %s397 = smul.addr %s396, 8
        %s398 = scalar_lea.vmem %s0, %s397
        %s399 = smul.u32 8, %s29
      $region56: #{dpc_forward.7} parent=51 // pred_fallthru
        _
      // Predicated region
      $region57: #{dpc_forward.7} parent=51 // pred_check
        %p400 = pneg %p90
      $region58: #{dpc_forward.7} parent=51 // pred_check_branch
        %402 = sbr.rel (%p400) target = $region60
      $region59: #{dpc_forward.7} parent=51 // pred_region
        %s403 = smul.u32 8, %s30
        %p404 = scmp.lt.s32.totalorder %s28, 1
        %s405 = scalar_select %p404, %s28, 1
        %p406 = scmp.lt.s32.totalorder %s403, 7
        %s407 = scalar_select %p406, %s403, 7
        %s408 = smul.addr %s405, 8
        %s409 = sadd.s32 %s407, %s408
        %s410 = smul.addr %s409, 8
        %s411 = scalar_lea.vmem %s1, %s410
        %s412 = smul.u32 8, %s30
      $region60: #{dpc_forward.7} parent=51 // pred_fallthru
        _
    $region52: #{dpc_forward.7} parent=5 // pred_fallthru
      _
    %p413 = scmp.le.s32.totalorder 1, %s21
    %p414 = scmp.lt.s32.totalorder %s21, 3
    %p415 = pnand %p413, %p414
    %p416 = pneg %p415
    // Predicated region
    $region61: #{dpc_forward.7} parent=5 // pred_check
      _
    $region62: #{dpc_forward.7} parent=5 // pred_check_branch
      %418 = sbr.rel (%p415) target = $region64
    $region63: #{dpc_forward.7} parent=5 // pred_region
      %s419 = ssub.s32 %s21, 1
      %s420 = smul.u32 8, %s32
      %p421 = scmp.lt.s32.totalorder %s31, 1
      %s422 = scalar_select %p421, %s31, 1
      %p423 = scmp.lt.s32.totalorder %s420, 7
      %s424 = scalar_select %p423, %s420, 7
      %s425 = smul.addr %s422, 8
      %s426 = sadd.s32 %s424, %s425
      %s427 = smul.addr %s426, 8
      %s428 = scalar_lea.vmem %s0, %s427
      %p429 = pneg %p68
      %p430 = pneg %p65
      %s431 = smul.u32 8, %s33
      %p432 = scmp.lt.s32.totalorder %s31, 1
      %s433 = scalar_select %p432, %s31, 1
      %p434 = scmp.lt.s32.totalorder %s431, 7
      %s435 = scalar_select %p434, %s431, 7
      %s436 = smul.addr %s433, 8
      %s437 = sadd.s32 %s435, %s436
      %s438 = smul.addr %s437, 8
      %s439 = scalar_lea.vmem %s1, %s438
      %p440 = pneg %p96
      %p441 = pneg %p93
      %p442 = pneg %p117
      %p443 = pneg %p114
      %p444 = pneg %p138
      %p445 = pneg %p135
      %p446 = pneg %p159
      %p447 = pneg %p156
      %p448 = pneg %p180
      %p449 = pneg %p177
      %p450 = pneg %p201
      %p451 = pneg %p198
      %p452 = pneg %p222
      %p453 = pneg %p219
      %p454 = pneg %p243
      %p455 = pneg %p240
      %p456 = pneg %p264
      %p457 = pneg %p261
      %p458 = pneg %p285
      %p459 = pneg %p282
      %p460 = pneg %p313
      %p461 = pneg %p310
      %s462 = smul.u32 8, %s32
      %p463 = scmp.lt.s32.totalorder %s31, 1
      %s464 = scalar_select %p463, %s31, 1
      %p465 = scmp.lt.s32.totalorder %s462, 7
      %s466 = scalar_select %p465, %s462, 7
      %s467 = smul.addr %s464, 8
      %s468 = sadd.s32 %s466, %s467
      %s469 = smul.addr %s468, 8
      %s470 = scalar_lea.vmem %s11, %s469
      %p471 = pneg %p341
      %p472 = pneg %p338
      %s473 = smul.u32 8, %s32
      %p474 = scmp.lt.s32.totalorder %s31, 1
      %s475 = scalar_select %p474, %s31, 1
      %p476 = scmp.lt.s32.totalorder %s473, 7
      %s477 = scalar_select %p476, %s473, 7
      %s478 = smul.addr %s475, 8
      %s479 = sadd.s32 %s477, %s478
      %s480 = smul.addr %s479, 8
      %s481 = scalar_lea.vmem %s12, %s480
      %s482 = smul.u32 8, %s32
      %p483 = scmp.lt.s32.totalorder %s31, 1
      %s484 = scalar_select %p483, %s31, 1
      %p485 = scmp.lt.s32.totalorder %s482, 7
      %s486 = scalar_select %p485, %s482, 7
      %s487 = smul.addr %s484, 8
      %s488 = sadd.s32 %s486, %s487
      %s489 = smul.addr %s488, 8
      %s490 = scalar_lea.vmem %s0, %s489
      %s491 = smul.u32 8, %s32
      %s492 = smul.u32 8, %s33
      %p493 = scmp.lt.s32.totalorder %s31, 1
      %s494 = scalar_select %p493, %s31, 1
      %p495 = scmp.lt.s32.totalorder %s492, 7
      %s496 = scalar_select %p495, %s492, 7
      %s497 = smul.addr %s494, 8
      %s498 = sadd.s32 %s496, %s497
      %s499 = smul.addr %s498, 8
      %s500 = scalar_lea.vmem %s1, %s499
      %s501 = smul.u32 8, %s33
      %s502 = smul.u32 8, %s32
      %p503 = scmp.lt.s32.totalorder %s31, 1
      %s504 = scalar_select %p503, %s31, 1
      %p505 = scmp.lt.s32.totalorder %s502, 7
      %s506 = scalar_select %p505, %s502, 7
      %s507 = smul.addr %s504, 8
      %s508 = sadd.s32 %s506, %s507
      %s509 = smul.addr %s508, 8
      %s510 = scalar_lea.vmem %s11, %s509
      %s511 = smul.u32 8, %s32
      %s512 = smul.u32 8, %s32
      %p513 = scmp.lt.s32.totalorder %s31, 1
      %s514 = scalar_select %p513, %s31, 1
      %p515 = scmp.lt.s32.totalorder %s512, 7
      %s516 = scalar_select %p515, %s512, 7
      %s517 = smul.addr %s514, 8
      %s518 = sadd.s32 %s516, %s517
      %s519 = smul.addr %s518, 8
      %s520 = scalar_lea.vmem %s12, %s519
      %s521 = smul.u32 8, %s32
      %p523 = scmp.eq.s32.totalorder %s33, 0
      // Predicated region
      $region65: #{dpc_forward.7} parent=63 // pred_check
        %p524 = pneg %p523
      $region66: #{dpc_forward.7} parent=63 // pred_check_branch
        %526 = sbr.rel (%p524) target = $region68
      $region67: #{dpc_forward.7} parent=63 // pred_region
        %v527 = vld [vmem:[%s490] sm:$0xff]
        %v528 = vld [vmem:[%s490 + $0x8] sm:$0xff]
        %v529 = vld [vmem:[%s490 + $0x10] sm:$0xff]
        %v530 = vld [vmem:[%s490 + $0x18] sm:$0xff]
        %v531 = vld [vmem:[%s490 + $0x20] sm:$0xff]
        %v532 = vld [vmem:[%s490 + $0x28] sm:$0xff]
        %v533 = vld [vmem:[%s490 + $0x30] sm:$0xff]
        %v534 = vld [vmem:[%s490 + $0x38] sm:$0xff]
        %v535 = vpack.c.bf16 %v528, %v527
        %v536 = vpack.c.bf16 %v530, %v529
        %v537 = vpack.c.bf16 %v532, %v531
        %v538 = vpack.c.bf16 %v534, %v533
        %v539 = vld [vmem:[%s2] sm:$0xf]
        %v540 = vld [vmem:[%s2 + $0x4] sm:$0xf]
        %v541 = vld [vmem:[%s3] sm:$0x1]
        %v543 = vlaneseq
        %v544 = vshrl.u32 %v543, 7
        %v545 = vsub.s32 0, %v544
        %v546 = vrot.slane %v541, %v545
        %v550 = vunpack.c.l.b16 %v539
        %v551 = vunpack.c.l.b16 %v540
        %v552 = vpack.c.b16 %v551, %v550
        %vm554 = vcmask 130048
        %v556 = vsel %vm554, %v535, 0
        %v559 = vsel %vm554, %v536, 0
        %v562 = vsel %vm554, %v537, 0
        %v565 = vsel %vm554, %v538, 0
        %567 = vmatprep.subr.bf16.mxu0 0
        %568 = vmatpush1.bf16.msra.mxu0 %v552
        %569 = vmatprep.subr.bf16.mxu0 0
        %570 = vmatpush1.bf16.msra.mxu0 0
        %571 = vmatprep.subr.bf16.mxu0 0
        %572 = vmatpush1.bf16.msra.mxu0 0
        %573 = vmatprep.subr.bf16.mxu0 0
        %574 = vmatpush1.bf16.msra.mxu0 0
        %575 = vmatprep.subr.bf16.mxu0 0
        %576 = vmatpush1.bf16.msra.mxu0 0
        %577 = vmatprep.subr.bf16.mxu0 0
        %578 = vmatpush1.bf16.msra.mxu0 0
        %579 = vmatprep.subr.bf16.mxu0 0
        %580 = vmatpush1.bf16.msra.mxu0 0
        %581 = vmatprep.subr.bf16.mxu0 0
        %582 = vmatpush1.bf16.msra.mxu0 0
        %583 = vmatprep.subr.bf16.mxu0 0
        %584 = vmatpush1.bf16.msra.mxu0 0
        %585 = vmatprep.subr.bf16.mxu0 0
        %586 = vmatpush1.bf16.msra.mxu0 0
        %587 = vmatprep.subr.bf16.mxu0 0
        %588 = vmatpush1.bf16.msra.mxu0 0
        %589 = vmatprep.subr.bf16.mxu0 0
        %590 = vmatpush1.bf16.msra.mxu0 0
        %591 = vmatprep.subr.bf16.mxu0 0
        %592 = vmatpush1.bf16.msra.mxu0 0
        %593 = vmatprep.subr.bf16.mxu0 0
        %594 = vmatpush1.bf16.msra.mxu0 0
        %595 = vmatprep.subr.bf16.mxu0 0
        %596 = vmatpush1.bf16.msra.mxu0 0
        %597 = vmatprep.subr.bf16.mxu0 0
        %598 = vmatpush1.bf16.msra.mxu0 0
        %599 = vmatprep.mubr.bf16.mxu0 0
        %600 = vmatmul.mubr.bf16.gmra.mrb[0].mxu0 %v556
        %v601 = vpop.f32.mrb[0].mxu0
        %v602 = vadd.f32 %v546, %v601
        %v603 = vpop.f32.mrb[0].mxu0
        %v604 = vpop.f32.mrb[0].mxu0
        %v605 = vadd.f32 %v546, %v604
        %v606 = vpop.f32.mrb[0].mxu0
        %607 = vmatprep.mubr.bf16.mxu0 0
        %608 = vmatmul.mubr.bf16.gmra.mrb[0].mxu0 %v559
        %v609 = vpop.f32.mrb[0].mxu0
        %v610 = vadd.f32 %v546, %v609
        %v611 = vpop.f32.mrb[0].mxu0
        %v612 = vpop.f32.mrb[0].mxu0
        %v613 = vadd.f32 %v546, %v612
        %v614 = vpop.f32.mrb[0].mxu0
        %615 = vmatprep.mubr.bf16.mxu0 0
        %616 = vmatmul.mubr.bf16.gmra.mrb[0].mxu0 %v562
        %v617 = vpop.f32.mrb[0].mxu0
        %v618 = vadd.f32 %v546, %v617
        %v619 = vpop.f32.mrb[0].mxu0
        %v620 = vpop.f32.mrb[0].mxu0
        %v621 = vadd.f32 %v546, %v620
        %v622 = vpop.f32.mrb[0].mxu0
        %623 = vmatprep.mubr.bf16.mxu0 0
        %624 = vmatmul.mubr.bf16.gmra.mrb[0].mxu0 %v565
        %v625 = vpop.f32.mrb[0].mxu0
        %v626 = vadd.f32 %v546, %v625
        %v627 = vpop.f32.mrb[0].mxu0
        %v628 = vpop.f32.mrb[0].mxu0
        %v629 = vadd.f32 %v546, %v628
        %v630 = vpop.f32.mrb[0].mxu0
        %631 = vdwg.mxu0
        %v632 = vpack.c.bf16 %v605, %v602
        %v633 = vpack.c.bf16 %v613, %v610
        %v634 = vpack.c.bf16 %v621, %v618
        %v635 = vpack.c.bf16 %v629, %v626
        %vm636 = vcmask 15360
        %637 = vst.msk [vmem:[#allocation2] sm:$0xff] %vm636, %v632
        %638 = vst.msk [vmem:[#allocation2 + $0x8] sm:$0xff] %vm636, %v633
        %639 = vst.msk [vmem:[#allocation2 + $0x10] sm:$0xff] %vm636, %v634
        %640 = vst.msk [vmem:[#allocation2 + $0x18] sm:$0xff] %vm636, %v635
        %vm641 = vcmask 7168
        %642 = vst.msk [vmem:[#allocation3] sm:$0xff] %vm641, -inf
        %643 = vst.msk [vmem:[#allocation3 + $0x8] sm:$0xff] %vm641, -inf
        %644 = vst.msk [vmem:[#allocation3 + $0x10] sm:$0xff] %vm641, -inf
        %645 = vst.msk [vmem:[#allocation3 + $0x18] sm:$0xff] %vm641, -inf
        %646 = vst.msk [vmem:[#allocation3 + $0x20] sm:$0xff] %vm641, -inf
        %647 = vst.msk [vmem:[#allocation3 + $0x28] sm:$0xff] %vm641, -inf
        %648 = vst.msk [vmem:[#allocation3 + $0x30] sm:$0xff] %vm641, -inf
        %649 = vst.msk [vmem:[#allocation3 + $0x38] sm:$0xff] %vm641, -inf
        %650 = vst.msk [vmem:[#allocation4] sm:$0xff] %vm641, 0.0
        %651 = vst.msk [vmem:[#allocation4 + $0x8] sm:$0xff] %vm641, 0.0
        %652 = vst.msk [vmem:[#allocation4 + $0x10] sm:$0xff] %vm641, 0.0
        %653 = vst.msk [vmem:[#allocation4 + $0x18] sm:$0xff] %vm641, 0.0
        %654 = vst.msk [vmem:[#allocation4 + $0x20] sm:$0xff] %vm641, 0.0
        %655 = vst.msk [vmem:[#allocation4 + $0x28] sm:$0xff] %vm641, 0.0
        %656 = vst.msk [vmem:[#allocation4 + $0x30] sm:$0xff] %vm641, 0.0
        %657 = vst.msk [vmem:[#allocation4 + $0x38] sm:$0xff] %vm641, 0.0
        %658 = vst.msk [vmem:[#allocation5] sm:$0xff] %vm554, 0.0
        %659 = vst.msk [vmem:[#allocation5 + $0x8] sm:$0xff] %vm554, 0.0
        %660 = vst.msk [vmem:[#allocation5 + $0x10] sm:$0xff] %vm554, 0.0
        %661 = vst.msk [vmem:[#allocation5 + $0x18] sm:$0xff] %vm554, 0.0
        %662 = vst.msk [vmem:[#allocation5 + $0x20] sm:$0xff] %vm554, 0.0
        %663 = vst.msk [vmem:[#allocation5 + $0x28] sm:$0xff] %vm554, 0.0
        %664 = vst.msk [vmem:[#allocation5 + $0x30] sm:$0xff] %vm554, 0.0
        %665 = vst.msk [vmem:[#allocation5 + $0x38] sm:$0xff] %vm554, 0.0
      $region68: #{dpc_forward.7} parent=63 // pred_fallthru
        _
      %v666 = vld [vmem:[%s500] sm:$0xff]
      %v667 = vld [vmem:[%s500 + $0x8] sm:$0xff]
      %v668 = vld [vmem:[%s500 + $0x10] sm:$0xff]
      %v669 = vld [vmem:[%s500 + $0x18] sm:$0xff]
      %v670 = vld [vmem:[%s500 + $0x20] sm:$0xff]
      %v671 = vld [vmem:[%s500 + $0x28] sm:$0xff]
      %v672 = vld [vmem:[%s500 + $0x30] sm:$0xff]
      %v673 = vld [vmem:[%s500 + $0x38] sm:$0xff]
      %v674 = vpack.c.bf16 %v667, %v666
      %v675 = vpack.c.bf16 %v669, %v668
      %v676 = vpack.c.bf16 %v671, %v670
      %v677 = vpack.c.bf16 %v673, %v672
      %v678 = vld [vmem:[%s4] sm:$0xf]
      %v679 = vld [vmem:[%s4 + $0x4] sm:$0xf]
      %v680 = vld [vmem:[%s5] sm:$0x1]
      %v682 = vlaneseq
      %v683 = vshrl.u32 %v682, 7
      %v684 = vsub.s32 0, %v683
      %v685 = vrot.slane %v680, %v684
      %v689 = vunpack.c.l.b16 %v678
      %v690 = vunpack.c.l.b16 %v679
      %v691 = vpack.c.b16 %v690, %v689
      %vm693 = vcmask 130048
      %v695 = vsel %vm693, %v674, 0
      %v698 = vsel %vm693, %v675, 0
      %v701 = vsel %vm693, %v676, 0
      %v704 = vsel %vm693, %v677, 0
      %706 = vmatprep.subr.bf16.mxu0 0
      %707 = vmatpush1.bf16.msra.mxu0 %v691
      %708 = vmatprep.subr.bf16.mxu0 0
      %709 = vmatpush1.bf16.msra.mxu0 0
      %710 = vmatprep.subr.bf16.mxu0 0
      %711 = vmatpush1.bf16.msra.mxu0 0
      %712 = vmatprep.subr.bf16.mxu0 0
      %713 = vmatpush1.bf16.msra.mxu0 0
      %714 = vmatprep.subr.bf16.mxu0 0
      %715 = vmatpush1.bf16.msra.mxu0 0
      %716 = vmatprep.subr.bf16.mxu0 0
      %717 = vmatpush1.bf16.msra.mxu0 0
      %718 = vmatprep.subr.bf16.mxu0 0
      %719 = vmatpush1.bf16.msra.mxu0 0
      %720 = vmatprep.subr.bf16.mxu0 0
      %721 = vmatpush1.bf16.msra.mxu0 0
      %722 = vmatprep.subr.bf16.mxu0 0
      %723 = vmatpush1.bf16.msra.mxu0 0
      %724 = vmatprep.subr.bf16.mxu0 0
      %725 = vmatpush1.bf16.msra.mxu0 0
      %726 = vmatprep.subr.bf16.mxu0 0
      %727 = vmatpush1.bf16.msra.mxu0 0
      %728 = vmatprep.subr.bf16.mxu0 0
      %729 = vmatpush1.bf16.msra.mxu0 0
      %730 = vmatprep.subr.bf16.mxu0 0
      %731 = vmatpush1.bf16.msra.mxu0 0
      %732 = vmatprep.subr.bf16.mxu0 0
      %733 = vmatpush1.bf16.msra.mxu0 0
      %734 = vmatprep.subr.bf16.mxu0 0
      %735 = vmatpush1.bf16.msra.mxu0 0
      %736 = vmatprep.subr.bf16.mxu0 0
      %737 = vmatpush1.bf16.msra.mxu0 0
      %738 = vmatprep.mubr.bf16.mxu0 0
      %739 = vmatmul.mubr.bf16.gmra.mrb[0].mxu0 %v695
      %v740 = vpop.f32.mrb[0].mxu0
      %v741 = vadd.f32 %v685, %v740
      %v742 = vpop.f32.mrb[0].mxu0
      %v743 = vpop.f32.mrb[0].mxu0
      %v744 = vadd.f32 %v685, %v743
      %v745 = vpop.f32.mrb[0].mxu0
      %746 = vmatprep.mubr.bf16.mxu0 0
      %747 = vmatmul.mubr.bf16.gmra.mrb[0].mxu0 %v698
      %v748 = vpop.f32.mrb[0].mxu0
      %v749 = vadd.f32 %v685, %v748
      %v750 = vpop.f32.mrb[0].mxu0
      %v751 = vpop.f32.mrb[0].mxu0
      %v752 = vadd.f32 %v685, %v751
      %v753 = vpop.f32.mrb[0].mxu0
      %754 = vmatprep.mubr.bf16.mxu0 0
      %755 = vmatmul.mubr.bf16.gmra.mrb[0].mxu0 %v701
      %v756 = vpop.f32.mrb[0].mxu0
      %v757 = vadd.f32 %v685, %v756
      %v758 = vpop.f32.mrb[0].mxu0
      %v759 = vpop.f32.mrb[0].mxu0
      %v760 = vadd.f32 %v685, %v759
      %v761 = vpop.f32.mrb[0].mxu0
      %762 = vmatprep.mubr.bf16.mxu0 0
      %763 = vmatmul.mubr.bf16.gmra.mrb[0].mxu0 %v704
      %v764 = vpop.f32.mrb[0].mxu0
      %v765 = vadd.f32 %v685, %v764
      %v766 = vpop.f32.mrb[0].mxu0
      %v767 = vpop.f32.mrb[0].mxu0
      %v768 = vadd.f32 %v685, %v767
      %v769 = vpop.f32.mrb[0].mxu0
      %770 = vdwg.mxu0
      %v771 = vld [vmem:[%s6] sm:$0xf]
      %v772 = vld [vmem:[%s6 + $0x4] sm:$0xf]
      %v773 = vld [vmem:[%s7] sm:$0x1]
      %v775 = vlaneseq
      %v776 = vshrl.u32 %v775, 7
      %v777 = vsub.s32 0, %v776
      %v778 = vrot.slane %v773, %v777
      %v782 = vunpack.c.l.b16 %v771
      %v783 = vunpack.c.l.b16 %v772
      %v784 = vpack.c.b16 %v783, %v782
      %786 = vmatprep.subr.bf16.mxu0 0
      %787 = vmatpush1.bf16.msra.mxu0 %v784
      %788 = vmatprep.subr.bf16.mxu0 0
      %789 = vmatpush1.bf16.msra.mxu0 0
      %790 = vmatprep.subr.bf16.mxu0 0
      %791 = vmatpush1.bf16.msra.mxu0 0
      %792 = vmatprep.subr.bf16.mxu0 0
      %793 = vmatpush1.bf16.msra.mxu0 0
      %794 = vmatprep.subr.bf16.mxu0 0
      %795 = vmatpush1.bf16.msra.mxu0 0
      %796 = vmatprep.subr.bf16.mxu0 0
      %797 = vmatpush1.bf16.msra.mxu0 0
      %798 = vmatprep.subr.bf16.mxu0 0
      %799 = vmatpush1.bf16.msra.mxu0 0
      %800 = vmatprep.subr.bf16.mxu0 0
      %801 = vmatpush1.bf16.msra.mxu0 0
      %802 = vmatprep.subr.bf16.mxu0 0
      %803 = vmatpush1.bf16.msra.mxu0 0
      %804 = vmatprep.subr.bf16.mxu0 0
      %805 = vmatpush1.bf16.msra.mxu0 0
      %806 = vmatprep.subr.bf16.mxu0 0
      %807 = vmatpush1.bf16.msra.mxu0 0
      %808 = vmatprep.subr.bf16.mxu0 0
      %809 = vmatpush1.bf16.msra.mxu0 0
      %810 = vmatprep.subr.bf16.mxu0 0
      %811 = vmatpush1.bf16.msra.mxu0 0
      %812 = vmatprep.subr.bf16.mxu0 0
      %813 = vmatpush1.bf16.msra.mxu0 0
      %814 = vmatprep.subr.bf16.mxu0 0
      %815 = vmatpush1.bf16.msra.mxu0 0
      %816 = vmatprep.subr.bf16.mxu0 0
      %817 = vmatpush1.bf16.msra.mxu0 0
      %818 = vmatprep.mubr.bf16.mxu0 0
      %819 = vmatmul.mubr.bf16.gmra.mrb[0].mxu0 %v695
      %v820 = vpop.f32.mrb[0].mxu0
      %v821 = vadd.f32 %v778, %v820
      %v822 = vpop.f32.mrb[0].mxu0
      %v823 = vpop.f32.mrb[0].mxu0
      %v824 = vadd.f32 %v778, %v823
      %v825 = vpop.f32.mrb[0].mxu0
      %826 = vmatprep.mubr.bf16.mxu0 0
      %827 = vmatmul.mubr.bf16.gmra.mrb[0].mxu0 %v698
      %v828 = vpop.f32.mrb[0].mxu0
      %v829 = vadd.f32 %v778, %v828
      %v830 = vpop.f32.mrb[0].mxu0
      %v831 = vpop.f32.mrb[0].mxu0
      %v832 = vadd.f32 %v778, %v831
      %v833 = vpop.f32.mrb[0].mxu0
      %834 = vmatprep.mubr.bf16.mxu0 0
      %835 = vmatmul.mubr.bf16.gmra.mrb[0].mxu0 %v701
      %v836 = vpop.f32.mrb[0].mxu0
      %v837 = vadd.f32 %v778, %v836
      %v838 = vpop.f32.mrb[0].mxu0
      %v839 = vpop.f32.mrb[0].mxu0
      %v840 = vadd.f32 %v778, %v839
      %v841 = vpop.f32.mrb[0].mxu0
      %842 = vmatprep.mubr.bf16.mxu0 0
      %843 = vmatmul.mubr.bf16.gmra.mrb[0].mxu0 %v704
      %v844 = vpop.f32.mrb[0].mxu0
      %v845 = vadd.f32 %v778, %v844
      %v846 = vpop.f32.mrb[0].mxu0
      %v847 = vpop.f32.mrb[0].mxu0
      %v848 = vadd.f32 %v778, %v847
      %v849 = vpop.f32.mrb[0].mxu0
      %850 = vdwg.mxu0
      %v851 = vld [vmem:[#allocation2] sm:$0xff]
      %v852 = vld [vmem:[#allocation2 + $0x8] sm:$0xff]
      %v853 = vld [vmem:[#allocation2 + $0x10] sm:$0xff]
      %v854 = vld [vmem:[#allocation2 + $0x18] sm:$0xff]
      %v855 = vpack.c.bf16 %v744, %v741
      %v856 = vpack.c.bf16 %v752, %v749
      %v857 = vpack.c.bf16 %v760, %v757
      %v858 = vpack.c.bf16 %v768, %v765
      %vm859 = vcmask 15360
      %v861 = vsel %vm859, %v851, 0
      %v864 = vsel %vm859, %v852, 0
      %v867 = vsel %vm859, %v853, 0
      %v870 = vsel %vm859, %v854, 0
      %v873 = vsel %vm859, %v855, 0
      %v876 = vsel %vm859, %v856, 0
      %v879 = vsel %vm859, %v857, 0
      %v882 = vsel %vm859, %v858, 0
      %884 = vmatprep.subr.bf16.mxu0 0
      %885 = vmatpush1.bf16.xpose.msra.mxu0 %v873
      %886 = vmatprep.subr.bf16.mxu0 0
      %887 = vmatpush1.bf16.xpose.msra.mxu0 %v876
      %888 = vmatprep.subr.bf16.mxu0 0
      %889 = vmatpush1.bf16.xpose.msra.mxu0 %v879
      %890 = vmatprep.subr.bf16.mxu0 0
      %891 = vmatpush1.bf16.xpose.msra.mxu0 %v882
      %892 = vmatprep.subr.bf16.mxu0 0
      %893 = vmatpush1.bf16.xpose.msra.mxu0 0
      %894 = vmatprep.subr.bf16.mxu0 0
      %895 = vmatpush1.bf16.xpose.msra.mxu0 0
      %896 = vmatprep.subr.bf16.mxu0 0
      %897 = vmatpush1.bf16.xpose.msra.mxu0 0
      %898 = vmatprep.subr.bf16.mxu0 0
      %899 = vmatpush1.bf16.xpose.msra.mxu0 0
      %900 = vmatprep.subr.bf16.mxu0 0
      %901 = vmatpush1.bf16.xpose.msra.mxu0 0
      %902 = vmatprep.subr.bf16.mxu0 0
      %903 = vmatpush1.bf16.xpose.msra.mxu0 0
      %904 = vmatprep.subr.bf16.mxu0 0
      %905 = vmatpush1.bf16.xpose.msra.mxu0 0
      %906 = vmatprep.subr.bf16.mxu0 0
      %907 = vmatpush1.bf16.xpose.msra.mxu0 0
      %908 = vmatprep.subr.bf16.mxu0 0
      %909 = vmatpush1.bf16.xpose.msra.mxu0 0
      %910 = vmatprep.subr.bf16.mxu0 0
      %911 = vmatpush1.bf16.xpose.msra.mxu0 0
      %912 = vmatprep.subr.bf16.mxu0 0
      %913 = vmatpush1.bf16.xpose.msra.mxu0 0
      %914 = vmatprep.subr.bf16.mxu0 0
      %915 = vmatpush1.bf16.xpose.msra.mxu0 0
      %916 = vmatprep.mubr.bf16.mxu0 0
      %917 = vmatmul.mubr.bf16.gmra.mrb[0].mxu0 %v861
      %v918 = vpop.f32.mrb[0].mxu0
      %v919 = vadd.f32 0.0, %v918
      %v920 = vpop.f32.mrb[0].mxu0
      %v921 = vpop.f32.mrb[0].mxu0
      %v922 = vadd.f32 0.0, %v921
      %v923 = vpop.f32.mrb[0].mxu0
      %924 = vmatprep.mubr.bf16.mxu0 0
      %925 = vmatmul.mubr.bf16.gmra.mrb[0].mxu0 %v864
      %v926 = vpop.f32.mrb[0].mxu0
      %v927 = vadd.f32 0.0, %v926
      %v928 = vpop.f32.mrb[0].mxu0
      %v929 = vpop.f32.mrb[0].mxu0
      %v930 = vadd.f32 0.0, %v929
      %v931 = vpop.f32.mrb[0].mxu0
      %932 = vmatprep.mubr.bf16.mxu0 0
      %933 = vmatmul.mubr.bf16.gmra.mrb[0].mxu0 %v867
      %v934 = vpop.f32.mrb[0].mxu0
      %v935 = vadd.f32 0.0, %v934
      %v936 = vpop.f32.mrb[0].mxu0
      %v937 = vpop.f32.mrb[0].mxu0
      %v938 = vadd.f32 0.0, %v937
      %v939 = vpop.f32.mrb[0].mxu0
      %940 = vmatprep.mubr.bf16.mxu0 0
      %941 = vmatmul.mubr.bf16.gmra.mrb[0].mxu0 %v870
      %v942 = vpop.f32.mrb[0].mxu0
      %v943 = vadd.f32 0.0, %v942
      %v944 = vpop.f32.mrb[0].mxu0
      %v945 = vpop.f32.mrb[0].mxu0
      %v946 = vadd.f32 0.0, %v945
      %v947 = vpop.f32.mrb[0].mxu0
      %948 = vdwg.mxu0
      %v949 = vld [vmem:[#allocation3] sm:$0xff]
      %v950 = vld [vmem:[#allocation3 + $0x8] sm:$0xff]
      %v951 = vld [vmem:[#allocation3 + $0x10] sm:$0xff]
      %v952 = vld [vmem:[#allocation3 + $0x18] sm:$0xff]
      %v953 = vld [vmem:[#allocation3 + $0x20] sm:$0xff]
      %v954 = vld [vmem:[#allocation3 + $0x28] sm:$0xff]
      %v955 = vld [vmem:[#allocation3 + $0x30] sm:$0xff]
      %v956 = vld [vmem:[#allocation3 + $0x38] sm:$0xff]
      %vm957 = vcmask 523264
      %v958 = vsel %vm957, %v919, -inf
      %959 = vmax.xlane.f32.xlu0 %v958
      %v960 = vpop.xlane.xlu0 %959
      %v961 = vsel %vm957, %v922, -inf
      %962 = vmax.xlane.f32.xlu0 %v961
      %v963 = vpop.xlane.xlu0 %962
      %v964 = vsel %vm957, %v927, -inf
      %965 = vmax.xlane.f32.xlu0 %v964
      %v966 = vpop.xlane.xlu0 %965
      %v967 = vsel %vm957, %v930, -inf
      %968 = vmax.xlane.f32.xlu0 %v967
      %v969 = vpop.xlane.xlu0 %968
      %v970 = vsel %vm957, %v935, -inf
      %971 = vmax.xlane.f32.xlu0 %v970
      %v972 = vpop.xlane.xlu0 %971
      %v973 = vsel %vm957, %v938, -inf
      %974 = vmax.xlane.f32.xlu0 %v973
      %v975 = vpop.xlane.xlu0 %974
      %v976 = vsel %vm957, %v943, -inf
      %977 = vmax.xlane.f32.xlu0 %v976
      %v978 = vpop.xlane.xlu0 %977
      %v979 = vsel %vm957, %v946, -inf
      %980 = vmax.xlane.f32.xlu0 %v979
      %v981 = vpop.xlane.xlu0 %980
      %v982 = vmax.f32 %v949, %v960
      %v983 = vmax.f32 %v950, %v963
      %v984 = vmax.f32 %v951, %v966
      %v985 = vmax.f32 %v952, %v969
      %v986 = vmax.f32 %v953, %v972
      %v987 = vmax.f32 %v954, %v975
      %v988 = vmax.f32 %v955, %v978
      %v989 = vmax.f32 %v956, %v981
      %v990 = vsub.f32 %v949, %v982
      %v991 = vsub.f32 %v950, %v983
      %v992 = vsub.f32 %v951, %v984
      %v993 = vsub.f32 %v952, %v985
      %v994 = vsub.f32 %v953, %v986
      %v995 = vsub.f32 %v954, %v987
      %v996 = vsub.f32 %v955, %v988
      %v997 = vsub.f32 %v956, %v989
      %v998 = vmul.f32 %v990, 1.442695
      %v999 = vpow.pop %v998
      %v1000 = vmul.f32 %v991, 1.442695
      %v1001 = vpow.pop %v1000
      %v1002 = vmul.f32 %v992, 1.442695
      %v1003 = vpow.pop %v1002
      %v1004 = vmul.f32 %v993, 1.442695
      %v1005 = vpow.pop %v1004
      %v1006 = vmul.f32 %v994, 1.442695
      %v1007 = vpow.pop %v1006
      %v1008 = vmul.f32 %v995, 1.442695
      %v1009 = vpow.pop %v1008
      %v1010 = vmul.f32 %v996, 1.442695
      %v1011 = vpow.pop %v1010
      %v1012 = vmul.f32 %v997, 1.442695
      %v1013 = vpow.pop %v1012
      %1015 = vset.pattern.permute.xlu0 0
      %1016 = vperm.xlu0 %1015, %v982
      %v1017 = vpop.permute.xlu0 %1016
      %1020 = vset.pattern.permute.xlu0 0
      %1021 = vperm.xlu0 %1020, %v983
      %v1022 = vpop.permute.xlu0 %1021
      %1025 = vset.pattern.permute.xlu0 0
      %1026 = vperm.xlu0 %1025, %v984
      %v1027 = vpop.permute.xlu0 %1026
      %1030 = vset.pattern.permute.xlu0 0
      %1031 = vperm.xlu0 %1030, %v985
      %v1032 = vpop.permute.xlu0 %1031
      %1035 = vset.pattern.permute.xlu0 0
      %1036 = vperm.xlu0 %1035, %v986
      %v1037 = vpop.permute.xlu0 %1036
      %1040 = vset.pattern.permute.xlu0 0
      %1041 = vperm.xlu0 %1040, %v987
      %v1042 = vpop.permute.xlu0 %1041
      %1045 = vset.pattern.permute.xlu0 0
      %1046 = vperm.xlu0 %1045, %v988
      %v1047 = vpop.permute.xlu0 %1046
      %1050 = vset.pattern.permute.xlu0 0
      %1051 = vperm.xlu0 %1050, %v989
      %v1052 = vpop.permute.xlu0 %1051
      %v1054 = vsub.f32 %v919, %v1017
      %v1055 = vsub.f32 %v922, %v1022
      %v1056 = vsub.f32 %v927, %v1027
      %v1057 = vsub.f32 %v930, %v1032
      %v1058 = vsub.f32 %v935, %v1037
      %v1059 = vsub.f32 %v938, %v1042
      %v1060 = vsub.f32 %v943, %v1047
      %v1061 = vsub.f32 %v946, %v1052
      %v1062 = vmul.f32 %v1054, 1.442695
      %v1063 = vpow.pop %v1062
      %v1064 = vmul.f32 %v1055, 1.442695
      %v1065 = vpow.pop %v1064
      %v1066 = vmul.f32 %v1056, 1.442695
      %v1067 = vpow.pop %v1066
      %v1068 = vmul.f32 %v1057, 1.442695
      %v1069 = vpow.pop %v1068
      %v1070 = vmul.f32 %v1058, 1.442695
      %v1071 = vpow.pop %v1070
      %v1072 = vmul.f32 %v1059, 1.442695
      %v1073 = vpow.pop %v1072
      %v1074 = vmul.f32 %v1060, 1.442695
      %v1075 = vpow.pop %v1074
      %v1076 = vmul.f32 %v1061, 1.442695
      %v1077 = vpow.pop %v1076
      %v1078 = vld [vmem:[#allocation4] sm:$0xff]
      %v1079 = vld [vmem:[#allocation4 + $0x8] sm:$0xff]
      %v1080 = vld [vmem:[#allocation4 + $0x10] sm:$0xff]
      %v1081 = vld [vmem:[#allocation4 + $0x18] sm:$0xff]
      %v1082 = vld [vmem:[#allocation4 + $0x20] sm:$0xff]
      %v1083 = vld [vmem:[#allocation4 + $0x28] sm:$0xff]
      %v1084 = vld [vmem:[#allocation4 + $0x30] sm:$0xff]
      %v1085 = vld [vmem:[#allocation4 + $0x38] sm:$0xff]
      %v1086 = vmul.f32 %v999, %v1078
      %v1087 = vmul.f32 %v1001, %v1079
      %v1088 = vmul.f32 %v1003, %v1080
      %v1089 = vmul.f32 %v1005, %v1081
      %v1090 = vmul.f32 %v1007, %v1082
      %v1091 = vmul.f32 %v1009, %v1083
      %v1092 = vmul.f32 %v1011, %v1084
      %v1093 = vmul.f32 %v1013, %v1085
      %v1094 = vsel %vm957, %v1063, 0.0
      %1095 = vadd.xlane.f32.xlu0 %v1094
      %v1096 = vpop.xlane.xlu0 %1095
      %v1097 = vsel %vm957, %v1065, 0.0
      %1098 = vadd.xlane.f32.xlu0 %v1097
      %v1099 = vpop.xlane.xlu0 %1098
      %v1100 = vsel %vm957, %v1067, 0.0
      %1101 = vadd.xlane.f32.xlu0 %v1100
      %v1102 = vpop.xlane.xlu0 %1101
      %v1103 = vsel %vm957, %v1069, 0.0
      %1104 = vadd.xlane.f32.xlu0 %v1103
      %v1105 = vpop.xlane.xlu0 %1104
      %v1106 = vsel %vm957, %v1071, 0.0
      %1107 = vadd.xlane.f32.xlu0 %v1106
      %v1108 = vpop.xlane.xlu0 %1107
      %v1109 = vsel %vm957, %v1073, 0.0
      %1110 = vadd.xlane.f32.xlu0 %v1109
      %v1111 = vpop.xlane.xlu0 %1110
      %v1112 = vsel %vm957, %v1075, 0.0
      %1113 = vadd.xlane.f32.xlu0 %v1112
      %v1114 = vpop.xlane.xlu0 %1113
      %v1115 = vsel %vm957, %v1077, 0.0
      %1116 = vadd.xlane.f32.xlu0 %v1115
      %v1117 = vpop.xlane.xlu0 %1116
      %v1118 = vadd.f32 %v1086, %v1096
      %v1119 = vadd.f32 %v1087, %v1099
      %v1120 = vadd.f32 %v1088, %v1102
      %v1121 = vadd.f32 %v1089, %v1105
      %v1122 = vadd.f32 %v1090, %v1108
      %v1123 = vadd.f32 %v1091, %v1111
      %v1124 = vadd.f32 %v1092, %v1114
      %v1125 = vadd.f32 %v1093, %v1117
      %vm1126 = vcmask 7168
      %1127 = vst.msk [vmem:[#allocation4] sm:$0xff] %vm1126, %v1118
      %1128 = vst.msk [vmem:[#allocation4 + $0x8] sm:$0xff] %vm1126, %v1119
      %1129 = vst.msk [vmem:[#allocation4 + $0x10] sm:$0xff] %vm1126, %v1120
      %1130 = vst.msk [vmem:[#allocation4 + $0x18] sm:$0xff] %vm1126, %v1121
      %1131 = vst.msk [vmem:[#allocation4 + $0x20] sm:$0xff] %vm1126, %v1122
      %1132 = vst.msk [vmem:[#allocation4 + $0x28] sm:$0xff] %vm1126, %v1123
      %1133 = vst.msk [vmem:[#allocation4 + $0x30] sm:$0xff] %vm1126, %v1124
      %1134 = vst.msk [vmem:[#allocation4 + $0x38] sm:$0xff] %vm1126, %v1125
      %v1135 = vld [vmem:[#allocation5] sm:$0xff]
      %v1136 = vld [vmem:[#allocation5 + $0x8] sm:$0xff]
      %v1137 = vld [vmem:[#allocation5 + $0x10] sm:$0xff]
      %v1138 = vld [vmem:[#allocation5 + $0x18] sm:$0xff]
      %v1139 = vld [vmem:[#allocation5 + $0x20] sm:$0xff]
      %v1140 = vld [vmem:[#allocation5 + $0x28] sm:$0xff]
      %v1141 = vld [vmem:[#allocation5 + $0x30] sm:$0xff]
      %v1142 = vld [vmem:[#allocation5 + $0x38] sm:$0xff]
      %1144 = vset.pattern.permute.xlu0 0
      %1145 = vperm.xlu0 %1144, %v999
      %v1146 = vpop.permute.xlu0 %1145
      %1149 = vset.pattern.permute.xlu0 0
      %1150 = vperm.xlu0 %1149, %v1001
      %v1151 = vpop.permute.xlu0 %1150
      %1154 = vset.pattern.permute.xlu0 0
      %1155 = vperm.xlu0 %1154, %v1003
      %v1156 = vpop.permute.xlu0 %1155
      %1159 = vset.pattern.permute.xlu0 0
      %1160 = vperm.xlu0 %1159, %v1005
      %v1161 = vpop.permute.xlu0 %1160
      %1164 = vset.pattern.permute.xlu0 0
      %1165 = vperm.xlu0 %1164, %v1007
      %v1166 = vpop.permute.xlu0 %1165
      %1169 = vset.pattern.permute.xlu0 0
      %1170 = vperm.xlu0 %1169, %v1009
      %v1171 = vpop.permute.xlu0 %1170
      %1174 = vset.pattern.permute.xlu0 0
      %1175 = vperm.xlu0 %1174, %v1011
      %v1176 = vpop.permute.xlu0 %1175
      %1179 = vset.pattern.permute.xlu0 0
      %1180 = vperm.xlu0 %1179, %v1013
      %v1181 = vpop.permute.xlu0 %1180
      %v1183 = vmul.f32 %v1146, %v1135
      %v1184 = vmul.f32 %v1151, %v1136
      %v1185 = vmul.f32 %v1156, %v1137
      %v1186 = vmul.f32 %v1161, %v1138
      %v1187 = vmul.f32 %v1166, %v1139
      %v1188 = vmul.f32 %v1171, %v1140
      %v1189 = vmul.f32 %v1176, %v1141
      %v1190 = vmul.f32 %v1181, %v1142
      %v1191 = vpack.c.bf16 %v1065, %v1063
      %v1192 = vpack.c.bf16 %v1069, %v1067
      %v1193 = vpack.c.bf16 %v1073, %v1071
      %v1194 = vpack.c.bf16 %v1077, %v1075
      %v1195 = vpack.c.bf16 %v824, %v821
      %v1196 = vpack.c.bf16 %v832, %v829
      %v1197 = vpack.c.bf16 %v840, %v837
      %v1198 = vpack.c.bf16 %v848, %v845
      %v1200 = vsel %vm957, %v1191, 0
      %v1203 = vsel %vm957, %v1192, 0
      %v1206 = vsel %vm957, %v1193, 0
      %v1209 = vsel %vm957, %v1194, 0
      %1211 = vmatprep.subr.bf16.mxu0 0
      %1212 = vmatpush1.bf16.msra.mxu0 %v1195
      %1213 = vmatprep.subr.bf16.mxu0 0
      %1214 = vmatpush1.bf16.msra.mxu0 %v1196
      %1215 = vmatprep.subr.bf16.mxu0 0
      %1216 = vmatpush1.bf16.msra.mxu0 %v1197
      %1217 = vmatprep.subr.bf16.mxu0 0
      %1218 = vmatpush1.bf16.msra.mxu0 %v1198
      %1219 = vmatprep.subr.bf16.mxu0 0
      %1220 = vmatpush1.bf16.msra.mxu0 0
      %1221 = vmatprep.subr.bf16.mxu0 0
      %1222 = vmatpush1.bf16.msra.mxu0 0
      %1223 = vmatprep.subr.bf16.mxu0 0
      %1224 = vmatpush1.bf16.msra.mxu0 0
      %1225 = vmatprep.subr.bf16.mxu0 0
      %1226 = vmatpush1.bf16.msra.mxu0 0
      %1227 = vmatprep.subr.bf16.mxu0 0
      %1228 = vmatpush1.bf16.msra.mxu0 0
      %1229 = vmatprep.subr.bf16.mxu0 0
      %1230 = vmatpush1.bf16.msra.mxu0 0
      %1231 = vmatprep.subr.bf16.mxu0 0
      %1232 = vmatpush1.bf16.msra.mxu0 0
      %1233 = vmatprep.subr.bf16.mxu0 0
      %1234 = vmatpush1.bf16.msra.mxu0 0
      %1235 = vmatprep.subr.bf16.mxu0 0
      %1236 = vmatpush1.bf16.msra.mxu0 0
      %1237 = vmatprep.subr.bf16.mxu0 0
      %1238 = vmatpush1.bf16.msra.mxu0 0
      %1239 = vmatprep.subr.bf16.mxu0 0
      %1240 = vmatpush1.bf16.msra.mxu0 0
      %1241 = vmatprep.subr.bf16.mxu0 0
      %1242 = vmatpush1.bf16.msra.mxu0 0
      %1243 = vmatprep.mubr.bf16.mxu0 0
      %1244 = vmatmul.mubr.bf16.gmra.mrb[0].mxu0 %v1200
      %v1245 = vpop.f32.mrb[0].mxu0
      %v1246 = vadd.f32 0.0, %v1245
      %v1247 = vpop.f32.mrb[0].mxu0
      %v1248 = vpop.f32.mrb[0].mxu0
      %v1249 = vadd.f32 0.0, %v1248
      %v1250 = vpop.f32.mrb[0].mxu0
      %1251 = vmatprep.mubr.bf16.mxu0 0
      %1252 = vmatmul.mubr.bf16.gmra.mrb[0].mxu0 %v1203
      %v1253 = vpop.f32.mrb[0].mxu0
      %v1254 = vadd.f32 0.0, %v1253
      %v1255 = vpop.f32.mrb[0].mxu0
      %v1256 = vpop.f32.mrb[0].mxu0
      %v1257 = vadd.f32 0.0, %v1256
      %v1258 = vpop.f32.mrb[0].mxu0
      %1259 = vmatprep.mubr.bf16.mxu0 0
      %1260 = vmatmul.mubr.bf16.gmra.mrb[0].mxu0 %v1206
      %v1261 = vpop.f32.mrb[0].mxu0
      %v1262 = vadd.f32 0.0, %v1261
      %v1263 = vpop.f32.mrb[0].mxu0
      %v1264 = vpop.f32.mrb[0].mxu0
      %v1265 = vadd.f32 0.0, %v1264
      %v1266 = vpop.f32.mrb[0].mxu0
      %1267 = vmatprep.mubr.bf16.mxu0 0
      %1268 = vmatmul.mubr.bf16.gmra.mrb[0].mxu0 %v1209
      %v1269 = vpop.f32.mrb[0].mxu0
      %v1270 = vadd.f32 0.0, %v1269
      %v1271 = vpop.f32.mrb[0].mxu0
      %v1272 = vpop.f32.mrb[0].mxu0
      %v1273 = vadd.f32 0.0, %v1272
      %v1274 = vpop.f32.mrb[0].mxu0
      %1275 = vdwg.mxu0
      %v1276 = vadd.f32 %v1183, %v1246
      %v1277 = vadd.f32 %v1184, %v1249
      %v1278 = vadd.f32 %v1185, %v1254
      %v1279 = vadd.f32 %v1186, %v1257
      %v1280 = vadd.f32 %v1187, %v1262
      %v1281 = vadd.f32 %v1188, %v1265
      %v1282 = vadd.f32 %v1189, %v1270
      %v1283 = vadd.f32 %v1190, %v1273
      %1284 = vst.msk [vmem:[#allocation5] sm:$0xff] %vm693, %v1276
      %1285 = vst.msk [vmem:[#allocation5 + $0x8] sm:$0xff] %vm693, %v1277
      %1286 = vst.msk [vmem:[#allocation5 + $0x10] sm:$0xff] %vm693, %v1278
      %1287 = vst.msk [vmem:[#allocation5 + $0x18] sm:$0xff] %vm693, %v1279
      %1288 = vst.msk [vmem:[#allocation5 + $0x20] sm:$0xff] %vm693, %v1280
      %1289 = vst.msk [vmem:[#allocation5 + $0x28] sm:$0xff] %vm693, %v1281
      %1290 = vst.msk [vmem:[#allocation5 + $0x30] sm:$0xff] %vm693, %v1282
      %1291 = vst.msk [vmem:[#allocation5 + $0x38] sm:$0xff] %vm693, %v1283
      %1292 = vst.msk [vmem:[#allocation3] sm:$0xff] %vm1126, %v982
      %1293 = vst.msk [vmem:[#allocation3 + $0x8] sm:$0xff] %vm1126, %v983
      %1294 = vst.msk [vmem:[#allocation3 + $0x10] sm:$0xff] %vm1126, %v984
      %1295 = vst.msk [vmem:[#allocation3 + $0x18] sm:$0xff] %vm1126, %v985
      %1296 = vst.msk [vmem:[#allocation3 + $0x20] sm:$0xff] %vm1126, %v986
      %1297 = vst.msk [vmem:[#allocation3 + $0x28] sm:$0xff] %vm1126, %v987
      %1298 = vst.msk [vmem:[#allocation3 + $0x30] sm:$0xff] %vm1126, %v988
      %1299 = vst.msk [vmem:[#allocation3 + $0x38] sm:$0xff] %vm1126, %v989
      // Predicated region
      $region69: #{dpc_forward.7} parent=63 // pred_check
        %p1300 = pneg %p523
      $region70: #{dpc_forward.7} parent=63 // pred_check_branch
        %1302 = sbr.rel (%p1300) target = $region72
      $region71: #{dpc_forward.7} parent=63 // pred_region
        %v1303 = vld [vmem:[#allocation5] sm:$0xff]
        %v1304 = vld [vmem:[#allocation5 + $0x8] sm:$0xff]
        %v1305 = vld [vmem:[#allocation5 + $0x10] sm:$0xff]
        %v1306 = vld [vmem:[#allocation5 + $0x18] sm:$0xff]
        %v1307 = vld [vmem:[#allocation5 + $0x20] sm:$0xff]
        %v1308 = vld [vmem:[#allocation5 + $0x28] sm:$0xff]
        %v1309 = vld [vmem:[#allocation5 + $0x30] sm:$0xff]
        %v1310 = vld [vmem:[#allocation5 + $0x38] sm:$0xff]
        %v1311 = vld [vmem:[#allocation4] sm:$0xff]
        %v1312 = vld [vmem:[#allocation4 + $0x8] sm:$0xff]
        %v1313 = vld [vmem:[#allocation4 + $0x10] sm:$0xff]
        %v1314 = vld [vmem:[#allocation4 + $0x18] sm:$0xff]
        %v1315 = vld [vmem:[#allocation4 + $0x20] sm:$0xff]
        %v1316 = vld [vmem:[#allocation4 + $0x28] sm:$0xff]
        %v1317 = vld [vmem:[#allocation4 + $0x30] sm:$0xff]
        %v1318 = vld [vmem:[#allocation4 + $0x38] sm:$0xff]
        %v1319 = vrcp.pop %v1311
        %v1320 = vrcp.pop %v1312
        %v1321 = vrcp.pop %v1313
        %v1322 = vrcp.pop %v1314
        %v1323 = vrcp.pop %v1315
        %v1324 = vrcp.pop %v1316
        %v1325 = vrcp.pop %v1317
        %v1326 = vrcp.pop %v1318
        %1328 = vset.pattern.permute.xlu0 0
        %1329 = vperm.xlu0 %1328, %v1319
        %v1330 = vpop.permute.xlu0 %1329
        %1333 = vset.pattern.permute.xlu0 0
        %1334 = vperm.xlu0 %1333, %v1320
        %v1335 = vpop.permute.xlu0 %1334
        %1338 = vset.pattern.permute.xlu0 0
        %1339 = vperm.xlu0 %1338, %v1321
        %v1340 = vpop.permute.xlu0 %1339
        %1343 = vset.pattern.permute.xlu0 0
        %1344 = vperm.xlu0 %1343, %v1322
        %v1345 = vpop.permute.xlu0 %1344
        %1348 = vset.pattern.permute.xlu0 0
        %1349 = vperm.xlu0 %1348, %v1323
        %v1350 = vpop.permute.xlu0 %1349
        %1353 = vset.pattern.permute.xlu0 0
        %1354 = vperm.xlu0 %1353, %v1324
        %v1355 = vpop.permute.xlu0 %1354
        %1358 = vset.pattern.permute.xlu0 0
        %1359 = vperm.xlu0 %1358, %v1325
        %v1360 = vpop.permute.xlu0 %1359
        %1363 = vset.pattern.permute.xlu0 0
        %1364 = vperm.xlu0 %1363, %v1326
        %v1365 = vpop.permute.xlu0 %1364
        %v1367 = vmul.f32 %v1303, %v1330
        %v1368 = vmul.f32 %v1304, %v1335
        %v1369 = vmul.f32 %v1305, %v1340
        %v1370 = vmul.f32 %v1306, %v1345
        %v1371 = vmul.f32 %v1307, %v1350
        %v1372 = vmul.f32 %v1308, %v1355
        %v1373 = vmul.f32 %v1309, %v1360
        %v1374 = vmul.f32 %v1310, %v1365
        %v1375 = vld [vmem:[#allocation6] sm:$0x1]
        %v1377 = vlaneseq
        %v1378 = vshrl.u32 %v1377, 7
        %v1379 = vsub.s32 0, %v1378
        %v1380 = vrot.slane %v1375, %v1379
        %1381 = vset.pattern.permute.xlu0 0
        %1382 = vperm.xlu0 %1381, %v1380
        %v1383 = vpop.permute.xlu0 %1382
        %v1385 = vmul.f32 %v1383, %v1367
        %v1386 = vmul.f32 %v1383, %v1368
        %v1387 = vmul.f32 %v1383, %v1369
        %v1388 = vmul.f32 %v1383, %v1370
        %v1389 = vmul.f32 %v1383, %v1371
        %v1390 = vmul.f32 %v1383, %v1372
        %v1391 = vmul.f32 %v1383, %v1373
        %v1392 = vmul.f32 %v1383, %v1374
        %v1393 = vld [vmem:[%s490] sm:$0xff]
        %v1394 = vld [vmem:[%s490 + $0x8] sm:$0xff]
        %v1395 = vld [vmem:[%s490 + $0x10] sm:$0xff]
        %v1396 = vld [vmem:[%s490 + $0x18] sm:$0xff]
        %v1397 = vld [vmem:[%s490 + $0x20] sm:$0xff]
        %v1398 = vld [vmem:[%s490 + $0x28] sm:$0xff]
        %v1399 = vld [vmem:[%s490 + $0x30] sm:$0xff]
        %v1400 = vld [vmem:[%s490 + $0x38] sm:$0xff]
        %v1401 = vadd.f32 %v1385, %v1393
        %v1402 = vadd.f32 %v1386, %v1394
        %v1403 = vadd.f32 %v1387, %v1395
        %v1404 = vadd.f32 %v1388, %v1396
        %v1405 = vadd.f32 %v1389, %v1397
        %v1406 = vadd.f32 %v1390, %v1398
        %v1407 = vadd.f32 %v1391, %v1399
        %v1408 = vadd.f32 %v1392, %v1400
        %1409 = vst.msk [vmem:[%s510] sm:$0xff] %vm693, %v1401
        %1410 = vst.msk [vmem:[%s510 + $0x8] sm:$0xff] %vm693, %v1402
        %1411 = vst.msk [vmem:[%s510 + $0x10] sm:$0xff] %vm693, %v1403
        %1412 = vst.msk [vmem:[%s510 + $0x18] sm:$0xff] %vm693, %v1404
        %1413 = vst.msk [vmem:[%s510 + $0x20] sm:$0xff] %vm693, %v1405
        %1414 = vst.msk [vmem:[%s510 + $0x28] sm:$0xff] %vm693, %v1406
        %1415 = vst.msk [vmem:[%s510 + $0x30] sm:$0xff] %vm693, %v1407
        %1416 = vst.msk [vmem:[%s510 + $0x38] sm:$0xff] %vm693, %v1408
        %v1417 = vpack.c.bf16 %v1402, %v1401
        %v1418 = vpack.c.bf16 %v1404, %v1403
        %v1419 = vpack.c.bf16 %v1406, %v1405
        %v1420 = vpack.c.bf16 %v1408, %v1407
        %v1421 = vld [vmem:[%s9] sm:$0xf]
        %v1422 = vld [vmem:[%s9 + $0x4] sm:$0xf]
        %v1423 = vld [vmem:[%s10] sm:$0x1]
        %v1425 = vlaneseq
        %v1426 = vshrl.u32 %v1425, 7
        %v1427 = vsub.s32 0, %v1426
        %v1428 = vrot.slane %v1423, %v1427
        %v1432 = vunpack.c.l.b16 %v1421
        %v1433 = vunpack.c.l.b16 %v1422
        %v1434 = vpack.c.b16 %v1433, %v1432
        %v1437 = vsel %vm693, %v1417, 0
        %v1440 = vsel %vm693, %v1418, 0
        %v1443 = vsel %vm693, %v1419, 0
        %v1446 = vsel %vm693, %v1420, 0
        %1448 = vmatprep.subr.bf16.mxu0 0
        %1449 = vmatpush1.bf16.msra.mxu0 %v1434
        %1450 = vmatprep.subr.bf16.mxu0 0
        %1451 = vmatpush1.bf16.msra.mxu0 0
        %1452 = vmatprep.subr.bf16.mxu0 0
        %1453 = vmatpush1.bf16.msra.mxu0 0
        %1454 = vmatprep.subr.bf16.mxu0 0
        %1455 = vmatpush1.bf16.msra.mxu0 0
        %1456 = vmatprep.subr.bf16.mxu0 0
        %1457 = vmatpush1.bf16.msra.mxu0 0
        %1458 = vmatprep.subr.bf16.mxu0 0
        %1459 = vmatpush1.bf16.msra.mxu0 0
        %1460 = vmatprep.subr.bf16.mxu0 0
        %1461 = vmatpush1.bf16.msra.mxu0 0
        %1462 = vmatprep.subr.bf16.mxu0 0
        %1463 = vmatpush1.bf16.msra.mxu0 0
        %1464 = vmatprep.subr.bf16.mxu0 0
        %1465 = vmatpush1.bf16.msra.mxu0 0
        %1466 = vmatprep.subr.bf16.mxu0 0
        %1467 = vmatpush1.bf16.msra.mxu0 0
        %1468 = vmatprep.subr.bf16.mxu0 0
        %1469 = vmatpush1.bf16.msra.mxu0 0
        %1470 = vmatprep.subr.bf16.mxu0 0
        %1471 = vmatpush1.bf16.msra.mxu0 0
        %1472 = vmatprep.subr.bf16.mxu0 0
        %1473 = vmatpush1.bf16.msra.mxu0 0
        %1474 = vmatprep.subr.bf16.mxu0 0
        %1475 = vmatpush1.bf16.msra.mxu0 0
        %1476 = vmatprep.subr.bf16.mxu0 0
        %1477 = vmatpush1.bf16.msra.mxu0 0
        %1478 = vmatprep.subr.bf16.mxu0 0
        %1479 = vmatpush1.bf16.msra.mxu0 0
        %1480 = vmatprep.mubr.bf16.mxu0 0
        %1481 = vmatmul.mubr.bf16.gmra.mrb[0].mxu0 %v1437
        %v1482 = vpop.f32.mrb[0].mxu0
        %v1483 = vadd.f32 %v1428, %v1482
        %v1484 = vpop.f32.mrb[0].mxu0
        %v1485 = vpop.f32.mrb[0].mxu0
        %v1486 = vadd.f32 %v1428, %v1485
        %v1487 = vpop.f32.mrb[0].mxu0
        %1488 = vmatprep.mubr.bf16.mxu0 0
        %1489 = vmatmul.mubr.bf16.gmra.mrb[0].mxu0 %v1440
        %v1490 = vpop.f32.mrb[0].mxu0
        %v1491 = vadd.f32 %v1428, %v1490
        %v1492 = vpop.f32.mrb[0].mxu0
        %v1493 = vpop.f32.mrb[0].mxu0
        %v1494 = vadd.f32 %v1428, %v1493
        %v1495 = vpop.f32.mrb[0].mxu0
        %1496 = vmatprep.mubr.bf16.mxu0 0
        %1497 = vmatmul.mubr.bf16.gmra.mrb[0].mxu0 %v1443
        %v1498 = vpop.f32.mrb[0].mxu0
        %v1499 = vadd.f32 %v1428, %v1498
        %v1500 = vpop.f32.mrb[0].mxu0
        %v1501 = vpop.f32.mrb[0].mxu0
        %v1502 = vadd.f32 %v1428, %v1501
        %v1503 = vpop.f32.mrb[0].mxu0
        %1504 = vmatprep.mubr.bf16.mxu0 0
        %1505 = vmatmul.mubr.bf16.gmra.mrb[0].mxu0 %v1446
        %v1506 = vpop.f32.mrb[0].mxu0
        %v1507 = vadd.f32 %v1428, %v1506
        %v1508 = vpop.f32.mrb[0].mxu0
        %v1509 = vpop.f32.mrb[0].mxu0
        %v1510 = vadd.f32 %v1428, %v1509
        %v1511 = vpop.f32.mrb[0].mxu0
        %1512 = vdwg.mxu0
        %1513 = vst.msk [vmem:[%s520] sm:$0xff] %vm693, %v1483
        %1514 = vst.msk [vmem:[%s520 + $0x8] sm:$0xff] %vm693, %v1486
        %1515 = vst.msk [vmem:[%s520 + $0x10] sm:$0xff] %vm693, %v1491
        %1516 = vst.msk [vmem:[%s520 + $0x18] sm:$0xff] %vm693, %v1494
        %1517 = vst.msk [vmem:[%s520 + $0x20] sm:$0xff] %vm693, %v1499
        %1518 = vst.msk [vmem:[%s520 + $0x28] sm:$0xff] %vm693, %v1502
        %1519 = vst.msk [vmem:[%s520 + $0x30] sm:$0xff] %vm693, %v1507
        %1520 = vst.msk [vmem:[%s520 + $0x38] sm:$0xff] %vm693, %v1510
      $region72: #{dpc_forward.7} parent=63 // pred_fallthru
        _
      %s1521 = smul.u32 8, %s32
      %p1522 = scmp.lt.s32.totalorder %s31, 1
      %s1523 = scalar_select %p1522, %s31, 1
      %p1524 = scmp.lt.s32.totalorder %s1521, 7
      %s1525 = scalar_select %p1524, %s1521, 7
      %s1526 = smul.addr %s1523, 8
      %s1527 = sadd.s32 %s1525, %s1526
      %s1528 = smul.addr %s1527, 8
      %s1529 = scalar_lea.vmem %s11, %s1528
      %s1530 = smul.u32 8, %s32
      %p1531 = scmp.lt.s32.totalorder %s31, 1
      %s1532 = scalar_select %p1531, %s31, 1
      %p1533 = scmp.lt.s32.totalorder %s1530, 7
      %s1534 = scalar_select %p1533, %s1530, 7
      %s1535 = smul.addr %s1532, 8
      %s1536 = sadd.s32 %s1534, %s1535
      %s1537 = smul.addr %s1536, 8
      %s1538 = scalar_lea.vmem %s12, %s1537
      // Predicated region
      $region73: #{dpc_forward.7} parent=63 // pred_check
        %p1539 = pneg %p310
      $region74: #{dpc_forward.7} parent=63 // pred_check_branch
        %1541 = sbr.rel (%p1539) target = $region76
      $region75: #{dpc_forward.7} parent=63 // pred_region
        %s1542 = smul.u32 8, %s32
      $region76: #{dpc_forward.7} parent=63 // pred_fallthru
        _
      // Predicated region
      $region77: #{dpc_forward.7} parent=63 // pred_check
        %p1543 = pneg %p338
      $region78: #{dpc_forward.7} parent=63 // pred_check_branch
        %1545 = sbr.rel (%p1543) target = $region80
      $region79: #{dpc_forward.7} parent=63 // pred_region
        %s1546 = smul.u32 8, %s32
      $region80: #{dpc_forward.7} parent=63 // pred_fallthru
        _
    $region64: #{dpc_forward.7} parent=5 // pred_fallthru
      _
    %p1547 = scmp.le.s32.totalorder 2, %s21
    // Predicated region
    $region81: #{dpc_forward.7} parent=5 // pred_check
      %p1548 = pneg %p1547
    $region82: #{dpc_forward.7} parent=5 // pred_check_branch
      %1550 = sbr.rel (%p1548) target = $region84
    $region83: #{dpc_forward.7} parent=5 // pred_region
      %s1551 = ssub.s32 %s21, 2
      // Predicated region
      $region85: #{dpc_forward.7} parent=83 // pred_check
        %p1552 = pneg %p316
      $region86: #{dpc_forward.7} parent=83 // pred_check_branch
        %1554 = sbr.rel (%p1552) target = $region88
      $region87: #{dpc_forward.7} parent=83 // pred_region
        %s1555 = smul.u32 8, %s35
        %p1556 = scmp.lt.s32.totalorder %s34, 1
        %s1557 = scalar_select %p1556, %s34, 1
        %p1558 = scmp.lt.s32.totalorder %s1555, 7
        %s1559 = scalar_select %p1558, %s1555, 7
        %s1560 = smul.addr %s1557, 8
        %s1561 = sadd.s32 %s1559, %s1560
        %s1562 = smul.addr %s1561, 8
        %s1563 = scalar_lea.vmem %s11, %s1562
      $region88: #{dpc_forward.7} parent=83 // pred_fallthru
        _
      // Predicated region
      $region89: #{dpc_forward.7} parent=83 // pred_check
        %p1564 = pneg %p344
      $region90: #{dpc_forward.7} parent=83 // pred_check_branch
        %1566 = sbr.rel (%p1564) target = $region92
      $region91: #{dpc_forward.7} parent=83 // pred_region
        %s1567 = smul.u32 8, %s35
        %p1568 = scmp.lt.s32.totalorder %s34, 1
        %s1569 = scalar_select %p1568, %s34, 1
        %p1570 = scmp.lt.s32.totalorder %s1567, 7
        %s1571 = scalar_select %p1570, %s1567, 7
        %s1572 = smul.addr %s1569, 8
        %s1573 = sadd.s32 %s1571, %s1572
        %s1574 = smul.addr %s1573, 8
        %s1575 = scalar_lea.vmem %s12, %s1574
      $region92: #{dpc_forward.7} parent=83 // pred_fallthru
        _
    $region84: #{dpc_forward.7} parent=5 // pred_fallthru
      _
  $region6: #{dpc_forward.7} parent=0 // loop_footer
    %s25 = sadd.s32 1, %s21
  $region7: #{dpc_forward.7} parent=0 // loop_footer_branch
    %20 = sbr.rel target = $region3
  $region8: #{dpc_forward.7} parent=0 // loop_exit
    _

// kernel: dpc_forward.6
$region0: #{dpc_forward.6}
  #allocation0 [shape = 'u32[]', space=smem, size = 0x4, offset = 0x4, fixed_abs, tag = 'smem constant byte address 0x4 - core index']
  #allocation1 [shape = 'u32[144,128]{1,0:T(1,128)}', space=vmem, size = 0x12000, scoped, tag = 'internal scratch']
  %s0 = inlined_call_operand.vmem [shape: bf16[2,10,10,64], index: 0, kind: input, shape index: {}]
  %s1 = inlined_call_operand.vmem [shape: bf16[9,64,16], index: 1, kind: input, shape index: {}]
  %s2 = inlined_call_operand.vmem [shape: f32[1,16], index: 2, kind: input, shape index: {}]
  %s3 = inlined_call_operand.vmem [shape: f32[1,16], index: 3, kind: input, shape index: {}]
  %s4 = inlined_call_operand.vmem [shape: f32[2,64,16], index: 4, kind: output, shape index: {}]
  %s5 = sld [smem:[#allocation0]]
  $region49: #{dpc_forward.6} parent=0
    _
  %s7 = ssub.s32 1, %s5
  %s8 = scalar_select 0, %s7, %s5
  loop: start=0, step=1, limit=4
  $region2: #{dpc_forward.6} parent=0 // loop_pre_header
    _
  $region3: #{dpc_forward.6} parent=0 // loop_header
    %s10 = sphi 0, %s14
    %p11 = scmp.ge.s32.totalorder %s10, 4
    %s20 = sphi 0, %s22
    %s23 = sphi 0, %s20
    %s24 = sphi 0, %s23
    %s40 = sphi 0, %s24
    %s44 = sphi 0, %s44
    %s46 = sphi 0, %s44
    %s47 = sphi 0, %s46
    %s61 = sphi 0, %s47
    %s65 = sphi 0, %s65
    %s67 = sphi 0, %s65
    %s68 = sphi 0, %s67
    %s82 = sphi 0, %s68
    %s86 = sphi 0, %s86
    %s88 = sphi 0, %s86
    %s89 = sphi 0, %s88
    %s103 = sphi 0, %s89
    %s109 = sphi 0, %s111
    %s112 = sphi 0, %s109
    %s113 = sphi 0, %s112
    %s129 = sphi 0, %s113
  $region4: #{dpc_forward.6} parent=0 // loop_header_branch
    %13 = sbr.rel (%p11) target = $region8
  $region5: #{dpc_forward.6} parent=0 // loop_body
    %s15 = ssub.s32 %s10, 1
    %s16 = ssub.s32 %s10, 2
    %s17 = sadd.s32 %s10, 1
    %s18 = ssub.s32 %s10, %s17
    %p19 = scmp.eq.s32.totalorder %s18, 0
    %s21 = sadd.s32 %s20, 1
    %s22 = scalar_select %p19, %s20, %s21
    %p25 = pneg %p19
    %p26 = scmp.eq.s32.totalorder %s10, 1
    %p27 = por %p25, %p26
    %p28 = scmp.ne.s32.totalorder %s20, %s23
    %p29 = scmp.eq.s32.totalorder %s10, 0
    %p30 = por %p28, %p29
    %p31 = scmp.ne.s32.totalorder %s20, %s23
    %p32 = scmp.eq.s32.totalorder %s15, 1
    %p33 = por %p31, %p32
    %p34 = scmp.ne.s32.totalorder %s23, %s24
    %p35 = scmp.eq.s32.totalorder %s15, 0
    %p36 = por %p34, %p35
    %p37 = scmp.ne.s32.totalorder %s23, %s24
    %p38 = scmp.eq.s32.totalorder %s16, 1
    %p39 = por %p37, %p38
    %p41 = scmp.ne.s32.totalorder %s24, %s40
    %p42 = scmp.eq.s32.totalorder %s16, 0
    %p43 = por %p41, %p42
    %s45 = sadd.s32 %s44, 1
    %p48 = scmp.eq.s32.totalorder %s10, 1
    %p49 = scmp.ne.s32.totalorder %s44, %s46
    %p50 = scmp.eq.s32.totalorder %s10, 0
    %p51 = por %p49, %p50
    %p52 = scmp.ne.s32.totalorder %s44, %s46
    %p53 = scmp.eq.s32.totalorder %s15, 1
    %p54 = por %p52, %p53
    %p55 = scmp.ne.s32.totalorder %s46, %s47
    %p56 = scmp.eq.s32.totalorder %s15, 0
    %p57 = por %p55, %p56
    %p58 = scmp.ne.s32.totalorder %s46, %s47
    %p59 = scmp.eq.s32.totalorder %s16, 1
    %p60 = por %p58, %p59
    %p62 = scmp.ne.s32.totalorder %s47, %s61
    %p63 = scmp.eq.s32.totalorder %s16, 0
    %p64 = por %p62, %p63
    %s66 = sadd.s32 %s65, 1
    %p69 = scmp.eq.s32.totalorder %s10, 1
    %p70 = scmp.ne.s32.totalorder %s65, %s67
    %p71 = scmp.eq.s32.totalorder %s10, 0
    %p72 = por %p70, %p71
    %p73 = scmp.ne.s32.totalorder %s65, %s67
    %p74 = scmp.eq.s32.totalorder %s15, 1
    %p75 = por %p73, %p74
    %p76 = scmp.ne.s32.totalorder %s67, %s68
    %p77 = scmp.eq.s32.totalorder %s15, 0
    %p78 = por %p76, %p77
    %p79 = scmp.ne.s32.totalorder %s67, %s68
    %p80 = scmp.eq.s32.totalorder %s16, 1
    %p81 = por %p79, %p80
    %p83 = scmp.ne.s32.totalorder %s68, %s82
    %p84 = scmp.eq.s32.totalorder %s16, 0
    %p85 = por %p83, %p84
    %s87 = sadd.s32 %s86, 1
    %p90 = scmp.eq.s32.totalorder %s10, 1
    %p91 = scmp.ne.s32.totalorder %s86, %s88
    %p92 = scmp.eq.s32.totalorder %s10, 0
    %p93 = por %p91, %p92
    %p94 = scmp.ne.s32.totalorder %s86, %s88
    %p95 = scmp.eq.s32.totalorder %s15, 1
    %p96 = por %p94, %p95
    %p97 = scmp.ne.s32.totalorder %s88, %s89
    %p98 = scmp.eq.s32.totalorder %s15, 0
    %p99 = por %p97, %p98
    %p100 = scmp.ne.s32.totalorder %s88, %s89
    %p101 = scmp.eq.s32.totalorder %s16, 1
    %p102 = por %p100, %p101
    %p104 = scmp.ne.s32.totalorder %s89, %s103
    %p105 = scmp.eq.s32.totalorder %s16, 0
    %p106 = por %p104, %p105
    %s107 = ssub.s32 %s10, %s17
    %p108 = scmp.eq.s32.totalorder %s107, 0
    %s110 = sadd.s32 %s109, 1
    %s111 = scalar_select %p108, %s109, %s110
    %p114 = pneg %p108
    %p115 = scmp.eq.s32.totalorder %s10, 1
    %p116 = por %p114, %p115
    %p117 = scmp.ne.s32.totalorder %s109, %s112
    %p118 = scmp.eq.s32.totalorder %s10, 0
    %p119 = por %p117, %p118
    %p120 = scmp.ne.s32.totalorder %s109, %s112
    %p121 = scmp.eq.s32.totalorder %s15, 1
    %p122 = por %p120, %p121
    %p123 = scmp.ne.s32.totalorder %s112, %s113
    %p124 = scmp.eq.s32.totalorder %s15, 0
    %p125 = por %p123, %p124
    %p126 = scmp.ne.s32.totalorder %s112, %s113
    %p127 = scmp.eq.s32.totalorder %s16, 1
    %p128 = por %p126, %p127
    %p130 = scmp.ne.s32.totalorder %s113, %s129
    %p131 = scmp.eq.s32.totalorder %s16, 0
    %p132 = por %p130, %p131
    %p133 = scmp.le.s32.totalorder 1, %s10
    %p134 = scmp.lt.s32.totalorder %s10, 3
    %p135 = pnand %p133, %p134
    %p136 = pneg %p135
    // Predicated region
    $region9: #{dpc_forward.6} parent=5 // pred_check
      _
    $region10: #{dpc_forward.6} parent=5 // pred_check_branch
      %138 = sbr.rel (%p135) target = $region12
    $region11: #{dpc_forward.6} parent=5 // pred_region
      %s139 = ssub.s32 %s10, 1
      // Predicated region
      $region13: #{dpc_forward.6} parent=11 // pred_check
        %p140 = pneg %p57
      $region14: #{dpc_forward.6} parent=11 // pred_check_branch
        %142 = sbr.rel (%p140) target = $region16
      $region15: #{dpc_forward.6} parent=11 // pred_region
        _
      $region16: #{dpc_forward.6} parent=11 // pred_fallthru
        _
      // Predicated region
      $region17: #{dpc_forward.6} parent=11 // pred_check
        %p143 = pneg %p78
      $region18: #{dpc_forward.6} parent=11 // pred_check_branch
        %145 = sbr.rel (%p143) target = $region20
      $region19: #{dpc_forward.6} parent=11 // pred_region
        _
      $region20: #{dpc_forward.6} parent=11 // pred_fallthru
        _
      // Predicated region
      $region21: #{dpc_forward.6} parent=11 // pred_check
        %p146 = pneg %p99
      $region22: #{dpc_forward.6} parent=11 // pred_check_branch
        %148 = sbr.rel (%p146) target = $region24
      $region23: #{dpc_forward.6} parent=11 // pred_region
        _
      $region24: #{dpc_forward.6} parent=11 // pred_fallthru
        _
    $region12: #{dpc_forward.6} parent=5 // pred_fallthru
      _
    %p149 = scmp.lt.s32.totalorder %s10, 2
    // Predicated region
    $region25: #{dpc_forward.6} parent=5 // pred_check
      %p150 = pneg %p149
    $region26: #{dpc_forward.6} parent=5 // pred_check_branch
      %152 = sbr.rel (%p150) target = $region28
    $region27: #{dpc_forward.6} parent=5 // pred_region
      // Predicated region
      $region29: #{dpc_forward.6} parent=27 // pred_check
        %p153 = pneg %p30
      $region30: #{dpc_forward.6} parent=27 // pred_check_branch
        %155 = sbr.rel (%p153) target = $region32
      $region31: #{dpc_forward.6} parent=27 // pred_region
        %p156 = scmp.lt.s32.totalorder %s10, 1
        %s157 = scalar_select %p156, %s10, 1
        %s158 = smul.addr %s157, 20
        %s159 = smul.addr %s158, 4
        %s160 = scalar_lea.vmem %s0, %s159
      $region32: #{dpc_forward.6} parent=27 // pred_fallthru
        _
    $region28: #{dpc_forward.6} parent=5 // pred_fallthru
      _
    %p161 = scmp.le.s32.totalorder 1, %s10
    %p162 = scmp.lt.s32.totalorder %s10, 3
    %p163 = pnand %p161, %p162
    %p164 = pneg %p163
    // Predicated region
    $region33: #{dpc_forward.6} parent=5 // pred_check
      _
    $region34: #{dpc_forward.6} parent=5 // pred_check_branch
      %166 = sbr.rel (%p163) target = $region36
    $region35: #{dpc_forward.6} parent=5 // pred_region
      %s167 = ssub.s32 %s10, 1
      %p168 = scmp.lt.s32.totalorder %s15, 1
      %s169 = scalar_select %p168, %s15, 1
      %s170 = smul.addr %s169, 20
      %s171 = smul.addr %s170, 4
      %s172 = scalar_lea.vmem %s0, %s171
      %p173 = pneg %p36
      %p174 = pneg %p33
      %p175 = pneg %p57
      %p176 = pneg %p54
      %p177 = pneg %p78
      %p178 = pneg %p75
      %p179 = pneg %p99
      %p180 = pneg %p96
      %p181 = pneg %p125
      %p182 = pneg %p122
      %p183 = scmp.lt.s32.totalorder %s15, 1
      %s184 = scalar_select %p183, %s15, 1
      %s185 = smul.addr %s184, 8
      %s186 = smul.addr %s185, 8
      %s187 = scalar_lea.vmem %s4, %s186
      %p188 = scmp.lt.s32.totalorder %s15, 1
      %s189 = scalar_select %p188, %s15, 1
      %s190 = smul.addr %s189, 20
      %s191 = smul.addr %s190, 4
      %s192 = scalar_lea.vmem %s0, %s191
      %p193 = scmp.lt.s32.totalorder %s15, 1
      %s194 = scalar_select %p193, %s15, 1
      %s195 = smul.addr %s194, 8
      %s196 = smul.addr %s195, 8
      %s197 = scalar_lea.vmem %s4, %s196
      %v199 = vld [vmem:[%s192] sm:$0xf]
      %v200 = vld [vmem:[%s192 + $0x4] sm:$0x1]
      %v201 = vld [vmem:[%s192 + $0x8] sm:$0xf]
      %v202 = vld [vmem:[%s192 + $0xc] sm:$0x1]
      %v203 = vld [vmem:[%s192 + $0x10] sm:$0xf]
      %v204 = vld [vmem:[%s192 + $0x14] sm:$0x1]
      %v205 = vld [vmem:[%s192 + $0x18] sm:$0xf]
      %v206 = vld [vmem:[%s192 + $0x1c] sm:$0x1]
      %v207 = vld [vmem:[%s192 + $0x20] sm:$0xf]
      %v208 = vld [vmem:[%s192 + $0x24] sm:$0x1]
      %v209 = vld [vmem:[%s192 + $0x28] sm:$0xf]
      %v210 = vld [vmem:[%s192 + $0x2c] sm:$0x1]
      %v211 = vld [vmem:[%s192 + $0x30] sm:$0xf]
      %v212 = vld [vmem:[%s192 + $0x34] sm:$0x1]
      %v213 = vld [vmem:[%s192 + $0x38] sm:$0xf]
      %v214 = vld [vmem:[%s192 + $0x3c] sm:$0x1]
      %v215 = vld [vmem:[%s192 + $0x40] sm:$0xf]
      %v216 = vld [vmem:[%s192 + $0x44] sm:$0x1]
      %v217 = vld [vmem:[%s192 + $0x48] sm:$0xf]
      %v218 = vld [vmem:[%s192 + $0x4c] sm:$0x1]
      %v219 = vld [vmem:[%s1] sm:$0xf]
      %v220 = vld [vmem:[%s1 + $0x4] sm:$0xf]
      %v221 = vld [vmem:[%s1 + $0x8] sm:$0xf]
      %v222 = vld [vmem:[%s1 + $0xc] sm:$0xf]
      %v223 = vld [vmem:[%s1 + $0x10] sm:$0xf]
      %v224 = vld [vmem:[%s1 + $0x14] sm:$0xf]
      %v225 = vld [vmem:[%s1 + $0x18] sm:$0xf]
      %v226 = vld [vmem:[%s1 + $0x1c] sm:$0xf]
      %vm227 = vsmask.f32 3328
      %vm228 = vsmask.f32 7440
      %vm229 = vmor %vm227, %vm228
      %v231 = vshrl.u32 %v199, 16
      %v233 = vrot.slane %v231, 4
      %v234 = vshll.u32 %v199, 16
      %v236 = vrot.slane %v234, 5
      %v237 = vor.u32 %v233, %v236
      %v238 = vrot.slane %v237, 4
      %v240 = vshll.u32 %v200, 16
      %v242 = vrot.slane %v240, 5
      %v243 = vsel %vm229, %v238, %v242
      %v245 = vshrl.u32 %v201, 16
      %v247 = vrot.slane %v245, 4
      %v248 = vshll.u32 %v201, 16
      %v250 = vrot.slane %v248, 5
      %v251 = vor.u32 %v247, %v250
      %v252 = vrot.slane %v251, 4
      %v254 = vshll.u32 %v202, 16
      %v256 = vrot.slane %v254, 5
      %v257 = vsel %vm229, %v252, %v256
      %v259 = vshrl.u32 %v203, 16
      %v261 = vrot.slane %v259, 4
      %v262 = vshll.u32 %v203, 16
      %v264 = vrot.slane %v262, 5
      %v265 = vor.u32 %v261, %v264
      %v266 = vrot.slane %v265, 4
      %v268 = vshll.u32 %v204, 16
      %v270 = vrot.slane %v268, 5
      %v271 = vsel %vm229, %v266, %v270
      %v273 = vshrl.u32 %v205, 16
      %v275 = vrot.slane %v273, 4
      %v276 = vshll.u32 %v205, 16
      %v278 = vrot.slane %v276, 5
      %v279 = vor.u32 %v275, %v278
      %v280 = vrot.slane %v279, 4
      %v282 = vshll.u32 %v206, 16
      %v284 = vrot.slane %v282, 5
      %v285 = vsel %vm229, %v280, %v284
      %v287 = vshrl.u32 %v207, 16
      %v289 = vrot.slane %v287, 4
      %v290 = vshll.u32 %v207, 16
      %v292 = vrot.slane %v290, 5
      %v293 = vor.u32 %v289, %v292
      %v294 = vrot.slane %v293, 4
      %v296 = vshll.u32 %v208, 16
      %v298 = vrot.slane %v296, 5
      %v299 = vsel %vm229, %v294, %v298
      %v301 = vshrl.u32 %v209, 16
      %v303 = vrot.slane %v301, 4
      %v304 = vshll.u32 %v209, 16
      %v306 = vrot.slane %v304, 5
      %v307 = vor.u32 %v303, %v306
      %v308 = vrot.slane %v307, 4
      %v310 = vshll.u32 %v210, 16
      %v312 = vrot.slane %v310, 5
      %v313 = vsel %vm229, %v308, %v312
      %v315 = vshrl.u32 %v211, 16
      %v317 = vrot.slane %v315, 4
      %v318 = vshll.u32 %v211, 16
      %v320 = vrot.slane %v318, 5
      %v321 = vor.u32 %v317, %v320
      %v322 = vrot.slane %v321, 4
      %v324 = vshll.u32 %v212, 16
      %v326 = vrot.slane %v324, 5
      %v327 = vsel %vm229, %v322, %v326
      %v329 = vshrl.u32 %v213, 16
      %v331 = vrot.slane %v329, 4
      %v332 = vshll.u32 %v213, 16
      %v334 = vrot.slane %v332, 5
      %v335 = vor.u32 %v331, %v334
      %v336 = vrot.slane %v335, 4
      %v338 = vshll.u32 %v214, 16
      %v340 = vrot.slane %v338, 5
      %v341 = vsel %vm229, %v336, %v340
      %s342 = scalar_lea.vmem %s1, 32
      %v343 = vld [vmem:[%s342] sm:$0xf]
      %v344 = vld [vmem:[%s342 + $0x4] sm:$0xf]
      %v345 = vld [vmem:[%s342 + $0x8] sm:$0xf]
      %v346 = vld [vmem:[%s342 + $0xc] sm:$0xf]
      %v347 = vld [vmem:[%s342 + $0x10] sm:$0xf]
      %v348 = vld [vmem:[%s342 + $0x14] sm:$0xf]
      %v349 = vld [vmem:[%s342 + $0x18] sm:$0xf]
      %v350 = vld [vmem:[%s342 + $0x1c] sm:$0xf]
      %v351 = vunpack.c.l.b16 %v243
      %v352 = vunpack.c.l.b16 %v257
      %v353 = vunpack.c.l.b16 %v271
      %v354 = vunpack.c.l.b16 %v285
      %v355 = vunpack.c.l.b16 %v299
      %v356 = vunpack.c.l.b16 %v313
      %v357 = vunpack.c.l.b16 %v327
      %v358 = vunpack.c.l.b16 %v341
      %v359 = vpack.c.b16 %v352, %v351
      %v360 = vpack.c.b16 %v354, %v353
      %v361 = vpack.c.b16 %v356, %v355
      %v362 = vpack.c.b16 %v358, %v357
      %v371 = vunpack.c.l.b16 %v343
      %v372 = vunpack.c.l.b16 %v344
      %v373 = vunpack.c.l.b16 %v345
      %v374 = vunpack.c.l.b16 %v346
      %v375 = vunpack.c.l.b16 %v347
      %v376 = vunpack.c.l.b16 %v348
      %v377 = vunpack.c.l.b16 %v349
      %v378 = vunpack.c.l.b16 %v350
      %v379 = vpack.c.b16 %v372, %v371
      %v380 = vpack.c.b16 %v374, %v373
      %v381 = vpack.c.b16 %v376, %v375
      %v382 = vpack.c.b16 %v378, %v377
      %vm387 = vcmask 523264
      %v389 = vsel %vm387, %v359, 0
      %v392 = vsel %vm387, %v360, 0
      %v395 = vsel %vm387, %v361, 0
      %v398 = vsel %vm387, %v362, 0
      %400 = vmatprep.subr.bf16.mxu0 0
      %401 = vmatpush1.bf16.msra.mxu0 %v379
      %402 = vmatprep.subr.bf16.mxu0 0
      %403 = vmatpush1.bf16.msra.mxu0 %v380
      %404 = vmatprep.subr.bf16.mxu0 0
      %405 = vmatpush1.bf16.msra.mxu0 %v381
      %406 = vmatprep.subr.bf16.mxu0 0
      %407 = vmatpush1.bf16.msra.mxu0 %v382
      %408 = vmatprep.subr.bf16.mxu0 0
      %409 = vmatpush1.bf16.msra.mxu0 0
      %410 = vmatprep.subr.bf16.mxu0 0
      %411 = vmatpush1.bf16.msra.mxu0 0
      %412 = vmatprep.subr.bf16.mxu0 0
      %413 = vmatpush1.bf16.msra.mxu0 0
      %414 = vmatprep.subr.bf16.mxu0 0
      %415 = vmatpush1.bf16.msra.mxu0 0
      %416 = vmatprep.subr.bf16.mxu0 0
      %417 = vmatpush1.bf16.msra.mxu0 0
      %418 = vmatprep.subr.bf16.mxu0 0
      %419 = vmatpush1.bf16.msra.mxu0 0
      %420 = vmatprep.subr.bf16.mxu0 0
      %421 = vmatpush1.bf16.msra.mxu0 0
      %422 = vmatprep.subr.bf16.mxu0 0
      %423 = vmatpush1.bf16.msra.mxu0 0
      %424 = vmatprep.subr.bf16.mxu0 0
      %425 = vmatpush1.bf16.msra.mxu0 0
      %426 = vmatprep.subr.bf16.mxu0 0
      %427 = vmatpush1.bf16.msra.mxu0 0
      %428 = vmatprep.subr.bf16.mxu0 0
      %429 = vmatpush1.bf16.msra.mxu0 0
      %430 = vmatprep.subr.bf16.mxu0 0
      %431 = vmatpush1.bf16.msra.mxu0 0
      %432 = vmatprep.mubr.bf16.mxu0 0
      %433 = vmatmul.mubr.bf16.gmra.mrb[0].mxu0 %v389
      %v434 = vpop.f32.mrb[0].mxu0
      %v435 = vadd.f32 0.0, %v434
      %v436 = vpop.f32.mrb[0].mxu0
      %v437 = vpop.f32.mrb[0].mxu0
      %v438 = vadd.f32 0.0, %v437
      %v439 = vpop.f32.mrb[0].mxu0
      %440 = vmatprep.mubr.bf16.mxu0 0
      %441 = vmatmul.mubr.bf16.gmra.mrb[0].mxu0 %v392
      %v442 = vpop.f32.mrb[0].mxu0
      %v443 = vadd.f32 0.0, %v442
      %v444 = vpop.f32.mrb[0].mxu0
      %v445 = vpop.f32.mrb[0].mxu0
      %v446 = vadd.f32 0.0, %v445
      %v447 = vpop.f32.mrb[0].mxu0
      %448 = vmatprep.mubr.bf16.mxu0 0
      %449 = vmatmul.mubr.bf16.gmra.mrb[0].mxu0 %v395
      %v450 = vpop.f32.mrb[0].mxu0
      %v451 = vadd.f32 0.0, %v450
      %v452 = vpop.f32.mrb[0].mxu0
      %v453 = vpop.f32.mrb[0].mxu0
      %v454 = vadd.f32 0.0, %v453
      %v455 = vpop.f32.mrb[0].mxu0
      %456 = vmatprep.mubr.bf16.mxu0 0
      %457 = vmatmul.mubr.bf16.gmra.mrb[0].mxu0 %v398
      %v458 = vpop.f32.mrb[0].mxu0
      %v459 = vadd.f32 0.0, %v458
      %v460 = vpop.f32.mrb[0].mxu0
      %v461 = vpop.f32.mrb[0].mxu0
      %v462 = vadd.f32 0.0, %v461
      %v463 = vpop.f32.mrb[0].mxu0
      %464 = vdwg.mxu0
      %v473 = vunpack.c.l.b16 %v199
      %v474 = vunpack.c.l.b16 %v201
      %v475 = vunpack.c.l.b16 %v203
      %v476 = vunpack.c.l.b16 %v205
      %v477 = vunpack.c.l.b16 %v207
      %v478 = vunpack.c.l.b16 %v209
      %v479 = vunpack.c.l.b16 %v211
      %v480 = vunpack.c.l.b16 %v213
      %v481 = vpack.c.b16 %v474, %v473
      %v482 = vpack.c.b16 %v476, %v475
      %v483 = vpack.c.b16 %v478, %v477
      %v484 = vpack.c.b16 %v480, %v479
      %v493 = vunpack.c.l.b16 %v219
      %v494 = vunpack.c.l.b16 %v220
      %v495 = vunpack.c.l.b16 %v221
      %v496 = vunpack.c.l.b16 %v222
      %v497 = vunpack.c.l.b16 %v223
      %v498 = vunpack.c.l.b16 %v224
      %v499 = vunpack.c.l.b16 %v225
      %v500 = vunpack.c.l.b16 %v226
      %v501 = vpack.c.b16 %v494, %v493
      %v502 = vpack.c.b16 %v496, %v495
      %v503 = vpack.c.b16 %v498, %v497
      %v504 = vpack.c.b16 %v500, %v499
      %v510 = vsel %vm387, %v481, 0
      %v513 = vsel %vm387, %v482, 0
      %v516 = vsel %vm387, %v483, 0
      %v519 = vsel %vm387, %v484, 0
      %521 = vmatprep.subr.bf16.mxu0 0
      %522 = vmatpush1.bf16.msra.mxu0 %v501
      %523 = vmatprep.subr.bf16.mxu0 0
      %524 = vmatpush1.bf16.msra.mxu0 %v502
      %525 = vmatprep.subr.bf16.mxu0 0
      %526 = vmatpush1.bf16.msra.mxu0 %v503
      %527 = vmatprep.subr.bf16.mxu0 0
      %528 = vmatpush1.bf16.msra.mxu0 %v504
      %529 = vmatprep.subr.bf16.mxu0 0
      %530 = vmatpush1.bf16.msra.mxu0 0
      %531 = vmatprep.subr.bf16.mxu0 0
      %532 = vmatpush1.bf16.msra.mxu0 0
      %533 = vmatprep.subr.bf16.mxu0 0
      %534 = vmatpush1.bf16.msra.mxu0 0
      %535 = vmatprep.subr.bf16.mxu0 0
      %536 = vmatpush1.bf16.msra.mxu0 0
      %537 = vmatprep.subr.bf16.mxu0 0
      %538 = vmatpush1.bf16.msra.mxu0 0
      %539 = vmatprep.subr.bf16.mxu0 0
      %540 = vmatpush1.bf16.msra.mxu0 0
      %541 = vmatprep.subr.bf16.mxu0 0
      %542 = vmatpush1.bf16.msra.mxu0 0
      %543 = vmatprep.subr.bf16.mxu0 0
      %544 = vmatpush1.bf16.msra.mxu0 0
      %545 = vmatprep.subr.bf16.mxu0 0
      %546 = vmatpush1.bf16.msra.mxu0 0
      %547 = vmatprep.subr.bf16.mxu0 0
      %548 = vmatpush1.bf16.msra.mxu0 0
      %549 = vmatprep.subr.bf16.mxu0 0
      %550 = vmatpush1.bf16.msra.mxu0 0
      %551 = vmatprep.subr.bf16.mxu0 0
      %552 = vmatpush1.bf16.msra.mxu0 0
      %553 = vmatprep.mubr.bf16.mxu0 0
      %554 = vmatmul.mubr.bf16.gmra.mrb[0].mxu0 %v510
      %v555 = vpop.f32.mrb[0].mxu0
      %v556 = vadd.f32 %v435, %v555
      %v557 = vpop.f32.mrb[0].mxu0
      %v558 = vpop.f32.mrb[0].mxu0
      %v559 = vadd.f32 %v438, %v558
      %v560 = vpop.f32.mrb[0].mxu0
      %561 = vmatprep.mubr.bf16.mxu0 0
      %562 = vmatmul.mubr.bf16.gmra.mrb[0].mxu0 %v513
      %v563 = vpop.f32.mrb[0].mxu0
      %v564 = vadd.f32 %v443, %v563
      %v565 = vpop.f32.mrb[0].mxu0
      %v566 = vpop.f32.mrb[0].mxu0
      %v567 = vadd.f32 %v446, %v566
      %v568 = vpop.f32.mrb[0].mxu0
      %569 = vmatprep.mubr.bf16.mxu0 0
      %570 = vmatmul.mubr.bf16.gmra.mrb[0].mxu0 %v516
      %v571 = vpop.f32.mrb[0].mxu0
      %v572 = vadd.f32 %v451, %v571
      %v573 = vpop.f32.mrb[0].mxu0
      %v574 = vpop.f32.mrb[0].mxu0
      %v575 = vadd.f32 %v454, %v574
      %v576 = vpop.f32.mrb[0].mxu0
      %577 = vmatprep.mubr.bf16.mxu0 0
      %578 = vmatmul.mubr.bf16.gmra.mrb[0].mxu0 %v519
      %v579 = vpop.f32.mrb[0].mxu0
      %v580 = vadd.f32 %v459, %v579
      %v581 = vpop.f32.mrb[0].mxu0
      %v582 = vpop.f32.mrb[0].mxu0
      %v583 = vadd.f32 %v462, %v582
      %v584 = vpop.f32.mrb[0].mxu0
      %585 = vdwg.mxu0
      %vm594 = vcmask 1042432
      %vm595 = vcmask 1046532
      %vm596 = vmor %vm594, %vm595
      %v597 = vrot.slane %v199, 5
      %v598 = vrot.slane %v597, 4
      %v599 = vrot.slane %v200, 5
      %v600 = vsel %vm596, %v598, %v599
      %v601 = vrot.slane %v201, 5
      %v602 = vrot.slane %v601, 4
      %v603 = vrot.slane %v202, 5
      %v604 = vsel %vm596, %v602, %v603
      %v605 = vrot.slane %v203, 5
      %v606 = vrot.slane %v605, 4
      %v607 = vrot.slane %v204, 5
      %v608 = vsel %vm596, %v606, %v607
      %v609 = vrot.slane %v205, 5
      %v610 = vrot.slane %v609, 4
      %v611 = vrot.slane %v206, 5
      %v612 = vsel %vm596, %v610, %v611
      %v613 = vrot.slane %v207, 5
      %v614 = vrot.slane %v613, 4
      %v615 = vrot.slane %v208, 5
      %v616 = vsel %vm596, %v614, %v615
      %v617 = vrot.slane %v209, 5
      %v618 = vrot.slane %v617, 4
      %v619 = vrot.slane %v210, 5
      %v620 = vsel %vm596, %v618, %v619
      %v621 = vrot.slane %v211, 5
      %v622 = vrot.slane %v621, 4
      %v623 = vrot.slane %v212, 5
      %v624 = vsel %vm596, %v622, %v623
      %v625 = vrot.slane %v213, 5
      %v626 = vrot.slane %v625, 4
      %v627 = vrot.slane %v214, 5
      %v628 = vsel %vm596, %v626, %v627
      %s629 = scalar_lea.vmem %s1, 64
      %v630 = vld [vmem:[%s629] sm:$0xf]
      %v631 = vld [vmem:[%s629 + $0x4] sm:$0xf]
      %v632 = vld [vmem:[%s629 + $0x8] sm:$0xf]
      %v633 = vld [vmem:[%s629 + $0xc] sm:$0xf]
      %v634 = vld [vmem:[%s629 + $0x10] sm:$0xf]
      %v635 = vld [vmem:[%s629 + $0x14] sm:$0xf]
      %v636 = vld [vmem:[%s629 + $0x18] sm:$0xf]
      %v637 = vld [vmem:[%s629 + $0x1c] sm:$0xf]
      %v638 = vunpack.c.l.b16 %v600
      %v639 = vunpack.c.l.b16 %v604
      %v640 = vunpack.c.l.b16 %v608
      %v641 = vunpack.c.l.b16 %v612
      %v642 = vunpack.c.l.b16 %v616
      %v643 = vunpack.c.l.b16 %v620
      %v644 = vunpack.c.l.b16 %v624
      %v645 = vunpack.c.l.b16 %v628
      %v646 = vpack.c.b16 %v639, %v638
      %v647 = vpack.c.b16 %v641, %v640
      %v648 = vpack.c.b16 %v643, %v642
      %v649 = vpack.c.b16 %v645, %v644
      %v658 = vunpack.c.l.b16 %v630
      %v659 = vunpack.c.l.b16 %v631
      %v660 = vunpack.c.l.b16 %v632
      %v661 = vunpack.c.l.b16 %v633
      %v662 = vunpack.c.l.b16 %v634
      %v663 = vunpack.c.l.b16 %v635
      %v664 = vunpack.c.l.b16 %v636
      %v665 = vunpack.c.l.b16 %v637
      %v666 = vpack.c.b16 %v659, %v658
      %v667 = vpack.c.b16 %v661, %v660
      %v668 = vpack.c.b16 %v663, %v662
      %v669 = vpack.c.b16 %v665, %v664
      %v675 = vsel %vm387, %v646, 0
      %v678 = vsel %vm387, %v647, 0
      %v681 = vsel %vm387, %v648, 0
      %v684 = vsel %vm387, %v649, 0
      %686 = vmatprep.subr.bf16.mxu0 0
      %687 = vmatpush1.bf16.msra.mxu0 %v666
      %688 = vmatprep.subr.bf16.mxu0 0
      %689 = vmatpush1.bf16.msra.mxu0 %v667
      %690 = vmatprep.subr.bf16.mxu0 0
      %691 = vmatpush1.bf16.msra.mxu0 %v668
      %692 = vmatprep.subr.bf16.mxu0 0
      %693 = vmatpush1.bf16.msra.mxu0 %v669
      %694 = vmatprep.subr.bf16.mxu0 0
      %695 = vmatpush1.bf16.msra.mxu0 0
      %696 = vmatprep.subr.bf16.mxu0 0
      %697 = vmatpush1.bf16.msra.mxu0 0
      %698 = vmatprep.subr.bf16.mxu0 0
      %699 = vmatpush1.bf16.msra.mxu0 0
      %700 = vmatprep.subr.bf16.mxu0 0
      %701 = vmatpush1.bf16.msra.mxu0 0
      %702 = vmatprep.subr.bf16.mxu0 0
      %703 = vmatpush1.bf16.msra.mxu0 0
      %704 = vmatprep.subr.bf16.mxu0 0
      %705 = vmatpush1.bf16.msra.mxu0 0
      %706 = vmatprep.subr.bf16.mxu0 0
      %707 = vmatpush1.bf16.msra.mxu0 0
      %708 = vmatprep.subr.bf16.mxu0 0
      %709 = vmatpush1.bf16.msra.mxu0 0
      %710 = vmatprep.subr.bf16.mxu0 0
      %711 = vmatpush1.bf16.msra.mxu0 0
      %712 = vmatprep.subr.bf16.mxu0 0
      %713 = vmatpush1.bf16.msra.mxu0 0
      %714 = vmatprep.subr.bf16.mxu0 0
      %715 = vmatpush1.bf16.msra.mxu0 0
      %716 = vmatprep.subr.bf16.mxu0 0
      %717 = vmatpush1.bf16.msra.mxu0 0
      %718 = vmatprep.mubr.bf16.mxu0 0
      %719 = vmatmul.mubr.bf16.gmra.mrb[0].mxu0 %v675
      %v720 = vpop.f32.mrb[0].mxu0
      %v721 = vadd.f32 0.0, %v720
      %v722 = vpop.f32.mrb[0].mxu0
      %v723 = vpop.f32.mrb[0].mxu0
      %v724 = vadd.f32 0.0, %v723
      %v725 = vpop.f32.mrb[0].mxu0
      %726 = vmatprep.mubr.bf16.mxu0 0
      %727 = vmatmul.mubr.bf16.gmra.mrb[0].mxu0 %v678
      %v728 = vpop.f32.mrb[0].mxu0
      %v729 = vadd.f32 0.0, %v728
      %v730 = vpop.f32.mrb[0].mxu0
      %v731 = vpop.f32.mrb[0].mxu0
      %v732 = vadd.f32 0.0, %v731
      %v733 = vpop.f32.mrb[0].mxu0
      %734 = vmatprep.mubr.bf16.mxu0 0
      %735 = vmatmul.mubr.bf16.gmra.mrb[0].mxu0 %v681
      %v736 = vpop.f32.mrb[0].mxu0
      %v737 = vadd.f32 0.0, %v736
      %v738 = vpop.f32.mrb[0].mxu0
      %v739 = vpop.f32.mrb[0].mxu0
      %v740 = vadd.f32 0.0, %v739
      %v741 = vpop.f32.mrb[0].mxu0
      %742 = vmatprep.mubr.bf16.mxu0 0
      %743 = vmatmul.mubr.bf16.gmra.mrb[0].mxu0 %v684
      %v744 = vpop.f32.mrb[0].mxu0
      %v745 = vadd.f32 0.0, %v744
      %v746 = vpop.f32.mrb[0].mxu0
      %v747 = vpop.f32.mrb[0].mxu0
      %v748 = vadd.f32 0.0, %v747
      %v749 = vpop.f32.mrb[0].mxu0
      %750 = vdwg.mxu0
      %v751 = vadd.f32 %v556, %v721
      %v752 = vadd.f32 %v559, %v724
      %v753 = vadd.f32 %v564, %v729
      %v754 = vadd.f32 %v567, %v732
      %v755 = vadd.f32 %v572, %v737
      %v756 = vadd.f32 %v575, %v740
      %v757 = vadd.f32 %v580, %v745
      %v758 = vadd.f32 %v583, %v748
      %s759 = scalar_lea.vmem %s1, 96
      %v760 = vld [vmem:[%s759] sm:$0xf]
      %v761 = vld [vmem:[%s759 + $0x4] sm:$0xf]
      %v762 = vld [vmem:[%s759 + $0x8] sm:$0xf]
      %v763 = vld [vmem:[%s759 + $0xc] sm:$0xf]
      %v764 = vld [vmem:[%s759 + $0x10] sm:$0xf]
      %v765 = vld [vmem:[%s759 + $0x14] sm:$0xf]
      %v766 = vld [vmem:[%s759 + $0x18] sm:$0xf]
      %v767 = vld [vmem:[%s759 + $0x1c] sm:$0xf]
      %v769 = vunpack.c.l.b16 %v215
      %v770 = vpack.c.b16 %v475, %v474
      %v771 = vpack.c.b16 %v477, %v476
      %v772 = vpack.c.b16 %v479, %v478
      %v773 = vpack.c.b16 %v769, %v480
      %v782 = vunpack.c.l.b16 %v760
      %v783 = vunpack.c.l.b16 %v761
      %v784 = vunpack.c.l.b16 %v762
      %v785 = vunpack.c.l.b16 %v763
      %v786 = vunpack.c.l.b16 %v764
      %v787 = vunpack.c.l.b16 %v765
      %v788 = vunpack.c.l.b16 %v766
      %v789 = vunpack.c.l.b16 %v767
      %v790 = vpack.c.b16 %v783, %v782
      %v791 = vpack.c.b16 %v785, %v784
      %v792 = vpack.c.b16 %v787, %v786
      %v793 = vpack.c.b16 %v789, %v788
      %v799 = vsel %vm387, %v770, 0
      %v802 = vsel %vm387, %v771, 0
      %v805 = vsel %vm387, %v772, 0
      %v808 = vsel %vm387, %v773, 0
      %810 = vmatprep.subr.bf16.mxu0 0
      %811 = vmatpush1.bf16.msra.mxu0 %v790
      %812 = vmatprep.subr.bf16.mxu0 0
      %813 = vmatpush1.bf16.msra.mxu0 %v791
      %814 = vmatprep.subr.bf16.mxu0 0
      %815 = vmatpush1.bf16.msra.mxu0 %v792
      %816 = vmatprep.subr.bf16.mxu0 0
      %817 = vmatpush1.bf16.msra.mxu0 %v793
      %818 = vmatprep.subr.bf16.mxu0 0
      %819 = vmatpush1.bf16.msra.mxu0 0
      %820 = vmatprep.subr.bf16.mxu0 0
      %821 = vmatpush1.bf16.msra.mxu0 0
      %822 = vmatprep.subr.bf16.mxu0 0
      %823 = vmatpush1.bf16.msra.mxu0 0
      %824 = vmatprep.subr.bf16.mxu0 0
      %825 = vmatpush1.bf16.msra.mxu0 0
      %826 = vmatprep.subr.bf16.mxu0 0
      %827 = vmatpush1.bf16.msra.mxu0 0
      %828 = vmatprep.subr.bf16.mxu0 0
      %829 = vmatpush1.bf16.msra.mxu0 0
      %830 = vmatprep.subr.bf16.mxu0 0
      %831 = vmatpush1.bf16.msra.mxu0 0
      %832 = vmatprep.subr.bf16.mxu0 0
      %833 = vmatpush1.bf16.msra.mxu0 0
      %834 = vmatprep.subr.bf16.mxu0 0
      %835 = vmatpush1.bf16.msra.mxu0 0
      %836 = vmatprep.subr.bf16.mxu0 0
      %837 = vmatpush1.bf16.msra.mxu0 0
      %838 = vmatprep.subr.bf16.mxu0 0
      %839 = vmatpush1.bf16.msra.mxu0 0
      %840 = vmatprep.subr.bf16.mxu0 0
      %841 = vmatpush1.bf16.msra.mxu0 0
      %842 = vmatprep.mubr.bf16.mxu0 0
      %843 = vmatmul.mubr.bf16.gmra.mrb[0].mxu0 %v799
      %v844 = vpop.f32.mrb[0].mxu0
      %v845 = vadd.f32 0.0, %v844
      %v846 = vpop.f32.mrb[0].mxu0
      %v847 = vpop.f32.mrb[0].mxu0
      %v848 = vadd.f32 0.0, %v847
      %v849 = vpop.f32.mrb[0].mxu0
      %850 = vmatprep.mubr.bf16.mxu0 0
      %851 = vmatmul.mubr.bf16.gmra.mrb[0].mxu0 %v802
      %v852 = vpop.f32.mrb[0].mxu0
      %v853 = vadd.f32 0.0, %v852
      %v854 = vpop.f32.mrb[0].mxu0
      %v855 = vpop.f32.mrb[0].mxu0
      %v856 = vadd.f32 0.0, %v855
      %v857 = vpop.f32.mrb[0].mxu0
      %858 = vmatprep.mubr.bf16.mxu0 0
      %859 = vmatmul.mubr.bf16.gmra.mrb[0].mxu0 %v805
      %v860 = vpop.f32.mrb[0].mxu0
      %v861 = vadd.f32 0.0, %v860
      %v862 = vpop.f32.mrb[0].mxu0
      %v863 = vpop.f32.mrb[0].mxu0
      %v864 = vadd.f32 0.0, %v863
      %v865 = vpop.f32.mrb[0].mxu0
      %866 = vmatprep.mubr.bf16.mxu0 0
      %867 = vmatmul.mubr.bf16.gmra.mrb[0].mxu0 %v808
      %v868 = vpop.f32.mrb[0].mxu0
      %v869 = vadd.f32 0.0, %v868
      %v870 = vpop.f32.mrb[0].mxu0
      %v871 = vpop.f32.mrb[0].mxu0
      %v872 = vadd.f32 0.0, %v871
      %v873 = vpop.f32.mrb[0].mxu0
      %874 = vdwg.mxu0
      %v875 = vadd.f32 %v751, %v845
      %v876 = vadd.f32 %v752, %v848
      %v877 = vadd.f32 %v753, %v853
      %v878 = vadd.f32 %v754, %v856
      %v879 = vadd.f32 %v755, %v861
      %v880 = vadd.f32 %v756, %v864
      %v881 = vadd.f32 %v757, %v869
      %v882 = vadd.f32 %v758, %v872
      %v884 = vshrl.u32 %v215, 16
      %v886 = vrot.slane %v884, 4
      %v887 = vshll.u32 %v215, 16
      %v889 = vrot.slane %v887, 5
      %v890 = vor.u32 %v886, %v889
      %v891 = vrot.slane %v890, 4
      %v893 = vshll.u32 %v216, 16
      %v895 = vrot.slane %v893, 5
      %v896 = vsel %vm229, %v891, %v895
      %s897 = scalar_lea.vmem %s1, 128
      %v898 = vld [vmem:[%s897] sm:$0xf]
      %v899 = vld [vmem:[%s897 + $0x4] sm:$0xf]
      %v900 = vld [vmem:[%s897 + $0x8] sm:$0xf]
      %v901 = vld [vmem:[%s897 + $0xc] sm:$0xf]
      %v902 = vld [vmem:[%s897 + $0x10] sm:$0xf]
      %v903 = vld [vmem:[%s897 + $0x14] sm:$0xf]
      %v904 = vld [vmem:[%s897 + $0x18] sm:$0xf]
      %v905 = vld [vmem:[%s897 + $0x1c] sm:$0xf]
      %v906 = vunpack.c.l.b16 %v896
      %v907 = vpack.c.b16 %v353, %v352
      %v908 = vpack.c.b16 %v355, %v354
      %v909 = vpack.c.b16 %v357, %v356
      %v910 = vpack.c.b16 %v906, %v358
      %v919 = vunpack.c.l.b16 %v898
      %v920 = vunpack.c.l.b16 %v899
      %v921 = vunpack.c.l.b16 %v900
      %v922 = vunpack.c.l.b16 %v901
      %v923 = vunpack.c.l.b16 %v902
      %v924 = vunpack.c.l.b16 %v903
      %v925 = vunpack.c.l.b16 %v904
      %v926 = vunpack.c.l.b16 %v905
      %v927 = vpack.c.b16 %v920, %v919
      %v928 = vpack.c.b16 %v922, %v921
      %v929 = vpack.c.b16 %v924, %v923
      %v930 = vpack.c.b16 %v926, %v925
      %v936 = vsel %vm387, %v907, 0
      %v939 = vsel %vm387, %v908, 0
      %v942 = vsel %vm387, %v909, 0
      %v945 = vsel %vm387, %v910, 0
      %947 = vmatprep.subr.bf16.mxu0 0
      %948 = vmatpush1.bf16.msra.mxu0 %v927
      %949 = vmatprep.subr.bf16.mxu0 0
      %950 = vmatpush1.bf16.msra.mxu0 %v928
      %951 = vmatprep.subr.bf16.mxu0 0
      %952 = vmatpush1.bf16.msra.mxu0 %v929
      %953 = vmatprep.subr.bf16.mxu0 0
      %954 = vmatpush1.bf16.msra.mxu0 %v930
      %955 = vmatprep.subr.bf16.mxu0 0
      %956 = vmatpush1.bf16.msra.mxu0 0
      %957 = vmatprep.subr.bf16.mxu0 0
      %958 = vmatpush1.bf16.msra.mxu0 0
      %959 = vmatprep.subr.bf16.mxu0 0
      %960 = vmatpush1.bf16.msra.mxu0 0
      %961 = vmatprep.subr.bf16.mxu0 0
      %962 = vmatpush1.bf16.msra.mxu0 0
      %963 = vmatprep.subr.bf16.mxu0 0
      %964 = vmatpush1.bf16.msra.mxu0 0
      %965 = vmatprep.subr.bf16.mxu0 0
      %966 = vmatpush1.bf16.msra.mxu0 0
      %967 = vmatprep.subr.bf16.mxu0 0
      %968 = vmatpush1.bf16.msra.mxu0 0
      %969 = vmatprep.subr.bf16.mxu0 0
      %970 = vmatpush1.bf16.msra.mxu0 0
      %971 = vmatprep.subr.bf16.mxu0 0
      %972 = vmatpush1.bf16.msra.mxu0 0
      %973 = vmatprep.subr.bf16.mxu0 0
      %974 = vmatpush1.bf16.msra.mxu0 0
      %975 = vmatprep.subr.bf16.mxu0 0
      %976 = vmatpush1.bf16.msra.mxu0 0
      %977 = vmatprep.subr.bf16.mxu0 0
      %978 = vmatpush1.bf16.msra.mxu0 0
      %979 = vmatprep.mubr.bf16.mxu0 0
      %980 = vmatmul.mubr.bf16.gmra.mrb[0].mxu0 %v936
      %v981 = vpop.f32.mrb[0].mxu0
      %v982 = vadd.f32 0.0, %v981
      %v983 = vpop.f32.mrb[0].mxu0
      %v984 = vpop.f32.mrb[0].mxu0
      %v985 = vadd.f32 0.0, %v984
      %v986 = vpop.f32.mrb[0].mxu0
      %987 = vmatprep.mubr.bf16.mxu0 0
      %988 = vmatmul.mubr.bf16.gmra.mrb[0].mxu0 %v939
      %v989 = vpop.f32.mrb[0].mxu0
      %v990 = vadd.f32 0.0, %v989
      %v991 = vpop.f32.mrb[0].mxu0
      %v992 = vpop.f32.mrb[0].mxu0
      %v993 = vadd.f32 0.0, %v992
      %v994 = vpop.f32.mrb[0].mxu0
      %995 = vmatprep.mubr.bf16.mxu0 0
      %996 = vmatmul.mubr.bf16.gmra.mrb[0].mxu0 %v942
      %v997 = vpop.f32.mrb[0].mxu0
      %v998 = vadd.f32 0.0, %v997
      %v999 = vpop.f32.mrb[0].mxu0
      %v1000 = vpop.f32.mrb[0].mxu0
      %v1001 = vadd.f32 0.0, %v1000
      %v1002 = vpop.f32.mrb[0].mxu0
      %1003 = vmatprep.mubr.bf16.mxu0 0
      %1004 = vmatmul.mubr.bf16.gmra.mrb[0].mxu0 %v945
      %v1005 = vpop.f32.mrb[0].mxu0
      %v1006 = vadd.f32 0.0, %v1005
      %v1007 = vpop.f32.mrb[0].mxu0
      %v1008 = vpop.f32.mrb[0].mxu0
      %v1009 = vadd.f32 0.0, %v1008
      %v1010 = vpop.f32.mrb[0].mxu0
      %1011 = vdwg.mxu0
      %v1012 = vadd.f32 %v875, %v982
      %v1013 = vadd.f32 %v876, %v985
      %v1014 = vadd.f32 %v877, %v990
      %v1015 = vadd.f32 %v878, %v993
      %v1016 = vadd.f32 %v879, %v998
      %v1017 = vadd.f32 %v880, %v1001
      %v1018 = vadd.f32 %v881, %v1006
      %v1019 = vadd.f32 %v882, %v1009
      %v1021 = vrot.slane %v215, 5
      %v1022 = vrot.slane %v1021, 4
      %v1023 = vrot.slane %v216, 5
      %v1024 = vsel %vm596, %v1022, %v1023
      %s1025 = scalar_lea.vmem %s1, 160
      %v1026 = vld [vmem:[%s1025] sm:$0xf]
      %v1027 = vld [vmem:[%s1025 + $0x4] sm:$0xf]
      %v1028 = vld [vmem:[%s1025 + $0x8] sm:$0xf]
      %v1029 = vld [vmem:[%s1025 + $0xc] sm:$0xf]
      %v1030 = vld [vmem:[%s1025 + $0x10] sm:$0xf]
      %v1031 = vld [vmem:[%s1025 + $0x14] sm:$0xf]
      %v1032 = vld [vmem:[%s1025 + $0x18] sm:$0xf]
      %v1033 = vld [vmem:[%s1025 + $0x1c] sm:$0xf]
      %v1034 = vunpack.c.l.b16 %v1024
      %v1035 = vpack.c.b16 %v640, %v639
      %v1036 = vpack.c.b16 %v642, %v641
      %v1037 = vpack.c.b16 %v644, %v643
      %v1038 = vpack.c.b16 %v1034, %v645
      %v1047 = vunpack.c.l.b16 %v1026
      %v1048 = vunpack.c.l.b16 %v1027
      %v1049 = vunpack.c.l.b16 %v1028
      %v1050 = vunpack.c.l.b16 %v1029
      %v1051 = vunpack.c.l.b16 %v1030
      %v1052 = vunpack.c.l.b16 %v1031
      %v1053 = vunpack.c.l.b16 %v1032
      %v1054 = vunpack.c.l.b16 %v1033
      %v1055 = vpack.c.b16 %v1048, %v1047
      %v1056 = vpack.c.b16 %v1050, %v1049
      %v1057 = vpack.c.b16 %v1052, %v1051
      %v1058 = vpack.c.b16 %v1054, %v1053
      %v1064 = vsel %vm387, %v1035, 0
      %v1067 = vsel %vm387, %v1036, 0
      %v1070 = vsel %vm387, %v1037, 0
      %v1073 = vsel %vm387, %v1038, 0
      %1075 = vmatprep.subr.bf16.mxu0 0
      %1076 = vmatpush1.bf16.msra.mxu0 %v1055
      %1077 = vmatprep.subr.bf16.mxu0 0
      %1078 = vmatpush1.bf16.msra.mxu0 %v1056
      %1079 = vmatprep.subr.bf16.mxu0 0
      %1080 = vmatpush1.bf16.msra.mxu0 %v1057
      %1081 = vmatprep.subr.bf16.mxu0 0
      %1082 = vmatpush1.bf16.msra.mxu0 %v1058
      %1083 = vmatprep.subr.bf16.mxu0 0
      %1084 = vmatpush1.bf16.msra.mxu0 0
      %1085 = vmatprep.subr.bf16.mxu0 0
      %1086 = vmatpush1.bf16.msra.mxu0 0
      %1087 = vmatprep.subr.bf16.mxu0 0
      %1088 = vmatpush1.bf16.msra.mxu0 0
      %1089 = vmatprep.subr.bf16.mxu0 0
      %1090 = vmatpush1.bf16.msra.mxu0 0
      %1091 = vmatprep.subr.bf16.mxu0 0
      %1092 = vmatpush1.bf16.msra.mxu0 0
      %1093 = vmatprep.subr.bf16.mxu0 0
      %1094 = vmatpush1.bf16.msra.mxu0 0
      %1095 = vmatprep.subr.bf16.mxu0 0
      %1096 = vmatpush1.bf16.msra.mxu0 0
      %1097 = vmatprep.subr.bf16.mxu0 0
      %1098 = vmatpush1.bf16.msra.mxu0 0
      %1099 = vmatprep.subr.bf16.mxu0 0
      %1100 = vmatpush1.bf16.msra.mxu0 0
      %1101 = vmatprep.subr.bf16.mxu0 0
      %1102 = vmatpush1.bf16.msra.mxu0 0
      %1103 = vmatprep.subr.bf16.mxu0 0
      %1104 = vmatpush1.bf16.msra.mxu0 0
      %1105 = vmatprep.subr.bf16.mxu0 0
      %1106 = vmatpush1.bf16.msra.mxu0 0
      %1107 = vmatprep.mubr.bf16.mxu0 0
      %1108 = vmatmul.mubr.bf16.gmra.mrb[0].mxu0 %v1064
      %v1109 = vpop.f32.mrb[0].mxu0
      %v1110 = vadd.f32 0.0, %v1109
      %v1111 = vpop.f32.mrb[0].mxu0
      %v1112 = vpop.f32.mrb[0].mxu0
      %v1113 = vadd.f32 0.0, %v1112
      %v1114 = vpop.f32.mrb[0].mxu0
      %1115 = vmatprep.mubr.bf16.mxu0 0
      %1116 = vmatmul.mubr.bf16.gmra.mrb[0].mxu0 %v1067
      %v1117 = vpop.f32.mrb[0].mxu0
      %v1118 = vadd.f32 0.0, %v1117
      %v1119 = vpop.f32.mrb[0].mxu0
      %v1120 = vpop.f32.mrb[0].mxu0
      %v1121 = vadd.f32 0.0, %v1120
      %v1122 = vpop.f32.mrb[0].mxu0
      %1123 = vmatprep.mubr.bf16.mxu0 0
      %1124 = vmatmul.mubr.bf16.gmra.mrb[0].mxu0 %v1070
      %v1125 = vpop.f32.mrb[0].mxu0
      %v1126 = vadd.f32 0.0, %v1125
      %v1127 = vpop.f32.mrb[0].mxu0
      %v1128 = vpop.f32.mrb[0].mxu0
      %v1129 = vadd.f32 0.0, %v1128
      %v1130 = vpop.f32.mrb[0].mxu0
      %1131 = vmatprep.mubr.bf16.mxu0 0
      %1132 = vmatmul.mubr.bf16.gmra.mrb[0].mxu0 %v1073
      %v1133 = vpop.f32.mrb[0].mxu0
      %v1134 = vadd.f32 0.0, %v1133
      %v1135 = vpop.f32.mrb[0].mxu0
      %v1136 = vpop.f32.mrb[0].mxu0
      %v1137 = vadd.f32 0.0, %v1136
      %v1138 = vpop.f32.mrb[0].mxu0
      %1139 = vdwg.mxu0
      %v1140 = vadd.f32 %v1012, %v1110
      %v1141 = vadd.f32 %v1013, %v1113
      %v1142 = vadd.f32 %v1014, %v1118
      %v1143 = vadd.f32 %v1015, %v1121
      %v1144 = vadd.f32 %v1016, %v1126
      %v1145 = vadd.f32 %v1017, %v1129
      %v1146 = vadd.f32 %v1018, %v1134
      %v1147 = vadd.f32 %v1019, %v1137
      %s1148 = scalar_lea.vmem %s1, 192
      %v1149 = vld [vmem:[%s1148] sm:$0xf]
      %v1150 = vld [vmem:[%s1148 + $0x4] sm:$0xf]
      %v1151 = vld [vmem:[%s1148 + $0x8] sm:$0xf]
      %v1152 = vld [vmem:[%s1148 + $0xc] sm:$0xf]
      %v1153 = vld [vmem:[%s1148 + $0x10] sm:$0xf]
      %v1154 = vld [vmem:[%s1148 + $0x14] sm:$0xf]
      %v1155 = vld [vmem:[%s1148 + $0x18] sm:$0xf]
      %v1156 = vld [vmem:[%s1148 + $0x1c] sm:$0xf]
      %v1158 = vunpack.c.l.b16 %v217
      %v1159 = vpack.c.b16 %v1158, %v769
      %v1168 = vunpack.c.l.b16 %v1149
      %v1169 = vunpack.c.l.b16 %v1150
      %v1170 = vunpack.c.l.b16 %v1151
      %v1171 = vunpack.c.l.b16 %v1152
      %v1172 = vunpack.c.l.b16 %v1153
      %v1173 = vunpack.c.l.b16 %v1154
      %v1174 = vunpack.c.l.b16 %v1155
      %v1175 = vunpack.c.l.b16 %v1156
      %v1176 = vpack.c.b16 %v1169, %v1168
      %v1177 = vpack.c.b16 %v1171, %v1170
      %v1178 = vpack.c.b16 %v1173, %v1172
      %v1179 = vpack.c.b16 %v1175, %v1174
      %v1185 = vsel %vm387, %v1159, 0
      %1187 = vmatprep.subr.bf16.mxu0 0
      %1188 = vmatpush1.bf16.msra.mxu0 %v1176
      %1189 = vmatprep.subr.bf16.mxu0 0
      %1190 = vmatpush1.bf16.msra.mxu0 %v1177
      %1191 = vmatprep.subr.bf16.mxu0 0
      %1192 = vmatpush1.bf16.msra.mxu0 %v1178
      %1193 = vmatprep.subr.bf16.mxu0 0
      %1194 = vmatpush1.bf16.msra.mxu0 %v1179
      %1195 = vmatprep.subr.bf16.mxu0 0
      %1196 = vmatpush1.bf16.msra.mxu0 0
      %1197 = vmatprep.subr.bf16.mxu0 0
      %1198 = vmatpush1.bf16.msra.mxu0 0
      %1199 = vmatprep.subr.bf16.mxu0 0
      %1200 = vmatpush1.bf16.msra.mxu0 0
      %1201 = vmatprep.subr.bf16.mxu0 0
      %1202 = vmatpush1.bf16.msra.mxu0 0
      %1203 = vmatprep.subr.bf16.mxu0 0
      %1204 = vmatpush1.bf16.msra.mxu0 0
      %1205 = vmatprep.subr.bf16.mxu0 0
      %1206 = vmatpush1.bf16.msra.mxu0 0
      %1207 = vmatprep.subr.bf16.mxu0 0
      %1208 = vmatpush1.bf16.msra.mxu0 0
      %1209 = vmatprep.subr.bf16.mxu0 0
      %1210 = vmatpush1.bf16.msra.mxu0 0
      %1211 = vmatprep.subr.bf16.mxu0 0
      %1212 = vmatpush1.bf16.msra.mxu0 0
      %1213 = vmatprep.subr.bf16.mxu0 0
      %1214 = vmatpush1.bf16.msra.mxu0 0
      %1215 = vmatprep.subr.bf16.mxu0 0
      %1216 = vmatpush1.bf16.msra.mxu0 0
      %1217 = vmatprep.subr.bf16.mxu0 0
      %1218 = vmatpush1.bf16.msra.mxu0 0
      %1219 = vmatprep.mubr.bf16.mxu0 0
      %1220 = vmatmul.mubr.bf16.gmra.mrb[0].mxu0 %v513
      %v1221 = vpop.f32.mrb[0].mxu0
      %v1222 = vadd.f32 0.0, %v1221
      %v1223 = vpop.f32.mrb[0].mxu0
      %v1224 = vpop.f32.mrb[0].mxu0
      %v1225 = vadd.f32 0.0, %v1224
      %v1226 = vpop.f32.mrb[0].mxu0
      %1227 = vmatprep.mubr.bf16.mxu0 0
      %1228 = vmatmul.mubr.bf16.gmra.mrb[0].mxu0 %v516
      %v1229 = vpop.f32.mrb[0].mxu0
      %v1230 = vadd.f32 0.0, %v1229
      %v1231 = vpop.f32.mrb[0].mxu0
      %v1232 = vpop.f32.mrb[0].mxu0
      %v1233 = vadd.f32 0.0, %v1232
      %v1234 = vpop.f32.mrb[0].mxu0
      %1235 = vmatprep.mubr.bf16.mxu0 0
      %1236 = vmatmul.mubr.bf16.gmra.mrb[0].mxu0 %v519
      %v1237 = vpop.f32.mrb[0].mxu0
      %v1238 = vadd.f32 0.0, %v1237
      %v1239 = vpop.f32.mrb[0].mxu0
      %v1240 = vpop.f32.mrb[0].mxu0
      %v1241 = vadd.f32 0.0, %v1240
      %v1242 = vpop.f32.mrb[0].mxu0
      %1243 = vmatprep.mubr.bf16.mxu0 0
      %1244 = vmatmul.mubr.bf16.gmra.mrb[0].mxu0 %v1185
      %v1245 = vpop.f32.mrb[0].mxu0
      %v1246 = vadd.f32 0.0, %v1245
      %v1247 = vpop.f32.mrb[0].mxu0
      %v1248 = vpop.f32.mrb[0].mxu0
      %v1249 = vadd.f32 0.0, %v1248
      %v1250 = vpop.f32.mrb[0].mxu0
      %1251 = vdwg.mxu0
      %v1252 = vadd.f32 %v1140, %v1222
      %v1253 = vadd.f32 %v1141, %v1225
      %v1254 = vadd.f32 %v1142, %v1230
      %v1255 = vadd.f32 %v1143, %v1233
      %v1256 = vadd.f32 %v1144, %v1238
      %v1257 = vadd.f32 %v1145, %v1241
      %v1258 = vadd.f32 %v1146, %v1246
      %v1259 = vadd.f32 %v1147, %v1249
      %v1261 = vshrl.u32 %v217, 16
      %v1263 = vrot.slane %v1261, 4
      %v1264 = vshll.u32 %v217, 16
      %v1266 = vrot.slane %v1264, 5
      %v1267 = vor.u32 %v1263, %v1266
      %v1268 = vrot.slane %v1267, 4
      %v1270 = vshll.u32 %v218, 16
      %v1272 = vrot.slane %v1270, 5
      %v1273 = vsel %vm229, %v1268, %v1272
      %s1274 = scalar_lea.vmem %s1, 224
      %v1275 = vld [vmem:[%s1274] sm:$0xf]
      %v1276 = vld [vmem:[%s1274 + $0x4] sm:$0xf]
      %v1277 = vld [vmem:[%s1274 + $0x8] sm:$0xf]
      %v1278 = vld [vmem:[%s1274 + $0xc] sm:$0xf]
      %v1279 = vld [vmem:[%s1274 + $0x10] sm:$0xf]
      %v1280 = vld [vmem:[%s1274 + $0x14] sm:$0xf]
      %v1281 = vld [vmem:[%s1274 + $0x18] sm:$0xf]
      %v1282 = vld [vmem:[%s1274 + $0x1c] sm:$0xf]
      %v1283 = vunpack.c.l.b16 %v1273
      %v1284 = vpack.c.b16 %v1283, %v906
      %v1293 = vunpack.c.l.b16 %v1275
      %v1294 = vunpack.c.l.b16 %v1276
      %v1295 = vunpack.c.l.b16 %v1277
      %v1296 = vunpack.c.l.b16 %v1278
      %v1297 = vunpack.c.l.b16 %v1279
      %v1298 = vunpack.c.l.b16 %v1280
      %v1299 = vunpack.c.l.b16 %v1281
      %v1300 = vunpack.c.l.b16 %v1282
      %v1301 = vpack.c.b16 %v1294, %v1293
      %v1302 = vpack.c.b16 %v1296, %v1295
      %v1303 = vpack.c.b16 %v1298, %v1297
      %v1304 = vpack.c.b16 %v1300, %v1299
      %v1310 = vsel %vm387, %v1284, 0
      %1312 = vmatprep.subr.bf16.mxu0 0
      %1313 = vmatpush1.bf16.msra.mxu0 %v1301
      %1314 = vmatprep.subr.bf16.mxu0 0
      %1315 = vmatpush1.bf16.msra.mxu0 %v1302
      %1316 = vmatprep.subr.bf16.mxu0 0
      %1317 = vmatpush1.bf16.msra.mxu0 %v1303
      %1318 = vmatprep.subr.bf16.mxu0 0
      %1319 = vmatpush1.bf16.msra.mxu0 %v1304
      %1320 = vmatprep.subr.bf16.mxu0 0
      %1321 = vmatpush1.bf16.msra.mxu0 0
      %1322 = vmatprep.subr.bf16.mxu0 0
      %1323 = vmatpush1.bf16.msra.mxu0 0
      %1324 = vmatprep.subr.bf16.mxu0 0
      %1325 = vmatpush1.bf16.msra.mxu0 0
      %1326 = vmatprep.subr.bf16.mxu0 0
      %1327 = vmatpush1.bf16.msra.mxu0 0
      %1328 = vmatprep.subr.bf16.mxu0 0
      %1329 = vmatpush1.bf16.msra.mxu0 0
      %1330 = vmatprep.subr.bf16.mxu0 0
      %1331 = vmatpush1.bf16.msra.mxu0 0
      %1332 = vmatprep.subr.bf16.mxu0 0
      %1333 = vmatpush1.bf16.msra.mxu0 0
      %1334 = vmatprep.subr.bf16.mxu0 0
      %1335 = vmatpush1.bf16.msra.mxu0 0
      %1336 = vmatprep.subr.bf16.mxu0 0
      %1337 = vmatpush1.bf16.msra.mxu0 0
      %1338 = vmatprep.subr.bf16.mxu0 0
      %1339 = vmatpush1.bf16.msra.mxu0 0
      %1340 = vmatprep.subr.bf16.mxu0 0
      %1341 = vmatpush1.bf16.msra.mxu0 0
      %1342 = vmatprep.subr.bf16.mxu0 0
      %1343 = vmatpush1.bf16.msra.mxu0 0
      %1344 = vmatprep.mubr.bf16.mxu0 0
      %1345 = vmatmul.mubr.bf16.gmra.mrb[0].mxu0 %v392
      %v1346 = vpop.f32.mrb[0].mxu0
      %v1347 = vadd.f32 0.0, %v1346
      %v1348 = vpop.f32.mrb[0].mxu0
      %v1349 = vpop.f32.mrb[0].mxu0
      %v1350 = vadd.f32 0.0, %v1349
      %v1351 = vpop.f32.mrb[0].mxu0
      %1352 = vmatprep.mubr.bf16.mxu0 0
      %1353 = vmatmul.mubr.bf16.gmra.mrb[0].mxu0 %v395
      %v1354 = vpop.f32.mrb[0].mxu0
      %v1355 = vadd.f32 0.0, %v1354
      %v1356 = vpop.f32.mrb[0].mxu0
      %v1357 = vpop.f32.mrb[0].mxu0
      %v1358 = vadd.f32 0.0, %v1357
      %v1359 = vpop.f32.mrb[0].mxu0
      %1360 = vmatprep.mubr.bf16.mxu0 0
      %1361 = vmatmul.mubr.bf16.gmra.mrb[0].mxu0 %v398
      %v1362 = vpop.f32.mrb[0].mxu0
      %v1363 = vadd.f32 0.0, %v1362
      %v1364 = vpop.f32.mrb[0].mxu0
      %v1365 = vpop.f32.mrb[0].mxu0
      %v1366 = vadd.f32 0.0, %v1365
      %v1367 = vpop.f32.mrb[0].mxu0
      %1368 = vmatprep.mubr.bf16.mxu0 0
      %1369 = vmatmul.mubr.bf16.gmra.mrb[0].mxu0 %v1310
      %v1370 = vpop.f32.mrb[0].mxu0
      %v1371 = vadd.f32 0.0, %v1370
      %v1372 = vpop.f32.mrb[0].mxu0
      %v1373 = vpop.f32.mrb[0].mxu0
      %v1374 = vadd.f32 0.0, %v1373
      %v1375 = vpop.f32.mrb[0].mxu0
      %1376 = vdwg.mxu0
      %v1377 = vadd.f32 %v1252, %v1347
      %v1378 = vadd.f32 %v1253, %v1350
      %v1379 = vadd.f32 %v1254, %v1355
      %v1380 = vadd.f32 %v1255, %v1358
      %v1381 = vadd.f32 %v1256, %v1363
      %v1382 = vadd.f32 %v1257, %v1366
      %v1383 = vadd.f32 %v1258, %v1371
      %v1384 = vadd.f32 %v1259, %v1374
      %v1386 = vrot.slane %v217, 5
      %v1387 = vrot.slane %v1386, 4
      %v1388 = vrot.slane %v218, 5
      %v1389 = vsel %vm596, %v1387, %v1388
      %s1390 = scalar_lea.vmem %s1, 256
      %v1391 = vld [vmem:[%s1390] sm:$0xf]
      %v1392 = vld [vmem:[%s1390 + $0x4] sm:$0xf]
      %v1393 = vld [vmem:[%s1390 + $0x8] sm:$0xf]
      %v1394 = vld [vmem:[%s1390 + $0xc] sm:$0xf]
      %v1395 = vld [vmem:[%s1390 + $0x10] sm:$0xf]
      %v1396 = vld [vmem:[%s1390 + $0x14] sm:$0xf]
      %v1397 = vld [vmem:[%s1390 + $0x18] sm:$0xf]
      %v1398 = vld [vmem:[%s1390 + $0x1c] sm:$0xf]
      %v1399 = vunpack.c.l.b16 %v1389
      %v1400 = vpack.c.b16 %v1399, %v1034
      %v1409 = vunpack.c.l.b16 %v1391
      %v1410 = vunpack.c.l.b16 %v1392
      %v1411 = vunpack.c.l.b16 %v1393
      %v1412 = vunpack.c.l.b16 %v1394
      %v1413 = vunpack.c.l.b16 %v1395
      %v1414 = vunpack.c.l.b16 %v1396
      %v1415 = vunpack.c.l.b16 %v1397
      %v1416 = vunpack.c.l.b16 %v1398
      %v1417 = vpack.c.b16 %v1410, %v1409
      %v1418 = vpack.c.b16 %v1412, %v1411
      %v1419 = vpack.c.b16 %v1414, %v1413
      %v1420 = vpack.c.b16 %v1416, %v1415
      %v1426 = vsel %vm387, %v1400, 0
      %1428 = vmatprep.subr.bf16.mxu0 0
      %1429 = vmatpush1.bf16.msra.mxu0 %v1417
      %1430 = vmatprep.subr.bf16.mxu0 0
      %1431 = vmatpush1.bf16.msra.mxu0 %v1418
      %1432 = vmatprep.subr.bf16.mxu0 0
      %1433 = vmatpush1.bf16.msra.mxu0 %v1419
      %1434 = vmatprep.subr.bf16.mxu0 0
      %1435 = vmatpush1.bf16.msra.mxu0 %v1420
      %1436 = vmatprep.subr.bf16.mxu0 0
      %1437 = vmatpush1.bf16.msra.mxu0 0
      %1438 = vmatprep.subr.bf16.mxu0 0
      %1439 = vmatpush1.bf16.msra.mxu0 0
      %1440 = vmatprep.subr.bf16.mxu0 0
      %1441 = vmatpush1.bf16.msra.mxu0 0
      %1442 = vmatprep.subr.bf16.mxu0 0
      %1443 = vmatpush1.bf16.msra.mxu0 0
      %1444 = vmatprep.subr.bf16.mxu0 0
      %1445 = vmatpush1.bf16.msra.mxu0 0
      %1446 = vmatprep.subr.bf16.mxu0 0
      %1447 = vmatpush1.bf16.msra.mxu0 0
      %1448 = vmatprep.subr.bf16.mxu0 0
      %1449 = vmatpush1.bf16.msra.mxu0 0
      %1450 = vmatprep.subr.bf16.mxu0 0
      %1451 = vmatpush1.bf16.msra.mxu0 0
      %1452 = vmatprep.subr.bf16.mxu0 0
      %1453 = vmatpush1.bf16.msra.mxu0 0
      %1454 = vmatprep.subr.bf16.mxu0 0
      %1455 = vmatpush1.bf16.msra.mxu0 0
      %1456 = vmatprep.subr.bf16.mxu0 0
      %1457 = vmatpush1.bf16.msra.mxu0 0
      %1458 = vmatprep.subr.bf16.mxu0 0
      %1459 = vmatpush1.bf16.msra.mxu0 0
      %1460 = vmatprep.mubr.bf16.mxu0 0
      %1461 = vmatmul.mubr.bf16.gmra.mrb[0].mxu0 %v678
      %v1462 = vpop.f32.mrb[0].mxu0
      %v1463 = vadd.f32 0.0, %v1462
      %v1464 = vpop.f32.mrb[0].mxu0
      %v1465 = vpop.f32.mrb[0].mxu0
      %v1466 = vadd.f32 0.0, %v1465
      %v1467 = vpop.f32.mrb[0].mxu0
      %1468 = vmatprep.mubr.bf16.mxu0 0
      %1469 = vmatmul.mubr.bf16.gmra.mrb[0].mxu0 %v681
      %v1470 = vpop.f32.mrb[0].mxu0
      %v1471 = vadd.f32 0.0, %v1470
      %v1472 = vpop.f32.mrb[0].mxu0
      %v1473 = vpop.f32.mrb[0].mxu0
      %v1474 = vadd.f32 0.0, %v1473
      %v1475 = vpop.f32.mrb[0].mxu0
      %1476 = vmatprep.mubr.bf16.mxu0 0
      %1477 = vmatmul.mubr.bf16.gmra.mrb[0].mxu0 %v684
      %v1478 = vpop.f32.mrb[0].mxu0
      %v1479 = vadd.f32 0.0, %v1478
      %v1480 = vpop.f32.mrb[0].mxu0
      %v1481 = vpop.f32.mrb[0].mxu0
      %v1482 = vadd.f32 0.0, %v1481
      %v1483 = vpop.f32.mrb[0].mxu0
      %1484 = vmatprep.mubr.bf16.mxu0 0
      %1485 = vmatmul.mubr.bf16.gmra.mrb[0].mxu0 %v1426
      %v1486 = vpop.f32.mrb[0].mxu0
      %v1487 = vadd.f32 0.0, %v1486
      %v1488 = vpop.f32.mrb[0].mxu0
      %v1489 = vpop.f32.mrb[0].mxu0
      %v1490 = vadd.f32 0.0, %v1489
      %v1491 = vpop.f32.mrb[0].mxu0
      %1492 = vdwg.mxu0
      %v1493 = vadd.f32 %v1377, %v1463
      %v1494 = vadd.f32 %v1378, %v1466
      %v1495 = vadd.f32 %v1379, %v1471
      %v1496 = vadd.f32 %v1380, %v1474
      %v1497 = vadd.f32 %v1381, %v1479
      %v1498 = vadd.f32 %v1382, %v1482
      %v1499 = vadd.f32 %v1383, %v1487
      %v1500 = vadd.f32 %v1384, %v1490
      %v1501 = vld [vmem:[%s2] sm:$0x1]
      %v1503 = vlaneseq
      %v1504 = vshrl.u32 %v1503, 7
      %v1505 = vsub.s32 0, %v1504
      %v1506 = vrot.slane %v1501, %v1505
      %v1508 = vmul.f32 %v1493, %v1506
      %v1509 = vmul.f32 %v1494, %v1506
      %v1510 = vmul.f32 %v1495, %v1506
      %v1511 = vmul.f32 %v1496, %v1506
      %v1512 = vmul.f32 %v1497, %v1506
      %v1513 = vmul.f32 %v1498, %v1506
      %v1514 = vmul.f32 %v1499, %v1506
      %v1515 = vmul.f32 %v1500, %v1506
      %v1516 = vld [vmem:[%s3] sm:$0x1]
      %v1518 = vlaneseq
      %v1519 = vshrl.u32 %v1518, 7
      %v1520 = vsub.s32 0, %v1519
      %v1521 = vrot.slane %v1516, %v1520
      %v1523 = vadd.f32 %v1508, %v1521
      %v1524 = vadd.f32 %v1509, %v1521
      %v1525 = vadd.f32 %v1510, %v1521
      %v1526 = vadd.f32 %v1511, %v1521
      %v1527 = vadd.f32 %v1512, %v1521
      %v1528 = vadd.f32 %v1513, %v1521
      %v1529 = vadd.f32 %v1514, %v1521
      %v1530 = vadd.f32 %v1515, %v1521
      %vm1531 = vcmp.ge.f32.partialorder %v1523, 0.0
      %vm1532 = vcmp.ge.f32.partialorder %v1524, 0.0
      %vm1533 = vcmp.ge.f32.partialorder %v1525, 0.0
      %vm1534 = vcmp.ge.f32.partialorder %v1526, 0.0
      %vm1535 = vcmp.ge.f32.partialorder %v1527, 0.0
      %vm1536 = vcmp.ge.f32.partialorder %v1528, 0.0
      %vm1537 = vcmp.ge.f32.partialorder %v1529, 0.0
      %vm1538 = vcmp.ge.f32.partialorder %v1530, 0.0
      %v1539 = vmul.f32 %v1523, 0.0
      %v1540 = vmul.f32 %v1524, 0.0
      %v1541 = vmul.f32 %v1525, 0.0
      %v1542 = vmul.f32 %v1526, 0.0
      %v1543 = vmul.f32 %v1527, 0.0
      %v1544 = vmul.f32 %v1528, 0.0
      %v1545 = vmul.f32 %v1529, 0.0
      %v1546 = vmul.f32 %v1530, 0.0
      %v1547 = vsel %vm1531, %v1523, %v1539
      %v1548 = vsel %vm1532, %v1524, %v1540
      %v1549 = vsel %vm1533, %v1525, %v1541
      %v1550 = vsel %vm1534, %v1526, %v1542
      %v1551 = vsel %vm1535, %v1527, %v1543
      %v1552 = vsel %vm1536, %v1528, %v1544
      %v1553 = vsel %vm1537, %v1529, %v1545
      %v1554 = vsel %vm1538, %v1530, %v1546
      %vm1555 = vcmask 130048
      %1556 = vst.msk [vmem:[%s197] sm:$0xff] %vm1555, %v1547
      %1557 = vst.msk [vmem:[%s197 + $0x8] sm:$0xff] %vm1555, %v1548
      %1558 = vst.msk [vmem:[%s197 + $0x10] sm:$0xff] %vm1555, %v1549
      %1559 = vst.msk [vmem:[%s197 + $0x18] sm:$0xff] %vm1555, %v1550
      %1560 = vst.msk [vmem:[%s197 + $0x20] sm:$0xff] %vm1555, %v1551
      %1561 = vst.msk [vmem:[%s197 + $0x28] sm:$0xff] %vm1555, %v1552
      %1562 = vst.msk [vmem:[%s197 + $0x30] sm:$0xff] %vm1555, %v1553
      %1563 = vst.msk [vmem:[%s197 + $0x38] sm:$0xff] %vm1555, %v1554
      %p1564 = scmp.lt.s32.totalorder %s15, 1
      %s1565 = scalar_select %p1564, %s15, 1
      %s1566 = smul.addr %s1565, 8
      %s1567 = smul.addr %s1566, 8
      %s1568 = scalar_lea.vmem %s4, %s1567
      // Predicated region
      $region37: #{dpc_forward.6} parent=35 // pred_check
        %p1569 = pneg %p122
      $region38: #{dpc_forward.6} parent=35 // pred_check_branch
        %1571 = sbr.rel (%p1569) target = $region40
      $region39: #{dpc_forward.6} parent=35 // pred_region
        _
      $region40: #{dpc_forward.6} parent=35 // pred_fallthru
        _
    $region36: #{dpc_forward.6} parent=5 // pred_fallthru
      _
    %p1572 = scmp.le.s32.totalorder 2, %s10
    // Predicated region
    $region41: #{dpc_forward.6} parent=5 // pred_check
      %p1573 = pneg %p1572
    $region42: #{dpc_forward.6} parent=5 // pred_check_branch
      %1575 = sbr.rel (%p1573) target = $region44
    $region43: #{dpc_forward.6} parent=5 // pred_region
      %s1576 = ssub.s32 %s10, 2
      // Predicated region
      $region45: #{dpc_forward.6} parent=43 // pred_check
        %p1577 = pneg %p128
      $region46: #{dpc_forward.6} parent=43 // pred_check_branch
        %1579 = sbr.rel (%p1577) target = $region48
      $region47: #{dpc_forward.6} parent=43 // pred_region
        %p1580 = scmp.lt.s32.totalorder %s16, 1
        %s1581 = scalar_select %p1580, %s16, 1
        %s1582 = smul.addr %s1581, 8
        %s1583 = smul.addr %s1582, 8
        %s1584 = scalar_lea.vmem %s4, %s1583
      $region48: #{dpc_forward.6} parent=43 // pred_fallthru
        _
    $region44: #{dpc_forward.6} parent=5 // pred_fallthru
      _
  $region6: #{dpc_forward.6} parent=0 // loop_footer
    %s14 = sadd.s32 1, %s10
  $region7: #{dpc_forward.6} parent=0 // loop_footer_branch
    %9 = sbr.rel target = $region3
  $region8: #{dpc_forward.6} parent=0 // loop_exit
    _

// kernel: dpc_forward.10
$region0: #{dpc_forward.10}
  #allocation0 [shape = 'u32[]', space=smem, size = 0x4, offset = 0x4, fixed_abs, tag = 'smem constant byte address 0x4 - core index']
  #allocation1 [shape = 'u32[144,128]{1,0:T(1,128)}', space=vmem, size = 0x12000, scoped, tag = 'internal scratch']
  #allocation2 [shape = 'bf16[64,2]{1,0:T(16,128)(2,1)}', space=vmem, size = 0x4000, scoped, tag = 'scratch operand']
  #allocation3 [shape = 'f32[64,1]{1,0:T(8,128)}', space=vmem, size = 0x8000, scoped, tag = 'scratch operand']
  #allocation4 [shape = 'f32[64,1]{1,0:T(8,128)}', space=vmem, size = 0x8000, scoped, tag = 'scratch operand']
  #allocation5 [shape = 'f32[64,16]{1,0:T(8,128)}', space=vmem, size = 0x8000, scoped, tag = 'scratch operand']
  #allocation6 [shape = 'f32[1,1]{1,0:T(1,128)S(1)}', space=vmem, size = 0x200, scoped, tag = 'scoped memory for dpc_forward.10']
  %s0 = inlined_call_operand.vmem [shape: f32[2,64,16], index: 0, kind: input, shape index: {}, may-alias: {0,1}]
  %s1 = inlined_call_operand.vmem [shape: f32[2,64,16], index: 1, kind: input, shape index: {}, may-alias: {0,1}]
  %s2 = inlined_call_operand.vmem [shape: bf16[16,2], index: 2, kind: input, shape index: {}]
  %s3 = inlined_call_operand.vmem [shape: f32[1,2], index: 3, kind: input, shape index: {}]
  %s4 = inlined_call_operand.vmem [shape: bf16[16,2], index: 4, kind: input, shape index: {}]
  %s5 = inlined_call_operand.vmem [shape: f32[1,2], index: 5, kind: input, shape index: {}]
  %s6 = inlined_call_operand.vmem [shape: bf16[16,16], index: 6, kind: input, shape index: {}]
  %s7 = inlined_call_operand.vmem [shape: f32[1,16], index: 7, kind: input, shape index: {}]
  %s8 = inlined_call_operand.<no memory space> [shape: f32[1,1], index: 8, kind: input, shape index: {}]
  %s9 = inlined_call_operand.vmem [shape: bf16[16,16], index: 9, kind: input, shape index: {}]
  %s10 = inlined_call_operand.vmem [shape: f32[1,16], index: 10, kind: input, shape index: {}]
  %s11 = inlined_call_operand.vmem [shape: f32[2,64,16], index: 11, kind: output, shape index: {}]
  %s12 = sld [smem:[#allocation0]]
  $region85: #{dpc_forward.10} parent=0
    _
  %s14 = ssub.s32 1, %s12
  %s15 = scalar_select 0, %s14, %s12
  %v16 = vstv %s8
  %17 = vst [vmem:[#allocation6] sm:$0x1] %v16
  loop: start=0, step=1, limit=4
  $region2: #{dpc_forward.10} parent=0 // loop_pre_header
    _
  $region3: #{dpc_forward.10} parent=0 // loop_header
    %s19 = sphi 0, %s23
    %p20 = scmp.ge.s32.totalorder %s19, 4
    %s26 = sphi 0, %s45
    %s27 = sphi 0, %s41
    %s28 = sphi 0, %s37
    %s29 = sphi 0, %s26
    %s30 = sphi 0, %s27
    %s31 = sphi 0, %s28
    %s32 = sphi 0, %s29
    %s33 = sphi 0, %s30
    %s34 = sphi 0, %s31
    %s50 = sphi 0, %s52
    %s53 = sphi 0, %s50
    %s54 = sphi 0, %s53
    %s70 = sphi 0, %s54
    %s78 = sphi 0, %s80
    %s81 = sphi 0, %s78
    %s82 = sphi 0, %s81
    %s98 = sphi 0, %s82
    %s102 = sphi 0, %s102
    %s104 = sphi 0, %s102
    %s105 = sphi 0, %s104
    %s119 = sphi 0, %s105
    %s123 = sphi 0, %s123
    %s125 = sphi 0, %s123
    %s126 = sphi 0, %s125
    %s140 = sphi 0, %s126
    %s144 = sphi 0, %s144
    %s146 = sphi 0, %s144
    %s147 = sphi 0, %s146
    %s161 = sphi 0, %s147
    %s165 = sphi 0, %s165
    %s167 = sphi 0, %s165
    %s168 = sphi 0, %s167
    %s182 = sphi 0, %s168
    %s186 = sphi 0, %s186
    %s188 = sphi 0, %s186
    %s189 = sphi 0, %s188
    %s203 = sphi 0, %s189
    %s207 = sphi 0, %s207
    %s209 = sphi 0, %s207
    %s210 = sphi 0, %s209
    %s224 = sphi 0, %s210
    %s228 = sphi 0, %s228
    %s230 = sphi 0, %s228
    %s231 = sphi 0, %s230
    %s245 = sphi 0, %s231
    %s249 = sphi 0, %s249
    %s251 = sphi 0, %s249
    %s252 = sphi 0, %s251
    %s266 = sphi 0, %s252
    %s270 = sphi 0, %s270
    %s272 = sphi 0, %s270
    %s273 = sphi 0, %s272
    %s287 = sphi 0, %s273
    %s295 = sphi 0, %s297
    %s298 = sphi 0, %s295
    %s299 = sphi 0, %s298
    %s315 = sphi 0, %s299
  $region4: #{dpc_forward.10} parent=0 // loop_header_branch
    %22 = sbr.rel (%p20) target = $region8
  $region5: #{dpc_forward.10} parent=0 // loop_body
    %s24 = ssub.s32 %s19, 1
    %s25 = ssub.s32 %s19, 2
    %s35 = sadd.s32 1, %s28
    %p36 = scmp.ge.s32.totalorder %s35, 1
    %s37 = scalar_select %p36, 0, %s35
    %s38 = sadd.s32 1, %s27
    %s39 = scalar_select %p36, %s38, %s27
    %p40 = scmp.ge.s32.totalorder %s39, 1
    %s41 = scalar_select %p40, 0, %s39
    %s42 = sadd.s32 1, %s26
    %s43 = scalar_select %p40, %s42, %s26
    %p44 = scmp.ge.s32.totalorder %s43, 2
    %s45 = scalar_select %p44, 0, %s43
    %s46 = ssub.s32 %s26, %s45
    %s47 = ssub.s32 %s27, %s41
    %s48 = sor.u32 %s46, %s47
    %p49 = scmp.eq.s32.totalorder %s48, 0
    %s51 = sadd.s32 %s50, 1
    %s52 = scalar_select %p49, %s50, %s51
    %p55 = pneg %p49
    %p56 = scmp.eq.s32.totalorder %s19, 1
    %p57 = por %p55, %p56
    %p58 = scmp.ne.s32.totalorder %s50, %s53
    %p59 = scmp.eq.s32.totalorder %s19, 0
    %p60 = por %p58, %p59
    %p61 = scmp.ne.s32.totalorder %s50, %s53
    %p62 = scmp.eq.s32.totalorder %s24, 1
    %p63 = por %p61, %p62
    %p64 = scmp.ne.s32.totalorder %s53, %s54
    %p65 = scmp.eq.s32.totalorder %s24, 0
    %p66 = por %p64, %p65
    %p67 = scmp.ne.s32.totalorder %s53, %s54
    %p68 = scmp.eq.s32.totalorder %s25, 1
    %p69 = por %p67, %p68
    %p71 = scmp.ne.s32.totalorder %s54, %s70
    %p72 = scmp.eq.s32.totalorder %s25, 0
    %p73 = por %p71, %p72
    %s74 = ssub.s32 %s26, %s45
    %s75 = ssub.s32 %s28, %s37
    %s76 = sor.u32 %s74, %s75
    %p77 = scmp.eq.s32.totalorder %s76, 0
    %s79 = sadd.s32 %s78, 1
    %s80 = scalar_select %p77, %s78, %s79
    %p83 = pneg %p77
    %p84 = scmp.eq.s32.totalorder %s19, 1
    %p85 = por %p83, %p84
    %p86 = scmp.ne.s32.totalorder %s78, %s81
    %p87 = scmp.eq.s32.totalorder %s19, 0
    %p88 = por %p86, %p87
    %p89 = scmp.ne.s32.totalorder %s78, %s81
    %p90 = scmp.eq.s32.totalorder %s24, 1
    %p91 = por %p89, %p90
    %p92 = scmp.ne.s32.totalorder %s81, %s82
    %p93 = scmp.eq.s32.totalorder %s24, 0
    %p94 = por %p92, %p93
    %p95 = scmp.ne.s32.totalorder %s81, %s82
    %p96 = scmp.eq.s32.totalorder %s25, 1
    %p97 = por %p95, %p96
    %p99 = scmp.ne.s32.totalorder %s82, %s98
    %p100 = scmp.eq.s32.totalorder %s25, 0
    %p101 = por %p99, %p100
    %s103 = sadd.s32 %s102, 1
    %p106 = scmp.eq.s32.totalorder %s19, 1
    %p107 = scmp.ne.s32.totalorder %s102, %s104
    %p108 = scmp.eq.s32.totalorder %s19, 0
    %p109 = por %p107, %p108
    %p110 = scmp.ne.s32.totalorder %s102, %s104
    %p111 = scmp.eq.s32.totalorder %s24, 1
    %p112 = por %p110, %p111
    %p113 = scmp.ne.s32.totalorder %s104, %s105
    %p114 = scmp.eq.s32.totalorder %s24, 0
    %p115 = por %p113, %p114
    %p116 = scmp.ne.s32.totalorder %s104, %s105
    %p117 = scmp.eq.s32.totalorder %s25, 1
    %p118 = por %p116, %p117
    %p120 = scmp.ne.s32.totalorder %s105, %s119
    %p121 = scmp.eq.s32.totalorder %s25, 0
    %p122 = por %p120, %p121
    %s124 = sadd.s32 %s123, 1
    %p127 = scmp.eq.s32.totalorder %s19, 1
    %p128 = scmp.ne.s32.totalorder %s123, %s125
    %p129 = scmp.eq.s32.totalorder %s19, 0
    %p130 = por %p128, %p129
    %p131 = scmp.ne.s32.totalorder %s123, %s125
    %p132 = scmp.eq.s32.totalorder %s24, 1
    %p133 = por %p131, %p132
    %p134 = scmp.ne.s32.totalorder %s125, %s126
    %p135 = scmp.eq.s32.totalorder %s24, 0
    %p136 = por %p134, %p135
    %p137 = scmp.ne.s32.totalorder %s125, %s126
    %p138 = scmp.eq.s32.totalorder %s25, 1
    %p139 = por %p137, %p138
    %p141 = scmp.ne.s32.totalorder %s126, %s140
    %p142 = scmp.eq.s32.totalorder %s25, 0
    %p143 = por %p141, %p142
    %s145 = sadd.s32 %s144, 1
    %p148 = scmp.eq.s32.totalorder %s19, 1
    %p149 = scmp.ne.s32.totalorder %s144, %s146
    %p150 = scmp.eq.s32.totalorder %s19, 0
    %p151 = por %p149, %p150
    %p152 = scmp.ne.s32.totalorder %s144, %s146
    %p153 = scmp.eq.s32.totalorder %s24, 1
    %p154 = por %p152, %p153
    %p155 = scmp.ne.s32.totalorder %s146, %s147
    %p156 = scmp.eq.s32.totalorder %s24, 0
    %p157 = por %p155, %p156
    %p158 = scmp.ne.s32.totalorder %s146, %s147
    %p159 = scmp.eq.s32.totalorder %s25, 1
    %p160 = por %p158, %p159
    %p162 = scmp.ne.s32.totalorder %s147, %s161
    %p163 = scmp.eq.s32.totalorder %s25, 0
    %p164 = por %p162, %p163
    %s166 = sadd.s32 %s165, 1
    %p169 = scmp.eq.s32.totalorder %s19, 1
    %p170 = scmp.ne.s32.totalorder %s165, %s167
    %p171 = scmp.eq.s32.totalorder %s19, 0
    %p172 = por %p170, %p171
    %p173 = scmp.ne.s32.totalorder %s165, %s167
    %p174 = scmp.eq.s32.totalorder %s24, 1
    %p175 = por %p173, %p174
    %p176 = scmp.ne.s32.totalorder %s167, %s168
    %p177 = scmp.eq.s32.totalorder %s24, 0
    %p178 = por %p176, %p177
    %p179 = scmp.ne.s32.totalorder %s167, %s168
    %p180 = scmp.eq.s32.totalorder %s25, 1
    %p181 = por %p179, %p180
    %p183 = scmp.ne.s32.totalorder %s168, %s182
    %p184 = scmp.eq.s32.totalorder %s25, 0
    %p185 = por %p183, %p184
    %s187 = sadd.s32 %s186, 1
    %p190 = scmp.eq.s32.totalorder %s19, 1
    %p191 = scmp.ne.s32.totalorder %s186, %s188
    %p192 = scmp.eq.s32.totalorder %s19, 0
    %p193 = por %p191, %p192
    %p194 = scmp.ne.s32.totalorder %s186, %s188
    %p195 = scmp.eq.s32.totalorder %s24, 1
    %p196 = por %p194, %p195
    %p197 = scmp.ne.s32.totalorder %s188, %s189
    %p198 = scmp.eq.s32.totalorder %s24, 0
    %p199 = por %p197, %p198
    %p200 = scmp.ne.s32.totalorder %s188, %s189
    %p201 = scmp.eq.s32.totalorder %s25, 1
    %p202 = por %p200, %p201
    %p204 = scmp.ne.s32.totalorder %s189, %s203
    %p205 = scmp.eq.s32.totalorder %s25, 0
    %p206 = por %p204, %p205
    %s208 = sadd.s32 %s207, 1
    %p211 = scmp.eq.s32.totalorder %s19, 1
    %p212 = scmp.ne.s32.totalorder %s207, %s209
    %p213 = scmp.eq.s32.totalorder %s19, 0
    %p214 = por %p212, %p213
    %p215 = scmp.ne.s32.totalorder %s207, %s209
    %p216 = scmp.eq.s32.totalorder %s24, 1
    %p217 = por %p215, %p216
    %p218 = scmp.ne.s32.totalorder %s209, %s210
    %p219 = scmp.eq.s32.totalorder %s24, 0
    %p220 = por %p218, %p219
    %p221 = scmp.ne.s32.totalorder %s209, %s210
    %p222 = scmp.eq.s32.totalorder %s25, 1
    %p223 = por %p221, %p222
    %p225 = scmp.ne.s32.totalorder %s210, %s224
    %p226 = scmp.eq.s32.totalorder %s25, 0
    %p227 = por %p225, %p226
    %s229 = sadd.s32 %s228, 1
    %p232 = scmp.eq.s32.totalorder %s19, 1
    %p233 = scmp.ne.s32.totalorder %s228, %s230
    %p234 = scmp.eq.s32.totalorder %s19, 0
    %p235 = por %p233, %p234
    %p236 = scmp.ne.s32.totalorder %s228, %s230
    %p237 = scmp.eq.s32.totalorder %s24, 1
    %p238 = por %p236, %p237
    %p239 = scmp.ne.s32.totalorder %s230, %s231
    %p240 = scmp.eq.s32.totalorder %s24, 0
    %p241 = por %p239, %p240
    %p242 = scmp.ne.s32.totalorder %s230, %s231
    %p243 = scmp.eq.s32.totalorder %s25, 1
    %p244 = por %p242, %p243
    %p246 = scmp.ne.s32.totalorder %s231, %s245
    %p247 = scmp.eq.s32.totalorder %s25, 0
    %p248 = por %p246, %p247
    %s250 = sadd.s32 %s249, 1
    %p253 = scmp.eq.s32.totalorder %s19, 1
    %p254 = scmp.ne.s32.totalorder %s249, %s251
    %p255 = scmp.eq.s32.totalorder %s19, 0
    %p256 = por %p254, %p255
    %p257 = scmp.ne.s32.totalorder %s249, %s251
    %p258 = scmp.eq.s32.totalorder %s24, 1
    %p259 = por %p257, %p258
    %p260 = scmp.ne.s32.totalorder %s251, %s252
    %p261 = scmp.eq.s32.totalorder %s24, 0
    %p262 = por %p260, %p261
    %p263 = scmp.ne.s32.totalorder %s251, %s252
    %p264 = scmp.eq.s32.totalorder %s25, 1
    %p265 = por %p263, %p264
    %p267 = scmp.ne.s32.totalorder %s252, %s266
    %p268 = scmp.eq.s32.totalorder %s25, 0
    %p269 = por %p267, %p268
    %s271 = sadd.s32 %s270, 1
    %p274 = scmp.eq.s32.totalorder %s19, 1
    %p275 = scmp.ne.s32.totalorder %s270, %s272
    %p276 = scmp.eq.s32.totalorder %s19, 0
    %p277 = por %p275, %p276
    %p278 = scmp.ne.s32.totalorder %s270, %s272
    %p279 = scmp.eq.s32.totalorder %s24, 1
    %p280 = por %p278, %p279
    %p281 = scmp.ne.s32.totalorder %s272, %s273
    %p282 = scmp.eq.s32.totalorder %s24, 0
    %p283 = por %p281, %p282
    %p284 = scmp.ne.s32.totalorder %s272, %s273
    %p285 = scmp.eq.s32.totalorder %s25, 1
    %p286 = por %p284, %p285
    %p288 = scmp.ne.s32.totalorder %s273, %s287
    %p289 = scmp.eq.s32.totalorder %s25, 0
    %p290 = por %p288, %p289
    %s291 = ssub.s32 %s26, %s45
    %s292 = ssub.s32 %s27, %s41
    %s293 = sor.u32 %s291, %s292
    %p294 = scmp.eq.s32.totalorder %s293, 0
    %s296 = sadd.s32 %s295, 1
    %s297 = scalar_select %p294, %s295, %s296
    %p300 = pneg %p294
    %p301 = scmp.eq.s32.totalorder %s19, 1
    %p302 = por %p300, %p301
    %p303 = scmp.ne.s32.totalorder %s295, %s298
    %p304 = scmp.eq.s32.totalorder %s19, 0
    %p305 = por %p303, %p304
    %p306 = scmp.ne.s32.totalorder %s295, %s298
    %p307 = scmp.eq.s32.totalorder %s24, 1
    %p308 = por %p306, %p307
    %p309 = scmp.ne.s32.totalorder %s298, %s299
    %p310 = scmp.eq.s32.totalorder %s24, 0
    %p311 = por %p309, %p310
    %p312 = scmp.ne.s32.totalorder %s298, %s299
    %p313 = scmp.eq.s32.totalorder %s25, 1
    %p314 = por %p312, %p313
    %p316 = scmp.ne.s32.totalorder %s299, %s315
    %p317 = scmp.eq.s32.totalorder %s25, 0
    %p318 = por %p316, %p317
    %p319 = scmp.le.s32.totalorder 1, %s19
    %p320 = scmp.lt.s32.totalorder %s19, 3
    %p321 = pnand %p319, %p320
    %p322 = pneg %p321
    // Predicated region
    $region9: #{dpc_forward.10} parent=5 // pred_check
      _
    $region10: #{dpc_forward.10} parent=5 // pred_check_branch
      %324 = sbr.rel (%p321) target = $region12
    $region11: #{dpc_forward.10} parent=5 // pred_region
      %s325 = ssub.s32 %s19, 1
      // Predicated region
      $region13: #{dpc_forward.10} parent=11 // pred_check
        %p326 = pneg %p115
      $region14: #{dpc_forward.10} parent=11 // pred_check_branch
        %328 = sbr.rel (%p326) target = $region16
      $region15: #{dpc_forward.10} parent=11 // pred_region
        _
      $region16: #{dpc_forward.10} parent=11 // pred_fallthru
        _
      // Predicated region
      $region17: #{dpc_forward.10} parent=11 // pred_check
        %p329 = pneg %p136
      $region18: #{dpc_forward.10} parent=11 // pred_check_branch
        %331 = sbr.rel (%p329) target = $region20
      $region19: #{dpc_forward.10} parent=11 // pred_region
        _
      $region20: #{dpc_forward.10} parent=11 // pred_fallthru
        _
      // Predicated region
      $region21: #{dpc_forward.10} parent=11 // pred_check
        %p332 = pneg %p157
      $region22: #{dpc_forward.10} parent=11 // pred_check_branch
        %334 = sbr.rel (%p332) target = $region24
      $region23: #{dpc_forward.10} parent=11 // pred_region
        _
      $region24: #{dpc_forward.10} parent=11 // pred_fallthru
        _
      // Predicated region
      $region25: #{dpc_forward.10} parent=11 // pred_check
        %p335 = pneg %p178
      $region26: #{dpc_forward.10} parent=11 // pred_check_branch
        %337 = sbr.rel (%p335) target = $region28
      $region27: #{dpc_forward.10} parent=11 // pred_region
        _
      $region28: #{dpc_forward.10} parent=11 // pred_fallthru
        _
      // Predicated region
      $region29: #{dpc_forward.10} parent=11 // pred_check
        %p338 = pneg %p199
      $region30: #{dpc_forward.10} parent=11 // pred_check_branch
        %340 = sbr.rel (%p338) target = $region32
      $region31: #{dpc_forward.10} parent=11 // pred_region
        _
      $region32: #{dpc_forward.10} parent=11 // pred_fallthru
        _
      // Predicated region
      $region33: #{dpc_forward.10} parent=11 // pred_check
        %p341 = pneg %p220
      $region34: #{dpc_forward.10} parent=11 // pred_check_branch
        %343 = sbr.rel (%p341) target = $region36
      $region35: #{dpc_forward.10} parent=11 // pred_region
        _
      $region36: #{dpc_forward.10} parent=11 // pred_fallthru
        _
      // Predicated region
      $region37: #{dpc_forward.10} parent=11 // pred_check
        %p344 = pneg %p241
      $region38: #{dpc_forward.10} parent=11 // pred_check_branch
        %346 = sbr.rel (%p344) target = $region40
      $region39: #{dpc_forward.10} parent=11 // pred_region
        _
      $region40: #{dpc_forward.10} parent=11 // pred_fallthru
        _
      // Predicated region
      $region41: #{dpc_forward.10} parent=11 // pred_check
        %p347 = pneg %p262
      $region42: #{dpc_forward.10} parent=11 // pred_check_branch
        %349 = sbr.rel (%p347) target = $region44
      $region43: #{dpc_forward.10} parent=11 // pred_region
        _
      $region44: #{dpc_forward.10} parent=11 // pred_fallthru
        _
      // Predicated region
      $region45: #{dpc_forward.10} parent=11 // pred_check
        %p350 = pneg %p283
      $region46: #{dpc_forward.10} parent=11 // pred_check_branch
        %352 = sbr.rel (%p350) target = $region48
      $region47: #{dpc_forward.10} parent=11 // pred_region
        _
      $region48: #{dpc_forward.10} parent=11 // pred_fallthru
        _
    $region12: #{dpc_forward.10} parent=5 // pred_fallthru
      _
    %p353 = scmp.lt.s32.totalorder %s19, 2
    // Predicated region
    $region49: #{dpc_forward.10} parent=5 // pred_check
      %p354 = pneg %p353
    $region50: #{dpc_forward.10} parent=5 // pred_check_branch
      %356 = sbr.rel (%p354) target = $region52
    $region51: #{dpc_forward.10} parent=5 // pred_region
      // Predicated region
      $region53: #{dpc_forward.10} parent=51 // pred_check
        %p357 = pneg %p60
      $region54: #{dpc_forward.10} parent=51 // pred_check_branch
        %359 = sbr.rel (%p357) target = $region56
      $region55: #{dpc_forward.10} parent=51 // pred_region
        %s360 = smul.u32 8, %s27
        %p361 = scmp.lt.s32.totalorder %s26, 1
        %s362 = scalar_select %p361, %s26, 1
        %p363 = scmp.lt.s32.totalorder %s360, 7
        %s364 = scalar_select %p363, %s360, 7
        %s365 = smul.addr %s362, 8
        %s366 = sadd.s32 %s364, %s365
        %s367 = smul.addr %s366, 8
        %s368 = scalar_lea.vmem %s0, %s367
        %s369 = smul.u32 8, %s27
      $region56: #{dpc_forward.10} parent=51 // pred_fallthru
        _
      // Predicated region
      $region57: #{dpc_forward.10} parent=51 // pred_check
        %p370 = pneg %p88
      $region58: #{dpc_forward.10} parent=51 // pred_check_branch
        %372 = sbr.rel (%p370) target = $region60
      $region59: #{dpc_forward.10} parent=51 // pred_region
        %s373 = smul.u32 8, %s28
        %p374 = scmp.lt.s32.totalorder %s26, 1
        %s375 = scalar_select %p374, %s26, 1
        %p376 = scmp.lt.s32.totalorder %s373, 7
        %s377 = scalar_select %p376, %s373, 7
        %s378 = smul.addr %s375, 8
        %s379 = sadd.s32 %s377, %s378
        %s380 = smul.addr %s379, 8
        %s381 = scalar_lea.vmem %s1, %s380
        %s382 = smul.u32 8, %s28
      $region60: #{dpc_forward.10} parent=51 // pred_fallthru
        _
    $region52: #{dpc_forward.10} parent=5 // pred_fallthru
      _
    %p383 = scmp.le.s32.totalorder 1, %s19
    %p384 = scmp.lt.s32.totalorder %s19, 3
    %p385 = pnand %p383, %p384
    %p386 = pneg %p385
    // Predicated region
    $region61: #{dpc_forward.10} parent=5 // pred_check
      _
    $region62: #{dpc_forward.10} parent=5 // pred_check_branch
      %388 = sbr.rel (%p385) target = $region64
    $region63: #{dpc_forward.10} parent=5 // pred_region
      %s389 = ssub.s32 %s19, 1
      %s390 = smul.u32 8, %s30
      %p391 = scmp.lt.s32.totalorder %s29, 1
      %s392 = scalar_select %p391, %s29, 1
      %p393 = scmp.lt.s32.totalorder %s390, 7
      %s394 = scalar_select %p393, %s390, 7
      %s395 = smul.addr %s392, 8
      %s396 = sadd.s32 %s394, %s395
      %s397 = smul.addr %s396, 8
      %s398 = scalar_lea.vmem %s0, %s397
      %p399 = pneg %p66
      %p400 = pneg %p63
      %s401 = smul.u32 8, %s31
      %p402 = scmp.lt.s32.totalorder %s29, 1
      %s403 = scalar_select %p402, %s29, 1
      %p404 = scmp.lt.s32.totalorder %s401, 7
      %s405 = scalar_select %p404, %s401, 7
      %s406 = smul.addr %s403, 8
      %s407 = sadd.s32 %s405, %s406
      %s408 = smul.addr %s407, 8
      %s409 = scalar_lea.vmem %s1, %s408
      %p410 = pneg %p94
      %p411 = pneg %p91
      %p412 = pneg %p115
      %p413 = pneg %p112
      %p414 = pneg %p136
      %p415 = pneg %p133
      %p416 = pneg %p157
      %p417 = pneg %p154
      %p418 = pneg %p178
      %p419 = pneg %p175
      %p420 = pneg %p199
      %p421 = pneg %p196
      %p422 = pneg %p220
      %p423 = pneg %p217
      %p424 = pneg %p241
      %p425 = pneg %p238
      %p426 = pneg %p262
      %p427 = pneg %p259
      %p428 = pneg %p283
      %p429 = pneg %p280
      %p430 = pneg %p311
      %p431 = pneg %p308
      %s432 = smul.u32 8, %s30
      %p433 = scmp.lt.s32.totalorder %s29, 1
      %s434 = scalar_select %p433, %s29, 1
      %p435 = scmp.lt.s32.totalorder %s432, 7
      %s436 = scalar_select %p435, %s432, 7
      %s437 = smul.addr %s434, 8
      %s438 = sadd.s32 %s436, %s437
      %s439 = smul.addr %s438, 8
      %s440 = scalar_lea.vmem %s11, %s439
      %s441 = smul.u32 8, %s30
      %p442 = scmp.lt.s32.totalorder %s29, 1
      %s443 = scalar_select %p442, %s29, 1
      %p444 = scmp.lt.s32.totalorder %s441, 7
      %s445 = scalar_select %p444, %s441, 7
      %s446 = smul.addr %s443, 8
      %s447 = sadd.s32 %s445, %s446
      %s448 = smul.addr %s447, 8
      %s449 = scalar_lea.vmem %s0, %s448
      %s450 = smul.u32 8, %s30
      %s451 = smul.u32 8, %s31
      %p452 = scmp.lt.s32.totalorder %s29, 1
      %s453 = scalar_select %p452, %s29, 1
      %p454 = scmp.lt.s32.totalorder %s451, 7
      %s455 = scalar_select %p454, %s451, 7
      %s456 = smul.addr %s453, 8
      %s457 = sadd.s32 %s455, %s456
      %s458 = smul.addr %s457, 8
      %s459 = scalar_lea.vmem %s1, %s458
      %s460 = smul.u32 8, %s31
      %s461 = smul.u32 8, %s30
      %p462 = scmp.lt.s32.totalorder %s29, 1
      %s463 = scalar_select %p462, %s29, 1
      %p464 = scmp.lt.s32.totalorder %s461, 7
      %s465 = scalar_select %p464, %s461, 7
      %s466 = smul.addr %s463, 8
      %s467 = sadd.s32 %s465, %s466
      %s468 = smul.addr %s467, 8
      %s469 = scalar_lea.vmem %s11, %s468
      %s470 = smul.u32 8, %s30
      %p472 = scmp.eq.s32.totalorder %s31, 0
      // Predicated region
      $region65: #{dpc_forward.10} parent=63 // pred_check
        %p473 = pneg %p472
      $region66: #{dpc_forward.10} parent=63 // pred_check_branch
        %475 = sbr.rel (%p473) target = $region68
      $region67: #{dpc_forward.10} parent=63 // pred_region
        %v476 = vld [vmem:[%s449] sm:$0xff]
        %v477 = vld [vmem:[%s449 + $0x8] sm:$0xff]
        %v478 = vld [vmem:[%s449 + $0x10] sm:$0xff]
        %v479 = vld [vmem:[%s449 + $0x18] sm:$0xff]
        %v480 = vld [vmem:[%s449 + $0x20] sm:$0xff]
        %v481 = vld [vmem:[%s449 + $0x28] sm:$0xff]
        %v482 = vld [vmem:[%s449 + $0x30] sm:$0xff]
        %v483 = vld [vmem:[%s449 + $0x38] sm:$0xff]
        %v484 = vpack.c.bf16 %v477, %v476
        %v485 = vpack.c.bf16 %v479, %v478
        %v486 = vpack.c.bf16 %v481, %v480
        %v487 = vpack.c.bf16 %v483, %v482
        %v488 = vld [vmem:[%s2] sm:$0xf]
        %v489 = vld [vmem:[%s2 + $0x4] sm:$0xf]
        %v490 = vld [vmem:[%s3] sm:$0x1]
        %v492 = vlaneseq
        %v493 = vshrl.u32 %v492, 7
        %v494 = vsub.s32 0, %v493
        %v495 = vrot.slane %v490, %v494
        %v499 = vunpack.c.l.b16 %v488
        %v500 = vunpack.c.l.b16 %v489
        %v501 = vpack.c.b16 %v500, %v499
        %vm503 = vcmask 130048
        %v505 = vsel %vm503, %v484, 0
        %v508 = vsel %vm503, %v485, 0
        %v511 = vsel %vm503, %v486, 0
        %v514 = vsel %vm503, %v487, 0
        %516 = vmatprep.subr.bf16.mxu0 0
        %517 = vmatpush1.bf16.msra.mxu0 %v501
        %518 = vmatprep.subr.bf16.mxu0 0
        %519 = vmatpush1.bf16.msra.mxu0 0
        %520 = vmatprep.subr.bf16.mxu0 0
        %521 = vmatpush1.bf16.msra.mxu0 0
        %522 = vmatprep.subr.bf16.mxu0 0
        %523 = vmatpush1.bf16.msra.mxu0 0
        %524 = vmatprep.subr.bf16.mxu0 0
        %525 = vmatpush1.bf16.msra.mxu0 0
        %526 = vmatprep.subr.bf16.mxu0 0
        %527 = vmatpush1.bf16.msra.mxu0 0
        %528 = vmatprep.subr.bf16.mxu0 0
        %529 = vmatpush1.bf16.msra.mxu0 0
        %530 = vmatprep.subr.bf16.mxu0 0
        %531 = vmatpush1.bf16.msra.mxu0 0
        %532 = vmatprep.subr.bf16.mxu0 0
        %533 = vmatpush1.bf16.msra.mxu0 0
        %534 = vmatprep.subr.bf16.mxu0 0
        %535 = vmatpush1.bf16.msra.mxu0 0
        %536 = vmatprep.subr.bf16.mxu0 0
        %537 = vmatpush1.bf16.msra.mxu0 0
        %538 = vmatprep.subr.bf16.mxu0 0
        %539 = vmatpush1.bf16.msra.mxu0 0
        %540 = vmatprep.subr.bf16.mxu0 0
        %541 = vmatpush1.bf16.msra.mxu0 0
        %542 = vmatprep.subr.bf16.mxu0 0
        %543 = vmatpush1.bf16.msra.mxu0 0
        %544 = vmatprep.subr.bf16.mxu0 0
        %545 = vmatpush1.bf16.msra.mxu0 0
        %546 = vmatprep.subr.bf16.mxu0 0
        %547 = vmatpush1.bf16.msra.mxu0 0
        %548 = vmatprep.mubr.bf16.mxu0 0
        %549 = vmatmul.mubr.bf16.gmra.mrb[0].mxu0 %v505
        %v550 = vpop.f32.mrb[0].mxu0
        %v551 = vadd.f32 %v495, %v550
        %v552 = vpop.f32.mrb[0].mxu0
        %v553 = vpop.f32.mrb[0].mxu0
        %v554 = vadd.f32 %v495, %v553
        %v555 = vpop.f32.mrb[0].mxu0
        %556 = vmatprep.mubr.bf16.mxu0 0
        %557 = vmatmul.mubr.bf16.gmra.mrb[0].mxu0 %v508
        %v558 = vpop.f32.mrb[0].mxu0
        %v559 = vadd.f32 %v495, %v558
        %v560 = vpop.f32.mrb[0].mxu0
        %v561 = vpop.f32.mrb[0].mxu0
        %v562 = vadd.f32 %v495, %v561
        %v563 = vpop.f32.mrb[0].mxu0
        %564 = vmatprep.mubr.bf16.mxu0 0
        %565 = vmatmul.mubr.bf16.gmra.mrb[0].mxu0 %v511
        %v566 = vpop.f32.mrb[0].mxu0
        %v567 = vadd.f32 %v495, %v566
        %v568 = vpop.f32.mrb[0].mxu0
        %v569 = vpop.f32.mrb[0].mxu0
        %v570 = vadd.f32 %v495, %v569
        %v571 = vpop.f32.mrb[0].mxu0
        %572 = vmatprep.mubr.bf16.mxu0 0
        %573 = vmatmul.mubr.bf16.gmra.mrb[0].mxu0 %v514
        %v574 = vpop.f32.mrb[0].mxu0
        %v575 = vadd.f32 %v495, %v574
        %v576 = vpop.f32.mrb[0].mxu0
        %v577 = vpop.f32.mrb[0].mxu0
        %v578 = vadd.f32 %v495, %v577
        %v579 = vpop.f32.mrb[0].mxu0
        %580 = vdwg.mxu0
        %v581 = vpack.c.bf16 %v554, %v551
        %v582 = vpack.c.bf16 %v562, %v559
        %v583 = vpack.c.bf16 %v570, %v567
        %v584 = vpack.c.bf16 %v578, %v575
        %vm585 = vcmask 15360
        %586 = vst.msk [vmem:[#allocation2] sm:$0xff] %vm585, %v581
        %587 = vst.msk [vmem:[#allocation2 + $0x8] sm:$0xff] %vm585, %v582
        %588 = vst.msk [vmem:[#allocation2 + $0x10] sm:$0xff] %vm585, %v583
        %589 = vst.msk [vmem:[#allocation2 + $0x18] sm:$0xff] %vm585, %v584
        %vm590 = vcmask 7168
        %591 = vst.msk [vmem:[#allocation3] sm:$0xff] %vm590, -inf
        %592 = vst.msk [vmem:[#allocation3 + $0x8] sm:$0xff] %vm590, -inf
        %593 = vst.msk [vmem:[#allocation3 + $0x10] sm:$0xff] %vm590, -inf
        %594 = vst.msk [vmem:[#allocation3 + $0x18] sm:$0xff] %vm590, -inf
        %595 = vst.msk [vmem:[#allocation3 + $0x20] sm:$0xff] %vm590, -inf
        %596 = vst.msk [vmem:[#allocation3 + $0x28] sm:$0xff] %vm590, -inf
        %597 = vst.msk [vmem:[#allocation3 + $0x30] sm:$0xff] %vm590, -inf
        %598 = vst.msk [vmem:[#allocation3 + $0x38] sm:$0xff] %vm590, -inf
        %599 = vst.msk [vmem:[#allocation4] sm:$0xff] %vm590, 0.0
        %600 = vst.msk [vmem:[#allocation4 + $0x8] sm:$0xff] %vm590, 0.0
        %601 = vst.msk [vmem:[#allocation4 + $0x10] sm:$0xff] %vm590, 0.0
        %602 = vst.msk [vmem:[#allocation4 + $0x18] sm:$0xff] %vm590, 0.0
        %603 = vst.msk [vmem:[#allocation4 + $0x20] sm:$0xff] %vm590, 0.0
        %604 = vst.msk [vmem:[#allocation4 + $0x28] sm:$0xff] %vm590, 0.0
        %605 = vst.msk [vmem:[#allocation4 + $0x30] sm:$0xff] %vm590, 0.0
        %606 = vst.msk [vmem:[#allocation4 + $0x38] sm:$0xff] %vm590, 0.0
        %607 = vst.msk [vmem:[#allocation5] sm:$0xff] %vm503, 0.0
        %608 = vst.msk [vmem:[#allocation5 + $0x8] sm:$0xff] %vm503, 0.0
        %609 = vst.msk [vmem:[#allocation5 + $0x10] sm:$0xff] %vm503, 0.0
        %610 = vst.msk [vmem:[#allocation5 + $0x18] sm:$0xff] %vm503, 0.0
        %611 = vst.msk [vmem:[#allocation5 + $0x20] sm:$0xff] %vm503, 0.0
        %612 = vst.msk [vmem:[#allocation5 + $0x28] sm:$0xff] %vm503, 0.0
        %613 = vst.msk [vmem:[#allocation5 + $0x30] sm:$0xff] %vm503, 0.0
        %614 = vst.msk [vmem:[#allocation5 + $0x38] sm:$0xff] %vm503, 0.0
      $region68: #{dpc_forward.10} parent=63 // pred_fallthru
        _
      %v615 = vld [vmem:[%s459] sm:$0xff]
      %v616 = vld [vmem:[%s459 + $0x8] sm:$0xff]
      %v617 = vld [vmem:[%s459 + $0x10] sm:$0xff]
      %v618 = vld [vmem:[%s459 + $0x18] sm:$0xff]
      %v619 = vld [vmem:[%s459 + $0x20] sm:$0xff]
      %v620 = vld [vmem:[%s459 + $0x28] sm:$0xff]
      %v621 = vld [vmem:[%s459 + $0x30] sm:$0xff]
      %v622 = vld [vmem:[%s459 + $0x38] sm:$0xff]
      %v623 = vpack.c.bf16 %v616, %v615
      %v624 = vpack.c.bf16 %v618, %v617
      %v625 = vpack.c.bf16 %v620, %v619
      %v626 = vpack.c.bf16 %v622, %v621
      %v627 = vld [vmem:[%s4] sm:$0xf]
      %v628 = vld [vmem:[%s4 + $0x4] sm:$0xf]
      %v629 = vld [vmem:[%s5] sm:$0x1]
      %v631 = vlaneseq
      %v632 = vshrl.u32 %v631, 7
      %v633 = vsub.s32 0, %v632
      %v634 = vrot.slane %v629, %v633
      %v638 = vunpack.c.l.b16 %v627
      %v639 = vunpack.c.l.b16 %v628
      %v640 = vpack.c.b16 %v639, %v638
      %vm642 = vcmask 130048
      %v644 = vsel %vm642, %v623, 0
      %v647 = vsel %vm642, %v624, 0
      %v650 = vsel %vm642, %v625, 0
      %v653 = vsel %vm642, %v626, 0
      %655 = vmatprep.subr.bf16.mxu0 0
      %656 = vmatpush1.bf16.msra.mxu0 %v640
      %657 = vmatprep.subr.bf16.mxu0 0
      %658 = vmatpush1.bf16.msra.mxu0 0
      %659 = vmatprep.subr.bf16.mxu0 0
      %660 = vmatpush1.bf16.msra.mxu0 0
      %661 = vmatprep.subr.bf16.mxu0 0
      %662 = vmatpush1.bf16.msra.mxu0 0
      %663 = vmatprep.subr.bf16.mxu0 0
      %664 = vmatpush1.bf16.msra.mxu0 0
      %665 = vmatprep.subr.bf16.mxu0 0
      %666 = vmatpush1.bf16.msra.mxu0 0
      %667 = vmatprep.subr.bf16.mxu0 0
      %668 = vmatpush1.bf16.msra.mxu0 0
      %669 = vmatprep.subr.bf16.mxu0 0
      %670 = vmatpush1.bf16.msra.mxu0 0
      %671 = vmatprep.subr.bf16.mxu0 0
      %672 = vmatpush1.bf16.msra.mxu0 0
      %673 = vmatprep.subr.bf16.mxu0 0
      %674 = vmatpush1.bf16.msra.mxu0 0
      %675 = vmatprep.subr.bf16.mxu0 0
      %676 = vmatpush1.bf16.msra.mxu0 0
      %677 = vmatprep.subr.bf16.mxu0 0
      %678 = vmatpush1.bf16.msra.mxu0 0
      %679 = vmatprep.subr.bf16.mxu0 0
      %680 = vmatpush1.bf16.msra.mxu0 0
      %681 = vmatprep.subr.bf16.mxu0 0
      %682 = vmatpush1.bf16.msra.mxu0 0
      %683 = vmatprep.subr.bf16.mxu0 0
      %684 = vmatpush1.bf16.msra.mxu0 0
      %685 = vmatprep.subr.bf16.mxu0 0
      %686 = vmatpush1.bf16.msra.mxu0 0
      %687 = vmatprep.mubr.bf16.mxu0 0
      %688 = vmatmul.mubr.bf16.gmra.mrb[0].mxu0 %v644
      %v689 = vpop.f32.mrb[0].mxu0
      %v690 = vadd.f32 %v634, %v689
      %v691 = vpop.f32.mrb[0].mxu0
      %v692 = vpop.f32.mrb[0].mxu0
      %v693 = vadd.f32 %v634, %v692
      %v694 = vpop.f32.mrb[0].mxu0
      %695 = vmatprep.mubr.bf16.mxu0 0
      %696 = vmatmul.mubr.bf16.gmra.mrb[0].mxu0 %v647
      %v697 = vpop.f32.mrb[0].mxu0
      %v698 = vadd.f32 %v634, %v697
      %v699 = vpop.f32.mrb[0].mxu0
      %v700 = vpop.f32.mrb[0].mxu0
      %v701 = vadd.f32 %v634, %v700
      %v702 = vpop.f32.mrb[0].mxu0
      %703 = vmatprep.mubr.bf16.mxu0 0
      %704 = vmatmul.mubr.bf16.gmra.mrb[0].mxu0 %v650
      %v705 = vpop.f32.mrb[0].mxu0
      %v706 = vadd.f32 %v634, %v705
      %v707 = vpop.f32.mrb[0].mxu0
      %v708 = vpop.f32.mrb[0].mxu0
      %v709 = vadd.f32 %v634, %v708
      %v710 = vpop.f32.mrb[0].mxu0
      %711 = vmatprep.mubr.bf16.mxu0 0
      %712 = vmatmul.mubr.bf16.gmra.mrb[0].mxu0 %v653
      %v713 = vpop.f32.mrb[0].mxu0
      %v714 = vadd.f32 %v634, %v713
      %v715 = vpop.f32.mrb[0].mxu0
      %v716 = vpop.f32.mrb[0].mxu0
      %v717 = vadd.f32 %v634, %v716
      %v718 = vpop.f32.mrb[0].mxu0
      %719 = vdwg.mxu0
      %v720 = vld [vmem:[%s6] sm:$0xf]
      %v721 = vld [vmem:[%s6 + $0x4] sm:$0xf]
      %v722 = vld [vmem:[%s7] sm:$0x1]
      %v724 = vlaneseq
      %v725 = vshrl.u32 %v724, 7
      %v726 = vsub.s32 0, %v725
      %v727 = vrot.slane %v722, %v726
      %v731 = vunpack.c.l.b16 %v720
      %v732 = vunpack.c.l.b16 %v721
      %v733 = vpack.c.b16 %v732, %v731
      %735 = vmatprep.subr.bf16.mxu0 0
      %736 = vmatpush1.bf16.msra.mxu0 %v733
      %737 = vmatprep.subr.bf16.mxu0 0
      %738 = vmatpush1.bf16.msra.mxu0 0
      %739 = vmatprep.subr.bf16.mxu0 0
      %740 = vmatpush1.bf16.msra.mxu0 0
      %741 = vmatprep.subr.bf16.mxu0 0
      %742 = vmatpush1.bf16.msra.mxu0 0
      %743 = vmatprep.subr.bf16.mxu0 0
      %744 = vmatpush1.bf16.msra.mxu0 0
      %745 = vmatprep.subr.bf16.mxu0 0
      %746 = vmatpush1.bf16.msra.mxu0 0
      %747 = vmatprep.subr.bf16.mxu0 0
      %748 = vmatpush1.bf16.msra.mxu0 0
      %749 = vmatprep.subr.bf16.mxu0 0
      %750 = vmatpush1.bf16.msra.mxu0 0
      %751 = vmatprep.subr.bf16.mxu0 0
      %752 = vmatpush1.bf16.msra.mxu0 0
      %753 = vmatprep.subr.bf16.mxu0 0
      %754 = vmatpush1.bf16.msra.mxu0 0
      %755 = vmatprep.subr.bf16.mxu0 0
      %756 = vmatpush1.bf16.msra.mxu0 0
      %757 = vmatprep.subr.bf16.mxu0 0
      %758 = vmatpush1.bf16.msra.mxu0 0
      %759 = vmatprep.subr.bf16.mxu0 0
      %760 = vmatpush1.bf16.msra.mxu0 0
      %761 = vmatprep.subr.bf16.mxu0 0
      %762 = vmatpush1.bf16.msra.mxu0 0
      %763 = vmatprep.subr.bf16.mxu0 0
      %764 = vmatpush1.bf16.msra.mxu0 0
      %765 = vmatprep.subr.bf16.mxu0 0
      %766 = vmatpush1.bf16.msra.mxu0 0
      %767 = vmatprep.mubr.bf16.mxu0 0
      %768 = vmatmul.mubr.bf16.gmra.mrb[0].mxu0 %v644
      %v769 = vpop.f32.mrb[0].mxu0
      %v770 = vadd.f32 %v727, %v769
      %v771 = vpop.f32.mrb[0].mxu0
      %v772 = vpop.f32.mrb[0].mxu0
      %v773 = vadd.f32 %v727, %v772
      %v774 = vpop.f32.mrb[0].mxu0
      %775 = vmatprep.mubr.bf16.mxu0 0
      %776 = vmatmul.mubr.bf16.gmra.mrb[0].mxu0 %v647
      %v777 = vpop.f32.mrb[0].mxu0
      %v778 = vadd.f32 %v727, %v777
      %v779 = vpop.f32.mrb[0].mxu0
      %v780 = vpop.f32.mrb[0].mxu0
      %v781 = vadd.f32 %v727, %v780
      %v782 = vpop.f32.mrb[0].mxu0
      %783 = vmatprep.mubr.bf16.mxu0 0
      %784 = vmatmul.mubr.bf16.gmra.mrb[0].mxu0 %v650
      %v785 = vpop.f32.mrb[0].mxu0
      %v786 = vadd.f32 %v727, %v785
      %v787 = vpop.f32.mrb[0].mxu0
      %v788 = vpop.f32.mrb[0].mxu0
      %v789 = vadd.f32 %v727, %v788
      %v790 = vpop.f32.mrb[0].mxu0
      %791 = vmatprep.mubr.bf16.mxu0 0
      %792 = vmatmul.mubr.bf16.gmra.mrb[0].mxu0 %v653
      %v793 = vpop.f32.mrb[0].mxu0
      %v794 = vadd.f32 %v727, %v793
      %v795 = vpop.f32.mrb[0].mxu0
      %v796 = vpop.f32.mrb[0].mxu0
      %v797 = vadd.f32 %v727, %v796
      %v798 = vpop.f32.mrb[0].mxu0
      %799 = vdwg.mxu0
      %v800 = vld [vmem:[#allocation2] sm:$0xff]
      %v801 = vld [vmem:[#allocation2 + $0x8] sm:$0xff]
      %v802 = vld [vmem:[#allocation2 + $0x10] sm:$0xff]
      %v803 = vld [vmem:[#allocation2 + $0x18] sm:$0xff]
      %v804 = vpack.c.bf16 %v693, %v690
      %v805 = vpack.c.bf16 %v701, %v698
      %v806 = vpack.c.bf16 %v709, %v706
      %v807 = vpack.c.bf16 %v717, %v714
      %vm808 = vcmask 15360
      %v810 = vsel %vm808, %v800, 0
      %v813 = vsel %vm808, %v801, 0
      %v816 = vsel %vm808, %v802, 0
      %v819 = vsel %vm808, %v803, 0
      %v822 = vsel %vm808, %v804, 0
      %v825 = vsel %vm808, %v805, 0
      %v828 = vsel %vm808, %v806, 0
      %v831 = vsel %vm808, %v807, 0
      %833 = vmatprep.subr.bf16.mxu0 0
      %834 = vmatpush1.bf16.xpose.msra.mxu0 %v822
      %835 = vmatprep.subr.bf16.mxu0 0
      %836 = vmatpush1.bf16.xpose.msra.mxu0 %v825
      %837 = vmatprep.subr.bf16.mxu0 0
      %838 = vmatpush1.bf16.xpose.msra.mxu0 %v828
      %839 = vmatprep.subr.bf16.mxu0 0
      %840 = vmatpush1.bf16.xpose.msra.mxu0 %v831
      %841 = vmatprep.subr.bf16.mxu0 0
      %842 = vmatpush1.bf16.xpose.msra.mxu0 0
      %843 = vmatprep.subr.bf16.mxu0 0
      %844 = vmatpush1.bf16.xpose.msra.mxu0 0
      %845 = vmatprep.subr.bf16.mxu0 0
      %846 = vmatpush1.bf16.xpose.msra.mxu0 0
      %847 = vmatprep.subr.bf16.mxu0 0
      %848 = vmatpush1.bf16.xpose.msra.mxu0 0
      %849 = vmatprep.subr.bf16.mxu0 0
      %850 = vmatpush1.bf16.xpose.msra.mxu0 0
      %851 = vmatprep.subr.bf16.mxu0 0
      %852 = vmatpush1.bf16.xpose.msra.mxu0 0
      %853 = vmatprep.subr.bf16.mxu0 0
      %854 = vmatpush1.bf16.xpose.msra.mxu0 0
      %855 = vmatprep.subr.bf16.mxu0 0
      %856 = vmatpush1.bf16.xpose.msra.mxu0 0
      %857 = vmatprep.subr.bf16.mxu0 0
      %858 = vmatpush1.bf16.xpose.msra.mxu0 0
      %859 = vmatprep.subr.bf16.mxu0 0
      %860 = vmatpush1.bf16.xpose.msra.mxu0 0
      %861 = vmatprep.subr.bf16.mxu0 0
      %862 = vmatpush1.bf16.xpose.msra.mxu0 0
      %863 = vmatprep.subr.bf16.mxu0 0
      %864 = vmatpush1.bf16.xpose.msra.mxu0 0
      %865 = vmatprep.mubr.bf16.mxu0 0
      %866 = vmatmul.mubr.bf16.gmra.mrb[0].mxu0 %v810
      %v867 = vpop.f32.mrb[0].mxu0
      %v868 = vadd.f32 0.0, %v867
      %v869 = vpop.f32.mrb[0].mxu0
      %v870 = vpop.f32.mrb[0].mxu0
      %v871 = vadd.f32 0.0, %v870
      %v872 = vpop.f32.mrb[0].mxu0
      %873 = vmatprep.mubr.bf16.mxu0 0
      %874 = vmatmul.mubr.bf16.gmra.mrb[0].mxu0 %v813
      %v875 = vpop.f32.mrb[0].mxu0
      %v876 = vadd.f32 0.0, %v875
      %v877 = vpop.f32.mrb[0].mxu0
      %v878 = vpop.f32.mrb[0].mxu0
      %v879 = vadd.f32 0.0, %v878
      %v880 = vpop.f32.mrb[0].mxu0
      %881 = vmatprep.mubr.bf16.mxu0 0
      %882 = vmatmul.mubr.bf16.gmra.mrb[0].mxu0 %v816
      %v883 = vpop.f32.mrb[0].mxu0
      %v884 = vadd.f32 0.0, %v883
      %v885 = vpop.f32.mrb[0].mxu0
      %v886 = vpop.f32.mrb[0].mxu0
      %v887 = vadd.f32 0.0, %v886
      %v888 = vpop.f32.mrb[0].mxu0
      %889 = vmatprep.mubr.bf16.mxu0 0
      %890 = vmatmul.mubr.bf16.gmra.mrb[0].mxu0 %v819
      %v891 = vpop.f32.mrb[0].mxu0
      %v892 = vadd.f32 0.0, %v891
      %v893 = vpop.f32.mrb[0].mxu0
      %v894 = vpop.f32.mrb[0].mxu0
      %v895 = vadd.f32 0.0, %v894
      %v896 = vpop.f32.mrb[0].mxu0
      %897 = vdwg.mxu0
      %v898 = vld [vmem:[#allocation3] sm:$0xff]
      %v899 = vld [vmem:[#allocation3 + $0x8] sm:$0xff]
      %v900 = vld [vmem:[#allocation3 + $0x10] sm:$0xff]
      %v901 = vld [vmem:[#allocation3 + $0x18] sm:$0xff]
      %v902 = vld [vmem:[#allocation3 + $0x20] sm:$0xff]
      %v903 = vld [vmem:[#allocation3 + $0x28] sm:$0xff]
      %v904 = vld [vmem:[#allocation3 + $0x30] sm:$0xff]
      %v905 = vld [vmem:[#allocation3 + $0x38] sm:$0xff]
      %vm906 = vcmask 523264
      %v907 = vsel %vm906, %v868, -inf
      %908 = vmax.xlane.f32.xlu0 %v907
      %v909 = vpop.xlane.xlu0 %908
      %v910 = vsel %vm906, %v871, -inf
      %911 = vmax.xlane.f32.xlu0 %v910
      %v912 = vpop.xlane.xlu0 %911
      %v913 = vsel %vm906, %v876, -inf
      %914 = vmax.xlane.f32.xlu0 %v913
      %v915 = vpop.xlane.xlu0 %914
      %v916 = vsel %vm906, %v879, -inf
      %917 = vmax.xlane.f32.xlu0 %v916
      %v918 = vpop.xlane.xlu0 %917
      %v919 = vsel %vm906, %v884, -inf
      %920 = vmax.xlane.f32.xlu0 %v919
      %v921 = vpop.xlane.xlu0 %920
      %v922 = vsel %vm906, %v887, -inf
      %923 = vmax.xlane.f32.xlu0 %v922
      %v924 = vpop.xlane.xlu0 %923
      %v925 = vsel %vm906, %v892, -inf
      %926 = vmax.xlane.f32.xlu0 %v925
      %v927 = vpop.xlane.xlu0 %926
      %v928 = vsel %vm906, %v895, -inf
      %929 = vmax.xlane.f32.xlu0 %v928
      %v930 = vpop.xlane.xlu0 %929
      %v931 = vmax.f32 %v898, %v909
      %v932 = vmax.f32 %v899, %v912
      %v933 = vmax.f32 %v900, %v915
      %v934 = vmax.f32 %v901, %v918
      %v935 = vmax.f32 %v902, %v921
      %v936 = vmax.f32 %v903, %v924
      %v937 = vmax.f32 %v904, %v927
      %v938 = vmax.f32 %v905, %v930
      %v939 = vsub.f32 %v898, %v931
      %v940 = vsub.f32 %v899, %v932
      %v941 = vsub.f32 %v900, %v933
      %v942 = vsub.f32 %v901, %v934
      %v943 = vsub.f32 %v902, %v935
      %v944 = vsub.f32 %v903, %v936
      %v945 = vsub.f32 %v904, %v937
      %v946 = vsub.f32 %v905, %v938
      %v947 = vmul.f32 %v939, 1.442695
      %v948 = vpow.pop %v947
      %v949 = vmul.f32 %v940, 1.442695
      %v950 = vpow.pop %v949
      %v951 = vmul.f32 %v941, 1.442695
      %v952 = vpow.pop %v951
      %v953 = vmul.f32 %v942, 1.442695
      %v954 = vpow.pop %v953
      %v955 = vmul.f32 %v943, 1.442695
      %v956 = vpow.pop %v955
      %v957 = vmul.f32 %v944, 1.442695
      %v958 = vpow.pop %v957
      %v959 = vmul.f32 %v945, 1.442695
      %v960 = vpow.pop %v959
      %v961 = vmul.f32 %v946, 1.442695
      %v962 = vpow.pop %v961
      %964 = vset.pattern.permute.xlu0 0
      %965 = vperm.xlu0 %964, %v931
      %v966 = vpop.permute.xlu0 %965
      %969 = vset.pattern.permute.xlu0 0
      %970 = vperm.xlu0 %969, %v932
      %v971 = vpop.permute.xlu0 %970
      %974 = vset.pattern.permute.xlu0 0
      %975 = vperm.xlu0 %974, %v933
      %v976 = vpop.permute.xlu0 %975
      %979 = vset.pattern.permute.xlu0 0
      %980 = vperm.xlu0 %979, %v934
      %v981 = vpop.permute.xlu0 %980
      %984 = vset.pattern.permute.xlu0 0
      %985 = vperm.xlu0 %984, %v935
      %v986 = vpop.permute.xlu0 %985
      %989 = vset.pattern.permute.xlu0 0
      %990 = vperm.xlu0 %989, %v936
      %v991 = vpop.permute.xlu0 %990
      %994 = vset.pattern.permute.xlu0 0
      %995 = vperm.xlu0 %994, %v937
      %v996 = vpop.permute.xlu0 %995
      %999 = vset.pattern.permute.xlu0 0
      %1000 = vperm.xlu0 %999, %v938
      %v1001 = vpop.permute.xlu0 %1000
      %v1003 = vsub.f32 %v868, %v966
      %v1004 = vsub.f32 %v871, %v971
      %v1005 = vsub.f32 %v876, %v976
      %v1006 = vsub.f32 %v879, %v981
      %v1007 = vsub.f32 %v884, %v986
      %v1008 = vsub.f32 %v887, %v991
      %v1009 = vsub.f32 %v892, %v996
      %v1010 = vsub.f32 %v895, %v1001
      %v1011 = vmul.f32 %v1003, 1.442695
      %v1012 = vpow.pop %v1011
      %v1013 = vmul.f32 %v1004, 1.442695
      %v1014 = vpow.pop %v1013
      %v1015 = vmul.f32 %v1005, 1.442695
      %v1016 = vpow.pop %v1015
      %v1017 = vmul.f32 %v1006, 1.442695
      %v1018 = vpow.pop %v1017
      %v1019 = vmul.f32 %v1007, 1.442695
      %v1020 = vpow.pop %v1019
      %v1021 = vmul.f32 %v1008, 1.442695
      %v1022 = vpow.pop %v1021
      %v1023 = vmul.f32 %v1009, 1.442695
      %v1024 = vpow.pop %v1023
      %v1025 = vmul.f32 %v1010, 1.442695
      %v1026 = vpow.pop %v1025
      %v1027 = vld [vmem:[#allocation4] sm:$0xff]
      %v1028 = vld [vmem:[#allocation4 + $0x8] sm:$0xff]
      %v1029 = vld [vmem:[#allocation4 + $0x10] sm:$0xff]
      %v1030 = vld [vmem:[#allocation4 + $0x18] sm:$0xff]
      %v1031 = vld [vmem:[#allocation4 + $0x20] sm:$0xff]
      %v1032 = vld [vmem:[#allocation4 + $0x28] sm:$0xff]
      %v1033 = vld [vmem:[#allocation4 + $0x30] sm:$0xff]
      %v1034 = vld [vmem:[#allocation4 + $0x38] sm:$0xff]
      %v1035 = vmul.f32 %v948, %v1027
      %v1036 = vmul.f32 %v950, %v1028
      %v1037 = vmul.f32 %v952, %v1029
      %v1038 = vmul.f32 %v954, %v1030
      %v1039 = vmul.f32 %v956, %v1031
      %v1040 = vmul.f32 %v958, %v1032
      %v1041 = vmul.f32 %v960, %v1033
      %v1042 = vmul.f32 %v962, %v1034
      %v1043 = vsel %vm906, %v1012, 0.0
      %1044 = vadd.xlane.f32.xlu0 %v1043
      %v1045 = vpop.xlane.xlu0 %1044
      %v1046 = vsel %vm906, %v1014, 0.0
      %1047 = vadd.xlane.f32.xlu0 %v1046
      %v1048 = vpop.xlane.xlu0 %1047
      %v1049 = vsel %vm906, %v1016, 0.0
      %1050 = vadd.xlane.f32.xlu0 %v1049
      %v1051 = vpop.xlane.xlu0 %1050
      %v1052 = vsel %vm906, %v1018, 0.0
      %1053 = vadd.xlane.f32.xlu0 %v1052
      %v1054 = vpop.xlane.xlu0 %1053
      %v1055 = vsel %vm906, %v1020, 0.0
      %1056 = vadd.xlane.f32.xlu0 %v1055
      %v1057 = vpop.xlane.xlu0 %1056
      %v1058 = vsel %vm906, %v1022, 0.0
      %1059 = vadd.xlane.f32.xlu0 %v1058
      %v1060 = vpop.xlane.xlu0 %1059
      %v1061 = vsel %vm906, %v1024, 0.0
      %1062 = vadd.xlane.f32.xlu0 %v1061
      %v1063 = vpop.xlane.xlu0 %1062
      %v1064 = vsel %vm906, %v1026, 0.0
      %1065 = vadd.xlane.f32.xlu0 %v1064
      %v1066 = vpop.xlane.xlu0 %1065
      %v1067 = vadd.f32 %v1035, %v1045
      %v1068 = vadd.f32 %v1036, %v1048
      %v1069 = vadd.f32 %v1037, %v1051
      %v1070 = vadd.f32 %v1038, %v1054
      %v1071 = vadd.f32 %v1039, %v1057
      %v1072 = vadd.f32 %v1040, %v1060
      %v1073 = vadd.f32 %v1041, %v1063
      %v1074 = vadd.f32 %v1042, %v1066
      %vm1075 = vcmask 7168
      %1076 = vst.msk [vmem:[#allocation4] sm:$0xff] %vm1075, %v1067
      %1077 = vst.msk [vmem:[#allocation4 + $0x8] sm:$0xff] %vm1075, %v1068
      %1078 = vst.msk [vmem:[#allocation4 + $0x10] sm:$0xff] %vm1075, %v1069
      %1079 = vst.msk [vmem:[#allocation4 + $0x18] sm:$0xff] %vm1075, %v1070
      %1080 = vst.msk [vmem:[#allocation4 + $0x20] sm:$0xff] %vm1075, %v1071
      %1081 = vst.msk [vmem:[#allocation4 + $0x28] sm:$0xff] %vm1075, %v1072
      %1082 = vst.msk [vmem:[#allocation4 + $0x30] sm:$0xff] %vm1075, %v1073
      %1083 = vst.msk [vmem:[#allocation4 + $0x38] sm:$0xff] %vm1075, %v1074
      %v1084 = vld [vmem:[#allocation5] sm:$0xff]
      %v1085 = vld [vmem:[#allocation5 + $0x8] sm:$0xff]
      %v1086 = vld [vmem:[#allocation5 + $0x10] sm:$0xff]
      %v1087 = vld [vmem:[#allocation5 + $0x18] sm:$0xff]
      %v1088 = vld [vmem:[#allocation5 + $0x20] sm:$0xff]
      %v1089 = vld [vmem:[#allocation5 + $0x28] sm:$0xff]
      %v1090 = vld [vmem:[#allocation5 + $0x30] sm:$0xff]
      %v1091 = vld [vmem:[#allocation5 + $0x38] sm:$0xff]
      %1093 = vset.pattern.permute.xlu0 0
      %1094 = vperm.xlu0 %1093, %v948
      %v1095 = vpop.permute.xlu0 %1094
      %1098 = vset.pattern.permute.xlu0 0
      %1099 = vperm.xlu0 %1098, %v950
      %v1100 = vpop.permute.xlu0 %1099
      %1103 = vset.pattern.permute.xlu0 0
      %1104 = vperm.xlu0 %1103, %v952
      %v1105 = vpop.permute.xlu0 %1104
      %1108 = vset.pattern.permute.xlu0 0
      %1109 = vperm.xlu0 %1108, %v954
      %v1110 = vpop.permute.xlu0 %1109
      %1113 = vset.pattern.permute.xlu0 0
      %1114 = vperm.xlu0 %1113, %v956
      %v1115 = vpop.permute.xlu0 %1114
      %1118 = vset.pattern.permute.xlu0 0
      %1119 = vperm.xlu0 %1118, %v958
      %v1120 = vpop.permute.xlu0 %1119
      %1123 = vset.pattern.permute.xlu0 0
      %1124 = vperm.xlu0 %1123, %v960
      %v1125 = vpop.permute.xlu0 %1124
      %1128 = vset.pattern.permute.xlu0 0
      %1129 = vperm.xlu0 %1128, %v962
      %v1130 = vpop.permute.xlu0 %1129
      %v1132 = vmul.f32 %v1095, %v1084
      %v1133 = vmul.f32 %v1100, %v1085
      %v1134 = vmul.f32 %v1105, %v1086
      %v1135 = vmul.f32 %v1110, %v1087
      %v1136 = vmul.f32 %v1115, %v1088
      %v1137 = vmul.f32 %v1120, %v1089
      %v1138 = vmul.f32 %v1125, %v1090
      %v1139 = vmul.f32 %v1130, %v1091
      %v1140 = vpack.c.bf16 %v1014, %v1012
      %v1141 = vpack.c.bf16 %v1018, %v1016
      %v1142 = vpack.c.bf16 %v1022, %v1020
      %v1143 = vpack.c.bf16 %v1026, %v1024
      %v1144 = vpack.c.bf16 %v773, %v770
      %v1145 = vpack.c.bf16 %v781, %v778
      %v1146 = vpack.c.bf16 %v789, %v786
      %v1147 = vpack.c.bf16 %v797, %v794
      %v1149 = vsel %vm906, %v1140, 0
      %v1152 = vsel %vm906, %v1141, 0
      %v1155 = vsel %vm906, %v1142, 0
      %v1158 = vsel %vm906, %v1143, 0
      %1160 = vmatprep.subr.bf16.mxu0 0
      %1161 = vmatpush1.bf16.msra.mxu0 %v1144
      %1162 = vmatprep.subr.bf16.mxu0 0
      %1163 = vmatpush1.bf16.msra.mxu0 %v1145
      %1164 = vmatprep.subr.bf16.mxu0 0
      %1165 = vmatpush1.bf16.msra.mxu0 %v1146
      %1166 = vmatprep.subr.bf16.mxu0 0
      %1167 = vmatpush1.bf16.msra.mxu0 %v1147
      %1168 = vmatprep.subr.bf16.mxu0 0
      %1169 = vmatpush1.bf16.msra.mxu0 0
      %1170 = vmatprep.subr.bf16.mxu0 0
      %1171 = vmatpush1.bf16.msra.mxu0 0
      %1172 = vmatprep.subr.bf16.mxu0 0
      %1173 = vmatpush1.bf16.msra.mxu0 0
      %1174 = vmatprep.subr.bf16.mxu0 0
      %1175 = vmatpush1.bf16.msra.mxu0 0
      %1176 = vmatprep.subr.bf16.mxu0 0
      %1177 = vmatpush1.bf16.msra.mxu0 0
      %1178 = vmatprep.subr.bf16.mxu0 0
      %1179 = vmatpush1.bf16.msra.mxu0 0
      %1180 = vmatprep.subr.bf16.mxu0 0
      %1181 = vmatpush1.bf16.msra.mxu0 0
      %1182 = vmatprep.subr.bf16.mxu0 0
      %1183 = vmatpush1.bf16.msra.mxu0 0
      %1184 = vmatprep.subr.bf16.mxu0 0
      %1185 = vmatpush1.bf16.msra.mxu0 0
      %1186 = vmatprep.subr.bf16.mxu0 0
      %1187 = vmatpush1.bf16.msra.mxu0 0
      %1188 = vmatprep.subr.bf16.mxu0 0
      %1189 = vmatpush1.bf16.msra.mxu0 0
      %1190 = vmatprep.subr.bf16.mxu0 0
      %1191 = vmatpush1.bf16.msra.mxu0 0
      %1192 = vmatprep.mubr.bf16.mxu0 0
      %1193 = vmatmul.mubr.bf16.gmra.mrb[0].mxu0 %v1149
      %v1194 = vpop.f32.mrb[0].mxu0
      %v1195 = vadd.f32 0.0, %v1194
      %v1196 = vpop.f32.mrb[0].mxu0
      %v1197 = vpop.f32.mrb[0].mxu0
      %v1198 = vadd.f32 0.0, %v1197
      %v1199 = vpop.f32.mrb[0].mxu0
      %1200 = vmatprep.mubr.bf16.mxu0 0
      %1201 = vmatmul.mubr.bf16.gmra.mrb[0].mxu0 %v1152
      %v1202 = vpop.f32.mrb[0].mxu0
      %v1203 = vadd.f32 0.0, %v1202
      %v1204 = vpop.f32.mrb[0].mxu0
      %v1205 = vpop.f32.mrb[0].mxu0
      %v1206 = vadd.f32 0.0, %v1205
      %v1207 = vpop.f32.mrb[0].mxu0
      %1208 = vmatprep.mubr.bf16.mxu0 0
      %1209 = vmatmul.mubr.bf16.gmra.mrb[0].mxu0 %v1155
      %v1210 = vpop.f32.mrb[0].mxu0
      %v1211 = vadd.f32 0.0, %v1210
      %v1212 = vpop.f32.mrb[0].mxu0
      %v1213 = vpop.f32.mrb[0].mxu0
      %v1214 = vadd.f32 0.0, %v1213
      %v1215 = vpop.f32.mrb[0].mxu0
      %1216 = vmatprep.mubr.bf16.mxu0 0
      %1217 = vmatmul.mubr.bf16.gmra.mrb[0].mxu0 %v1158
      %v1218 = vpop.f32.mrb[0].mxu0
      %v1219 = vadd.f32 0.0, %v1218
      %v1220 = vpop.f32.mrb[0].mxu0
      %v1221 = vpop.f32.mrb[0].mxu0
      %v1222 = vadd.f32 0.0, %v1221
      %v1223 = vpop.f32.mrb[0].mxu0
      %1224 = vdwg.mxu0
      %v1225 = vadd.f32 %v1132, %v1195
      %v1226 = vadd.f32 %v1133, %v1198
      %v1227 = vadd.f32 %v1134, %v1203
      %v1228 = vadd.f32 %v1135, %v1206
      %v1229 = vadd.f32 %v1136, %v1211
      %v1230 = vadd.f32 %v1137, %v1214
      %v1231 = vadd.f32 %v1138, %v1219
      %v1232 = vadd.f32 %v1139, %v1222
      %1233 = vst.msk [vmem:[#allocation5] sm:$0xff] %vm642, %v1225
      %1234 = vst.msk [vmem:[#allocation5 + $0x8] sm:$0xff] %vm642, %v1226
      %1235 = vst.msk [vmem:[#allocation5 + $0x10] sm:$0xff] %vm642, %v1227
      %1236 = vst.msk [vmem:[#allocation5 + $0x18] sm:$0xff] %vm642, %v1228
      %1237 = vst.msk [vmem:[#allocation5 + $0x20] sm:$0xff] %vm642, %v1229
      %1238 = vst.msk [vmem:[#allocation5 + $0x28] sm:$0xff] %vm642, %v1230
      %1239 = vst.msk [vmem:[#allocation5 + $0x30] sm:$0xff] %vm642, %v1231
      %1240 = vst.msk [vmem:[#allocation5 + $0x38] sm:$0xff] %vm642, %v1232
      %1241 = vst.msk [vmem:[#allocation3] sm:$0xff] %vm1075, %v931
      %1242 = vst.msk [vmem:[#allocation3 + $0x8] sm:$0xff] %vm1075, %v932
      %1243 = vst.msk [vmem:[#allocation3 + $0x10] sm:$0xff] %vm1075, %v933
      %1244 = vst.msk [vmem:[#allocation3 + $0x18] sm:$0xff] %vm1075, %v934
      %1245 = vst.msk [vmem:[#allocation3 + $0x20] sm:$0xff] %vm1075, %v935
      %1246 = vst.msk [vmem:[#allocation3 + $0x28] sm:$0xff] %vm1075, %v936
      %1247 = vst.msk [vmem:[#allocation3 + $0x30] sm:$0xff] %vm1075, %v937
      %1248 = vst.msk [vmem:[#allocation3 + $0x38] sm:$0xff] %vm1075, %v938
      // Predicated region
      $region69: #{dpc_forward.10} parent=63 // pred_check
        %p1249 = pneg %p472
      $region70: #{dpc_forward.10} parent=63 // pred_check_branch
        %1251 = sbr.rel (%p1249) target = $region72
      $region71: #{dpc_forward.10} parent=63 // pred_region
        %v1252 = vld [vmem:[#allocation5] sm:$0xff]
        %v1253 = vld [vmem:[#allocation5 + $0x8] sm:$0xff]
        %v1254 = vld [vmem:[#allocation5 + $0x10] sm:$0xff]
        %v1255 = vld [vmem:[#allocation5 + $0x18] sm:$0xff]
        %v1256 = vld [vmem:[#allocation5 + $0x20] sm:$0xff]
        %v1257 = vld [vmem:[#allocation5 + $0x28] sm:$0xff]
        %v1258 = vld [vmem:[#allocation5 + $0x30] sm:$0xff]
        %v1259 = vld [vmem:[#allocation5 + $0x38] sm:$0xff]
        %v1260 = vld [vmem:[#allocation4] sm:$0xff]
        %v1261 = vld [vmem:[#allocation4 + $0x8] sm:$0xff]
        %v1262 = vld [vmem:[#allocation4 + $0x10] sm:$0xff]
        %v1263 = vld [vmem:[#allocation4 + $0x18] sm:$0xff]
        %v1264 = vld [vmem:[#allocation4 + $0x20] sm:$0xff]
        %v1265 = vld [vmem:[#allocation4 + $0x28] sm:$0xff]
        %v1266 = vld [vmem:[#allocation4 + $0x30] sm:$0xff]
        %v1267 = vld [vmem:[#allocation4 + $0x38] sm:$0xff]
        %v1268 = vrcp.pop %v1260
        %v1269 = vrcp.pop %v1261
        %v1270 = vrcp.pop %v1262
        %v1271 = vrcp.pop %v1263
        %v1272 = vrcp.pop %v1264
        %v1273 = vrcp.pop %v1265
        %v1274 = vrcp.pop %v1266
        %v1275 = vrcp.pop %v1267
        %1277 = vset.pattern.permute.xlu0 0
        %1278 = vperm.xlu0 %1277, %v1268
        %v1279 = vpop.permute.xlu0 %1278
        %1282 = vset.pattern.permute.xlu0 0
        %1283 = vperm.xlu0 %1282, %v1269
        %v1284 = vpop.permute.xlu0 %1283
        %1287 = vset.pattern.permute.xlu0 0
        %1288 = vperm.xlu0 %1287, %v1270
        %v1289 = vpop.permute.xlu0 %1288
        %1292 = vset.pattern.permute.xlu0 0
        %1293 = vperm.xlu0 %1292, %v1271
        %v1294 = vpop.permute.xlu0 %1293
        %1297 = vset.pattern.permute.xlu0 0
        %1298 = vperm.xlu0 %1297, %v1272
        %v1299 = vpop.permute.xlu0 %1298
        %1302 = vset.pattern.permute.xlu0 0
        %1303 = vperm.xlu0 %1302, %v1273
        %v1304 = vpop.permute.xlu0 %1303
        %1307 = vset.pattern.permute.xlu0 0
        %1308 = vperm.xlu0 %1307, %v1274
        %v1309 = vpop.permute.xlu0 %1308
        %1312 = vset.pattern.permute.xlu0 0
        %1313 = vperm.xlu0 %1312, %v1275
        %v1314 = vpop.permute.xlu0 %1313
        %v1316 = vmul.f32 %v1252, %v1279
        %v1317 = vmul.f32 %v1253, %v1284
        %v1318 = vmul.f32 %v1254, %v1289
        %v1319 = vmul.f32 %v1255, %v1294
        %v1320 = vmul.f32 %v1256, %v1299
        %v1321 = vmul.f32 %v1257, %v1304
        %v1322 = vmul.f32 %v1258, %v1309
        %v1323 = vmul.f32 %v1259, %v1314
        %v1324 = vld [vmem:[#allocation6] sm:$0x1]
        %v1326 = vlaneseq
        %v1327 = vshrl.u32 %v1326, 7
        %v1328 = vsub.s32 0, %v1327
        %v1329 = vrot.slane %v1324, %v1328
        %1330 = vset.pattern.permute.xlu0 0
        %1331 = vperm.xlu0 %1330, %v1329
        %v1332 = vpop.permute.xlu0 %1331
        %v1334 = vmul.f32 %v1332, %v1316
        %v1335 = vmul.f32 %v1332, %v1317
        %v1336 = vmul.f32 %v1332, %v1318
        %v1337 = vmul.f32 %v1332, %v1319
        %v1338 = vmul.f32 %v1332, %v1320
        %v1339 = vmul.f32 %v1332, %v1321
        %v1340 = vmul.f32 %v1332, %v1322
        %v1341 = vmul.f32 %v1332, %v1323
        %v1342 = vld [vmem:[%s449] sm:$0xff]
        %v1343 = vld [vmem:[%s449 + $0x8] sm:$0xff]
        %v1344 = vld [vmem:[%s449 + $0x10] sm:$0xff]
        %v1345 = vld [vmem:[%s449 + $0x18] sm:$0xff]
        %v1346 = vld [vmem:[%s449 + $0x20] sm:$0xff]
        %v1347 = vld [vmem:[%s449 + $0x28] sm:$0xff]
        %v1348 = vld [vmem:[%s449 + $0x30] sm:$0xff]
        %v1349 = vld [vmem:[%s449 + $0x38] sm:$0xff]
        %v1350 = vadd.f32 %v1334, %v1342
        %v1351 = vadd.f32 %v1335, %v1343
        %v1352 = vadd.f32 %v1336, %v1344
        %v1353 = vadd.f32 %v1337, %v1345
        %v1354 = vadd.f32 %v1338, %v1346
        %v1355 = vadd.f32 %v1339, %v1347
        %v1356 = vadd.f32 %v1340, %v1348
        %v1357 = vadd.f32 %v1341, %v1349
        %v1358 = vpack.c.bf16 %v1351, %v1350
        %v1359 = vpack.c.bf16 %v1353, %v1352
        %v1360 = vpack.c.bf16 %v1355, %v1354
        %v1361 = vpack.c.bf16 %v1357, %v1356
        %v1362 = vld [vmem:[%s9] sm:$0xf]
        %v1363 = vld [vmem:[%s9 + $0x4] sm:$0xf]
        %v1364 = vld [vmem:[%s10] sm:$0x1]
        %v1366 = vlaneseq
        %v1367 = vshrl.u32 %v1366, 7
        %v1368 = vsub.s32 0, %v1367
        %v1369 = vrot.slane %v1364, %v1368
        %v1373 = vunpack.c.l.b16 %v1362
        %v1374 = vunpack.c.l.b16 %v1363
        %v1375 = vpack.c.b16 %v1374, %v1373
        %v1378 = vsel %vm642, %v1358, 0
        %v1381 = vsel %vm642, %v1359, 0
        %v1384 = vsel %vm642, %v1360, 0
        %v1387 = vsel %vm642, %v1361, 0
        %1389 = vmatprep.subr.bf16.mxu0 0
        %1390 = vmatpush1.bf16.msra.mxu0 %v1375
        %1391 = vmatprep.subr.bf16.mxu0 0
        %1392 = vmatpush1.bf16.msra.mxu0 0
        %1393 = vmatprep.subr.bf16.mxu0 0
        %1394 = vmatpush1.bf16.msra.mxu0 0
        %1395 = vmatprep.subr.bf16.mxu0 0
        %1396 = vmatpush1.bf16.msra.mxu0 0
        %1397 = vmatprep.subr.bf16.mxu0 0
        %1398 = vmatpush1.bf16.msra.mxu0 0
        %1399 = vmatprep.subr.bf16.mxu0 0
        %1400 = vmatpush1.bf16.msra.mxu0 0
        %1401 = vmatprep.subr.bf16.mxu0 0
        %1402 = vmatpush1.bf16.msra.mxu0 0
        %1403 = vmatprep.subr.bf16.mxu0 0
        %1404 = vmatpush1.bf16.msra.mxu0 0
        %1405 = vmatprep.subr.bf16.mxu0 0
        %1406 = vmatpush1.bf16.msra.mxu0 0
        %1407 = vmatprep.subr.bf16.mxu0 0
        %1408 = vmatpush1.bf16.msra.mxu0 0
        %1409 = vmatprep.subr.bf16.mxu0 0
        %1410 = vmatpush1.bf16.msra.mxu0 0
        %1411 = vmatprep.subr.bf16.mxu0 0
        %1412 = vmatpush1.bf16.msra.mxu0 0
        %1413 = vmatprep.subr.bf16.mxu0 0
        %1414 = vmatpush1.bf16.msra.mxu0 0
        %1415 = vmatprep.subr.bf16.mxu0 0
        %1416 = vmatpush1.bf16.msra.mxu0 0
        %1417 = vmatprep.subr.bf16.mxu0 0
        %1418 = vmatpush1.bf16.msra.mxu0 0
        %1419 = vmatprep.subr.bf16.mxu0 0
        %1420 = vmatpush1.bf16.msra.mxu0 0
        %1421 = vmatprep.mubr.bf16.mxu0 0
        %1422 = vmatmul.mubr.bf16.gmra.mrb[0].mxu0 %v1378
        %v1423 = vpop.f32.mrb[0].mxu0
        %v1424 = vadd.f32 %v1369, %v1423
        %v1425 = vpop.f32.mrb[0].mxu0
        %v1426 = vpop.f32.mrb[0].mxu0
        %v1427 = vadd.f32 %v1369, %v1426
        %v1428 = vpop.f32.mrb[0].mxu0
        %1429 = vmatprep.mubr.bf16.mxu0 0
        %1430 = vmatmul.mubr.bf16.gmra.mrb[0].mxu0 %v1381
        %v1431 = vpop.f32.mrb[0].mxu0
        %v1432 = vadd.f32 %v1369, %v1431
        %v1433 = vpop.f32.mrb[0].mxu0
        %v1434 = vpop.f32.mrb[0].mxu0
        %v1435 = vadd.f32 %v1369, %v1434
        %v1436 = vpop.f32.mrb[0].mxu0
        %1437 = vmatprep.mubr.bf16.mxu0 0
        %1438 = vmatmul.mubr.bf16.gmra.mrb[0].mxu0 %v1384
        %v1439 = vpop.f32.mrb[0].mxu0
        %v1440 = vadd.f32 %v1369, %v1439
        %v1441 = vpop.f32.mrb[0].mxu0
        %v1442 = vpop.f32.mrb[0].mxu0
        %v1443 = vadd.f32 %v1369, %v1442
        %v1444 = vpop.f32.mrb[0].mxu0
        %1445 = vmatprep.mubr.bf16.mxu0 0
        %1446 = vmatmul.mubr.bf16.gmra.mrb[0].mxu0 %v1387
        %v1447 = vpop.f32.mrb[0].mxu0
        %v1448 = vadd.f32 %v1369, %v1447
        %v1449 = vpop.f32.mrb[0].mxu0
        %v1450 = vpop.f32.mrb[0].mxu0
        %v1451 = vadd.f32 %v1369, %v1450
        %v1452 = vpop.f32.mrb[0].mxu0
        %1453 = vdwg.mxu0
        %1454 = vst.msk [vmem:[%s469] sm:$0xff] %vm642, %v1424
        %1455 = vst.msk [vmem:[%s469 + $0x8] sm:$0xff] %vm642, %v1427
        %1456 = vst.msk [vmem:[%s469 + $0x10] sm:$0xff] %vm642, %v1432
        %1457 = vst.msk [vmem:[%s469 + $0x18] sm:$0xff] %vm642, %v1435
        %1458 = vst.msk [vmem:[%s469 + $0x20] sm:$0xff] %vm642, %v1440
        %1459 = vst.msk [vmem:[%s469 + $0x28] sm:$0xff] %vm642, %v1443
        %1460 = vst.msk [vmem:[%s469 + $0x30] sm:$0xff] %vm642, %v1448
        %1461 = vst.msk [vmem:[%s469 + $0x38] sm:$0xff] %vm642, %v1451
      $region72: #{dpc_forward.10} parent=63 // pred_fallthru
        _
      %s1462 = smul.u32 8, %s30
      %p1463 = scmp.lt.s32.totalorder %s29, 1
      %s1464 = scalar_select %p1463, %s29, 1
      %p1465 = scmp.lt.s32.totalorder %s1462, 7
      %s1466 = scalar_select %p1465, %s1462, 7
      %s1467 = smul.addr %s1464, 8
      %s1468 = sadd.s32 %s1466, %s1467
      %s1469 = smul.addr %s1468, 8
      %s1470 = scalar_lea.vmem %s11, %s1469
      // Predicated region
      $region73: #{dpc_forward.10} parent=63 // pred_check
        %p1471 = pneg %p308
      $region74: #{dpc_forward.10} parent=63 // pred_check_branch
        %1473 = sbr.rel (%p1471) target = $region76
      $region75: #{dpc_forward.10} parent=63 // pred_region
        %s1474 = smul.u32 8, %s30
      $region76: #{dpc_forward.10} parent=63 // pred_fallthru
        _
    $region64: #{dpc_forward.10} parent=5 // pred_fallthru
      _
    %p1475 = scmp.le.s32.totalorder 2, %s19
    // Predicated region
    $region77: #{dpc_forward.10} parent=5 // pred_check
      %p1476 = pneg %p1475
    $region78: #{dpc_forward.10} parent=5 // pred_check_branch
      %1478 = sbr.rel (%p1476) target = $region80
    $region79: #{dpc_forward.10} parent=5 // pred_region
      %s1479 = ssub.s32 %s19, 2
      // Predicated region
      $region81: #{dpc_forward.10} parent=79 // pred_check
        %p1480 = pneg %p314
      $region82: #{dpc_forward.10} parent=79 // pred_check_branch
        %1482 = sbr.rel (%p1480) target = $region84
      $region83: #{dpc_forward.10} parent=79 // pred_region
        %s1483 = smul.u32 8, %s33
        %p1484 = scmp.lt.s32.totalorder %s32, 1
        %s1485 = scalar_select %p1484, %s32, 1
        %p1486 = scmp.lt.s32.totalorder %s1483, 7
        %s1487 = scalar_select %p1486, %s1483, 7
        %s1488 = smul.addr %s1485, 8
        %s1489 = sadd.s32 %s1487, %s1488
        %s1490 = smul.addr %s1489, 8
        %s1491 = scalar_lea.vmem %s11, %s1490
      $region84: #{dpc_forward.10} parent=79 // pred_fallthru
        _
    $region80: #{dpc_forward.10} parent=5 // pred_fallthru
      _
  $region6: #{dpc_forward.10} parent=0 // loop_footer
    %s23 = sadd.s32 1, %s19
  $region7: #{dpc_forward.10} parent=0 // loop_footer_branch
    %18 = sbr.rel target = $region3
  $region8: #{dpc_forward.10} parent=0 // loop_exit
    _

// kernel: dpc_forward.11
$region0: #{dpc_forward.11}
  #allocation0 [shape = 'u32[]', space=smem, size = 0x4, offset = 0x4, fixed_abs, tag = 'smem constant byte address 0x4 - core index']
  #allocation1 [shape = 'u32[144,128]{1,0:T(1,128)}', space=vmem, size = 0x12000, scoped, tag = 'internal scratch']
  %s0 = inlined_call_operand.vmem [shape: bf16[2,10,10,112], index: 0, kind: input, shape index: {}]
  %s1 = inlined_call_operand.vmem [shape: bf16[9,112,16], index: 1, kind: input, shape index: {}]
  %s2 = inlined_call_operand.vmem [shape: f32[1,16], index: 2, kind: input, shape index: {}]
  %s3 = inlined_call_operand.vmem [shape: f32[1,16], index: 3, kind: input, shape index: {}]
  %s4 = inlined_call_operand.hbm [shape: f32[2,64,16], index: 4, kind: output, shape index: {}]
  %s5 = sld [smem:[#allocation0]]
  $region49: #{dpc_forward.11} parent=0
    _
  %s7 = ssub.s32 1, %s5
  %s8 = scalar_select 0, %s7, %s5
  $region1: #{dpc_forward.11} parent=0
    #allocation2 [shape = 'u8[65536]{0}', space=vmem, size = 0x10000, scoped, tag = 'output window, operand 0']
    #allocation3 [shape = 's32[2]{0}', space=sflag, size = 0x8, scoped, tag = 'scoped memory for dpc_forward.11']
    %9 = vsyncpa [#allocation3], 0
    %s10 = scalar_lea.sflag [#allocation3], 1
    %11 = vsyncpa %s10, 0
    loop: start=0, step=1, limit=4
    $region2: #{dpc_forward.11} parent=1 // loop_pre_header
      _
    $region3: #{dpc_forward.11} parent=1 // loop_header
      %s13 = sphi 0, %s17
      %p14 = scmp.ge.s32.totalorder %s13, 4
      %s23 = sphi 0, %s25
      %s26 = sphi 0, %s23
      %s27 = sphi 0, %s26
      %s43 = sphi 0, %s27
      %s47 = sphi 0, %s47
      %s49 = sphi 0, %s47
      %s50 = sphi 0, %s49
      %s64 = sphi 0, %s50
      %s68 = sphi 0, %s68
      %s70 = sphi 0, %s68
      %s71 = sphi 0, %s70
      %s85 = sphi 0, %s71
      %s89 = sphi 0, %s89
      %s91 = sphi 0, %s89
      %s92 = sphi 0, %s91
      %s106 = sphi 0, %s92
      %s112 = sphi 0, %s114
      %s115 = sphi 0, %s112
      %s116 = sphi 0, %s115
      %s132 = sphi 0, %s116
    $region4: #{dpc_forward.11} parent=1 // loop_header_branch
      %16 = sbr.rel (%p14) target = $region8
    $region5: #{dpc_forward.11} parent=1 // loop_body
      %s18 = ssub.s32 %s13, 1
      %s19 = ssub.s32 %s13, 2
      %s20 = sadd.s32 %s13, 1
      %s21 = ssub.s32 %s13, %s20
      %p22 = scmp.eq.s32.totalorder %s21, 0
      %s24 = sadd.s32 %s23, 1
      %s25 = scalar_select %p22, %s23, %s24
      %p28 = pneg %p22
      %p29 = scmp.eq.s32.totalorder %s13, 1
      %p30 = por %p28, %p29
      %p31 = scmp.ne.s32.totalorder %s23, %s26
      %p32 = scmp.eq.s32.totalorder %s13, 0
      %p33 = por %p31, %p32
      %p34 = scmp.ne.s32.totalorder %s23, %s26
      %p35 = scmp.eq.s32.totalorder %s18, 1
      %p36 = por %p34, %p35
      %p37 = scmp.ne.s32.totalorder %s26, %s27
      %p38 = scmp.eq.s32.totalorder %s18, 0
      %p39 = por %p37, %p38
      %p40 = scmp.ne.s32.totalorder %s26, %s27
      %p41 = scmp.eq.s32.totalorder %s19, 1
      %p42 = por %p40, %p41
      %p44 = scmp.ne.s32.totalorder %s27, %s43
      %p45 = scmp.eq.s32.totalorder %s19, 0
      %p46 = por %p44, %p45
      %s48 = sadd.s32 %s47, 1
      %p51 = scmp.eq.s32.totalorder %s13, 1
      %p52 = scmp.ne.s32.totalorder %s47, %s49
      %p53 = scmp.eq.s32.totalorder %s13, 0
      %p54 = por %p52, %p53
      %p55 = scmp.ne.s32.totalorder %s47, %s49
      %p56 = scmp.eq.s32.totalorder %s18, 1
      %p57 = por %p55, %p56
      %p58 = scmp.ne.s32.totalorder %s49, %s50
      %p59 = scmp.eq.s32.totalorder %s18, 0
      %p60 = por %p58, %p59
      %p61 = scmp.ne.s32.totalorder %s49, %s50
      %p62 = scmp.eq.s32.totalorder %s19, 1
      %p63 = por %p61, %p62
      %p65 = scmp.ne.s32.totalorder %s50, %s64
      %p66 = scmp.eq.s32.totalorder %s19, 0
      %p67 = por %p65, %p66
      %s69 = sadd.s32 %s68, 1
      %p72 = scmp.eq.s32.totalorder %s13, 1
      %p73 = scmp.ne.s32.totalorder %s68, %s70
      %p74 = scmp.eq.s32.totalorder %s13, 0
      %p75 = por %p73, %p74
      %p76 = scmp.ne.s32.totalorder %s68, %s70
      %p77 = scmp.eq.s32.totalorder %s18, 1
      %p78 = por %p76, %p77
      %p79 = scmp.ne.s32.totalorder %s70, %s71
      %p80 = scmp.eq.s32.totalorder %s18, 0
      %p81 = por %p79, %p80
      %p82 = scmp.ne.s32.totalorder %s70, %s71
      %p83 = scmp.eq.s32.totalorder %s19, 1
      %p84 = por %p82, %p83
      %p86 = scmp.ne.s32.totalorder %s71, %s85
      %p87 = scmp.eq.s32.totalorder %s19, 0
      %p88 = por %p86, %p87
      %s90 = sadd.s32 %s89, 1
      %p93 = scmp.eq.s32.totalorder %s13, 1
      %p94 = scmp.ne.s32.totalorder %s89, %s91
      %p95 = scmp.eq.s32.totalorder %s13, 0
      %p96 = por %p94, %p95
      %p97 = scmp.ne.s32.totalorder %s89, %s91
      %p98 = scmp.eq.s32.totalorder %s18, 1
      %p99 = por %p97, %p98
      %p100 = scmp.ne.s32.totalorder %s91, %s92
      %p101 = scmp.eq.s32.totalorder %s18, 0
      %p102 = por %p100, %p101
      %p103 = scmp.ne.s32.totalorder %s91, %s92
      %p104 = scmp.eq.s32.totalorder %s19, 1
      %p105 = por %p103, %p104
      %p107 = scmp.ne.s32.totalorder %s92, %s106
      %p108 = scmp.eq.s32.totalorder %s19, 0
      %p109 = por %p107, %p108
      %s110 = ssub.s32 %s13, %s20
      %p111 = scmp.eq.s32.totalorder %s110, 0
      %s113 = sadd.s32 %s112, 1
      %s114 = scalar_select %p111, %s112, %s113
      %p117 = pneg %p111
      %p118 = scmp.eq.s32.totalorder %s13, 1
      %p119 = por %p117, %p118
      %p120 = scmp.ne.s32.totalorder %s112, %s115
      %p121 = scmp.eq.s32.totalorder %s13, 0
      %p122 = por %p120, %p121
      %p123 = scmp.ne.s32.totalorder %s112, %s115
      %p124 = scmp.eq.s32.totalorder %s18, 1
      %p125 = por %p123, %p124
      %p126 = scmp.ne.s32.totalorder %s115, %s116
      %p127 = scmp.eq.s32.totalorder %s18, 0
      %p128 = por %p126, %p127
      %p129 = scmp.ne.s32.totalorder %s115, %s116
      %p130 = scmp.eq.s32.totalorder %s19, 1
      %p131 = por %p129, %p130
      %p133 = scmp.ne.s32.totalorder %s116, %s132
      %p134 = scmp.eq.s32.totalorder %s19, 0
      %p135 = por %p133, %p134
      %p136 = scmp.le.s32.totalorder 1, %s13
      %p137 = scmp.lt.s32.totalorder %s13, 3
      %p138 = pnand %p136, %p137
      %p139 = pneg %p138
      // Predicated region
      $region9: #{dpc_forward.11} parent=5 // pred_check
        _
      $region10: #{dpc_forward.11} parent=5 // pred_check_branch
        %141 = sbr.rel (%p138) target = $region12
      $region11: #{dpc_forward.11} parent=5 // pred_region
        %s142 = ssub.s32 %s13, 1
        // Predicated region
        $region13: #{dpc_forward.11} parent=11 // pred_check
          %p143 = pneg %p60
        $region14: #{dpc_forward.11} parent=11 // pred_check_branch
          %145 = sbr.rel (%p143) target = $region16
        $region15: #{dpc_forward.11} parent=11 // pred_region
          _
        $region16: #{dpc_forward.11} parent=11 // pred_fallthru
          _
        // Predicated region
        $region17: #{dpc_forward.11} parent=11 // pred_check
          %p146 = pneg %p81
        $region18: #{dpc_forward.11} parent=11 // pred_check_branch
          %148 = sbr.rel (%p146) target = $region20
        $region19: #{dpc_forward.11} parent=11 // pred_region
          _
        $region20: #{dpc_forward.11} parent=11 // pred_fallthru
          _
        // Predicated region
        $region21: #{dpc_forward.11} parent=11 // pred_check
          %p149 = pneg %p102
        $region22: #{dpc_forward.11} parent=11 // pred_check_branch
          %151 = sbr.rel (%p149) target = $region24
        $region23: #{dpc_forward.11} parent=11 // pred_region
          _
        $region24: #{dpc_forward.11} parent=11 // pred_fallthru
          _
      $region12: #{dpc_forward.11} parent=5 // pred_fallthru
        _
      %p152 = scmp.lt.s32.totalorder %s13, 2
      // Predicated region
      $region25: #{dpc_forward.11} parent=5 // pred_check
        %p153 = pneg %p152
      $region26: #{dpc_forward.11} parent=5 // pred_check_branch
        %155 = sbr.rel (%p153) target = $region28
      $region27: #{dpc_forward.11} parent=5 // pred_region
        // Predicated region
        $region29: #{dpc_forward.11} parent=27 // pred_check
          %p156 = pneg %p33
        $region30: #{dpc_forward.11} parent=27 // pred_check_branch
          %158 = sbr.rel (%p156) target = $region32
        $region31: #{dpc_forward.11} parent=27 // pred_region
          %p159 = scmp.lt.s32.totalorder %s13, 1
          %s160 = scalar_select %p159, %s13, 1
          %s161 = smul.addr %s160, 20
          %s162 = smul.addr %s161, 4
          %s163 = scalar_lea.vmem %s0, %s162
        $region32: #{dpc_forward.11} parent=27 // pred_fallthru
          _
      $region28: #{dpc_forward.11} parent=5 // pred_fallthru
        _
      %p164 = scmp.le.s32.totalorder 1, %s13
      %p165 = scmp.lt.s32.totalorder %s13, 3
      %p166 = pnand %p164, %p165
      %p167 = pneg %p166
      // Predicated region
      $region33: #{dpc_forward.11} parent=5 // pred_check
        _
      $region34: #{dpc_forward.11} parent=5 // pred_check_branch
        %169 = sbr.rel (%p166) target = $region36
      $region35: #{dpc_forward.11} parent=5 // pred_region
        %s170 = ssub.s32 %s13, 1
        %p171 = scmp.lt.s32.totalorder %s18, 1
        %s172 = scalar_select %p171, %s18, 1
        %s173 = smul.addr %s172, 20
        %s174 = smul.addr %s173, 4
        %s175 = scalar_lea.vmem %s0, %s174
        %p176 = pneg %p39
        %p177 = pneg %p36
        %p178 = pneg %p60
        %p179 = pneg %p57
        %p180 = pneg %p81
        %p181 = pneg %p78
        %p182 = pneg %p102
        %p183 = pneg %p99
        %p184 = pneg %p128
        %p185 = pneg %p125
        %s186 = sand.u32 %s115, 1
        %s187 = scalar_lea.sflag [#allocation3], %s186
        %s188 = sand.u32 %s115, 1
        %s189 = smul.addr %s188, 64
        %s190 = scalar_lea.vmem [#allocation2], %s189
        %p191 = scmp.lt.s32.totalorder %s18, 1
        %s192 = scalar_select %p191, %s18, 1
        %s193 = smul.addr %s192, 20
        %s194 = smul.addr %s193, 4
        %s195 = scalar_lea.vmem %s0, %s194
        %v197 = vld [vmem:[%s195] sm:$0xf]
        %v198 = vld [vmem:[%s195 + $0x4] sm:$0x1]
        %v199 = vld [vmem:[%s195 + $0x8] sm:$0xf]
        %v200 = vld [vmem:[%s195 + $0xc] sm:$0x1]
        %v201 = vld [vmem:[%s195 + $0x10] sm:$0xf]
        %v202 = vld [vmem:[%s195 + $0x14] sm:$0x1]
        %v203 = vld [vmem:[%s195 + $0x18] sm:$0xf]
        %v204 = vld [vmem:[%s195 + $0x1c] sm:$0x1]
        %v205 = vld [vmem:[%s195 + $0x20] sm:$0xf]
        %v206 = vld [vmem:[%s195 + $0x24] sm:$0x1]
        %v207 = vld [vmem:[%s195 + $0x28] sm:$0xf]
        %v208 = vld [vmem:[%s195 + $0x2c] sm:$0x1]
        %v209 = vld [vmem:[%s195 + $0x30] sm:$0xf]
        %v210 = vld [vmem:[%s195 + $0x34] sm:$0x1]
        %v211 = vld [vmem:[%s195 + $0x38] sm:$0xf]
        %v212 = vld [vmem:[%s195 + $0x3c] sm:$0x1]
        %v213 = vld [vmem:[%s195 + $0x40] sm:$0xf]
        %v214 = vld [vmem:[%s195 + $0x44] sm:$0x1]
        %v215 = vld [vmem:[%s195 + $0x48] sm:$0xf]
        %v216 = vld [vmem:[%s195 + $0x4c] sm:$0x1]
        %v217 = vld [vmem:[%s1] sm:$0xf]
        %v218 = vld [vmem:[%s1 + $0x4] sm:$0xf]
        %v219 = vld [vmem:[%s1 + $0x8] sm:$0xf]
        %v220 = vld [vmem:[%s1 + $0xc] sm:$0xf]
        %v221 = vld [vmem:[%s1 + $0x10] sm:$0xf]
        %v222 = vld [vmem:[%s1 + $0x14] sm:$0xf]
        %v223 = vld [vmem:[%s1 + $0x18] sm:$0xf]
        %v224 = vld [vmem:[%s1 + $0x1c] sm:$0xf]
        %v225 = vld [vmem:[%s1 + $0x20] sm:$0xf]
        %v226 = vld [vmem:[%s1 + $0x24] sm:$0xf]
        %v227 = vld [vmem:[%s1 + $0x28] sm:$0xf]
        %v228 = vld [vmem:[%s1 + $0x2c] sm:$0xf]
        %v229 = vld [vmem:[%s1 + $0x30] sm:$0xf]
        %v230 = vld [vmem:[%s1 + $0x34] sm:$0xf]
        %vm231 = vsmask.f32 3328
        %vm232 = vsmask.f32 7440
        %vm233 = vmor %vm231, %vm232
        %v235 = vshrl.u32 %v197, 16
        %v237 = vrot.slane %v235, 4
        %v238 = vshll.u32 %v197, 16
        %v240 = vrot.slane %v238, 5
        %v241 = vor.u32 %v237, %v240
        %v242 = vrot.slane %v241, 4
        %v244 = vshll.u32 %v198, 16
        %v246 = vrot.slane %v244, 5
        %v247 = vsel %vm233, %v242, %v246
        %v249 = vshrl.u32 %v199, 16
        %v251 = vrot.slane %v249, 4
        %v252 = vshll.u32 %v199, 16
        %v254 = vrot.slane %v252, 5
        %v255 = vor.u32 %v251, %v254
        %v256 = vrot.slane %v255, 4
        %v258 = vshll.u32 %v200, 16
        %v260 = vrot.slane %v258, 5
        %v261 = vsel %vm233, %v256, %v260
        %v263 = vshrl.u32 %v201, 16
        %v265 = vrot.slane %v263, 4
        %v266 = vshll.u32 %v201, 16
        %v268 = vrot.slane %v266, 5
        %v269 = vor.u32 %v265, %v268
        %v270 = vrot.slane %v269, 4
        %v272 = vshll.u32 %v202, 16
        %v274 = vrot.slane %v272, 5
        %v275 = vsel %vm233, %v270, %v274
        %v277 = vshrl.u32 %v203, 16
        %v279 = vrot.slane %v277, 4
        %v280 = vshll.u32 %v203, 16
        %v282 = vrot.slane %v280, 5
        %v283 = vor.u32 %v279, %v282
        %v284 = vrot.slane %v283, 4
        %v286 = vshll.u32 %v204, 16
        %v288 = vrot.slane %v286, 5
        %v289 = vsel %vm233, %v284, %v288
        %v291 = vshrl.u32 %v205, 16
        %v293 = vrot.slane %v291, 4
        %v294 = vshll.u32 %v205, 16
        %v296 = vrot.slane %v294, 5
        %v297 = vor.u32 %v293, %v296
        %v298 = vrot.slane %v297, 4
        %v300 = vshll.u32 %v206, 16
        %v302 = vrot.slane %v300, 5
        %v303 = vsel %vm233, %v298, %v302
        %v305 = vshrl.u32 %v207, 16
        %v307 = vrot.slane %v305, 4
        %v308 = vshll.u32 %v207, 16
        %v310 = vrot.slane %v308, 5
        %v311 = vor.u32 %v307, %v310
        %v312 = vrot.slane %v311, 4
        %v314 = vshll.u32 %v208, 16
        %v316 = vrot.slane %v314, 5
        %v317 = vsel %vm233, %v312, %v316
        %v319 = vshrl.u32 %v209, 16
        %v321 = vrot.slane %v319, 4
        %v322 = vshll.u32 %v209, 16
        %v324 = vrot.slane %v322, 5
        %v325 = vor.u32 %v321, %v324
        %v326 = vrot.slane %v325, 4
        %v328 = vshll.u32 %v210, 16
        %v330 = vrot.slane %v328, 5
        %v331 = vsel %vm233, %v326, %v330
        %v333 = vshrl.u32 %v211, 16
        %v335 = vrot.slane %v333, 4
        %v336 = vshll.u32 %v211, 16
        %v338 = vrot.slane %v336, 5
        %v339 = vor.u32 %v335, %v338
        %v340 = vrot.slane %v339, 4
        %v342 = vshll.u32 %v212, 16
        %v344 = vrot.slane %v342, 5
        %v345 = vsel %vm233, %v340, %v344
        %s346 = scalar_lea.vmem %s1, 56
        %v347 = vld [vmem:[%s346] sm:$0xf]
        %v348 = vld [vmem:[%s346 + $0x4] sm:$0xf]
        %v349 = vld [vmem:[%s346 + $0x8] sm:$0xf]
        %v350 = vld [vmem:[%s346 + $0xc] sm:$0xf]
        %v351 = vld [vmem:[%s346 + $0x10] sm:$0xf]
        %v352 = vld [vmem:[%s346 + $0x14] sm:$0xf]
        %v353 = vld [vmem:[%s346 + $0x18] sm:$0xf]
        %v354 = vld [vmem:[%s346 + $0x1c] sm:$0xf]
        %v355 = vld [vmem:[%s346 + $0x20] sm:$0xf]
        %v356 = vld [vmem:[%s346 + $0x24] sm:$0xf]
        %v357 = vld [vmem:[%s346 + $0x28] sm:$0xf]
        %v358 = vld [vmem:[%s346 + $0x2c] sm:$0xf]
        %v359 = vld [vmem:[%s346 + $0x30] sm:$0xf]
        %v360 = vld [vmem:[%s346 + $0x34] sm:$0xf]
        %v361 = vunpack.c.l.b16 %v247
        %v362 = vunpack.c.l.b16 %v261
        %v363 = vunpack.c.l.b16 %v275
        %v364 = vunpack.c.l.b16 %v289
        %v365 = vunpack.c.l.b16 %v303
        %v366 = vunpack.c.l.b16 %v317
        %v367 = vunpack.c.l.b16 %v331
        %v368 = vunpack.c.l.b16 %v345
        %v369 = vpack.c.b16 %v362, %v361
        %v370 = vpack.c.b16 %v364, %v363
        %v371 = vpack.c.b16 %v366, %v365
        %v372 = vpack.c.b16 %v368, %v367
        %v387 = vunpack.c.l.b16 %v347
        %v388 = vunpack.c.l.b16 %v348
        %v389 = vunpack.c.l.b16 %v349
        %v390 = vunpack.c.l.b16 %v350
        %v391 = vunpack.c.l.b16 %v351
        %v392 = vunpack.c.l.b16 %v352
        %v393 = vunpack.c.l.b16 %v353
        %v394 = vunpack.c.l.b16 %v354
        %v395 = vunpack.c.l.b16 %v355
        %v396 = vunpack.c.l.b16 %v356
        %v397 = vunpack.c.l.b16 %v357
        %v398 = vunpack.c.l.b16 %v358
        %v399 = vunpack.c.l.b16 %v359
        %v400 = vunpack.c.l.b16 %v360
        %v401 = vpack.c.b16 %v388, %v387
        %v402 = vpack.c.b16 %v390, %v389
        %v403 = vpack.c.b16 %v392, %v391
        %v404 = vpack.c.b16 %v394, %v393
        %v405 = vpack.c.b16 %v396, %v395
        %v406 = vpack.c.b16 %v398, %v397
        %v407 = vpack.c.b16 %v400, %v399
        %vm415 = vcmask 916480
        %v417 = vsel %vm415, %v369, 0
        %v420 = vsel %vm415, %v370, 0
        %v423 = vsel %vm415, %v371, 0
        %v426 = vsel %vm415, %v372, 0
        %428 = vmatprep.subr.bf16.mxu0 0
        %429 = vmatpush1.bf16.msra.mxu0 %v401
        %430 = vmatprep.subr.bf16.mxu0 0
        %431 = vmatpush1.bf16.msra.mxu0 %v402
        %432 = vmatprep.subr.bf16.mxu0 0
        %433 = vmatpush1.bf16.msra.mxu0 %v403
        %434 = vmatprep.subr.bf16.mxu0 0
        %435 = vmatpush1.bf16.msra.mxu0 %v404
        %436 = vmatprep.subr.bf16.mxu0 0
        %437 = vmatpush1.bf16.msra.mxu0 %v405
        %438 = vmatprep.subr.bf16.mxu0 0
        %439 = vmatpush1.bf16.msra.mxu0 %v406
        %440 = vmatprep.subr.bf16.mxu0 0
        %441 = vmatpush1.bf16.msra.mxu0 %v407
        %442 = vmatprep.subr.bf16.mxu0 0
        %443 = vmatpush1.bf16.msra.mxu0 0
        %444 = vmatprep.subr.bf16.mxu0 0
        %445 = vmatpush1.bf16.msra.mxu0 0
        %446 = vmatprep.subr.bf16.mxu0 0
        %447 = vmatpush1.bf16.msra.mxu0 0
        %448 = vmatprep.subr.bf16.mxu0 0
        %449 = vmatpush1.bf16.msra.mxu0 0
        %450 = vmatprep.subr.bf16.mxu0 0
        %451 = vmatpush1.bf16.msra.mxu0 0
        %452 = vmatprep.subr.bf16.mxu0 0
        %453 = vmatpush1.bf16.msra.mxu0 0
        %454 = vmatprep.subr.bf16.mxu0 0
        %455 = vmatpush1.bf16.msra.mxu0 0
        %456 = vmatprep.subr.bf16.mxu0 0
        %457 = vmatpush1.bf16.msra.mxu0 0
        %458 = vmatprep.subr.bf16.mxu0 0
        %459 = vmatpush1.bf16.msra.mxu0 0
        %460 = vmatprep.mubr.bf16.mxu0 0
        %461 = vmatmul.mubr.bf16.gmra.mrb[0].mxu0 %v417
        %v462 = vpop.f32.mrb[0].mxu0
        %v463 = vadd.f32 0.0, %v462
        %v464 = vpop.f32.mrb[0].mxu0
        %v465 = vpop.f32.mrb[0].mxu0
        %v466 = vadd.f32 0.0, %v465
        %v467 = vpop.f32.mrb[0].mxu0
        %468 = vmatprep.mubr.bf16.mxu0 0
        %469 = vmatmul.mubr.bf16.gmra.mrb[0].mxu0 %v420
        %v470 = vpop.f32.mrb[0].mxu0
        %v471 = vadd.f32 0.0, %v470
        %v472 = vpop.f32.mrb[0].mxu0
        %v473 = vpop.f32.mrb[0].mxu0
        %v474 = vadd.f32 0.0, %v473
        %v475 = vpop.f32.mrb[0].mxu0
        %476 = vmatprep.mubr.bf16.mxu0 0
        %477 = vmatmul.mubr.bf16.gmra.mrb[0].mxu0 %v423
        %v478 = vpop.f32.mrb[0].mxu0
        %v479 = vadd.f32 0.0, %v478
        %v480 = vpop.f32.mrb[0].mxu0
        %v481 = vpop.f32.mrb[0].mxu0
        %v482 = vadd.f32 0.0, %v481
        %v483 = vpop.f32.mrb[0].mxu0
        %484 = vmatprep.mubr.bf16.mxu0 0
        %485 = vmatmul.mubr.bf16.gmra.mrb[0].mxu0 %v426
        %v486 = vpop.f32.mrb[0].mxu0
        %v487 = vadd.f32 0.0, %v486
        %v488 = vpop.f32.mrb[0].mxu0
        %v489 = vpop.f32.mrb[0].mxu0
        %v490 = vadd.f32 0.0, %v489
        %v491 = vpop.f32.mrb[0].mxu0
        %492 = vdwg.mxu0
        %v501 = vunpack.c.l.b16 %v197
        %v502 = vunpack.c.l.b16 %v199
        %v503 = vunpack.c.l.b16 %v201
        %v504 = vunpack.c.l.b16 %v203
        %v505 = vunpack.c.l.b16 %v205
        %v506 = vunpack.c.l.b16 %v207
        %v507 = vunpack.c.l.b16 %v209
        %v508 = vunpack.c.l.b16 %v211
        %v509 = vpack.c.b16 %v502, %v501
        %v510 = vpack.c.b16 %v504, %v503
        %v511 = vpack.c.b16 %v506, %v505
        %v512 = vpack.c.b16 %v508, %v507
        %v527 = vunpack.c.l.b16 %v217
        %v528 = vunpack.c.l.b16 %v218
        %v529 = vunpack.c.l.b16 %v219
        %v530 = vunpack.c.l.b16 %v220
        %v531 = vunpack.c.l.b16 %v221
        %v532 = vunpack.c.l.b16 %v222
        %v533 = vunpack.c.l.b16 %v223
        %v534 = vunpack.c.l.b16 %v224
        %v535 = vunpack.c.l.b16 %v225
        %v536 = vunpack.c.l.b16 %v226
        %v537 = vunpack.c.l.b16 %v227
        %v538 = vunpack.c.l.b16 %v228
        %v539 = vunpack.c.l.b16 %v229
        %v540 = vunpack.c.l.b16 %v230
        %v541 = vpack.c.b16 %v528, %v527
        %v542 = vpack.c.b16 %v530, %v529
        %v543 = vpack.c.b16 %v532, %v531
        %v544 = vpack.c.b16 %v534, %v533
        %v545 = vpack.c.b16 %v536, %v535
        %v546 = vpack.c.b16 %v538, %v537
        %v547 = vpack.c.b16 %v540, %v539
        %v556 = vsel %vm415, %v509, 0
        %v559 = vsel %vm415, %v510, 0
        %v562 = vsel %vm415, %v511, 0
        %v565 = vsel %vm415, %v512, 0
        %567 = vmatprep.subr.bf16.mxu0 0
        %568 = vmatpush1.bf16.msra.mxu0 %v541
        %569 = vmatprep.subr.bf16.mxu0 0
        %570 = vmatpush1.bf16.msra.mxu0 %v542
        %571 = vmatprep.subr.bf16.mxu0 0
        %572 = vmatpush1.bf16.msra.mxu0 %v543
        %573 = vmatprep.subr.bf16.mxu0 0
        %574 = vmatpush1.bf16.msra.mxu0 %v544
        %575 = vmatprep.subr.bf16.mxu0 0
        %576 = vmatpush1.bf16.msra.mxu0 %v545
        %577 = vmatprep.subr.bf16.mxu0 0
        %578 = vmatpush1.bf16.msra.mxu0 %v546
        %579 = vmatprep.subr.bf16.mxu0 0
        %580 = vmatpush1.bf16.msra.mxu0 %v547
        %581 = vmatprep.subr.bf16.mxu0 0
        %582 = vmatpush1.bf16.msra.mxu0 0
        %583 = vmatprep.subr.bf16.mxu0 0
        %584 = vmatpush1.bf16.msra.mxu0 0
        %585 = vmatprep.subr.bf16.mxu0 0
        %586 = vmatpush1.bf16.msra.mxu0 0
        %587 = vmatprep.subr.bf16.mxu0 0
        %588 = vmatpush1.bf16.msra.mxu0 0
        %589 = vmatprep.subr.bf16.mxu0 0
        %590 = vmatpush1.bf16.msra.mxu0 0
        %591 = vmatprep.subr.bf16.mxu0 0
        %592 = vmatpush1.bf16.msra.mxu0 0
        %593 = vmatprep.subr.bf16.mxu0 0
        %594 = vmatpush1.bf16.msra.mxu0 0
        %595 = vmatprep.subr.bf16.mxu0 0
        %596 = vmatpush1.bf16.msra.mxu0 0
        %597 = vmatprep.subr.bf16.mxu0 0
        %598 = vmatpush1.bf16.msra.mxu0 0
        %599 = vmatprep.mubr.bf16.mxu0 0
        %600 = vmatmul.mubr.bf16.gmra.mrb[0].mxu0 %v556
        %v601 = vpop.f32.mrb[0].mxu0
        %v602 = vadd.f32 %v463, %v601
        %v603 = vpop.f32.mrb[0].mxu0
        %v604 = vpop.f32.mrb[0].mxu0
        %v605 = vadd.f32 %v466, %v604
        %v606 = vpop.f32.mrb[0].mxu0
        %607 = vmatprep.mubr.bf16.mxu0 0
        %608 = vmatmul.mubr.bf16.gmra.mrb[0].mxu0 %v559
        %v609 = vpop.f32.mrb[0].mxu0
        %v610 = vadd.f32 %v471, %v609
        %v611 = vpop.f32.mrb[0].mxu0
        %v612 = vpop.f32.mrb[0].mxu0
        %v613 = vadd.f32 %v474, %v612
        %v614 = vpop.f32.mrb[0].mxu0
        %615 = vmatprep.mubr.bf16.mxu0 0
        %616 = vmatmul.mubr.bf16.gmra.mrb[0].mxu0 %v562
        %v617 = vpop.f32.mrb[0].mxu0
        %v618 = vadd.f32 %v479, %v617
        %v619 = vpop.f32.mrb[0].mxu0
        %v620 = vpop.f32.mrb[0].mxu0
        %v621 = vadd.f32 %v482, %v620
        %v622 = vpop.f32.mrb[0].mxu0
        %623 = vmatprep.mubr.bf16.mxu0 0
        %624 = vmatmul.mubr.bf16.gmra.mrb[0].mxu0 %v565
        %v625 = vpop.f32.mrb[0].mxu0
        %v626 = vadd.f32 %v487, %v625
        %v627 = vpop.f32.mrb[0].mxu0
        %v628 = vpop.f32.mrb[0].mxu0
        %v629 = vadd.f32 %v490, %v628
        %v630 = vpop.f32.mrb[0].mxu0
        %631 = vdwg.mxu0
        %vm640 = vcmask 1042432
        %vm641 = vcmask 1046532
        %vm642 = vmor %vm640, %vm641
        %v643 = vrot.slane %v197, 5
        %v644 = vrot.slane %v643, 4
        %v645 = vrot.slane %v198, 5
        %v646 = vsel %vm642, %v644, %v645
        %v647 = vrot.slane %v199, 5
        %v648 = vrot.slane %v647, 4
        %v649 = vrot.slane %v200, 5
        %v650 = vsel %vm642, %v648, %v649
        %v651 = vrot.slane %v201, 5
        %v652 = vrot.slane %v651, 4
        %v653 = vrot.slane %v202, 5
        %v654 = vsel %vm642, %v652, %v653
        %v655 = vrot.slane %v203, 5
        %v656 = vrot.slane %v655, 4
        %v657 = vrot.slane %v204, 5
        %v658 = vsel %vm642, %v656, %v657
        %v659 = vrot.slane %v205, 5
        %v660 = vrot.slane %v659, 4
        %v661 = vrot.slane %v206, 5
        %v662 = vsel %vm642, %v660, %v661
        %v663 = vrot.slane %v207, 5
        %v664 = vrot.slane %v663, 4
        %v665 = vrot.slane %v208, 5
        %v666 = vsel %vm642, %v664, %v665
        %v667 = vrot.slane %v209, 5
        %v668 = vrot.slane %v667, 4
        %v669 = vrot.slane %v210, 5
        %v670 = vsel %vm642, %v668, %v669
        %v671 = vrot.slane %v211, 5
        %v672 = vrot.slane %v671, 4
        %v673 = vrot.slane %v212, 5
        %v674 = vsel %vm642, %v672, %v673
        %s675 = scalar_lea.vmem %s1, 112
        %v676 = vld [vmem:[%s675] sm:$0xf]
        %v677 = vld [vmem:[%s675 + $0x4] sm:$0xf]
        %v678 = vld [vmem:[%s675 + $0x8] sm:$0xf]
        %v679 = vld [vmem:[%s675 + $0xc] sm:$0xf]
        %v680 = vld [vmem:[%s675 + $0x10] sm:$0xf]
        %v681 = vld [vmem:[%s675 + $0x14] sm:$0xf]
        %v682 = vld [vmem:[%s675 + $0x18] sm:$0xf]
        %v683 = vld [vmem:[%s675 + $0x1c] sm:$0xf]
        %v684 = vld [vmem:[%s675 + $0x20] sm:$0xf]
        %v685 = vld [vmem:[%s675 + $0x24] sm:$0xf]
        %v686 = vld [vmem:[%s675 + $0x28] sm:$0xf]
        %v687 = vld [vmem:[%s675 + $0x2c] sm:$0xf]
        %v688 = vld [vmem:[%s675 + $0x30] sm:$0xf]
        %v689 = vld [vmem:[%s675 + $0x34] sm:$0xf]
        %v690 = vunpack.c.l.b16 %v646
        %v691 = vunpack.c.l.b16 %v650
        %v692 = vunpack.c.l.b16 %v654
        %v693 = vunpack.c.l.b16 %v658
        %v694 = vunpack.c.l.b16 %v662
        %v695 = vunpack.c.l.b16 %v666
        %v696 = vunpack.c.l.b16 %v670
        %v697 = vunpack.c.l.b16 %v674
        %v698 = vpack.c.b16 %v691, %v690
        %v699 = vpack.c.b16 %v693, %v692
        %v700 = vpack.c.b16 %v695, %v694
        %v701 = vpack.c.b16 %v697, %v696
        %v716 = vunpack.c.l.b16 %v676
        %v717 = vunpack.c.l.b16 %v677
        %v718 = vunpack.c.l.b16 %v678
        %v719 = vunpack.c.l.b16 %v679
        %v720 = vunpack.c.l.b16 %v680
        %v721 = vunpack.c.l.b16 %v681
        %v722 = vunpack.c.l.b16 %v682
        %v723 = vunpack.c.l.b16 %v683
        %v724 = vunpack.c.l.b16 %v684
        %v725 = vunpack.c.l.b16 %v685
        %v726 = vunpack.c.l.b16 %v686
        %v727 = vunpack.c.l.b16 %v687
        %v728 = vunpack.c.l.b16 %v688
        %v729 = vunpack.c.l.b16 %v689
        %v730 = vpack.c.b16 %v717, %v716
        %v731 = vpack.c.b16 %v719, %v718
        %v732 = vpack.c.b16 %v721, %v720
        %v733 = vpack.c.b16 %v723, %v722
        %v734 = vpack.c.b16 %v725, %v724
        %v735 = vpack.c.b16 %v727, %v726
        %v736 = vpack.c.b16 %v729, %v728
        %v745 = vsel %vm415, %v698, 0
        %v748 = vsel %vm415, %v699, 0
        %v751 = vsel %vm415, %v700, 0
        %v754 = vsel %vm415, %v701, 0
        %756 = vmatprep.subr.bf16.mxu0 0
        %757 = vmatpush1.bf16.msra.mxu0 %v730
        %758 = vmatprep.subr.bf16.mxu0 0
        %759 = vmatpush1.bf16.msra.mxu0 %v731
        %760 = vmatprep.subr.bf16.mxu0 0
        %761 = vmatpush1.bf16.msra.mxu0 %v732
        %762 = vmatprep.subr.bf16.mxu0 0
        %763 = vmatpush1.bf16.msra.mxu0 %v733
        %764 = vmatprep.subr.bf16.mxu0 0
        %765 = vmatpush1.bf16.msra.mxu0 %v734
        %766 = vmatprep.subr.bf16.mxu0 0
        %767 = vmatpush1.bf16.msra.mxu0 %v735
        %768 = vmatprep.subr.bf16.mxu0 0
        %769 = vmatpush1.bf16.msra.mxu0 %v736
        %770 = vmatprep.subr.bf16.mxu0 0
        %771 = vmatpush1.bf16.msra.mxu0 0
        %772 = vmatprep.subr.bf16.mxu0 0
        %773 = vmatpush1.bf16.msra.mxu0 0
        %774 = vmatprep.subr.bf16.mxu0 0
        %775 = vmatpush1.bf16.msra.mxu0 0
        %776 = vmatprep.subr.bf16.mxu0 0
        %777 = vmatpush1.bf16.msra.mxu0 0
        %778 = vmatprep.subr.bf16.mxu0 0
        %779 = vmatpush1.bf16.msra.mxu0 0
        %780 = vmatprep.subr.bf16.mxu0 0
        %781 = vmatpush1.bf16.msra.mxu0 0
        %782 = vmatprep.subr.bf16.mxu0 0
        %783 = vmatpush1.bf16.msra.mxu0 0
        %784 = vmatprep.subr.bf16.mxu0 0
        %785 = vmatpush1.bf16.msra.mxu0 0
        %786 = vmatprep.subr.bf16.mxu0 0
        %787 = vmatpush1.bf16.msra.mxu0 0
        %788 = vmatprep.mubr.bf16.mxu0 0
        %789 = vmatmul.mubr.bf16.gmra.mrb[0].mxu0 %v745
        %v790 = vpop.f32.mrb[0].mxu0
        %v791 = vadd.f32 0.0, %v790
        %v792 = vpop.f32.mrb[0].mxu0
        %v793 = vpop.f32.mrb[0].mxu0
        %v794 = vadd.f32 0.0, %v793
        %v795 = vpop.f32.mrb[0].mxu0
        %796 = vmatprep.mubr.bf16.mxu0 0
        %797 = vmatmul.mubr.bf16.gmra.mrb[0].mxu0 %v748
        %v798 = vpop.f32.mrb[0].mxu0
        %v799 = vadd.f32 0.0, %v798
        %v800 = vpop.f32.mrb[0].mxu0
        %v801 = vpop.f32.mrb[0].mxu0
        %v802 = vadd.f32 0.0, %v801
        %v803 = vpop.f32.mrb[0].mxu0
        %804 = vmatprep.mubr.bf16.mxu0 0
        %805 = vmatmul.mubr.bf16.gmra.mrb[0].mxu0 %v751
        %v806 = vpop.f32.mrb[0].mxu0
        %v807 = vadd.f32 0.0, %v806
        %v808 = vpop.f32.mrb[0].mxu0
        %v809 = vpop.f32.mrb[0].mxu0
        %v810 = vadd.f32 0.0, %v809
        %v811 = vpop.f32.mrb[0].mxu0
        %812 = vmatprep.mubr.bf16.mxu0 0
        %813 = vmatmul.mubr.bf16.gmra.mrb[0].mxu0 %v754
        %v814 = vpop.f32.mrb[0].mxu0
        %v815 = vadd.f32 0.0, %v814
        %v816 = vpop.f32.mrb[0].mxu0
        %v817 = vpop.f32.mrb[0].mxu0
        %v818 = vadd.f32 0.0, %v817
        %v819 = vpop.f32.mrb[0].mxu0
        %820 = vdwg.mxu0
        %v821 = vadd.f32 %v602, %v791
        %v822 = vadd.f32 %v605, %v794
        %v823 = vadd.f32 %v610, %v799
        %v824 = vadd.f32 %v613, %v802
        %v825 = vadd.f32 %v618, %v807
        %v826 = vadd.f32 %v621, %v810
        %v827 = vadd.f32 %v626, %v815
        %v828 = vadd.f32 %v629, %v818
        %s829 = scalar_lea.vmem %s1, 168
        %v830 = vld [vmem:[%s829] sm:$0xf]
        %v831 = vld [vmem:[%s829 + $0x4] sm:$0xf]
        %v832 = vld [vmem:[%s829 + $0x8] sm:$0xf]
        %v833 = vld [vmem:[%s829 + $0xc] sm:$0xf]
        %v834 = vld [vmem:[%s829 + $0x10] sm:$0xf]
        %v835 = vld [vmem:[%s829 + $0x14] sm:$0xf]
        %v836 = vld [vmem:[%s829 + $0x18] sm:$0xf]
        %v837 = vld [vmem:[%s829 + $0x1c] sm:$0xf]
        %v838 = vld [vmem:[%s829 + $0x20] sm:$0xf]
        %v839 = vld [vmem:[%s829 + $0x24] sm:$0xf]
        %v840 = vld [vmem:[%s829 + $0x28] sm:$0xf]
        %v841 = vld [vmem:[%s829 + $0x2c] sm:$0xf]
        %v842 = vld [vmem:[%s829 + $0x30] sm:$0xf]
        %v843 = vld [vmem:[%s829 + $0x34] sm:$0xf]
        %v845 = vunpack.c.l.b16 %v213
        %v846 = vpack.c.b16 %v503, %v502
        %v847 = vpack.c.b16 %v505, %v504
        %v848 = vpack.c.b16 %v507, %v506
        %v849 = vpack.c.b16 %v845, %v508
        %v864 = vunpack.c.l.b16 %v830
        %v865 = vunpack.c.l.b16 %v831
        %v866 = vunpack.c.l.b16 %v832
        %v867 = vunpack.c.l.b16 %v833
        %v868 = vunpack.c.l.b16 %v834
        %v869 = vunpack.c.l.b16 %v835
        %v870 = vunpack.c.l.b16 %v836
        %v871 = vunpack.c.l.b16 %v837
        %v872 = vunpack.c.l.b16 %v838
        %v873 = vunpack.c.l.b16 %v839
        %v874 = vunpack.c.l.b16 %v840
        %v875 = vunpack.c.l.b16 %v841
        %v876 = vunpack.c.l.b16 %v842
        %v877 = vunpack.c.l.b16 %v843
        %v878 = vpack.c.b16 %v865, %v864
        %v879 = vpack.c.b16 %v867, %v866
        %v880 = vpack.c.b16 %v869, %v868
        %v881 = vpack.c.b16 %v871, %v870
        %v882 = vpack.c.b16 %v873, %v872
        %v883 = vpack.c.b16 %v875, %v874
        %v884 = vpack.c.b16 %v877, %v876
        %v893 = vsel %vm415, %v846, 0
        %v896 = vsel %vm415, %v847, 0
        %v899 = vsel %vm415, %v848, 0
        %v902 = vsel %vm415, %v849, 0
        %904 = vmatprep.subr.bf16.mxu0 0
        %905 = vmatpush1.bf16.msra.mxu0 %v878
        %906 = vmatprep.subr.bf16.mxu0 0
        %907 = vmatpush1.bf16.msra.mxu0 %v879
        %908 = vmatprep.subr.bf16.mxu0 0
        %909 = vmatpush1.bf16.msra.mxu0 %v880
        %910 = vmatprep.subr.bf16.mxu0 0
        %911 = vmatpush1.bf16.msra.mxu0 %v881
        %912 = vmatprep.subr.bf16.mxu0 0
        %913 = vmatpush1.bf16.msra.mxu0 %v882
        %914 = vmatprep.subr.bf16.mxu0 0
        %915 = vmatpush1.bf16.msra.mxu0 %v883
        %916 = vmatprep.subr.bf16.mxu0 0
        %917 = vmatpush1.bf16.msra.mxu0 %v884
        %918 = vmatprep.subr.bf16.mxu0 0
        %919 = vmatpush1.bf16.msra.mxu0 0
        %920 = vmatprep.subr.bf16.mxu0 0
        %921 = vmatpush1.bf16.msra.mxu0 0
        %922 = vmatprep.subr.bf16.mxu0 0
        %923 = vmatpush1.bf16.msra.mxu0 0
        %924 = vmatprep.subr.bf16.mxu0 0
        %925 = vmatpush1.bf16.msra.mxu0 0
        %926 = vmatprep.subr.bf16.mxu0 0
        %927 = vmatpush1.bf16.msra.mxu0 0
        %928 = vmatprep.subr.bf16.mxu0 0
        %929 = vmatpush1.bf16.msra.mxu0 0
        %930 = vmatprep.subr.bf16.mxu0 0
        %931 = vmatpush1.bf16.msra.mxu0 0
        %932 = vmatprep.subr.bf16.mxu0 0
        %933 = vmatpush1.bf16.msra.mxu0 0
        %934 = vmatprep.subr.bf16.mxu0 0
        %935 = vmatpush1.bf16.msra.mxu0 0
        %936 = vmatprep.mubr.bf16.mxu0 0
        %937 = vmatmul.mubr.bf16.gmra.mrb[0].mxu0 %v893
        %v938 = vpop.f32.mrb[0].mxu0
        %v939 = vadd.f32 0.0, %v938
        %v940 = vpop.f32.mrb[0].mxu0
        %v941 = vpop.f32.mrb[0].mxu0
        %v942 = vadd.f32 0.0, %v941
        %v943 = vpop.f32.mrb[0].mxu0
        %944 = vmatprep.mubr.bf16.mxu0 0
        %945 = vmatmul.mubr.bf16.gmra.mrb[0].mxu0 %v896
        %v946 = vpop.f32.mrb[0].mxu0
        %v947 = vadd.f32 0.0, %v946
        %v948 = vpop.f32.mrb[0].mxu0
        %v949 = vpop.f32.mrb[0].mxu0
        %v950 = vadd.f32 0.0, %v949
        %v951 = vpop.f32.mrb[0].mxu0
        %952 = vmatprep.mubr.bf16.mxu0 0
        %953 = vmatmul.mubr.bf16.gmra.mrb[0].mxu0 %v899
        %v954 = vpop.f32.mrb[0].mxu0
        %v955 = vadd.f32 0.0, %v954
        %v956 = vpop.f32.mrb[0].mxu0
        %v957 = vpop.f32.mrb[0].mxu0
        %v958 = vadd.f32 0.0, %v957
        %v959 = vpop.f32.mrb[0].mxu0
        %960 = vmatprep.mubr.bf16.mxu0 0
        %961 = vmatmul.mubr.bf16.gmra.mrb[0].mxu0 %v902
        %v962 = vpop.f32.mrb[0].mxu0
        %v963 = vadd.f32 0.0, %v962
        %v964 = vpop.f32.mrb[0].mxu0
        %v965 = vpop.f32.mrb[0].mxu0
        %v966 = vadd.f32 0.0, %v965
        %v967 = vpop.f32.mrb[0].mxu0
        %968 = vdwg.mxu0
        %v969 = vadd.f32 %v821, %v939
        %v970 = vadd.f32 %v822, %v942
        %v971 = vadd.f32 %v823, %v947
        %v972 = vadd.f32 %v824, %v950
        %v973 = vadd.f32 %v825, %v955
        %v974 = vadd.f32 %v826, %v958
        %v975 = vadd.f32 %v827, %v963
        %v976 = vadd.f32 %v828, %v966
        %v978 = vshrl.u32 %v213, 16
        %v980 = vrot.slane %v978, 4
        %v981 = vshll.u32 %v213, 16
        %v983 = vrot.slane %v981, 5
        %v984 = vor.u32 %v980, %v983
        %v985 = vrot.slane %v984, 4
        %v987 = vshll.u32 %v214, 16
        %v989 = vrot.slane %v987, 5
        %v990 = vsel %vm233, %v985, %v989
        %s991 = scalar_lea.vmem %s1, 224
        %v992 = vld [vmem:[%s991] sm:$0xf]
        %v993 = vld [vmem:[%s991 + $0x4] sm:$0xf]
        %v994 = vld [vmem:[%s991 + $0x8] sm:$0xf]
        %v995 = vld [vmem:[%s991 + $0xc] sm:$0xf]
        %v996 = vld [vmem:[%s991 + $0x10] sm:$0xf]
        %v997 = vld [vmem:[%s991 + $0x14] sm:$0xf]
        %v998 = vld [vmem:[%s991 + $0x18] sm:$0xf]
        %v999 = vld [vmem:[%s991 + $0x1c] sm:$0xf]
        %v1000 = vld [vmem:[%s991 + $0x20] sm:$0xf]
        %v1001 = vld [vmem:[%s991 + $0x24] sm:$0xf]
        %v1002 = vld [vmem:[%s991 + $0x28] sm:$0xf]
        %v1003 = vld [vmem:[%s991 + $0x2c] sm:$0xf]
        %v1004 = vld [vmem:[%s991 + $0x30] sm:$0xf]
        %v1005 = vld [vmem:[%s991 + $0x34] sm:$0xf]
        %v1006 = vunpack.c.l.b16 %v990
        %v1007 = vpack.c.b16 %v363, %v362
        %v1008 = vpack.c.b16 %v365, %v364
        %v1009 = vpack.c.b16 %v367, %v366
        %v1010 = vpack.c.b16 %v1006, %v368
        %v1025 = vunpack.c.l.b16 %v992
        %v1026 = vunpack.c.l.b16 %v993
        %v1027 = vunpack.c.l.b16 %v994
        %v1028 = vunpack.c.l.b16 %v995
        %v1029 = vunpack.c.l.b16 %v996
        %v1030 = vunpack.c.l.b16 %v997
        %v1031 = vunpack.c.l.b16 %v998
        %v1032 = vunpack.c.l.b16 %v999
        %v1033 = vunpack.c.l.b16 %v1000
        %v1034 = vunpack.c.l.b16 %v1001
        %v1035 = vunpack.c.l.b16 %v1002
        %v1036 = vunpack.c.l.b16 %v1003
        %v1037 = vunpack.c.l.b16 %v1004
        %v1038 = vunpack.c.l.b16 %v1005
        %v1039 = vpack.c.b16 %v1026, %v1025
        %v1040 = vpack.c.b16 %v1028, %v1027
        %v1041 = vpack.c.b16 %v1030, %v1029
        %v1042 = vpack.c.b16 %v1032, %v1031
        %v1043 = vpack.c.b16 %v1034, %v1033
        %v1044 = vpack.c.b16 %v1036, %v1035
        %v1045 = vpack.c.b16 %v1038, %v1037
        %v1054 = vsel %vm415, %v1007, 0
        %v1057 = vsel %vm415, %v1008, 0
        %v1060 = vsel %vm415, %v1009, 0
        %v1063 = vsel %vm415, %v1010, 0
        %1065 = vmatprep.subr.bf16.mxu0 0
        %1066 = vmatpush1.bf16.msra.mxu0 %v1039
        %1067 = vmatprep.subr.bf16.mxu0 0
        %1068 = vmatpush1.bf16.msra.mxu0 %v1040
        %1069 = vmatprep.subr.bf16.mxu0 0
        %1070 = vmatpush1.bf16.msra.mxu0 %v1041
        %1071 = vmatprep.subr.bf16.mxu0 0
        %1072 = vmatpush1.bf16.msra.mxu0 %v1042
        %1073 = vmatprep.subr.bf16.mxu0 0
        %1074 = vmatpush1.bf16.msra.mxu0 %v1043
        %1075 = vmatprep.subr.bf16.mxu0 0
        %1076 = vmatpush1.bf16.msra.mxu0 %v1044
        %1077 = vmatprep.subr.bf16.mxu0 0
        %1078 = vmatpush1.bf16.msra.mxu0 %v1045
        %1079 = vmatprep.subr.bf16.mxu0 0
        %1080 = vmatpush1.bf16.msra.mxu0 0
        %1081 = vmatprep.subr.bf16.mxu0 0
        %1082 = vmatpush1.bf16.msra.mxu0 0
        %1083 = vmatprep.subr.bf16.mxu0 0
        %1084 = vmatpush1.bf16.msra.mxu0 0
        %1085 = vmatprep.subr.bf16.mxu0 0
        %1086 = vmatpush1.bf16.msra.mxu0 0
        %1087 = vmatprep.subr.bf16.mxu0 0
        %1088 = vmatpush1.bf16.msra.mxu0 0
        %1089 = vmatprep.subr.bf16.mxu0 0
        %1090 = vmatpush1.bf16.msra.mxu0 0
        %1091 = vmatprep.subr.bf16.mxu0 0
        %1092 = vmatpush1.bf16.msra.mxu0 0
        %1093 = vmatprep.subr.bf16.mxu0 0
        %1094 = vmatpush1.bf16.msra.mxu0 0
        %1095 = vmatprep.subr.bf16.mxu0 0
        %1096 = vmatpush1.bf16.msra.mxu0 0
        %1097 = vmatprep.mubr.bf16.mxu0 0
        %1098 = vmatmul.mubr.bf16.gmra.mrb[0].mxu0 %v1054
        %v1099 = vpop.f32.mrb[0].mxu0
        %v1100 = vadd.f32 0.0, %v1099
        %v1101 = vpop.f32.mrb[0].mxu0
        %v1102 = vpop.f32.mrb[0].mxu0
        %v1103 = vadd.f32 0.0, %v1102
        %v1104 = vpop.f32.mrb[0].mxu0
        %1105 = vmatprep.mubr.bf16.mxu0 0
        %1106 = vmatmul.mubr.bf16.gmra.mrb[0].mxu0 %v1057
        %v1107 = vpop.f32.mrb[0].mxu0
        %v1108 = vadd.f32 0.0, %v1107
        %v1109 = vpop.f32.mrb[0].mxu0
        %v1110 = vpop.f32.mrb[0].mxu0
        %v1111 = vadd.f32 0.0, %v1110
        %v1112 = vpop.f32.mrb[0].mxu0
        %1113 = vmatprep.mubr.bf16.mxu0 0
        %1114 = vmatmul.mubr.bf16.gmra.mrb[0].mxu0 %v1060
        %v1115 = vpop.f32.mrb[0].mxu0
        %v1116 = vadd.f32 0.0, %v1115
        %v1117 = vpop.f32.mrb[0].mxu0
        %v1118 = vpop.f32.mrb[0].mxu0
        %v1119 = vadd.f32 0.0, %v1118
        %v1120 = vpop.f32.mrb[0].mxu0
        %1121 = vmatprep.mubr.bf16.mxu0 0
        %1122 = vmatmul.mubr.bf16.gmra.mrb[0].mxu0 %v1063
        %v1123 = vpop.f32.mrb[0].mxu0
        %v1124 = vadd.f32 0.0, %v1123
        %v1125 = vpop.f32.mrb[0].mxu0
        %v1126 = vpop.f32.mrb[0].mxu0
        %v1127 = vadd.f32 0.0, %v1126
        %v1128 = vpop.f32.mrb[0].mxu0
        %1129 = vdwg.mxu0
        %v1130 = vadd.f32 %v969, %v1100
        %v1131 = vadd.f32 %v970, %v1103
        %v1132 = vadd.f32 %v971, %v1108
        %v1133 = vadd.f32 %v972, %v1111
        %v1134 = vadd.f32 %v973, %v1116
        %v1135 = vadd.f32 %v974, %v1119
        %v1136 = vadd.f32 %v975, %v1124
        %v1137 = vadd.f32 %v976, %v1127
        %v1139 = vrot.slane %v213, 5
        %v1140 = vrot.slane %v1139, 4
        %v1141 = vrot.slane %v214, 5
        %v1142 = vsel %vm642, %v1140, %v1141
        %s1143 = scalar_lea.vmem %s1, 280
        %v1144 = vld [vmem:[%s1143] sm:$0xf]
        %v1145 = vld [vmem:[%s1143 + $0x4] sm:$0xf]
        %v1146 = vld [vmem:[%s1143 + $0x8] sm:$0xf]
        %v1147 = vld [vmem:[%s1143 + $0xc] sm:$0xf]
        %v1148 = vld [vmem:[%s1143 + $0x10] sm:$0xf]
        %v1149 = vld [vmem:[%s1143 + $0x14] sm:$0xf]
        %v1150 = vld [vmem:[%s1143 + $0x18] sm:$0xf]
        %v1151 = vld [vmem:[%s1143 + $0x1c] sm:$0xf]
        %v1152 = vld [vmem:[%s1143 + $0x20] sm:$0xf]
        %v1153 = vld [vmem:[%s1143 + $0x24] sm:$0xf]
        %v1154 = vld [vmem:[%s1143 + $0x28] sm:$0xf]
        %v1155 = vld [vmem:[%s1143 + $0x2c] sm:$0xf]
        %v1156 = vld [vmem:[%s1143 + $0x30] sm:$0xf]
        %v1157 = vld [vmem:[%s1143 + $0x34] sm:$0xf]
        %v1158 = vunpack.c.l.b16 %v1142
        %v1159 = vpack.c.b16 %v692, %v691
        %v1160 = vpack.c.b16 %v694, %v693
        %v1161 = vpack.c.b16 %v696, %v695
        %v1162 = vpack.c.b16 %v1158, %v697
        %v1177 = vunpack.c.l.b16 %v1144
        %v1178 = vunpack.c.l.b16 %v1145
        %v1179 = vunpack.c.l.b16 %v1146
        %v1180 = vunpack.c.l.b16 %v1147
        %v1181 = vunpack.c.l.b16 %v1148
        %v1182 = vunpack.c.l.b16 %v1149
        %v1183 = vunpack.c.l.b16 %v1150
        %v1184 = vunpack.c.l.b16 %v1151
        %v1185 = vunpack.c.l.b16 %v1152
        %v1186 = vunpack.c.l.b16 %v1153
        %v1187 = vunpack.c.l.b16 %v1154
        %v1188 = vunpack.c.l.b16 %v1155
        %v1189 = vunpack.c.l.b16 %v1156
        %v1190 = vunpack.c.l.b16 %v1157
        %v1191 = vpack.c.b16 %v1178, %v1177
        %v1192 = vpack.c.b16 %v1180, %v1179
        %v1193 = vpack.c.b16 %v1182, %v1181
        %v1194 = vpack.c.b16 %v1184, %v1183
        %v1195 = vpack.c.b16 %v1186, %v1185
        %v1196 = vpack.c.b16 %v1188, %v1187
        %v1197 = vpack.c.b16 %v1190, %v1189
        %v1206 = vsel %vm415, %v1159, 0
        %v1209 = vsel %vm415, %v1160, 0
        %v1212 = vsel %vm415, %v1161, 0
        %v1215 = vsel %vm415, %v1162, 0
        %1217 = vmatprep.subr.bf16.mxu0 0
        %1218 = vmatpush1.bf16.msra.mxu0 %v1191
        %1219 = vmatprep.subr.bf16.mxu0 0
        %1220 = vmatpush1.bf16.msra.mxu0 %v1192
        %1221 = vmatprep.subr.bf16.mxu0 0
        %1222 = vmatpush1.bf16.msra.mxu0 %v1193
        %1223 = vmatprep.subr.bf16.mxu0 0
        %1224 = vmatpush1.bf16.msra.mxu0 %v1194
        %1225 = vmatprep.subr.bf16.mxu0 0
        %1226 = vmatpush1.bf16.msra.mxu0 %v1195
        %1227 = vmatprep.subr.bf16.mxu0 0
        %1228 = vmatpush1.bf16.msra.mxu0 %v1196
        %1229 = vmatprep.subr.bf16.mxu0 0
        %1230 = vmatpush1.bf16.msra.mxu0 %v1197
        %1231 = vmatprep.subr.bf16.mxu0 0
        %1232 = vmatpush1.bf16.msra.mxu0 0
        %1233 = vmatprep.subr.bf16.mxu0 0
        %1234 = vmatpush1.bf16.msra.mxu0 0
        %1235 = vmatprep.subr.bf16.mxu0 0
        %1236 = vmatpush1.bf16.msra.mxu0 0
        %1237 = vmatprep.subr.bf16.mxu0 0
        %1238 = vmatpush1.bf16.msra.mxu0 0
        %1239 = vmatprep.subr.bf16.mxu0 0
        %1240 = vmatpush1.bf16.msra.mxu0 0
        %1241 = vmatprep.subr.bf16.mxu0 0
        %1242 = vmatpush1.bf16.msra.mxu0 0
        %1243 = vmatprep.subr.bf16.mxu0 0
        %1244 = vmatpush1.bf16.msra.mxu0 0
        %1245 = vmatprep.subr.bf16.mxu0 0
        %1246 = vmatpush1.bf16.msra.mxu0 0
        %1247 = vmatprep.subr.bf16.mxu0 0
        %1248 = vmatpush1.bf16.msra.mxu0 0
        %1249 = vmatprep.mubr.bf16.mxu0 0
        %1250 = vmatmul.mubr.bf16.gmra.mrb[0].mxu0 %v1206
        %v1251 = vpop.f32.mrb[0].mxu0
        %v1252 = vadd.f32 0.0, %v1251
        %v1253 = vpop.f32.mrb[0].mxu0
        %v1254 = vpop.f32.mrb[0].mxu0
        %v1255 = vadd.f32 0.0, %v1254
        %v1256 = vpop.f32.mrb[0].mxu0
        %1257 = vmatprep.mubr.bf16.mxu0 0
        %1258 = vmatmul.mubr.bf16.gmra.mrb[0].mxu0 %v1209
        %v1259 = vpop.f32.mrb[0].mxu0
        %v1260 = vadd.f32 0.0, %v1259
        %v1261 = vpop.f32.mrb[0].mxu0
        %v1262 = vpop.f32.mrb[0].mxu0
        %v1263 = vadd.f32 0.0, %v1262
        %v1264 = vpop.f32.mrb[0].mxu0
        %1265 = vmatprep.mubr.bf16.mxu0 0
        %1266 = vmatmul.mubr.bf16.gmra.mrb[0].mxu0 %v1212
        %v1267 = vpop.f32.mrb[0].mxu0
        %v1268 = vadd.f32 0.0, %v1267
        %v1269 = vpop.f32.mrb[0].mxu0
        %v1270 = vpop.f32.mrb[0].mxu0
        %v1271 = vadd.f32 0.0, %v1270
        %v1272 = vpop.f32.mrb[0].mxu0
        %1273 = vmatprep.mubr.bf16.mxu0 0
        %1274 = vmatmul.mubr.bf16.gmra.mrb[0].mxu0 %v1215
        %v1275 = vpop.f32.mrb[0].mxu0
        %v1276 = vadd.f32 0.0, %v1275
        %v1277 = vpop.f32.mrb[0].mxu0
        %v1278 = vpop.f32.mrb[0].mxu0
        %v1279 = vadd.f32 0.0, %v1278
        %v1280 = vpop.f32.mrb[0].mxu0
        %1281 = vdwg.mxu0
        %v1282 = vadd.f32 %v1130, %v1252
        %v1283 = vadd.f32 %v1131, %v1255
        %v1284 = vadd.f32 %v1132, %v1260
        %v1285 = vadd.f32 %v1133, %v1263
        %v1286 = vadd.f32 %v1134, %v1268
        %v1287 = vadd.f32 %v1135, %v1271
        %v1288 = vadd.f32 %v1136, %v1276
        %v1289 = vadd.f32 %v1137, %v1279
        %s1290 = scalar_lea.vmem %s1, 336
        %v1291 = vld [vmem:[%s1290] sm:$0xf]
        %v1292 = vld [vmem:[%s1290 + $0x4] sm:$0xf]
        %v1293 = vld [vmem:[%s1290 + $0x8] sm:$0xf]
        %v1294 = vld [vmem:[%s1290 + $0xc] sm:$0xf]
        %v1295 = vld [vmem:[%s1290 + $0x10] sm:$0xf]
        %v1296 = vld [vmem:[%s1290 + $0x14] sm:$0xf]
        %v1297 = vld [vmem:[%s1290 + $0x18] sm:$0xf]
        %v1298 = vld [vmem:[%s1290 + $0x1c] sm:$0xf]
        %v1299 = vld [vmem:[%s1290 + $0x20] sm:$0xf]
        %v1300 = vld [vmem:[%s1290 + $0x24] sm:$0xf]
        %v1301 = vld [vmem:[%s1290 + $0x28] sm:$0xf]
        %v1302 = vld [vmem:[%s1290 + $0x2c] sm:$0xf]
        %v1303 = vld [vmem:[%s1290 + $0x30] sm:$0xf]
        %v1304 = vld [vmem:[%s1290 + $0x34] sm:$0xf]
        %v1306 = vunpack.c.l.b16 %v215
        %v1307 = vpack.c.b16 %v1306, %v845
        %v1322 = vunpack.c.l.b16 %v1291
        %v1323 = vunpack.c.l.b16 %v1292
        %v1324 = vunpack.c.l.b16 %v1293
        %v1325 = vunpack.c.l.b16 %v1294
        %v1326 = vunpack.c.l.b16 %v1295
        %v1327 = vunpack.c.l.b16 %v1296
        %v1328 = vunpack.c.l.b16 %v1297
        %v1329 = vunpack.c.l.b16 %v1298
        %v1330 = vunpack.c.l.b16 %v1299
        %v1331 = vunpack.c.l.b16 %v1300
        %v1332 = vunpack.c.l.b16 %v1301
        %v1333 = vunpack.c.l.b16 %v1302
        %v1334 = vunpack.c.l.b16 %v1303
        %v1335 = vunpack.c.l.b16 %v1304
        %v1336 = vpack.c.b16 %v1323, %v1322
        %v1337 = vpack.c.b16 %v1325, %v1324
        %v1338 = vpack.c.b16 %v1327, %v1326
        %v1339 = vpack.c.b16 %v1329, %v1328
        %v1340 = vpack.c.b16 %v1331, %v1330
        %v1341 = vpack.c.b16 %v1333, %v1332
        %v1342 = vpack.c.b16 %v1335, %v1334
        %v1351 = vsel %vm415, %v1307, 0
        %1353 = vmatprep.subr.bf16.mxu0 0
        %1354 = vmatpush1.bf16.msra.mxu0 %v1336
        %1355 = vmatprep.subr.bf16.mxu0 0
        %1356 = vmatpush1.bf16.msra.mxu0 %v1337
        %1357 = vmatprep.subr.bf16.mxu0 0
        %1358 = vmatpush1.bf16.msra.mxu0 %v1338
        %1359 = vmatprep.subr.bf16.mxu0 0
        %1360 = vmatpush1.bf16.msra.mxu0 %v1339
        %1361 = vmatprep.subr.bf16.mxu0 0
        %1362 = vmatpush1.bf16.msra.mxu0 %v1340
        %1363 = vmatprep.subr.bf16.mxu0 0
        %1364 = vmatpush1.bf16.msra.mxu0 %v1341
        %1365 = vmatprep.subr.bf16.mxu0 0
        %1366 = vmatpush1.bf16.msra.mxu0 %v1342
        %1367 = vmatprep.subr.bf16.mxu0 0
        %1368 = vmatpush1.bf16.msra.mxu0 0
        %1369 = vmatprep.subr.bf16.mxu0 0
        %1370 = vmatpush1.bf16.msra.mxu0 0
        %1371 = vmatprep.subr.bf16.mxu0 0
        %1372 = vmatpush1.bf16.msra.mxu0 0
        %1373 = vmatprep.subr.bf16.mxu0 0
        %1374 = vmatpush1.bf16.msra.mxu0 0
        %1375 = vmatprep.subr.bf16.mxu0 0
        %1376 = vmatpush1.bf16.msra.mxu0 0
        %1377 = vmatprep.subr.bf16.mxu0 0
        %1378 = vmatpush1.bf16.msra.mxu0 0
        %1379 = vmatprep.subr.bf16.mxu0 0
        %1380 = vmatpush1.bf16.msra.mxu0 0
        %1381 = vmatprep.subr.bf16.mxu0 0
        %1382 = vmatpush1.bf16.msra.mxu0 0
        %1383 = vmatprep.subr.bf16.mxu0 0
        %1384 = vmatpush1.bf16.msra.mxu0 0
        %1385 = vmatprep.mubr.bf16.mxu0 0
        %1386 = vmatmul.mubr.bf16.gmra.mrb[0].mxu0 %v559
        %v1387 = vpop.f32.mrb[0].mxu0
        %v1388 = vadd.f32 0.0, %v1387
        %v1389 = vpop.f32.mrb[0].mxu0
        %v1390 = vpop.f32.mrb[0].mxu0
        %v1391 = vadd.f32 0.0, %v1390
        %v1392 = vpop.f32.mrb[0].mxu0
        %1393 = vmatprep.mubr.bf16.mxu0 0
        %1394 = vmatmul.mubr.bf16.gmra.mrb[0].mxu0 %v562
        %v1395 = vpop.f32.mrb[0].mxu0
        %v1396 = vadd.f32 0.0, %v1395
        %v1397 = vpop.f32.mrb[0].mxu0
        %v1398 = vpop.f32.mrb[0].mxu0
        %v1399 = vadd.f32 0.0, %v1398
        %v1400 = vpop.f32.mrb[0].mxu0
        %1401 = vmatprep.mubr.bf16.mxu0 0
        %1402 = vmatmul.mubr.bf16.gmra.mrb[0].mxu0 %v565
        %v1403 = vpop.f32.mrb[0].mxu0
        %v1404 = vadd.f32 0.0, %v1403
        %v1405 = vpop.f32.mrb[0].mxu0
        %v1406 = vpop.f32.mrb[0].mxu0
        %v1407 = vadd.f32 0.0, %v1406
        %v1408 = vpop.f32.mrb[0].mxu0
        %1409 = vmatprep.mubr.bf16.mxu0 0
        %1410 = vmatmul.mubr.bf16.gmra.mrb[0].mxu0 %v1351
        %v1411 = vpop.f32.mrb[0].mxu0
        %v1412 = vadd.f32 0.0, %v1411
        %v1413 = vpop.f32.mrb[0].mxu0
        %v1414 = vpop.f32.mrb[0].mxu0
        %v1415 = vadd.f32 0.0, %v1414
        %v1416 = vpop.f32.mrb[0].mxu0
        %1417 = vdwg.mxu0
        %v1418 = vadd.f32 %v1282, %v1388
        %v1419 = vadd.f32 %v1283, %v1391
        %v1420 = vadd.f32 %v1284, %v1396
        %v1421 = vadd.f32 %v1285, %v1399
        %v1422 = vadd.f32 %v1286, %v1404
        %v1423 = vadd.f32 %v1287, %v1407
        %v1424 = vadd.f32 %v1288, %v1412
        %v1425 = vadd.f32 %v1289, %v1415
        %v1427 = vshrl.u32 %v215, 16
        %v1429 = vrot.slane %v1427, 4
        %v1430 = vshll.u32 %v215, 16
        %v1432 = vrot.slane %v1430, 5
        %v1433 = vor.u32 %v1429, %v1432
        %v1434 = vrot.slane %v1433, 4
        %v1436 = vshll.u32 %v216, 16
        %v1438 = vrot.slane %v1436, 5
        %v1439 = vsel %vm233, %v1434, %v1438
        %s1440 = scalar_lea.vmem %s1, 392
        %v1441 = vld [vmem:[%s1440] sm:$0xf]
        %v1442 = vld [vmem:[%s1440 + $0x4] sm:$0xf]
        %v1443 = vld [vmem:[%s1440 + $0x8] sm:$0xf]
        %v1444 = vld [vmem:[%s1440 + $0xc] sm:$0xf]
        %v1445 = vld [vmem:[%s1440 + $0x10] sm:$0xf]
        %v1446 = vld [vmem:[%s1440 + $0x14] sm:$0xf]
        %v1447 = vld [vmem:[%s1440 + $0x18] sm:$0xf]
        %v1448 = vld [vmem:[%s1440 + $0x1c] sm:$0xf]
        %v1449 = vld [vmem:[%s1440 + $0x20] sm:$0xf]
        %v1450 = vld [vmem:[%s1440 + $0x24] sm:$0xf]
        %v1451 = vld [vmem:[%s1440 + $0x28] sm:$0xf]
        %v1452 = vld [vmem:[%s1440 + $0x2c] sm:$0xf]
        %v1453 = vld [vmem:[%s1440 + $0x30] sm:$0xf]
        %v1454 = vld [vmem:[%s1440 + $0x34] sm:$0xf]
        %v1455 = vunpack.c.l.b16 %v1439
        %v1456 = vpack.c.b16 %v1455, %v1006
        %v1471 = vunpack.c.l.b16 %v1441
        %v1472 = vunpack.c.l.b16 %v1442
        %v1473 = vunpack.c.l.b16 %v1443
        %v1474 = vunpack.c.l.b16 %v1444
        %v1475 = vunpack.c.l.b16 %v1445
        %v1476 = vunpack.c.l.b16 %v1446
        %v1477 = vunpack.c.l.b16 %v1447
        %v1478 = vunpack.c.l.b16 %v1448
        %v1479 = vunpack.c.l.b16 %v1449
        %v1480 = vunpack.c.l.b16 %v1450
        %v1481 = vunpack.c.l.b16 %v1451
        %v1482 = vunpack.c.l.b16 %v1452
        %v1483 = vunpack.c.l.b16 %v1453
        %v1484 = vunpack.c.l.b16 %v1454
        %v1485 = vpack.c.b16 %v1472, %v1471
        %v1486 = vpack.c.b16 %v1474, %v1473
        %v1487 = vpack.c.b16 %v1476, %v1475
        %v1488 = vpack.c.b16 %v1478, %v1477
        %v1489 = vpack.c.b16 %v1480, %v1479
        %v1490 = vpack.c.b16 %v1482, %v1481
        %v1491 = vpack.c.b16 %v1484, %v1483
        %v1500 = vsel %vm415, %v1456, 0
        %1502 = vmatprep.subr.bf16.mxu0 0
        %1503 = vmatpush1.bf16.msra.mxu0 %v1485
        %1504 = vmatprep.subr.bf16.mxu0 0
        %1505 = vmatpush1.bf16.msra.mxu0 %v1486
        %1506 = vmatprep.subr.bf16.mxu0 0
        %1507 = vmatpush1.bf16.msra.mxu0 %v1487
        %1508 = vmatprep.subr.bf16.mxu0 0
        %1509 = vmatpush1.bf16.msra.mxu0 %v1488
        %1510 = vmatprep.subr.bf16.mxu0 0
        %1511 = vmatpush1.bf16.msra.mxu0 %v1489
        %1512 = vmatprep.subr.bf16.mxu0 0
        %1513 = vmatpush1.bf16.msra.mxu0 %v1490
        %1514 = vmatprep.subr.bf16.mxu0 0
        %1515 = vmatpush1.bf16.msra.mxu0 %v1491
        %1516 = vmatprep.subr.bf16.mxu0 0
        %1517 = vmatpush1.bf16.msra.mxu0 0
        %1518 = vmatprep.subr.bf16.mxu0 0
        %1519 = vmatpush1.bf16.msra.mxu0 0
        %1520 = vmatprep.subr.bf16.mxu0 0
        %1521 = vmatpush1.bf16.msra.mxu0 0
        %1522 = vmatprep.subr.bf16.mxu0 0
        %1523 = vmatpush1.bf16.msra.mxu0 0
        %1524 = vmatprep.subr.bf16.mxu0 0
        %1525 = vmatpush1.bf16.msra.mxu0 0
        %1526 = vmatprep.subr.bf16.mxu0 0
        %1527 = vmatpush1.bf16.msra.mxu0 0
        %1528 = vmatprep.subr.bf16.mxu0 0
        %1529 = vmatpush1.bf16.msra.mxu0 0
        %1530 = vmatprep.subr.bf16.mxu0 0
        %1531 = vmatpush1.bf16.msra.mxu0 0
        %1532 = vmatprep.subr.bf16.mxu0 0
        %1533 = vmatpush1.bf16.msra.mxu0 0
        %1534 = vmatprep.mubr.bf16.mxu0 0
        %1535 = vmatmul.mubr.bf16.gmra.mrb[0].mxu0 %v420
        %v1536 = vpop.f32.mrb[0].mxu0
        %v1537 = vadd.f32 0.0, %v1536
        %v1538 = vpop.f32.mrb[0].mxu0
        %v1539 = vpop.f32.mrb[0].mxu0
        %v1540 = vadd.f32 0.0, %v1539
        %v1541 = vpop.f32.mrb[0].mxu0
        %1542 = vmatprep.mubr.bf16.mxu0 0
        %1543 = vmatmul.mubr.bf16.gmra.mrb[0].mxu0 %v423
        %v1544 = vpop.f32.mrb[0].mxu0
        %v1545 = vadd.f32 0.0, %v1544
        %v1546 = vpop.f32.mrb[0].mxu0
        %v1547 = vpop.f32.mrb[0].mxu0
        %v1548 = vadd.f32 0.0, %v1547
        %v1549 = vpop.f32.mrb[0].mxu0
        %1550 = vmatprep.mubr.bf16.mxu0 0
        %1551 = vmatmul.mubr.bf16.gmra.mrb[0].mxu0 %v426
        %v1552 = vpop.f32.mrb[0].mxu0
        %v1553 = vadd.f32 0.0, %v1552
        %v1554 = vpop.f32.mrb[0].mxu0
        %v1555 = vpop.f32.mrb[0].mxu0
        %v1556 = vadd.f32 0.0, %v1555
        %v1557 = vpop.f32.mrb[0].mxu0
        %1558 = vmatprep.mubr.bf16.mxu0 0
        %1559 = vmatmul.mubr.bf16.gmra.mrb[0].mxu0 %v1500
        %v1560 = vpop.f32.mrb[0].mxu0
        %v1561 = vadd.f32 0.0, %v1560
        %v1562 = vpop.f32.mrb[0].mxu0
        %v1563 = vpop.f32.mrb[0].mxu0
        %v1564 = vadd.f32 0.0, %v1563
        %v1565 = vpop.f32.mrb[0].mxu0
        %1566 = vdwg.mxu0
        %v1567 = vadd.f32 %v1418, %v1537
        %v1568 = vadd.f32 %v1419, %v1540
        %v1569 = vadd.f32 %v1420, %v1545
        %v1570 = vadd.f32 %v1421, %v1548
        %v1571 = vadd.f32 %v1422, %v1553
        %v1572 = vadd.f32 %v1423, %v1556
        %v1573 = vadd.f32 %v1424, %v1561
        %v1574 = vadd.f32 %v1425, %v1564
        %v1576 = vrot.slane %v215, 5
        %v1577 = vrot.slane %v1576, 4
        %v1578 = vrot.slane %v216, 5
        %v1579 = vsel %vm642, %v1577, %v1578
        %s1580 = scalar_lea.vmem %s1, 448
        %v1581 = vld [vmem:[%s1580] sm:$0xf]
        %v1582 = vld [vmem:[%s1580 + $0x4] sm:$0xf]
        %v1583 = vld [vmem:[%s1580 + $0x8] sm:$0xf]
        %v1584 = vld [vmem:[%s1580 + $0xc] sm:$0xf]
        %v1585 = vld [vmem:[%s1580 + $0x10] sm:$0xf]
        %v1586 = vld [vmem:[%s1580 + $0x14] sm:$0xf]
        %v1587 = vld [vmem:[%s1580 + $0x18] sm:$0xf]
        %v1588 = vld [vmem:[%s1580 + $0x1c] sm:$0xf]
        %v1589 = vld [vmem:[%s1580 + $0x20] sm:$0xf]
        %v1590 = vld [vmem:[%s1580 + $0x24] sm:$0xf]
        %v1591 = vld [vmem:[%s1580 + $0x28] sm:$0xf]
        %v1592 = vld [vmem:[%s1580 + $0x2c] sm:$0xf]
        %v1593 = vld [vmem:[%s1580 + $0x30] sm:$0xf]
        %v1594 = vld [vmem:[%s1580 + $0x34] sm:$0xf]
        %v1595 = vunpack.c.l.b16 %v1579
        %v1596 = vpack.c.b16 %v1595, %v1158
        %v1611 = vunpack.c.l.b16 %v1581
        %v1612 = vunpack.c.l.b16 %v1582
        %v1613 = vunpack.c.l.b16 %v1583
        %v1614 = vunpack.c.l.b16 %v1584
        %v1615 = vunpack.c.l.b16 %v1585
        %v1616 = vunpack.c.l.b16 %v1586
        %v1617 = vunpack.c.l.b16 %v1587
        %v1618 = vunpack.c.l.b16 %v1588
        %v1619 = vunpack.c.l.b16 %v1589
        %v1620 = vunpack.c.l.b16 %v1590
        %v1621 = vunpack.c.l.b16 %v1591
        %v1622 = vunpack.c.l.b16 %v1592
        %v1623 = vunpack.c.l.b16 %v1593
        %v1624 = vunpack.c.l.b16 %v1594
        %v1625 = vpack.c.b16 %v1612, %v1611
        %v1626 = vpack.c.b16 %v1614, %v1613
        %v1627 = vpack.c.b16 %v1616, %v1615
        %v1628 = vpack.c.b16 %v1618, %v1617
        %v1629 = vpack.c.b16 %v1620, %v1619
        %v1630 = vpack.c.b16 %v1622, %v1621
        %v1631 = vpack.c.b16 %v1624, %v1623
        %v1640 = vsel %vm415, %v1596, 0
        %1642 = vmatprep.subr.bf16.mxu0 0
        %1643 = vmatpush1.bf16.msra.mxu0 %v1625
        %1644 = vmatprep.subr.bf16.mxu0 0
        %1645 = vmatpush1.bf16.msra.mxu0 %v1626
        %1646 = vmatprep.subr.bf16.mxu0 0
        %1647 = vmatpush1.bf16.msra.mxu0 %v1627
        %1648 = vmatprep.subr.bf16.mxu0 0
        %1649 = vmatpush1.bf16.msra.mxu0 %v1628
        %1650 = vmatprep.subr.bf16.mxu0 0
        %1651 = vmatpush1.bf16.msra.mxu0 %v1629
        %1652 = vmatprep.subr.bf16.mxu0 0
        %1653 = vmatpush1.bf16.msra.mxu0 %v1630
        %1654 = vmatprep.subr.bf16.mxu0 0
        %1655 = vmatpush1.bf16.msra.mxu0 %v1631
        %1656 = vmatprep.subr.bf16.mxu0 0
        %1657 = vmatpush1.bf16.msra.mxu0 0
        %1658 = vmatprep.subr.bf16.mxu0 0
        %1659 = vmatpush1.bf16.msra.mxu0 0
        %1660 = vmatprep.subr.bf16.mxu0 0
        %1661 = vmatpush1.bf16.msra.mxu0 0
        %1662 = vmatprep.subr.bf16.mxu0 0
        %1663 = vmatpush1.bf16.msra.mxu0 0
        %1664 = vmatprep.subr.bf16.mxu0 0
        %1665 = vmatpush1.bf16.msra.mxu0 0
        %1666 = vmatprep.subr.bf16.mxu0 0
        %1667 = vmatpush1.bf16.msra.mxu0 0
        %1668 = vmatprep.subr.bf16.mxu0 0
        %1669 = vmatpush1.bf16.msra.mxu0 0
        %1670 = vmatprep.subr.bf16.mxu0 0
        %1671 = vmatpush1.bf16.msra.mxu0 0
        %1672 = vmatprep.subr.bf16.mxu0 0
        %1673 = vmatpush1.bf16.msra.mxu0 0
        %1674 = vmatprep.mubr.bf16.mxu0 0
        %1675 = vmatmul.mubr.bf16.gmra.mrb[0].mxu0 %v748
        %v1676 = vpop.f32.mrb[0].mxu0
        %v1677 = vadd.f32 0.0, %v1676
        %v1678 = vpop.f32.mrb[0].mxu0
        %v1679 = vpop.f32.mrb[0].mxu0
        %v1680 = vadd.f32 0.0, %v1679
        %v1681 = vpop.f32.mrb[0].mxu0
        %1682 = vmatprep.mubr.bf16.mxu0 0
        %1683 = vmatmul.mubr.bf16.gmra.mrb[0].mxu0 %v751
        %v1684 = vpop.f32.mrb[0].mxu0
        %v1685 = vadd.f32 0.0, %v1684
        %v1686 = vpop.f32.mrb[0].mxu0
        %v1687 = vpop.f32.mrb[0].mxu0
        %v1688 = vadd.f32 0.0, %v1687
        %v1689 = vpop.f32.mrb[0].mxu0
        %1690 = vmatprep.mubr.bf16.mxu0 0
        %1691 = vmatmul.mubr.bf16.gmra.mrb[0].mxu0 %v754
        %v1692 = vpop.f32.mrb[0].mxu0
        %v1693 = vadd.f32 0.0, %v1692
        %v1694 = vpop.f32.mrb[0].mxu0
        %v1695 = vpop.f32.mrb[0].mxu0
        %v1696 = vadd.f32 0.0, %v1695
        %v1697 = vpop.f32.mrb[0].mxu0
        %1698 = vmatprep.mubr.bf16.mxu0 0
        %1699 = vmatmul.mubr.bf16.gmra.mrb[0].mxu0 %v1640
        %v1700 = vpop.f32.mrb[0].mxu0
        %v1701 = vadd.f32 0.0, %v1700
        %v1702 = vpop.f32.mrb[0].mxu0
        %v1703 = vpop.f32.mrb[0].mxu0
        %v1704 = vadd.f32 0.0, %v1703
        %v1705 = vpop.f32.mrb[0].mxu0
        %1706 = vdwg.mxu0
        %v1707 = vadd.f32 %v1567, %v1677
        %v1708 = vadd.f32 %v1568, %v1680
        %v1709 = vadd.f32 %v1569, %v1685
        %v1710 = vadd.f32 %v1570, %v1688
        %v1711 = vadd.f32 %v1571, %v1693
        %v1712 = vadd.f32 %v1572, %v1696
        %v1713 = vadd.f32 %v1573, %v1701
        %v1714 = vadd.f32 %v1574, %v1704
        %v1715 = vld [vmem:[%s2] sm:$0x1]
        %v1717 = vlaneseq
        %v1718 = vshrl.u32 %v1717, 7
        %v1719 = vsub.s32 0, %v1718
        %v1720 = vrot.slane %v1715, %v1719
        %v1722 = vmul.f32 %v1707, %v1720
        %v1723 = vmul.f32 %v1708, %v1720
        %v1724 = vmul.f32 %v1709, %v1720
        %v1725 = vmul.f32 %v1710, %v1720
        %v1726 = vmul.f32 %v1711, %v1720
        %v1727 = vmul.f32 %v1712, %v1720
        %v1728 = vmul.f32 %v1713, %v1720
        %v1729 = vmul.f32 %v1714, %v1720
        %v1730 = vld [vmem:[%s3] sm:$0x1]
        %v1732 = vlaneseq
        %v1733 = vshrl.u32 %v1732, 7
        %v1734 = vsub.s32 0, %v1733
        %v1735 = vrot.slane %v1730, %v1734
        %v1737 = vadd.f32 %v1722, %v1735
        %v1738 = vadd.f32 %v1723, %v1735
        %v1739 = vadd.f32 %v1724, %v1735
        %v1740 = vadd.f32 %v1725, %v1735
        %v1741 = vadd.f32 %v1726, %v1735
        %v1742 = vadd.f32 %v1727, %v1735
        %v1743 = vadd.f32 %v1728, %v1735
        %v1744 = vadd.f32 %v1729, %v1735
        %vm1745 = vcmp.ge.f32.partialorder %v1737, 0.0
        %vm1746 = vcmp.ge.f32.partialorder %v1738, 0.0
        %vm1747 = vcmp.ge.f32.partialorder %v1739, 0.0
        %vm1748 = vcmp.ge.f32.partialorder %v1740, 0.0
        %vm1749 = vcmp.ge.f32.partialorder %v1741, 0.0
        %vm1750 = vcmp.ge.f32.partialorder %v1742, 0.0
        %vm1751 = vcmp.ge.f32.partialorder %v1743, 0.0
        %vm1752 = vcmp.ge.f32.partialorder %v1744, 0.0
        %v1753 = vmul.f32 %v1737, 0.01
        %v1754 = vmul.f32 %v1738, 0.01
        %v1755 = vmul.f32 %v1739, 0.01
        %v1756 = vmul.f32 %v1740, 0.01
        %v1757 = vmul.f32 %v1741, 0.01
        %v1758 = vmul.f32 %v1742, 0.01
        %v1759 = vmul.f32 %v1743, 0.01
        %v1760 = vmul.f32 %v1744, 0.01
        %v1761 = vsel %vm1745, %v1737, %v1753
        %v1762 = vsel %vm1746, %v1738, %v1754
        %v1763 = vsel %vm1747, %v1739, %v1755
        %v1764 = vsel %vm1748, %v1740, %v1756
        %v1765 = vsel %vm1749, %v1741, %v1757
        %v1766 = vsel %vm1750, %v1742, %v1758
        %v1767 = vsel %vm1751, %v1743, %v1759
        %v1768 = vsel %vm1752, %v1744, %v1760
        %vm1769 = vcmask 130048
        %1770 = vst.msk [vmem:[%s190] sm:$0xff] %vm1769, %v1761
        %1771 = vst.msk [vmem:[%s190 + $0x8] sm:$0xff] %vm1769, %v1762
        %1772 = vst.msk [vmem:[%s190 + $0x10] sm:$0xff] %vm1769, %v1763
        %1773 = vst.msk [vmem:[%s190 + $0x18] sm:$0xff] %vm1769, %v1764
        %1774 = vst.msk [vmem:[%s190 + $0x20] sm:$0xff] %vm1769, %v1765
        %1775 = vst.msk [vmem:[%s190 + $0x28] sm:$0xff] %vm1769, %v1766
        %1776 = vst.msk [vmem:[%s190 + $0x30] sm:$0xff] %vm1769, %v1767
        %1777 = vst.msk [vmem:[%s190 + $0x38] sm:$0xff] %vm1769, %v1768
        %s1778 = sand.u32 %s115, 1
        %s1779 = scalar_lea.sflag [#allocation3], %s1778
        %s1780 = sand.u32 %s115, 1
        %s1781 = smul.addr %s1780, 64
        %s1782 = scalar_lea.vmem [#allocation2], %s1781
        // Predicated region
        $region37: #{dpc_forward.11} parent=35 // pred_check
          %p1783 = pneg %p125
        $region38: #{dpc_forward.11} parent=35 // pred_check_branch
          %1785 = sbr.rel (%p1783) target = $region40
        $region39: #{dpc_forward.11} parent=35 // pred_region
          %s1787 = ssub.s32 1024, 1024
          %1788 = vsyncadd %s1779, %s1787
          %s1789 = smul.addr %s18, 8
          %s1790 = smul.addr %s1789, 128
          %s1791 = scalar_lea.hbm %s4, %s1790
          %s1792 = sshll.u32 %s1782, 4
          %s1793 = int_to_ptr.vmem [resolvable:$true] %s1792
          %1798 = dma.vmem_to_hbm [thread:$0]  %s1793, 1024, %s1791, %s1779, 128, 128, 8
        $region40: #{dpc_forward.11} parent=35 // pred_fallthru
          _
      $region36: #{dpc_forward.11} parent=5 // pred_fallthru
        _
      %p1799 = scmp.le.s32.totalorder 2, %s13
      // Predicated region
      $region41: #{dpc_forward.11} parent=5 // pred_check
        %p1800 = pneg %p1799
      $region42: #{dpc_forward.11} parent=5 // pred_check_branch
        %1802 = sbr.rel (%p1800) target = $region44
      $region43: #{dpc_forward.11} parent=5 // pred_region
        %s1803 = ssub.s32 %s13, 2
        // Predicated region
        $region45: #{dpc_forward.11} parent=43 // pred_check
          %p1804 = pneg %p131
        $region46: #{dpc_forward.11} parent=43 // pred_check_branch
          %1806 = sbr.rel (%p1804) target = $region48
        $region47: #{dpc_forward.11} parent=43 // pred_region
          %s1807 = sand.u32 %s116, 1
          %s1808 = scalar_lea.sflag [#allocation3], %s1807
          %s1809 = sand.u32 %s116, 1
          %s1810 = smul.addr %s1809, 64
          %s1811 = scalar_lea.vmem [#allocation2], %s1810
          %1812 = dma.done %s1808, 1024
        $region48: #{dpc_forward.11} parent=43 // pred_fallthru
          _
      $region44: #{dpc_forward.11} parent=5 // pred_fallthru
        _
    $region6: #{dpc_forward.11} parent=1 // loop_footer
      %s17 = sadd.s32 1, %s13
    $region7: #{dpc_forward.11} parent=1 // loop_footer_branch
      %12 = sbr.rel target = $region3
    $region8: #{dpc_forward.11} parent=1 // loop_exit
      _
    %1813 = vsyncpa [#allocation3], 1
    %s1814 = scalar_lea.sflag [#allocation3], 1
    %1815 = vsyncpa %s1814, 1

</llo_original>
